<compile_context>
chip_gen: v7x
topology: tpu7x:2x2x1
jax: 0.10.0
libtpu: 0.0.40
codegen_flags: <defaults>
</compile_context>

<pallas_src>
import functools

import jax
import jax.numpy as jnp
from jax import lax
from jax.experimental import pallas as pl
from jax.experimental.pallas import tpu as pltpu

VGG_MEAN = jnp.array([0.485, 0.456, 0.406], jnp.float32)
VGG_STD = jnp.array([0.229, 0.224, 0.225], jnp.float32)   # rgb_range = 1

_VMEM_LIMIT = 48 * 1024 * 1024      # <= v7x physical (64 MiB), plenty on v5e/v6e


# ------------------------------ tiling helpers -------------------------------

def _round_up(x, m):
    return ((x + m - 1) // m) * m


def _pick_tile(dim, max_tile, align):
    """Balanced tile: tile <= max_tile (mult of align), padded_dim % tile == 0."""
    if dim <= align:
        return align, align
    n = -(-dim // max_tile)                       # number of tiles
    t = _round_up(-(-dim // n), align)
    t = min(t, _round_up(dim, align))
    return t, _round_up(dim, t)


# --------------------------- matmul (fallback conv) ---------------------------

def _mm_bias_kernel_single(a_ref, b_ref, bias_ref, o_ref, *, relu):
    # Single K step: no accumulator scratch, no pl.when phases.
    out = jnp.dot(a_ref[...], b_ref[...],
                  preferred_element_type=jnp.float32) + bias_ref[...]
    if relu:
        out = jnp.maximum(out, 0.0)
    o_ref[...] = out.astype(o_ref.dtype)


def _mm_bias_kernel_multi(a_ref, b_ref, bias_ref, o_ref, acc_ref, *, relu):
    @pl.when(pl.program_id(2) == 0)
    def _():
        acc_ref[...] = jnp.zeros_like(acc_ref)

    acc_ref[...] += jnp.dot(a_ref[...], b_ref[...],
                            preferred_element_type=jnp.float32)

    @pl.when(pl.program_id(2) == pl.num_programs(2) - 1)
    def _():
        out = acc_ref[...] + bias_ref[...]
        if relu:
            out = jnp.maximum(out, 0.0)
        o_ref[...] = out.astype(o_ref.dtype)


def matmul_bias(a, b, bias, relu=False, out_dtype=jnp.bfloat16):
    """(M,K)@(K,N)+bias[,ReLU] -> bf16 (M,N). bf16 MXU inputs, f32 accumulation."""
    M, K = a.shape
    K2, N = b.shape
    assert K == K2
    tm, M_pad = _pick_tile(M, 512, 16)
    tn, N_pad = _pick_tile(N, 256, 128)        # lane-dense output stores
    K_pad = _round_up(K, 128)
    if K_pad <= 2560:
        tk = K_pad                              # full-K tile -> single K step
    else:
        tk, K_pad = 512, _round_up(K_pad, 512)

    a_p = jnp.pad(a.astype(jnp.bfloat16), ((0, M_pad - M), (0, K_pad - K)))
    b_p = jnp.pad(b.astype(jnp.bfloat16), ((0, K_pad - K), (0, N_pad - N)))
    bias_p = jnp.pad(bias.astype(jnp.float32), (0, N_pad - N)).reshape(1, N_pad)

    nk = K_pad // tk
    if nk == 1:
        kern = functools.partial(_mm_bias_kernel_single, relu=relu)
        scratch = []
    else:
        kern = functools.partial(_mm_bias_kernel_multi, relu=relu)
        scratch = [pltpu.VMEM((tm, tn), jnp.float32)]

    out = pl.pallas_call(
        kern,
        out_shape=jax.ShapeDtypeStruct((M_pad, N_pad), out_dtype),
        grid=(M_pad // tm, N_pad // tn, nk),
        in_specs=[
            pl.BlockSpec((tm, tk), lambda i, j, k: (i, k)),
            pl.BlockSpec((tk, tn), lambda i, j, k: (k, j)),
            pl.BlockSpec((1, tn), lambda i, j, k: (0, j)),
        ],
        out_specs=pl.BlockSpec((tm, tn), lambda i, j, k: (i, j)),
        scratch_shapes=scratch,
        compiler_params=pltpu.CompilerParams(
            dimension_semantics=("parallel", "parallel", "arbitrary"),
            vmem_limit_bytes=_VMEM_LIMIT),
    )(a_p, b_p, bias_p)
    return out[:M, :N]


# ------------------------------ fused 3x3 conv --------------------------------

def _conv3x3_kernel(x_ref, w_ref, b_ref, o_ref, *, th, W, relu):
    # x_ref: (1, Hp, Wp, Cin) bf16  (whole padded image, resident across row blocks)
    # w_ref: (9*Cin, Cout) bf16, b_ref: (1, Cout) f32, o_ref: (1, th, W, Cout) bf16
    r0 = pl.program_id(1) * th
    xin = x_ref[0, pl.ds(r0, th + 2), :, :]                  # (th+2, Wp, Cin)
    taps = [xin[ky:ky + th, kx:kx + W, :].reshape(th * W, xin.shape[2])
            for ky in range(3) for kx in range(3)]
    a = jnp.concatenate(taps, axis=1)                        # (th*W, 9*Cin)
    acc = jnp.dot(a, w_ref[...], preferred_element_type=jnp.float32)
    out = acc + b_ref[...]
    if relu:
        out = jnp.maximum(out, 0.0)
    o_ref[0] = out.reshape(th, W, -1).astype(o_ref.dtype)


def _fused_conv_vmem_estimate(Hp, Wp, Cin, th, W, Cout):
    in_blk = Hp * Wp * Cin * 2
    out_blk = th * W * Cout * 2
    w_bytes = 9 * Cin * Cout * 2 + Cout * 4
    inter = th * W * (9 * Cin * 2 + Cout * 4) + 2 * (th + 2) * Wp * Cin * 2
    return 2 * in_blk + 2 * out_blk + w_bytes + inter


def conv2d_nhwc(x, weight, bias, padding, relu=False):
    """3x3 conv (NHWC), bf16 output with f32 accumulation. weight is torch OIHW."""
    B, H, W, Cin = x.shape
    Cout, Cin_w, kh, kw = weight.shape
    assert Cin == Cin_w

    fused_ok = (kh == 3 and kw == 3 and padding == 1
                and Cin % 8 == 0 and Cout % 64 == 0)
    if fused_ok:
        th, H_pad = _pick_tile(H, max(1, 2048 // max(W, 1)), 1)
        Hp, Wp = H_pad + 2, W + 2
        fused_ok = _fused_conv_vmem_estimate(Hp, Wp, Cin, th, W, Cout) <= 40 * 1024 * 1024

    if fused_ok:
        xp = jnp.pad(x.astype(jnp.bfloat16),
                     ((0, 0), (1, 1 + (H_pad - H)), (1, 1), (0, 0)))
        wmat = weight.transpose(2, 3, 1, 0).reshape(9 * Cin, Cout).astype(jnp.bfloat16)
        bias2 = bias.astype(jnp.float32).reshape(1, Cout)
        out = pl.pallas_call(
            functools.partial(_conv3x3_kernel, th=th, W=W, relu=relu),
            out_shape=jax.ShapeDtypeStruct((B, H_pad, W, Cout), jnp.bfloat16),
            grid=(B, H_pad // th),
            in_specs=[
                pl.BlockSpec((1, Hp, Wp, Cin), lambda b, r: (b, 0, 0, 0)),
                pl.BlockSpec((9 * Cin, Cout), lambda b, r: (0, 0)),
                pl.BlockSpec((1, Cout), lambda b, r: (0, 0)),
            ],
            out_specs=pl.BlockSpec((1, th, W, Cout), lambda b, r: (b, r, 0, 0)),
            compiler_params=pltpu.CompilerParams(
                dimension_semantics=("parallel", "arbitrary"),
                vmem_limit_bytes=_VMEM_LIMIT),
        )(xp, wmat, bias2)
        return out[:, :H]

    # Fallback (Cin=3 first layer / oversized images): im2col + tiled matmul.
    patches, (oh, ow) = im2col_nhwc(x.astype(jnp.bfloat16), kh, kw, padding, 1)
    K = kh * kw * Cin
    a = patches.reshape(B * oh * ow, K)
    wmat = weight.transpose(2, 3, 1, 0).reshape(K, Cout)      # K order = (ky, kx, cin)
    out = matmul_bias(a, wmat, bias, relu=relu)               # (B*L, Cout) bf16
    return out.reshape(B, oh, ow, Cout)


# ------------------- L2-normalize + streaming correlation --------------------

def _l2norm_kernel(x_ref, o_ref, *, f_pad, transpose_out):
    # x: (1, tp, F) bf16 -> normalized bf16 (F.normalize, eps=1e-12), padded to
    # f_pad lanes in-kernel; optionally written transposed as (f_pad, tp).
    x = x_ref[0].astype(jnp.float32)
    ss = jnp.sum(x * x, axis=1, keepdims=True)
    inv = lax.rsqrt(jnp.maximum(ss, 1e-24))                   # == 1/max(||x||,1e-12)
    y = (x * inv).astype(o_ref.dtype)
    pad = f_pad - y.shape[1]
    if pad:
        y = jnp.concatenate([y, jnp.zeros((y.shape[0], pad), y.dtype)], axis=1)
    if transpose_out:
        y = y.T
    o_ref[0] = y


def l2_normalize_patches(p, tile, f_pad, transpose_out):
    """Normalize (B, P, F) along F. Returns bf16 (B, P_pad, f_pad) or (B, f_pad, P_pad)."""
    B, P, F = p.shape
    P_pad = _round_up(P, tile)
    p = jnp.pad(p.astype(jnp.bfloat16), ((0, 0), (0, P_pad - P), (0, 0)))
    if transpose_out:
        out_shape, out_block = (B, f_pad, P_pad), (1, f_pad, tile)
        out_idx = lambda b, i: (b, 0, i)
    else:
        out_shape, out_block = (B, P_pad, f_pad), (1, tile, f_pad)
        out_idx = lambda b, i: (b, i, 0)
    return pl.pallas_call(
        functools.partial(_l2norm_kernel, f_pad=f_pad, transpose_out=transpose_out),
        out_shape=jax.ShapeDtypeStruct(out_shape, jnp.bfloat16),
        grid=(B, P_pad // tile),
        in_specs=[pl.BlockSpec((1, tile, F), lambda b, i: (b, i, 0))],
        out_specs=pl.BlockSpec(out_block, out_idx),
        compiler_params=pltpu.CompilerParams(
            dimension_semantics=("parallel", "parallel"),
            vmem_limit_bytes=_VMEM_LIMIT),
    )(p)


def _corr_argmax_kernel(a_ref, bT_ref, arg_ref, max_sc, arg_sc, *,
                        tpr, p_ref_real, need_mask):
    # a: (1, tpr, F_pad) normalized ref patches (B=1, bf16);
    # bT: (1, F_pad, tpl) normalized+transposed lr patches (bf16).
    pr = pl.program_id(2)
    last = pl.num_programs(2) - 1

    @pl.when(pr == 0)
    def _():
        max_sc[...] = jnp.full(max_sc.shape, -jnp.inf, dtype=max_sc.dtype)
        arg_sc[...] = jnp.zeros(arg_sc.shape, dtype=arg_sc.dtype)

    scores = jnp.dot(a_ref[0], bT_ref[0],
                     preferred_element_type=jnp.float32)       # (tpr, tpl), plain MXU
    row_ids = lax.broadcasted_iota(jnp.int32, scores.shape, 0) + pr * tpr

    def update(s):
        tile_max = jnp.max(s, axis=0, keepdims=True)            # (1, tpl)
        tile_arg = jnp.min(jnp.where(s == tile_max, row_ids, jnp.int32(2 ** 30)),
                           axis=0, keepdims=True)                # first-max in tile
        better = tile_max > max_sc[...]                          # keep earliest on ties
        arg_sc[...] = jnp.where(better, tile_arg, arg_sc[...])
        max_sc[...] = jnp.where(better, tile_max, max_sc[...])

    if need_mask:
        # Only the last ref tile contains padded rows -> mask only there.
        @pl.when(pr == last)
        def _():
            update(jnp.where(row_ids < p_ref_real, scores, -jnp.inf))

        @pl.when(pr != last)
        def _():
            update(scores)
    else:
        update(scores)

    @pl.when(pr == last)
    def _():
        arg_ref[0] = arg_sc[...]


def corr_argmax(ref_n, lr_nT, tpr, tpl, p_ref_real):
    """ref_n (1, Pr_pad, F_pad) bf16, lr_nT (B, F_pad, Pl_pad) bf16 -> argmax rows."""
    _, Pr_pad, F_pad = ref_n.shape
    B, F_pad2, Pl_pad = lr_nT.shape
    assert F_pad == F_pad2
    out = pl.pallas_call(
        functools.partial(_corr_argmax_kernel, tpr=tpr, p_ref_real=p_ref_real,
                          need_mask=(Pr_pad != p_ref_real)),
        out_shape=jax.ShapeDtypeStruct((B, 1, Pl_pad), jnp.int32),
        grid=(B, Pl_pad // tpl, Pr_pad // tpr),
        in_specs=[
            pl.BlockSpec((1, tpr, F_pad), lambda b, j, k: (0, k, 0)),   # B=1 ref reuse
            pl.BlockSpec((1, F_pad, tpl), lambda b, j, k: (b, 0, j)),
        ],
        out_specs=pl.BlockSpec((1, 1, tpl), lambda b, j, k: (b, 0, j)),
        scratch_shapes=[pltpu.VMEM((1, tpl), jnp.float32),
                        pltpu.VMEM((1, tpl), jnp.int32)],
        compiler_params=pltpu.CompilerParams(
            dimension_semantics=("parallel", "parallel", "arbitrary"),
            vmem_limit_bytes=_VMEM_LIMIT),
    )(ref_n, lr_nT)
    return out[:, 0, :]


# ------------------------------- JAX glue -------------------------------------

def im2col_nhwc(x, kh, kw, padding, stride):
    """(B,H,W,C) -> (B, oh*ow, kh*kw*C) patch slab; K order = (ky, kx, c)."""
    B, H, W, C = x.shape
    xp = jnp.pad(x, ((0, 0), (padding, padding), (padding, padding), (0, 0)))
    Hp, Wp = H + 2 * padding, W + 2 * padding
    oh = (Hp - kh) // stride + 1
    ow = (Wp - kw) // stride + 1
    cols = []
    for ky in range(kh):
        for kx in range(kw):
            cols.append(xp[:, ky:ky + stride * (oh - 1) + 1:stride,
                           kx:kx + stride * (ow - 1) + 1:stride, :])
    cols = jnp.stack(cols, axis=3)                   # (B, oh, ow, kh*kw, C)
    return cols.reshape(B, oh * ow, kh * kw * C), (oh, ow)


def fold_nhwc(t, output_size, kernel_size, padding, stride):
    """Inverse of im2col_nhwc; overlapping patches are summed (torch.fold)."""
    # TODO(synk): replace the 9 serialized XLA scatter-adds with one Pallas
    # overlap-add pass for large images (negligible at these test sizes).
    B, L, KC = t.shape
    kh, kw = kernel_size
    C = KC // (kh * kw)
    H, W = output_size
    Hp, Wp = H + 2 * padding, W + 2 * padding
    oh = (Hp - kh) // stride + 1
    ow = (Wp - kw) // stride + 1
    assert oh * ow == L
    t = t.astype(jnp.float32).reshape(B, oh, ow, kh * kw, C)
    out_p = jnp.zeros((B, Hp, Wp, C), jnp.float32)
    for ky in range(kh):
        for kx in range(kw):
            out_p = out_p.at[:, ky:ky + stride * (oh - 1) + 1:stride,
                             kx:kx + stride * (ow - 1) + 1:stride, :].add(
                                 t[:, :, :, ky * kw + kx, :])
    return out_p[:, padding:padding + H, padding:padding + W, :]


def maxpool2_nhwc(x):
    B, H, W, C = x.shape
    return x.reshape(B, H // 2, 2, W // 2, 2, C).max(axis=(2, 4))


# ------------------------------ LTE (VGG19 slices) ----------------------------

def fold_meanshift_into_conv1(w, b):
    """MeanShift (rgb_range=1): y[c] = x[c]/std[c] - mean[c]/std[c]; fold into conv1_1."""
    scale = 1.0 / VGG_STD
    shift = -VGG_MEAN / VGG_STD
    w_f = w * scale[None, :, None, None]
    b_f = b + jnp.sum(w * shift[None, :, None, None], axis=(1, 2, 3))
    return w_f, b_f


def init_lte_params(key):
    # TODO(synk): VGG19 pretrained weights replaced by deterministic random init.
    def conv_param(k, cout, cin, ks):
        kw_, kb_ = jax.random.split(k)
        w = jax.random.normal(kw_, (cout, cin, ks, ks), jnp.float32) * 0.05
        b = jax.random.normal(kb_, (cout,), jnp.float32) * 0.01
        return w, b

    keys = jax.random.split(key, 5)
    w1, b1 = conv_param(keys[0], 64, 3, 3)                   # vgg features[0]
    return {
        "conv1_1": fold_meanshift_into_conv1(w1, b1),        # MeanShift folded in
        "conv2_1": conv_param(keys[1], 64, 64, 3),           # vgg features[2]
        "conv2_2": conv_param(keys[2], 128, 64, 3),          # vgg features[5]
        "conv3_1": conv_param(keys[3], 128, 128, 3),         # vgg features[7]
        "conv3_2": conv_param(keys[4], 256, 128, 3),         # vgg features[10]
    }


def lte_forward(params, x_nhwc):
    w, b = params["conv1_1"]
    x = conv2d_nhwc(x_nhwc, w, b, 1, relu=True)
    x_lv1 = x
    w, b = params["conv2_1"]
    x = conv2d_nhwc(x, w, b, 1, relu=True)
    x = maxpool2_nhwc(x)
    w, b = params["conv2_2"]
    x = conv2d_nhwc(x, w, b, 1, relu=True)
    x_lv2 = x
    w, b = params["conv3_1"]
    x = conv2d_nhwc(x, w, b, 1, relu=True)
    x = maxpool2_nhwc(x)
    w, b = params["conv3_2"]
    x = conv2d_nhwc(x, w, b, 1, relu=True)
    x_lv3 = x
    return x_lv1, x_lv2, x_lv3


# ------------------------------- SearchTransfer -------------------------------

def search_transfer(lrsr_f, refsr_f, org, fold_params, lv):
    """lrsr_f: (B,H,W,C); refsr_f / org: (1,H,W,C). Returns (T_org NHWC f32, S)."""
    ks = fold_params["kernel_size"]
    pad = fold_params["padding"]
    st = fold_params["stride"]
    B = lrsr_f.shape[0]

    lr_p, _ = im2col_nhwc(lrsr_f.astype(jnp.bfloat16), ks[0], ks[1], pad, st)   # (B,P_lr,F)
    ref_p, _ = im2col_nhwc(refsr_f.astype(jnp.bfloat16), ks[0], ks[1], pad, st)  # (1,P_ref,F)
    P_lr, F = lr_p.shape[1], lr_p.shape[2]
    P_ref = ref_p.shape[1]
    F_pad = _round_up(F, 128)

    # correlation tiles (decoupled from normalize tiles, large for ref reuse)
    tpl, _ = _pick_tile(P_lr, 1024, 128)
    tpr, _ = _pick_tile(P_ref, 512, 16)

    # normalize once; LR side written transposed (F_pad, P) for a plain MXU matmul
    lr_nT = l2_normalize_patches(lr_p, tile=tpl, f_pad=F_pad, transpose_out=True)
    ref_n = l2_normalize_patches(ref_p, tile=tpr, f_pad=F_pad, transpose_out=False)

    S = corr_argmax(ref_n, lr_nT, tpr=tpr, tpl=tpl, p_ref_real=P_ref)[:, :P_lr]

    lv_ = max(lv - 1, 0)
    ks2 = (2 ** lv_ * ks[0], 2 ** lv_ * ks[1])
    pad2 = 2 ** lv_ * pad
    st2 = 2 ** lv_ * st

    org_p, _ = im2col_nhwc(org, ks2[0], ks2[1], pad2, st2)   # (1, P_ref, K2)
    K2 = org_p.shape[2]
    # gather rows of the (B=1) ref patch slab with the per-batch argmax indices
    T_p = jnp.take(org_p[0], S.reshape(-1), axis=0).reshape(B, P_lr, K2)

    H_out = lrsr_f.shape[1] * (2 ** lv_)
    W_out = lrsr_f.shape[2] * (2 ** lv_)
    T_org = fold_nhwc(T_p, (H_out, W_out), ks2, pad2, st2)
    return T_org, S


# ----------------------------------- TTSR -------------------------------------

def ttsr_forward(params, lrsr, ref, refsr,
                 fold_params=None, divisor=None, n=1, lv=1, skip=1,
                 return_img=False):
    if fold_params is None:
        fold_params = {"kernel_size": (3, 3), "padding": 1, "stride": 1}
    # ref/refsr are identical per batch element in the reference model (repeat);
    # keep them at B=1 and dedup all ref-side compute. Model boundary: NCHW->NHWC.
    lrsr_h = jnp.transpose(lrsr, (0, 2, 3, 1))
    ref_h = jnp.transpose(ref, (0, 2, 3, 1))
    refsr_h = jnp.transpose(refsr, (0, 2, 3, 1))

    refsr_lv1, refsr_lv2, refsr_lv3 = lte_forward(params, (refsr_h + 1.0) / 2.0)
    ref_lv1, _, _ = lte_forward(params, (ref_h + 1.0) / 2.0)

    if lv == 0:
        refsr_f = (refsr_h + 1.0) / 2.0
    elif lv == 1:
        refsr_f = refsr_lv1[..., ::skip]
    elif lv == 2:
        refsr_f = refsr_lv2[..., ::skip]
    else:
        refsr_f = refsr_lv3[..., ::skip]

    T_org_h = lrsr_h
    S = None
    for _ in range(n):
        lrsr_lv1, lrsr_lv2, lrsr_lv3 = lte_forward(params, (T_org_h + 1.0) / 2.0)
        if lv == 0:
            lrsr_f = (T_org_h + 1.0) / 2.0
        elif lv == 1:
            lrsr_f = lrsr_lv1[..., ::skip]
        elif lv == 2:
            lrsr_f = lrsr_lv2[..., ::skip]
        else:
            lrsr_f = lrsr_lv3[..., ::skip]
        ref_f = (ref_h + 1.0) / 2.0 if return_img else ref_lv1     # (1, H, W, C)
        T_org_h, S = search_transfer(lrsr_f, refsr_f, ref_f, fold_params, lv=lv)
        if divisor is not None:
            # divisor must be broadcastable against the NHWC tensor here
            T_org_h = T_org_h * jnp.broadcast_to(divisor, T_org_h.shape)
            T_org_h = (T_org_h - 0.5) * 2.0
    T_org = jnp.transpose(T_org_h, (0, 3, 1, 2))             # back to NCHW
    return T_org, S


# ----------------------------------- main --------------------------------------

if __name__ == "__main__":
    key = jax.random.PRNGKey(0)
    k1, k2, k3, kp = jax.random.split(key, 4)
    # small shapes consistent with the module (batch=2, 3-channel RGB, 16x16)
    lrsr = jax.random.uniform(k1, (2, 3, 16, 16), jnp.float32, -1.0, 1.0)
    ref = jax.random.uniform(k2, (1, 3, 16, 16), jnp.float32, -1.0, 1.0)
    refsr = jax.random.uniform(k3, (1, 3, 16, 16), jnp.float32, -1.0, 1.0)

    params = init_lte_params(kp)

    fwd = jax.jit(lambda p, a, b, c: ttsr_forward(p, a, b, c, n=1, lv=1, skip=1))
    T_org, S = fwd(params, lrsr, ref, refsr)
    jax.block_until_ready((T_org, S))

    assert T_org.shape == (2, 64, 16, 16), T_org.shape
    assert S.shape == (2, 256), S.shape
    assert bool(jnp.all(S >= 0)) and bool(jnp.all(S < 256))
    print("KERNEL_OK")
</pallas_src>

<mosaic_0001>
module attributes {stable_mosaic.version = 11 : i64} {
  func.func @_mm_bias_kernel_single(%arg0: i32, %arg1: i32, %arg2: i32, %arg3: memref<512x128xbf16, #tpu.memory_space<vmem>>, %arg4: memref<128x128xbf16, #tpu.memory_space<vmem>>, %arg5: memref<1x128xf32, #tpu.memory_space<vmem>>, %arg6: memref<512x128xbf16, #tpu.memory_space<vmem>>) attributes {dimension_semantics = [#tpu.dimension_semantics<parallel>, #tpu.dimension_semantics<parallel>, #tpu.dimension_semantics<arbitrary>], iteration_bounds = array<i64: 1, 1, 1>, scalar_prefetch = 0 : i64, scratch_operands = 0 : i64, tpu.core_type = #tpu.core_type<tc>, window_params = [{transform_indices = @transform_0, window_bounds = array<i64: 512, 128>}, {transform_indices = @transform_1, window_bounds = array<i64: 128, 128>}, {transform_indices = @transform_2, window_bounds = array<i64: 1, 128>}, {transform_indices = @transform_3, window_bounds = array<i64: 512, 128>}]} {
    %c0 = arith.constant 0 : index
    %c0_0 = arith.constant 0 : index
    %0 = vector.load %arg3[%c0, %c0_0] : memref<512x128xbf16, #tpu.memory_space<vmem>>, vector<512x128xbf16>
    %c0_1 = arith.constant 0 : index
    %c0_2 = arith.constant 0 : index
    %1 = vector.load %arg4[%c0_1, %c0_2] : memref<128x128xbf16, #tpu.memory_space<vmem>>, vector<128x128xbf16>
    %cst = arith.constant dense<0.000000e+00> : vector<512x128xf32>
    %2 = tpu.matmul %0, %1, %cst {dimension_numbers = #tpu.dot_dimension_numbers<[1], [0], [0], [1], [0, 0, 1, 1], [], []>} : vector<512x128xbf16>, vector<128x128xbf16>, vector<512x128xf32> -> vector<512x128xf32>
    %c0_3 = arith.constant 0 : index
    %c0_4 = arith.constant 0 : index
    %3 = vector.load %arg5[%c0_3, %c0_4] : memref<1x128xf32, #tpu.memory_space<vmem>>, vector<1x128xf32>
    %4 = vector.broadcast %3 : vector<1x128xf32> to vector<512x128xf32>
    %5 = arith.addf %2, %4 : vector<512x128xf32>
    %cst_5 = arith.constant 0.000000e+00 : f32
    %6 = vector.broadcast %cst_5 : f32 to vector<512x128xf32>
    %7 = arith.maximumf %5, %6 : vector<512x128xf32>
    %8 = arith.truncf %7 : vector<512x128xf32> to vector<512x128xbf16>
    %c0_6 = arith.constant 0 : index
    %c0_7 = arith.constant 0 : index
    %9 = vector.load %arg6[%c0_6, %c0_7] : memref<512x128xbf16, #tpu.memory_space<vmem>>, vector<512x128xbf16>
    tpu.vector_store %arg6[%c0_6, %c0_7], %8 {strides = array<i32>} : memref<512x128xbf16, #tpu.memory_space<vmem>>, vector<512x128xbf16>,
    return
  }
  func.func @transform_0(%arg0: i32, %arg1: i32, %arg2: i32) -> (i32, i32) {
    %c0_i32 = arith.constant 0 : i32
    return %arg0, %arg2 : i32, i32
  }
  func.func @transform_1(%arg0: i32, %arg1: i32, %arg2: i32) -> (i32, i32) {
    %c0_i32 = arith.constant 0 : i32
    return %arg2, %arg1 : i32, i32
  }
  func.func @transform_2(%arg0: i32, %arg1: i32, %arg2: i32) -> (i32, i32) {
    %c0_i32 = arith.constant 0 : i32
    %c0_i32_0 = arith.constant 0 : i32
    return %c0_i32, %arg1 : i32, i32
  }
  func.func @transform_3(%arg0: i32, %arg1: i32, %arg2: i32) -> (i32, i32) {
    %c0_i32 = arith.constant 0 : i32
    return %arg0, %arg1 : i32, i32
  }
}

module attributes {stable_mosaic.version = 11 : i64} {
  func.func @_l2norm_kernel(%arg0: i32, %arg1: i32, %arg2: memref<1x256x576xbf16, #tpu.memory_space<vmem>>, %arg3: memref<1x640x256xbf16, #tpu.memory_space<vmem>>) attributes {dimension_semantics = [#tpu.dimension_semantics<parallel>, #tpu.dimension_semantics<parallel>], iteration_bounds = array<i64: 2, 1>, scalar_prefetch = 0 : i64, scratch_operands = 0 : i64, tpu.core_type = #tpu.core_type<tc>, window_params = [{transform_indices = @transform_0, window_bounds = array<i64: 1, 256, 576>}, {transform_indices = @transform_1, window_bounds = array<i64: 1, 640, 256>}]} {
    %c0 = arith.constant 0 : index
    %c0_0 = arith.constant 0 : index
    %c0_1 = arith.constant 0 : index
    %0 = vector.load %arg2[%c0, %c0_0, %c0_1] : memref<1x256x576xbf16, #tpu.memory_space<vmem>>, vector<1x256x576xbf16>
    %1 = vector.shape_cast %0 : vector<1x256x576xbf16> to vector<256x576xbf16>
    %2 = arith.extf %1 : vector<256x576xbf16> to vector<256x576xf32>
    %3 = arith.mulf %2, %2 : vector<256x576xf32>
    %cst = arith.constant dense<0.000000e+00> : vector<256xf32>
    %4 = vector.multi_reduction <add>, %3, %cst [1] : vector<256x576xf32> to vector<256xf32>
    %5 = vector.shape_cast %4 : vector<256xf32> to vector<256x1xf32>
    %cst_2 = arith.constant 1.000000e-24 : f32
    %6 = vector.broadcast %cst_2 : f32 to vector<256x1xf32>
    %7 = arith.maximumf %5, %6 : vector<256x1xf32>
    %8 = math.rsqrt %7 : vector<256x1xf32>
    %9 = vector.broadcast %8 : vector<256x1xf32> to vector<256x576xf32>
    %10 = arith.mulf %2, %9 : vector<256x576xf32>
    %11 = arith.truncf %10 : vector<256x576xf32> to vector<256x576xbf16>
    %cst_3 = arith.constant 0.000000e+00 : bf16
    %12 = vector.broadcast %cst_3 : bf16 to vector<256x64xbf16>
    %13 = tpu.concatenate %11, %12 in 1 : vector<256x576xbf16>, vector<256x64xbf16> -> vector<256x640xbf16>
    %14 = tpu.transpose %13, [1, 0] : vector<256x640xbf16> -> vector<640x256xbf16>
    %c0_4 = arith.constant 0 : index
    %c0_5 = arith.constant 0 : index
    %c0_6 = arith.constant 0 : index
    %15 = vector.load %arg3[%c0_4, %c0_5, %c0_6] : memref<1x640x256xbf16, #tpu.memory_space<vmem>>, vector<1x640x256xbf16>
    %16 = vector.shape_cast %15 : vector<1x640x256xbf16> to vector<640x256xbf16>
    %17 = vector.shape_cast %14 : vector<640x256xbf16> to vector<1x640x256xbf16>
    tpu.vector_store %arg3[%c0_4, %c0_5, %c0_6], %17 {strides = array<i32>} : memref<1x640x256xbf16, #tpu.memory_space<vmem>>, vector<1x640x256xbf16>,
    return
  }
  func.func @transform_0(%arg0: i32, %arg1: i32) -> (i32, i32, i32) {
    %c0_i32 = arith.constant 0 : i32
    %c0_i32_0 = arith.constant 0 : i32
    return %arg0, %arg1, %c0_i32 : i32, i32, i32
  }
  func.func @transform_1(%arg0: i32, %arg1: i32) -> (i32, i32, i32) {
    %c0_i32 = arith.constant 0 : i32
    %c0_i32_0 = arith.constant 0 : i32
    return %arg0, %c0_i32, %arg1 : i32, i32, i32
  }
}

module attributes {stable_mosaic.version = 11 : i64} {
  func.func @_mm_bias_kernel_single(%arg0: i32, %arg1: i32, %arg2: i32, %arg3: memref<256x128xbf16, #tpu.memory_space<vmem>>, %arg4: memref<128x128xbf16, #tpu.memory_space<vmem>>, %arg5: memref<1x128xf32, #tpu.memory_space<vmem>>, %arg6: memref<256x128xbf16, #tpu.memory_space<vmem>>) attributes {dimension_semantics = [#tpu.dimension_semantics<parallel>, #tpu.dimension_semantics<parallel>, #tpu.dimension_semantics<arbitrary>], iteration_bounds = array<i64: 1, 1, 1>, scalar_prefetch = 0 : i64, scratch_operands = 0 : i64, tpu.core_type = #tpu.core_type<tc>, window_params = [{transform_indices = @transform_0, window_bounds = array<i64: 256, 128>}, {transform_indices = @transform_1, window_bounds = array<i64: 128, 128>}, {transform_indices = @transform_2, window_bounds = array<i64: 1, 128>}, {transform_indices = @transform_3, window_bounds = array<i64: 256, 128>}]} {
    %c0 = arith.constant 0 : index
    %c0_0 = arith.constant 0 : index
    %0 = vector.load %arg3[%c0, %c0_0] : memref<256x128xbf16, #tpu.memory_space<vmem>>, vector<256x128xbf16>
    %c0_1 = arith.constant 0 : index
    %c0_2 = arith.constant 0 : index
    %1 = vector.load %arg4[%c0_1, %c0_2] : memref<128x128xbf16, #tpu.memory_space<vmem>>, vector<128x128xbf16>
    %cst = arith.constant dense<0.000000e+00> : vector<256x128xf32>
    %2 = tpu.matmul %0, %1, %cst {dimension_numbers = #tpu.dot_dimension_numbers<[1], [0], [0], [1], [0, 0, 1, 1], [], []>} : vector<256x128xbf16>, vector<128x128xbf16>, vector<256x128xf32> -> vector<256x128xf32>
    %c0_3 = arith.constant 0 : index
    %c0_4 = arith.constant 0 : index
    %3 = vector.load %arg5[%c0_3, %c0_4] : memref<1x128xf32, #tpu.memory_space<vmem>>, vector<1x128xf32>
    %4 = vector.broadcast %3 : vector<1x128xf32> to vector<256x128xf32>
    %5 = arith.addf %2, %4 : vector<256x128xf32>
    %cst_5 = arith.constant 0.000000e+00 : f32
    %6 = vector.broadcast %cst_5 : f32 to vector<256x128xf32>
    %7 = arith.maximumf %5, %6 : vector<256x128xf32>
    %8 = arith.truncf %7 : vector<256x128xf32> to vector<256x128xbf16>
    %c0_6 = arith.constant 0 : index
    %c0_7 = arith.constant 0 : index
    %9 = vector.load %arg6[%c0_6, %c0_7] : memref<256x128xbf16, #tpu.memory_space<vmem>>, vector<256x128xbf16>
    tpu.vector_store %arg6[%c0_6, %c0_7], %8 {strides = array<i32>} : memref<256x128xbf16, #tpu.memory_space<vmem>>, vector<256x128xbf16>,
    return
  }
  func.func @transform_0(%arg0: i32, %arg1: i32, %arg2: i32) -> (i32, i32) {
    %c0_i32 = arith.constant 0 : i32
    return %arg0, %arg2 : i32, i32
  }
  func.func @transform_1(%arg0: i32, %arg1: i32, %arg2: i32) -> (i32, i32) {
    %c0_i32 = arith.constant 0 : i32
    return %arg2, %arg1 : i32, i32
  }
  func.func @transform_2(%arg0: i32, %arg1: i32, %arg2: i32) -> (i32, i32) {
    %c0_i32 = arith.constant 0 : i32
    %c0_i32_0 = arith.constant 0 : i32
    return %c0_i32, %arg1 : i32, i32
  }
  func.func @transform_3(%arg0: i32, %arg1: i32, %arg2: i32) -> (i32, i32) {
    %c0_i32 = arith.constant 0 : i32
    return %arg0, %arg1 : i32, i32
  }
}

module attributes {stable_mosaic.version = 11 : i64} {
  func.func @_l2norm_kernel(%arg0: i32, %arg1: i32, %arg2: memref<1x256x576xbf16, #tpu.memory_space<vmem>>, %arg3: memref<1x256x640xbf16, #tpu.memory_space<vmem>>) attributes {dimension_semantics = [#tpu.dimension_semantics<parallel>, #tpu.dimension_semantics<parallel>], iteration_bounds = array<i64: 1, 1>, scalar_prefetch = 0 : i64, scratch_operands = 0 : i64, tpu.core_type = #tpu.core_type<tc>, window_params = [{transform_indices = @transform_0, window_bounds = array<i64: 1, 256, 576>}, {transform_indices = @transform_1, window_bounds = array<i64: 1, 256, 640>}]} {
    %c0 = arith.constant 0 : index
    %c0_0 = arith.constant 0 : index
    %c0_1 = arith.constant 0 : index
    %0 = vector.load %arg2[%c0, %c0_0, %c0_1] : memref<1x256x576xbf16, #tpu.memory_space<vmem>>, vector<1x256x576xbf16>
    %1 = vector.shape_cast %0 : vector<1x256x576xbf16> to vector<256x576xbf16>
    %2 = arith.extf %1 : vector<256x576xbf16> to vector<256x576xf32>
    %3 = arith.mulf %2, %2 : vector<256x576xf32>
    %cst = arith.constant dense<0.000000e+00> : vector<256xf32>
    %4 = vector.multi_reduction <add>, %3, %cst [1] : vector<256x576xf32> to vector<256xf32>
    %5 = vector.shape_cast %4 : vector<256xf32> to vector<256x1xf32>
    %cst_2 = arith.constant 1.000000e-24 : f32
    %6 = vector.broadcast %cst_2 : f32 to vector<256x1xf32>
    %7 = arith.maximumf %5, %6 : vector<256x1xf32>
    %8 = math.rsqrt %7 : vector<256x1xf32>
    %9 = vector.broadcast %8 : vector<256x1xf32> to vector<256x576xf32>
    %10 = arith.mulf %2, %9 : vector<256x576xf32>
    %11 = arith.truncf %10 : vector<256x576xf32> to vector<256x576xbf16>
    %cst_3 = arith.constant 0.000000e+00 : bf16
    %12 = vector.broadcast %cst_3 : bf16 to vector<256x64xbf16>
    %13 = tpu.concatenate %11, %12 in 1 : vector<256x576xbf16>, vector<256x64xbf16> -> vector<256x640xbf16>
    %c0_4 = arith.constant 0 : index
    %c0_5 = arith.constant 0 : index
    %c0_6 = arith.constant 0 : index
    %14 = vector.load %arg3[%c0_4, %c0_5, %c0_6] : memref<1x256x640xbf16, #tpu.memory_space<vmem>>, vector<1x256x640xbf16>
    %15 = vector.shape_cast %14 : vector<1x256x640xbf16> to vector<256x640xbf16>
    %16 = vector.shape_cast %13 : vector<256x640xbf16> to vector<1x256x640xbf16>
    tpu.vector_store %arg3[%c0_4, %c0_5, %c0_6], %16 {strides = array<i32>} : memref<1x256x640xbf16, #tpu.memory_space<vmem>>, vector<1x256x640xbf16>,
    return
  }
  func.func @transform_0(%arg0: i32, %arg1: i32) -> (i32, i32, i32) {
    %c0_i32 = arith.constant 0 : i32
    %c0_i32_0 = arith.constant 0 : i32
    return %arg0, %arg1, %c0_i32 : i32, i32, i32
  }
  func.func @transform_1(%arg0: i32, %arg1: i32) -> (i32, i32, i32) {
    %c0_i32 = arith.constant 0 : i32
    %c0_i32_0 = arith.constant 0 : i32
    return %arg0, %arg1, %c0_i32 : i32, i32, i32
  }
}

module attributes {stable_mosaic.version = 11 : i64} {
  func.func @_corr_argmax_kernel(%arg0: i32, %arg1: i32, %arg2: i32, %arg3: memref<1x256x640xbf16, #tpu.memory_space<vmem>>, %arg4: memref<1x640x256xbf16, #tpu.memory_space<vmem>>, %arg5: memref<1x1x256xi32, #tpu.memory_space<vmem>>, %arg6: memref<1x256xf32, #tpu.memory_space<vmem>>, %arg7: memref<1x256xi32, #tpu.memory_space<vmem>>) attributes {dimension_semantics = [#tpu.dimension_semantics<parallel>, #tpu.dimension_semantics<parallel>, #tpu.dimension_semantics<arbitrary>], iteration_bounds = array<i64: 2, 1, 1>, scalar_prefetch = 0 : i64, scratch_operands = 2 : i64, tpu.core_type = #tpu.core_type<tc>, window_params = [{transform_indices = @transform_0, window_bounds = array<i64: 1, 256, 640>}, {transform_indices = @transform_1, window_bounds = array<i64: 1, 640, 256>}, {transform_indices = @transform_2, window_bounds = array<i64: 1, 1, 256>}]} {
    %c0_i32 = arith.constant 0 : i32
    %0 = arith.cmpi eq, %arg2, %c0_i32 : i32
    %1 = arith.extui %0 : i1 to i32
    %c0_i32_0 = arith.constant 0 : i32
    %2 = arith.cmpi ne, %1, %c0_i32_0 : i32
    scf.if %2 {
      %cst_20 = arith.constant 0xFF800000 : f32
      %31 = vector.broadcast %cst_20 : f32 to vector<1x256xf32>
      %c0_21 = arith.constant 0 : index
      %c0_22 = arith.constant 0 : index
      %32 = vector.load %arg6[%c0_21, %c0_22] : memref<1x256xf32, #tpu.memory_space<vmem>>, vector<1x256xf32>
      tpu.vector_store %arg6[%c0_21, %c0_22], %31 {strides = array<i32>} : memref<1x256xf32, #tpu.memory_space<vmem>>, vector<1x256xf32>,
      %c0_i32_23 = arith.constant 0 : i32
      %33 = vector.broadcast %c0_i32_23 : i32 to vector<1x256xi32>
      %c0_24 = arith.constant 0 : index
      %c0_25 = arith.constant 0 : index
      %34 = vector.load %arg7[%c0_24, %c0_25] : memref<1x256xi32, #tpu.memory_space<vmem>>, vector<1x256xi32>
      tpu.vector_store %arg7[%c0_24, %c0_25], %33 {strides = array<i32>} : memref<1x256xi32, #tpu.memory_space<vmem>>, vector<1x256xi32>,
    } else {
    }
    %c0 = arith.constant 0 : index
    %c0_1 = arith.constant 0 : index
    %c0_2 = arith.constant 0 : index
    %3 = vector.load %arg3[%c0, %c0_1, %c0_2] : memref<1x256x640xbf16, #tpu.memory_space<vmem>>, vector<1x256x640xbf16>
    %4 = vector.shape_cast %3 : vector<1x256x640xbf16> to vector<256x640xbf16>
    %c0_3 = arith.constant 0 : index
    %c0_4 = arith.constant 0 : index
    %c0_5 = arith.constant 0 : index
    %5 = vector.load %arg4[%c0_3, %c0_4, %c0_5] : memref<1x640x256xbf16, #tpu.memory_space<vmem>>, vector<1x640x256xbf16>
    %6 = vector.shape_cast %5 : vector<1x640x256xbf16> to vector<640x256xbf16>
    %cst = arith.constant dense<0.000000e+00> : vector<256x256xf32>
    %7 = tpu.matmul %4, %6, %cst {dimension_numbers = #tpu.dot_dimension_numbers<[1], [0], [0], [1], [0, 0, 1, 1], [], []>} : vector<256x640xbf16>, vector<640x256xbf16>, vector<256x256xf32> -> vector<256x256xf32>
    %8 = tpu.iota {dimensions = array<i32: 0>} : vector<256x256xi32>
    %c256_i32 = arith.constant 256 : i32
    %9 = arith.muli %arg2, %c256_i32 : i32
    %10 = vector.broadcast %9 : i32 to vector<256x256xi32>
    %11 = arith.addi %8, %10 : vector<256x256xi32>
    %cst_6 = arith.constant dense<0xFF800000> : vector<256xf32>
    %12 = vector.multi_reduction <maximumf>, %7, %cst_6 [0] : vector<256x256xf32> to vector<256xf32>
    %13 = vector.shape_cast %12 : vector<256xf32> to vector<1x256xf32>
    %14 = vector.broadcast %13 : vector<1x256xf32> to vector<256x256xf32>
    %15 = arith.cmpf oeq, %7, %14 : vector<256x256xf32>
    %c1073741824_i32 = arith.constant 1073741824 : i32
    %16 = vector.broadcast %c1073741824_i32 : i32 to vector<256x256xi32>
    %17 = arith.select %15, %11, %16 : vector<256x256xi1>, vector<256x256xi32>
    %cst_7 = arith.constant dense<2147483647> : vector<256xi32>
    %18 = vector.multi_reduction <minsi>, %17, %cst_7 [0] : vector<256x256xi32> to vector<256xi32>
    %19 = vector.shape_cast %18 : vector<256xi32> to vector<1x256xi32>
    %c0_8 = arith.constant 0 : index
    %c0_9 = arith.constant 0 : index
    %20 = vector.load %arg6[%c0_8, %c0_9] : memref<1x256xf32, #tpu.memory_space<vmem>>, vector<1x256xf32>
    %21 = arith.cmpf ogt, %13, %20 : vector<1x256xf32>
    %c0_10 = arith.constant 0 : index
    %c0_11 = arith.constant 0 : index
    %22 = vector.load %arg7[%c0_10, %c0_11] : memref<1x256xi32, #tpu.memory_space<vmem>>, vector<1x256xi32>
    %23 = arith.select %21, %19, %22 : vector<1x256xi1>, vector<1x256xi32>
    %c0_12 = arith.constant 0 : index
    %c0_13 = arith.constant 0 : index
    %24 = vector.load %arg7[%c0_12, %c0_13] : memref<1x256xi32, #tpu.memory_space<vmem>>, vector<1x256xi32>
    tpu.vector_store %arg7[%c0_12, %c0_13], %23 {strides = array<i32>} : memref<1x256xi32, #tpu.memory_space<vmem>>, vector<1x256xi32>,
    %c0_14 = arith.constant 0 : index
    %c0_15 = arith.constant 0 : index
    %25 = vector.load %arg6[%c0_14, %c0_15] : memref<1x256xf32, #tpu.memory_space<vmem>>, vector<1x256xf32>
    %26 = arith.select %21, %13, %25 : vector<1x256xi1>, vector<1x256xf32>
    %c0_16 = arith.constant 0 : index
    %c0_17 = arith.constant 0 : index
    %27 = vector.load %arg6[%c0_16, %c0_17] : memref<1x256xf32, #tpu.memory_space<vmem>>, vector<1x256xf32>
    tpu.vector_store %arg6[%c0_16, %c0_17], %26 {strides = array<i32>} : memref<1x256xf32, #tpu.memory_space<vmem>>, vector<1x256xf32>,
    %c0_i32_18 = arith.constant 0 : i32
    %28 = arith.cmpi eq, %arg2, %c0_i32_18 : i32
    %29 = arith.extui %28 : i1 to i32
    %c0_i32_19 = arith.constant 0 : i32
    %30 = arith.cmpi ne, %29, %c0_i32_19 : i32
    scf.if %30 {
      %c0_20 = arith.constant 0 : index
      %c0_21 = arith.constant 0 : index
      %31 = vector.load %arg7[%c0_20, %c0_21] : memref<1x256xi32, #tpu.memory_space<vmem>>, vector<1x256xi32>
      %c0_22 = arith.constant 0 : index
      %c0_23 = arith.constant 0 : index
      %c0_24 = arith.constant 0 : index
      %32 = vector.load %arg5[%c0_22, %c0_23, %c0_24] : memref<1x1x256xi32, #tpu.memory_space<vmem>>, vector<1x1x256xi32>
      %33 = vector.shape_cast %32 : vector<1x1x256xi32> to vector<1x256xi32>
      %34 = vector.shape_cast %31 : vector<1x256xi32> to vector<1x1x256xi32>
      tpu.vector_store %arg5[%c0_22, %c0_23, %c0_24], %34 {strides = array<i32>} : memref<1x1x256xi32, #tpu.memory_space<vmem>>, vector<1x1x256xi32>,
    } else {
    }
    return
  }
  func.func @transform_0(%arg0: i32, %arg1: i32, %arg2: i32) -> (i32, i32, i32) {
    %c0_i32 = arith.constant 0 : i32
    %c0_i32_0 = arith.constant 0 : i32
    %c0_i32_1 = arith.constant 0 : i32
    return %c0_i32, %arg2, %c0_i32_0 : i32, i32, i32
  }
  func.func @transform_1(%arg0: i32, %arg1: i32, %arg2: i32) -> (i32, i32, i32) {
    %c0_i32 = arith.constant 0 : i32
    %c0_i32_0 = arith.constant 0 : i32
    return %arg0, %c0_i32, %arg1 : i32, i32, i32
  }
  func.func @transform_2(%arg0: i32, %arg1: i32, %arg2: i32) -> (i32, i32, i32) {
    %c0_i32 = arith.constant 0 : i32
    %c0_i32_0 = arith.constant 0 : i32
    return %arg0, %c0_i32, %arg1 : i32, i32, i32
  }
}

</mosaic_0001>

<llo_original>
// kernel: _lambda_.8
$region0: #{_lambda_.8}
  #allocation0 [shape = 'u32[]', space=smem, size = 0x4, offset = 0x4, fixed_abs, tag = 'smem constant byte address 0x4 - core index']
  #allocation1 [shape = 'u32[144,128]{1,0:T(1,128)}', space=vmem, size = 0x12000, scoped, tag = 'internal scratch']
  %s0 = inlined_call_operand.vmem [shape: bf16[512,128], index: 0, kind: input, shape index: {}]
  %s1 = inlined_call_operand.vmem [shape: bf16[128,128], index: 1, kind: input, shape index: {}]
  %s2 = inlined_call_operand.vmem [shape: f32[1,128], index: 2, kind: input, shape index: {}]
  %s3 = inlined_call_operand.vmem [shape: bf16[512,128], index: 3, kind: output, shape index: {}]
  %s4 = sld [smem:[#allocation0]]
  $region22: #{_lambda_.8} parent=0
    _
  %s6 = ssub.s32 1, %s4
  %s7 = scalar_select 0, %s6, %s4
  // Predicated region
  $region2: #{_lambda_.8} parent=0 // pred_check
    _
  $region3: #{_lambda_.8} parent=0 // pred_check_branch
    %9 = sbr.rel (0) target = $region5
  $region4: #{_lambda_.8} parent=0 // pred_region
    _
  $region5: #{_lambda_.8} parent=0 // pred_fallthru
    _
  // Predicated region
  $region6: #{_lambda_.8} parent=0 // pred_check
    _
  $region7: #{_lambda_.8} parent=0 // pred_check_branch
    %11 = sbr.rel (0) target = $region9
  $region8: #{_lambda_.8} parent=0 // pred_region
    _
  $region9: #{_lambda_.8} parent=0 // pred_fallthru
    _
  // Predicated region
  $region10: #{_lambda_.8} parent=0 // pred_check
    _
  $region11: #{_lambda_.8} parent=0 // pred_check_branch
    %13 = sbr.rel (0) target = $region13
  $region12: #{_lambda_.8} parent=0 // pred_region
    _
  $region13: #{_lambda_.8} parent=0 // pred_fallthru
    _
  %v15 = vld [vmem:[%s0] sm:$0xf]
  %v16 = vld [vmem:[%s0 + $0x4] sm:$0xf]
  %v17 = vld [vmem:[%s0 + $0x8] sm:$0xf]
  %v18 = vld [vmem:[%s0 + $0xc] sm:$0xf]
  %v19 = vld [vmem:[%s0 + $0x10] sm:$0xf]
  %v20 = vld [vmem:[%s0 + $0x14] sm:$0xf]
  %v21 = vld [vmem:[%s0 + $0x18] sm:$0xf]
  %v22 = vld [vmem:[%s0 + $0x1c] sm:$0xf]
  %v23 = vld [vmem:[%s0 + $0x20] sm:$0xf]
  %v24 = vld [vmem:[%s0 + $0x24] sm:$0xf]
  %v25 = vld [vmem:[%s0 + $0x28] sm:$0xf]
  %v26 = vld [vmem:[%s0 + $0x2c] sm:$0xf]
  %v27 = vld [vmem:[%s0 + $0x30] sm:$0xf]
  %v28 = vld [vmem:[%s0 + $0x34] sm:$0xf]
  %v29 = vld [vmem:[%s0 + $0x38] sm:$0xf]
  %v30 = vld [vmem:[%s0 + $0x3c] sm:$0xf]
  %v31 = vld [vmem:[%s0 + $0x40] sm:$0xf]
  %v32 = vld [vmem:[%s0 + $0x44] sm:$0xf]
  %v33 = vld [vmem:[%s0 + $0x48] sm:$0xf]
  %v34 = vld [vmem:[%s0 + $0x4c] sm:$0xf]
  %v35 = vld [vmem:[%s0 + $0x50] sm:$0xf]
  %v36 = vld [vmem:[%s0 + $0x54] sm:$0xf]
  %v37 = vld [vmem:[%s0 + $0x58] sm:$0xf]
  %v38 = vld [vmem:[%s0 + $0x5c] sm:$0xf]
  %v39 = vld [vmem:[%s0 + $0x60] sm:$0xf]
  %v40 = vld [vmem:[%s0 + $0x64] sm:$0xf]
  %v41 = vld [vmem:[%s0 + $0x68] sm:$0xf]
  %v42 = vld [vmem:[%s0 + $0x6c] sm:$0xf]
  %v43 = vld [vmem:[%s0 + $0x70] sm:$0xf]
  %v44 = vld [vmem:[%s0 + $0x74] sm:$0xf]
  %v45 = vld [vmem:[%s0 + $0x78] sm:$0xf]
  %v46 = vld [vmem:[%s0 + $0x7c] sm:$0xf]
  %v47 = vld [vmem:[%s0 + $0x80] sm:$0xf]
  %v48 = vld [vmem:[%s0 + $0x84] sm:$0xf]
  %v49 = vld [vmem:[%s0 + $0x88] sm:$0xf]
  %v50 = vld [vmem:[%s0 + $0x8c] sm:$0xf]
  %v51 = vld [vmem:[%s0 + $0x90] sm:$0xf]
  %v52 = vld [vmem:[%s0 + $0x94] sm:$0xf]
  %v53 = vld [vmem:[%s0 + $0x98] sm:$0xf]
  %v54 = vld [vmem:[%s0 + $0x9c] sm:$0xf]
  %v55 = vld [vmem:[%s0 + $0xa0] sm:$0xf]
  %v56 = vld [vmem:[%s0 + $0xa4] sm:$0xf]
  %v57 = vld [vmem:[%s0 + $0xa8] sm:$0xf]
  %v58 = vld [vmem:[%s0 + $0xac] sm:$0xf]
  %v59 = vld [vmem:[%s0 + $0xb0] sm:$0xf]
  %v60 = vld [vmem:[%s0 + $0xb4] sm:$0xf]
  %v61 = vld [vmem:[%s0 + $0xb8] sm:$0xf]
  %v62 = vld [vmem:[%s0 + $0xbc] sm:$0xf]
  %v63 = vld [vmem:[%s0 + $0xc0] sm:$0xf]
  %v64 = vld [vmem:[%s0 + $0xc4] sm:$0xf]
  %v65 = vld [vmem:[%s0 + $0xc8] sm:$0xf]
  %v66 = vld [vmem:[%s0 + $0xcc] sm:$0xf]
  %v67 = vld [vmem:[%s0 + $0xd0] sm:$0xf]
  %v68 = vld [vmem:[%s0 + $0xd4] sm:$0xf]
  %v69 = vld [vmem:[%s0 + $0xd8] sm:$0xf]
  %v70 = vld [vmem:[%s0 + $0xdc] sm:$0xf]
  %v71 = vld [vmem:[%s0 + $0xe0] sm:$0xf]
  %v72 = vld [vmem:[%s0 + $0xe4] sm:$0xf]
  %v73 = vld [vmem:[%s0 + $0xe8] sm:$0xf]
  %v74 = vld [vmem:[%s0 + $0xec] sm:$0xf]
  %v75 = vld [vmem:[%s0 + $0xf0] sm:$0xf]
  %v76 = vld [vmem:[%s0 + $0xf4] sm:$0xf]
  %v77 = vld [vmem:[%s0 + $0xf8] sm:$0xf]
  %v78 = vld [vmem:[%s0 + $0xfc] sm:$0xf]
  %v79 = vld [vmem:[%s1] sm:$0xf]
  %v80 = vld [vmem:[%s1 + $0x4] sm:$0xf]
  %v81 = vld [vmem:[%s1 + $0x8] sm:$0xf]
  %v82 = vld [vmem:[%s1 + $0xc] sm:$0xf]
  %v83 = vld [vmem:[%s1 + $0x10] sm:$0xf]
  %v84 = vld [vmem:[%s1 + $0x14] sm:$0xf]
  %v85 = vld [vmem:[%s1 + $0x18] sm:$0xf]
  %v86 = vld [vmem:[%s1 + $0x1c] sm:$0xf]
  %v87 = vld [vmem:[%s1 + $0x20] sm:$0xf]
  %v88 = vld [vmem:[%s1 + $0x24] sm:$0xf]
  %v89 = vld [vmem:[%s1 + $0x28] sm:$0xf]
  %v90 = vld [vmem:[%s1 + $0x2c] sm:$0xf]
  %v91 = vld [vmem:[%s1 + $0x30] sm:$0xf]
  %v92 = vld [vmem:[%s1 + $0x34] sm:$0xf]
  %v93 = vld [vmem:[%s1 + $0x38] sm:$0xf]
  %v94 = vld [vmem:[%s1 + $0x3c] sm:$0xf]
  %v95 = vld [vmem:[%s2] sm:$0x1]
  %v97 = vlaneseq
  %v98 = vshrl.u32 %v97, 7
  %v99 = vsub.s32 0, %v98
  %v100 = vrot.slane %v95, %v99
  %v166 = vunpack.c.l.b16 %v15
  %v167 = vunpack.c.l.b16 %v16
  %v168 = vunpack.c.l.b16 %v17
  %v169 = vunpack.c.l.b16 %v18
  %v170 = vunpack.c.l.b16 %v19
  %v171 = vunpack.c.l.b16 %v20
  %v172 = vunpack.c.l.b16 %v21
  %v173 = vunpack.c.l.b16 %v22
  %v174 = vunpack.c.l.b16 %v23
  %v175 = vunpack.c.l.b16 %v24
  %v176 = vunpack.c.l.b16 %v25
  %v177 = vunpack.c.l.b16 %v26
  %v178 = vunpack.c.l.b16 %v27
  %v179 = vunpack.c.l.b16 %v28
  %v180 = vunpack.c.l.b16 %v29
  %v181 = vunpack.c.l.b16 %v30
  %v182 = vunpack.c.l.b16 %v31
  %v183 = vunpack.c.l.b16 %v32
  %v184 = vunpack.c.l.b16 %v33
  %v185 = vunpack.c.l.b16 %v34
  %v186 = vunpack.c.l.b16 %v35
  %v187 = vunpack.c.l.b16 %v36
  %v188 = vunpack.c.l.b16 %v37
  %v189 = vunpack.c.l.b16 %v38
  %v190 = vunpack.c.l.b16 %v39
  %v191 = vunpack.c.l.b16 %v40
  %v192 = vunpack.c.l.b16 %v41
  %v193 = vunpack.c.l.b16 %v42
  %v194 = vunpack.c.l.b16 %v43
  %v195 = vunpack.c.l.b16 %v44
  %v196 = vunpack.c.l.b16 %v45
  %v197 = vunpack.c.l.b16 %v46
  %v198 = vunpack.c.l.b16 %v47
  %v199 = vunpack.c.l.b16 %v48
  %v200 = vunpack.c.l.b16 %v49
  %v201 = vunpack.c.l.b16 %v50
  %v202 = vunpack.c.l.b16 %v51
  %v203 = vunpack.c.l.b16 %v52
  %v204 = vunpack.c.l.b16 %v53
  %v205 = vunpack.c.l.b16 %v54
  %v206 = vunpack.c.l.b16 %v55
  %v207 = vunpack.c.l.b16 %v56
  %v208 = vunpack.c.l.b16 %v57
  %v209 = vunpack.c.l.b16 %v58
  %v210 = vunpack.c.l.b16 %v59
  %v211 = vunpack.c.l.b16 %v60
  %v212 = vunpack.c.l.b16 %v61
  %v213 = vunpack.c.l.b16 %v62
  %v214 = vunpack.c.l.b16 %v63
  %v215 = vunpack.c.l.b16 %v64
  %v216 = vunpack.c.l.b16 %v65
  %v217 = vunpack.c.l.b16 %v66
  %v218 = vunpack.c.l.b16 %v67
  %v219 = vunpack.c.l.b16 %v68
  %v220 = vunpack.c.l.b16 %v69
  %v221 = vunpack.c.l.b16 %v70
  %v222 = vunpack.c.l.b16 %v71
  %v223 = vunpack.c.l.b16 %v72
  %v224 = vunpack.c.l.b16 %v73
  %v225 = vunpack.c.l.b16 %v74
  %v226 = vunpack.c.l.b16 %v75
  %v227 = vunpack.c.l.b16 %v76
  %v228 = vunpack.c.l.b16 %v77
  %v229 = vunpack.c.l.b16 %v78
  %v230 = vpack.c.b16 %v167, %v166
  %v231 = vpack.c.b16 %v169, %v168
  %v232 = vpack.c.b16 %v171, %v170
  %v233 = vpack.c.b16 %v173, %v172
  %v234 = vpack.c.b16 %v175, %v174
  %v235 = vpack.c.b16 %v177, %v176
  %v236 = vpack.c.b16 %v179, %v178
  %v237 = vpack.c.b16 %v181, %v180
  %v238 = vpack.c.b16 %v183, %v182
  %v239 = vpack.c.b16 %v185, %v184
  %v240 = vpack.c.b16 %v187, %v186
  %v241 = vpack.c.b16 %v189, %v188
  %v242 = vpack.c.b16 %v191, %v190
  %v243 = vpack.c.b16 %v193, %v192
  %v244 = vpack.c.b16 %v195, %v194
  %v245 = vpack.c.b16 %v197, %v196
  %v246 = vpack.c.b16 %v199, %v198
  %v247 = vpack.c.b16 %v201, %v200
  %v248 = vpack.c.b16 %v203, %v202
  %v249 = vpack.c.b16 %v205, %v204
  %v250 = vpack.c.b16 %v207, %v206
  %v251 = vpack.c.b16 %v209, %v208
  %v252 = vpack.c.b16 %v211, %v210
  %v253 = vpack.c.b16 %v213, %v212
  %v254 = vpack.c.b16 %v215, %v214
  %v255 = vpack.c.b16 %v217, %v216
  %v256 = vpack.c.b16 %v219, %v218
  %v257 = vpack.c.b16 %v221, %v220
  %v258 = vpack.c.b16 %v223, %v222
  %v259 = vpack.c.b16 %v225, %v224
  %v260 = vpack.c.b16 %v227, %v226
  %v261 = vpack.c.b16 %v229, %v228
  %v310 = vunpack.c.l.b16 %v79
  %v311 = vunpack.c.l.b16 %v80
  %v312 = vunpack.c.l.b16 %v81
  %v313 = vunpack.c.l.b16 %v82
  %v314 = vunpack.c.l.b16 %v83
  %v315 = vunpack.c.l.b16 %v84
  %v316 = vunpack.c.l.b16 %v85
  %v317 = vunpack.c.l.b16 %v86
  %v318 = vunpack.c.l.b16 %v87
  %v319 = vunpack.c.l.b16 %v88
  %v320 = vunpack.c.l.b16 %v89
  %v321 = vunpack.c.l.b16 %v90
  %v322 = vunpack.c.l.b16 %v91
  %v323 = vunpack.c.l.b16 %v92
  %v324 = vunpack.c.l.b16 %v93
  %v325 = vunpack.c.l.b16 %v94
  %v326 = vpack.c.b16 %v311, %v310
  %v327 = vpack.c.b16 %v313, %v312
  %v328 = vpack.c.b16 %v315, %v314
  %v329 = vpack.c.b16 %v317, %v316
  %v330 = vpack.c.b16 %v319, %v318
  %v331 = vpack.c.b16 %v321, %v320
  %v332 = vpack.c.b16 %v323, %v322
  %v333 = vpack.c.b16 %v325, %v324
  %342 = vmatprep.subr.bf16.mxu0 0
  %343 = vmatpush1.bf16.msra.mxu0 %v326
  %344 = vmatprep.subr.bf16.mxu0 0
  %345 = vmatpush1.bf16.msra.mxu0 %v327
  %346 = vmatprep.subr.bf16.mxu0 0
  %347 = vmatpush1.bf16.msra.mxu0 %v328
  %348 = vmatprep.subr.bf16.mxu0 0
  %349 = vmatpush1.bf16.msra.mxu0 %v329
  %350 = vmatprep.subr.bf16.mxu0 0
  %351 = vmatpush1.bf16.msra.mxu0 %v330
  %352 = vmatprep.subr.bf16.mxu0 0
  %353 = vmatpush1.bf16.msra.mxu0 %v331
  %354 = vmatprep.subr.bf16.mxu0 0
  %355 = vmatpush1.bf16.msra.mxu0 %v332
  %356 = vmatprep.subr.bf16.mxu0 0
  %357 = vmatpush1.bf16.msra.mxu0 %v333
  %358 = vmatprep.subr.bf16.mxu0 0
  %359 = vmatpush1.bf16.msra.mxu0 0
  %360 = vmatprep.subr.bf16.mxu0 0
  %361 = vmatpush1.bf16.msra.mxu0 0
  %362 = vmatprep.subr.bf16.mxu0 0
  %363 = vmatpush1.bf16.msra.mxu0 0
  %364 = vmatprep.subr.bf16.mxu0 0
  %365 = vmatpush1.bf16.msra.mxu0 0
  %366 = vmatprep.subr.bf16.mxu0 0
  %367 = vmatpush1.bf16.msra.mxu0 0
  %368 = vmatprep.subr.bf16.mxu0 0
  %369 = vmatpush1.bf16.msra.mxu0 0
  %370 = vmatprep.subr.bf16.mxu0 0
  %371 = vmatpush1.bf16.msra.mxu0 0
  %372 = vmatprep.subr.bf16.mxu0 0
  %373 = vmatpush1.bf16.msra.mxu0 0
  %374 = vmatprep.mubr.bf16.mxu0 0
  %375 = vmatmul.mubr.bf16.gmra.mrb[0].mxu0 %v230
  %v376 = vpop.f32.mrb[0].mxu0
  %v377 = vadd.f32 %v100, %v376
  %v378 = vpop.f32.mrb[0].mxu0
  %v379 = vpop.f32.mrb[0].mxu0
  %v380 = vadd.f32 %v100, %v379
  %v381 = vpop.f32.mrb[0].mxu0
  %382 = vmatprep.mubr.bf16.mxu0 0
  %383 = vmatmul.mubr.bf16.gmra.mrb[0].mxu0 %v231
  %v384 = vpop.f32.mrb[0].mxu0
  %v385 = vadd.f32 %v100, %v384
  %v386 = vpop.f32.mrb[0].mxu0
  %v387 = vpop.f32.mrb[0].mxu0
  %v388 = vadd.f32 %v100, %v387
  %v389 = vpop.f32.mrb[0].mxu0
  %390 = vmatprep.mubr.bf16.mxu0 0
  %391 = vmatmul.mubr.bf16.gmra.mrb[0].mxu0 %v232
  %v392 = vpop.f32.mrb[0].mxu0
  %v393 = vadd.f32 %v100, %v392
  %v394 = vpop.f32.mrb[0].mxu0
  %v395 = vpop.f32.mrb[0].mxu0
  %v396 = vadd.f32 %v100, %v395
  %v397 = vpop.f32.mrb[0].mxu0
  %398 = vmatprep.mubr.bf16.mxu0 0
  %399 = vmatmul.mubr.bf16.gmra.mrb[0].mxu0 %v233
  %v400 = vpop.f32.mrb[0].mxu0
  %v401 = vadd.f32 %v100, %v400
  %v402 = vpop.f32.mrb[0].mxu0
  %v403 = vpop.f32.mrb[0].mxu0
  %v404 = vadd.f32 %v100, %v403
  %v405 = vpop.f32.mrb[0].mxu0
  %406 = vmatprep.mubr.bf16.mxu0 0
  %407 = vmatmul.mubr.bf16.gmra.mrb[0].mxu0 %v234
  %v408 = vpop.f32.mrb[0].mxu0
  %v409 = vadd.f32 %v100, %v408
  %v410 = vpop.f32.mrb[0].mxu0
  %v411 = vpop.f32.mrb[0].mxu0
  %v412 = vadd.f32 %v100, %v411
  %v413 = vpop.f32.mrb[0].mxu0
  %414 = vmatprep.mubr.bf16.mxu0 0
  %415 = vmatmul.mubr.bf16.gmra.mrb[0].mxu0 %v235
  %v416 = vpop.f32.mrb[0].mxu0
  %v417 = vadd.f32 %v100, %v416
  %v418 = vpop.f32.mrb[0].mxu0
  %v419 = vpop.f32.mrb[0].mxu0
  %v420 = vadd.f32 %v100, %v419
  %v421 = vpop.f32.mrb[0].mxu0
  %422 = vmatprep.mubr.bf16.mxu0 0
  %423 = vmatmul.mubr.bf16.gmra.mrb[0].mxu0 %v236
  %v424 = vpop.f32.mrb[0].mxu0
  %v425 = vadd.f32 %v100, %v424
  %v426 = vpop.f32.mrb[0].mxu0
  %v427 = vpop.f32.mrb[0].mxu0
  %v428 = vadd.f32 %v100, %v427
  %v429 = vpop.f32.mrb[0].mxu0
  %430 = vmatprep.mubr.bf16.mxu0 0
  %431 = vmatmul.mubr.bf16.gmra.mrb[0].mxu0 %v237
  %v432 = vpop.f32.mrb[0].mxu0
  %v433 = vadd.f32 %v100, %v432
  %v434 = vpop.f32.mrb[0].mxu0
  %v435 = vpop.f32.mrb[0].mxu0
  %v436 = vadd.f32 %v100, %v435
  %v437 = vpop.f32.mrb[0].mxu0
  %438 = vmatprep.mubr.bf16.mxu0 0
  %439 = vmatmul.mubr.bf16.gmra.mrb[0].mxu0 %v238
  %v440 = vpop.f32.mrb[0].mxu0
  %v441 = vadd.f32 %v100, %v440
  %v442 = vpop.f32.mrb[0].mxu0
  %v443 = vpop.f32.mrb[0].mxu0
  %v444 = vadd.f32 %v100, %v443
  %v445 = vpop.f32.mrb[0].mxu0
  %446 = vmatprep.mubr.bf16.mxu0 0
  %447 = vmatmul.mubr.bf16.gmra.mrb[0].mxu0 %v239
  %v448 = vpop.f32.mrb[0].mxu0
  %v449 = vadd.f32 %v100, %v448
  %v450 = vpop.f32.mrb[0].mxu0
  %v451 = vpop.f32.mrb[0].mxu0
  %v452 = vadd.f32 %v100, %v451
  %v453 = vpop.f32.mrb[0].mxu0
  %454 = vmatprep.mubr.bf16.mxu0 0
  %455 = vmatmul.mubr.bf16.gmra.mrb[0].mxu0 %v240
  %v456 = vpop.f32.mrb[0].mxu0
  %v457 = vadd.f32 %v100, %v456
  %v458 = vpop.f32.mrb[0].mxu0
  %v459 = vpop.f32.mrb[0].mxu0
  %v460 = vadd.f32 %v100, %v459
  %v461 = vpop.f32.mrb[0].mxu0
  %462 = vmatprep.mubr.bf16.mxu0 0
  %463 = vmatmul.mubr.bf16.gmra.mrb[0].mxu0 %v241
  %v464 = vpop.f32.mrb[0].mxu0
  %v465 = vadd.f32 %v100, %v464
  %v466 = vpop.f32.mrb[0].mxu0
  %v467 = vpop.f32.mrb[0].mxu0
  %v468 = vadd.f32 %v100, %v467
  %v469 = vpop.f32.mrb[0].mxu0
  %470 = vmatprep.mubr.bf16.mxu0 0
  %471 = vmatmul.mubr.bf16.gmra.mrb[0].mxu0 %v242
  %v472 = vpop.f32.mrb[0].mxu0
  %v473 = vadd.f32 %v100, %v472
  %v474 = vpop.f32.mrb[0].mxu0
  %v475 = vpop.f32.mrb[0].mxu0
  %v476 = vadd.f32 %v100, %v475
  %v477 = vpop.f32.mrb[0].mxu0
  %478 = vmatprep.mubr.bf16.mxu0 0
  %479 = vmatmul.mubr.bf16.gmra.mrb[0].mxu0 %v243
  %v480 = vpop.f32.mrb[0].mxu0
  %v481 = vadd.f32 %v100, %v480
  %v482 = vpop.f32.mrb[0].mxu0
  %v483 = vpop.f32.mrb[0].mxu0
  %v484 = vadd.f32 %v100, %v483
  %v485 = vpop.f32.mrb[0].mxu0
  %486 = vmatprep.mubr.bf16.mxu0 0
  %487 = vmatmul.mubr.bf16.gmra.mrb[0].mxu0 %v244
  %v488 = vpop.f32.mrb[0].mxu0
  %v489 = vadd.f32 %v100, %v488
  %v490 = vpop.f32.mrb[0].mxu0
  %v491 = vpop.f32.mrb[0].mxu0
  %v492 = vadd.f32 %v100, %v491
  %v493 = vpop.f32.mrb[0].mxu0
  %494 = vmatprep.mubr.bf16.mxu0 0
  %495 = vmatmul.mubr.bf16.gmra.mrb[0].mxu0 %v245
  %v496 = vpop.f32.mrb[0].mxu0
  %v497 = vadd.f32 %v100, %v496
  %v498 = vpop.f32.mrb[0].mxu0
  %v499 = vpop.f32.mrb[0].mxu0
  %v500 = vadd.f32 %v100, %v499
  %v501 = vpop.f32.mrb[0].mxu0
  %502 = vmatprep.mubr.bf16.mxu0 0
  %503 = vmatmul.mubr.bf16.gmra.mrb[0].mxu0 %v246
  %v504 = vpop.f32.mrb[0].mxu0
  %v505 = vadd.f32 %v100, %v504
  %v506 = vpop.f32.mrb[0].mxu0
  %v507 = vpop.f32.mrb[0].mxu0
  %v508 = vadd.f32 %v100, %v507
  %v509 = vpop.f32.mrb[0].mxu0
  %510 = vmatprep.mubr.bf16.mxu0 0
  %511 = vmatmul.mubr.bf16.gmra.mrb[0].mxu0 %v247
  %v512 = vpop.f32.mrb[0].mxu0
  %v513 = vadd.f32 %v100, %v512
  %v514 = vpop.f32.mrb[0].mxu0
  %v515 = vpop.f32.mrb[0].mxu0
  %v516 = vadd.f32 %v100, %v515
  %v517 = vpop.f32.mrb[0].mxu0
  %518 = vmatprep.mubr.bf16.mxu0 0
  %519 = vmatmul.mubr.bf16.gmra.mrb[0].mxu0 %v248
  %v520 = vpop.f32.mrb[0].mxu0
  %v521 = vadd.f32 %v100, %v520
  %v522 = vpop.f32.mrb[0].mxu0
  %v523 = vpop.f32.mrb[0].mxu0
  %v524 = vadd.f32 %v100, %v523
  %v525 = vpop.f32.mrb[0].mxu0
  %526 = vmatprep.mubr.bf16.mxu0 0
  %527 = vmatmul.mubr.bf16.gmra.mrb[0].mxu0 %v249
  %v528 = vpop.f32.mrb[0].mxu0
  %v529 = vadd.f32 %v100, %v528
  %v530 = vpop.f32.mrb[0].mxu0
  %v531 = vpop.f32.mrb[0].mxu0
  %v532 = vadd.f32 %v100, %v531
  %v533 = vpop.f32.mrb[0].mxu0
  %534 = vmatprep.mubr.bf16.mxu0 0
  %535 = vmatmul.mubr.bf16.gmra.mrb[0].mxu0 %v250
  %v536 = vpop.f32.mrb[0].mxu0
  %v537 = vadd.f32 %v100, %v536
  %v538 = vpop.f32.mrb[0].mxu0
  %v539 = vpop.f32.mrb[0].mxu0
  %v540 = vadd.f32 %v100, %v539
  %v541 = vpop.f32.mrb[0].mxu0
  %542 = vmatprep.mubr.bf16.mxu0 0
  %543 = vmatmul.mubr.bf16.gmra.mrb[0].mxu0 %v251
  %v544 = vpop.f32.mrb[0].mxu0
  %v545 = vadd.f32 %v100, %v544
  %v546 = vpop.f32.mrb[0].mxu0
  %v547 = vpop.f32.mrb[0].mxu0
  %v548 = vadd.f32 %v100, %v547
  %v549 = vpop.f32.mrb[0].mxu0
  %550 = vmatprep.mubr.bf16.mxu0 0
  %551 = vmatmul.mubr.bf16.gmra.mrb[0].mxu0 %v252
  %v552 = vpop.f32.mrb[0].mxu0
  %v553 = vadd.f32 %v100, %v552
  %v554 = vpop.f32.mrb[0].mxu0
  %v555 = vpop.f32.mrb[0].mxu0
  %v556 = vadd.f32 %v100, %v555
  %v557 = vpop.f32.mrb[0].mxu0
  %558 = vmatprep.mubr.bf16.mxu0 0
  %559 = vmatmul.mubr.bf16.gmra.mrb[0].mxu0 %v253
  %v560 = vpop.f32.mrb[0].mxu0
  %v561 = vadd.f32 %v100, %v560
  %v562 = vpop.f32.mrb[0].mxu0
  %v563 = vpop.f32.mrb[0].mxu0
  %v564 = vadd.f32 %v100, %v563
  %v565 = vpop.f32.mrb[0].mxu0
  %566 = vmatprep.mubr.bf16.mxu0 0
  %567 = vmatmul.mubr.bf16.gmra.mrb[0].mxu0 %v254
  %v568 = vpop.f32.mrb[0].mxu0
  %v569 = vadd.f32 %v100, %v568
  %v570 = vpop.f32.mrb[0].mxu0
  %v571 = vpop.f32.mrb[0].mxu0
  %v572 = vadd.f32 %v100, %v571
  %v573 = vpop.f32.mrb[0].mxu0
  %574 = vmatprep.mubr.bf16.mxu0 0
  %575 = vmatmul.mubr.bf16.gmra.mrb[0].mxu0 %v255
  %v576 = vpop.f32.mrb[0].mxu0
  %v577 = vadd.f32 %v100, %v576
  %v578 = vpop.f32.mrb[0].mxu0
  %v579 = vpop.f32.mrb[0].mxu0
  %v580 = vadd.f32 %v100, %v579
  %v581 = vpop.f32.mrb[0].mxu0
  %582 = vmatprep.mubr.bf16.mxu0 0
  %583 = vmatmul.mubr.bf16.gmra.mrb[0].mxu0 %v256
  %v584 = vpop.f32.mrb[0].mxu0
  %v585 = vadd.f32 %v100, %v584
  %v586 = vpop.f32.mrb[0].mxu0
  %v587 = vpop.f32.mrb[0].mxu0
  %v588 = vadd.f32 %v100, %v587
  %v589 = vpop.f32.mrb[0].mxu0
  %590 = vmatprep.mubr.bf16.mxu0 0
  %591 = vmatmul.mubr.bf16.gmra.mrb[0].mxu0 %v257
  %v592 = vpop.f32.mrb[0].mxu0
  %v593 = vadd.f32 %v100, %v592
  %v594 = vpop.f32.mrb[0].mxu0
  %v595 = vpop.f32.mrb[0].mxu0
  %v596 = vadd.f32 %v100, %v595
  %v597 = vpop.f32.mrb[0].mxu0
  %598 = vmatprep.mubr.bf16.mxu0 0
  %599 = vmatmul.mubr.bf16.gmra.mrb[0].mxu0 %v258
  %v600 = vpop.f32.mrb[0].mxu0
  %v601 = vadd.f32 %v100, %v600
  %v602 = vpop.f32.mrb[0].mxu0
  %v603 = vpop.f32.mrb[0].mxu0
  %v604 = vadd.f32 %v100, %v603
  %v605 = vpop.f32.mrb[0].mxu0
  %606 = vmatprep.mubr.bf16.mxu0 0
  %607 = vmatmul.mubr.bf16.gmra.mrb[0].mxu0 %v259
  %v608 = vpop.f32.mrb[0].mxu0
  %v609 = vadd.f32 %v100, %v608
  %v610 = vpop.f32.mrb[0].mxu0
  %v611 = vpop.f32.mrb[0].mxu0
  %v612 = vadd.f32 %v100, %v611
  %v613 = vpop.f32.mrb[0].mxu0
  %614 = vmatprep.mubr.bf16.mxu0 0
  %615 = vmatmul.mubr.bf16.gmra.mrb[0].mxu0 %v260
  %v616 = vpop.f32.mrb[0].mxu0
  %v617 = vadd.f32 %v100, %v616
  %v618 = vpop.f32.mrb[0].mxu0
  %v619 = vpop.f32.mrb[0].mxu0
  %v620 = vadd.f32 %v100, %v619
  %v621 = vpop.f32.mrb[0].mxu0
  %622 = vmatprep.mubr.bf16.mxu0 0
  %623 = vmatmul.mubr.bf16.gmra.mrb[0].mxu0 %v261
  %v624 = vpop.f32.mrb[0].mxu0
  %v625 = vadd.f32 %v100, %v624
  %v626 = vpop.f32.mrb[0].mxu0
  %v627 = vpop.f32.mrb[0].mxu0
  %v628 = vadd.f32 %v100, %v627
  %v629 = vpop.f32.mrb[0].mxu0
  %630 = vdwg.mxu0
  %v631 = vmax.f32 %v377, 0.0
  %v632 = vmax.f32 %v380, 0.0
  %v633 = vmax.f32 %v385, 0.0
  %v634 = vmax.f32 %v388, 0.0
  %v635 = vmax.f32 %v393, 0.0
  %v636 = vmax.f32 %v396, 0.0
  %v637 = vmax.f32 %v401, 0.0
  %v638 = vmax.f32 %v404, 0.0
  %v639 = vmax.f32 %v409, 0.0
  %v640 = vmax.f32 %v412, 0.0
  %v641 = vmax.f32 %v417, 0.0
  %v642 = vmax.f32 %v420, 0.0
  %v643 = vmax.f32 %v425, 0.0
  %v644 = vmax.f32 %v428, 0.0
  %v645 = vmax.f32 %v433, 0.0
  %v646 = vmax.f32 %v436, 0.0
  %v647 = vmax.f32 %v441, 0.0
  %v648 = vmax.f32 %v444, 0.0
  %v649 = vmax.f32 %v449, 0.0
  %v650 = vmax.f32 %v452, 0.0
  %v651 = vmax.f32 %v457, 0.0
  %v652 = vmax.f32 %v460, 0.0
  %v653 = vmax.f32 %v465, 0.0
  %v654 = vmax.f32 %v468, 0.0
  %v655 = vmax.f32 %v473, 0.0
  %v656 = vmax.f32 %v476, 0.0
  %v657 = vmax.f32 %v481, 0.0
  %v658 = vmax.f32 %v484, 0.0
  %v659 = vmax.f32 %v489, 0.0
  %v660 = vmax.f32 %v492, 0.0
  %v661 = vmax.f32 %v497, 0.0
  %v662 = vmax.f32 %v500, 0.0
  %v663 = vmax.f32 %v505, 0.0
  %v664 = vmax.f32 %v508, 0.0
  %v665 = vmax.f32 %v513, 0.0
  %v666 = vmax.f32 %v516, 0.0
  %v667 = vmax.f32 %v521, 0.0
  %v668 = vmax.f32 %v524, 0.0
  %v669 = vmax.f32 %v529, 0.0
  %v670 = vmax.f32 %v532, 0.0
  %v671 = vmax.f32 %v537, 0.0
  %v672 = vmax.f32 %v540, 0.0
  %v673 = vmax.f32 %v545, 0.0
  %v674 = vmax.f32 %v548, 0.0
  %v675 = vmax.f32 %v553, 0.0
  %v676 = vmax.f32 %v556, 0.0
  %v677 = vmax.f32 %v561, 0.0
  %v678 = vmax.f32 %v564, 0.0
  %v679 = vmax.f32 %v569, 0.0
  %v680 = vmax.f32 %v572, 0.0
  %v681 = vmax.f32 %v577, 0.0
  %v682 = vmax.f32 %v580, 0.0
  %v683 = vmax.f32 %v585, 0.0
  %v684 = vmax.f32 %v588, 0.0
  %v685 = vmax.f32 %v593, 0.0
  %v686 = vmax.f32 %v596, 0.0
  %v687 = vmax.f32 %v601, 0.0
  %v688 = vmax.f32 %v604, 0.0
  %v689 = vmax.f32 %v609, 0.0
  %v690 = vmax.f32 %v612, 0.0
  %v691 = vmax.f32 %v617, 0.0
  %v692 = vmax.f32 %v620, 0.0
  %v693 = vmax.f32 %v625, 0.0
  %v694 = vmax.f32 %v628, 0.0
  %v695 = vpack.c.bf16 %v632, %v631
  %v696 = vpack.c.bf16 %v634, %v633
  %v697 = vpack.c.bf16 %v636, %v635
  %v698 = vpack.c.bf16 %v638, %v637
  %v699 = vpack.c.bf16 %v640, %v639
  %v700 = vpack.c.bf16 %v642, %v641
  %v701 = vpack.c.bf16 %v644, %v643
  %v702 = vpack.c.bf16 %v646, %v645
  %v703 = vpack.c.bf16 %v648, %v647
  %v704 = vpack.c.bf16 %v650, %v649
  %v705 = vpack.c.bf16 %v652, %v651
  %v706 = vpack.c.bf16 %v654, %v653
  %v707 = vpack.c.bf16 %v656, %v655
  %v708 = vpack.c.bf16 %v658, %v657
  %v709 = vpack.c.bf16 %v660, %v659
  %v710 = vpack.c.bf16 %v662, %v661
  %v711 = vpack.c.bf16 %v664, %v663
  %v712 = vpack.c.bf16 %v666, %v665
  %v713 = vpack.c.bf16 %v668, %v667
  %v714 = vpack.c.bf16 %v670, %v669
  %v715 = vpack.c.bf16 %v672, %v671
  %v716 = vpack.c.bf16 %v674, %v673
  %v717 = vpack.c.bf16 %v676, %v675
  %v718 = vpack.c.bf16 %v678, %v677
  %v719 = vpack.c.bf16 %v680, %v679
  %v720 = vpack.c.bf16 %v682, %v681
  %v721 = vpack.c.bf16 %v684, %v683
  %v722 = vpack.c.bf16 %v686, %v685
  %v723 = vpack.c.bf16 %v688, %v687
  %v724 = vpack.c.bf16 %v690, %v689
  %v725 = vpack.c.bf16 %v692, %v691
  %v726 = vpack.c.bf16 %v694, %v693
  %v759 = vunpack.c.l.b16 %v695
  %v760 = vunpack.c.h.b16 %v695
  %v761 = vunpack.c.l.b16 %v696
  %v762 = vunpack.c.h.b16 %v696
  %v763 = vunpack.c.l.b16 %v697
  %v764 = vunpack.c.h.b16 %v697
  %v765 = vunpack.c.l.b16 %v698
  %v766 = vunpack.c.h.b16 %v698
  %v767 = vunpack.c.l.b16 %v699
  %v768 = vunpack.c.h.b16 %v699
  %v769 = vunpack.c.l.b16 %v700
  %v770 = vunpack.c.h.b16 %v700
  %v771 = vunpack.c.l.b16 %v701
  %v772 = vunpack.c.h.b16 %v701
  %v773 = vunpack.c.l.b16 %v702
  %v774 = vunpack.c.h.b16 %v702
  %v775 = vunpack.c.l.b16 %v703
  %v776 = vunpack.c.h.b16 %v703
  %v777 = vunpack.c.l.b16 %v704
  %v778 = vunpack.c.h.b16 %v704
  %v779 = vunpack.c.l.b16 %v705
  %v780 = vunpack.c.h.b16 %v705
  %v781 = vunpack.c.l.b16 %v706
  %v782 = vunpack.c.h.b16 %v706
  %v783 = vunpack.c.l.b16 %v707
  %v784 = vunpack.c.h.b16 %v707
  %v785 = vunpack.c.l.b16 %v708
  %v786 = vunpack.c.h.b16 %v708
  %v787 = vunpack.c.l.b16 %v709
  %v788 = vunpack.c.h.b16 %v709
  %v789 = vunpack.c.l.b16 %v710
  %v790 = vunpack.c.h.b16 %v710
  %v791 = vunpack.c.l.b16 %v711
  %v792 = vunpack.c.h.b16 %v711
  %v793 = vunpack.c.l.b16 %v712
  %v794 = vunpack.c.h.b16 %v712
  %v795 = vunpack.c.l.b16 %v713
  %v796 = vunpack.c.h.b16 %v713
  %v797 = vunpack.c.l.b16 %v714
  %v798 = vunpack.c.h.b16 %v714
  %v799 = vunpack.c.l.b16 %v715
  %v800 = vunpack.c.h.b16 %v715
  %v801 = vunpack.c.l.b16 %v716
  %v802 = vunpack.c.h.b16 %v716
  %v803 = vunpack.c.l.b16 %v717
  %v804 = vunpack.c.h.b16 %v717
  %v805 = vunpack.c.l.b16 %v718
  %v806 = vunpack.c.h.b16 %v718
  %v807 = vunpack.c.l.b16 %v719
  %v808 = vunpack.c.h.b16 %v719
  %v809 = vunpack.c.l.b16 %v720
  %v810 = vunpack.c.h.b16 %v720
  %v811 = vunpack.c.l.b16 %v721
  %v812 = vunpack.c.h.b16 %v721
  %v813 = vunpack.c.l.b16 %v722
  %v814 = vunpack.c.h.b16 %v722
  %v815 = vunpack.c.l.b16 %v723
  %v816 = vunpack.c.h.b16 %v723
  %v817 = vunpack.c.l.b16 %v724
  %v818 = vunpack.c.h.b16 %v724
  %v819 = vunpack.c.l.b16 %v725
  %v820 = vunpack.c.h.b16 %v725
  %v821 = vunpack.c.l.b16 %v726
  %v822 = vunpack.c.h.b16 %v726
  %v823 = vpack.c.b16 %v759, %v759
  %v824 = vpack.c.b16 %v760, %v760
  %v825 = vpack.c.b16 %v761, %v761
  %v826 = vpack.c.b16 %v762, %v762
  %v827 = vpack.c.b16 %v763, %v763
  %v828 = vpack.c.b16 %v764, %v764
  %v829 = vpack.c.b16 %v765, %v765
  %v830 = vpack.c.b16 %v766, %v766
  %v831 = vpack.c.b16 %v767, %v767
  %v832 = vpack.c.b16 %v768, %v768
  %v833 = vpack.c.b16 %v769, %v769
  %v834 = vpack.c.b16 %v770, %v770
  %v835 = vpack.c.b16 %v771, %v771
  %v836 = vpack.c.b16 %v772, %v772
  %v837 = vpack.c.b16 %v773, %v773
  %v838 = vpack.c.b16 %v774, %v774
  %v839 = vpack.c.b16 %v775, %v775
  %v840 = vpack.c.b16 %v776, %v776
  %v841 = vpack.c.b16 %v777, %v777
  %v842 = vpack.c.b16 %v778, %v778
  %v843 = vpack.c.b16 %v779, %v779
  %v844 = vpack.c.b16 %v780, %v780
  %v845 = vpack.c.b16 %v781, %v781
  %v846 = vpack.c.b16 %v782, %v782
  %v847 = vpack.c.b16 %v783, %v783
  %v848 = vpack.c.b16 %v784, %v784
  %v849 = vpack.c.b16 %v785, %v785
  %v850 = vpack.c.b16 %v786, %v786
  %v851 = vpack.c.b16 %v787, %v787
  %v852 = vpack.c.b16 %v788, %v788
  %v853 = vpack.c.b16 %v789, %v789
  %v854 = vpack.c.b16 %v790, %v790
  %v855 = vpack.c.b16 %v791, %v791
  %v856 = vpack.c.b16 %v792, %v792
  %v857 = vpack.c.b16 %v793, %v793
  %v858 = vpack.c.b16 %v794, %v794
  %v859 = vpack.c.b16 %v795, %v795
  %v860 = vpack.c.b16 %v796, %v796
  %v861 = vpack.c.b16 %v797, %v797
  %v862 = vpack.c.b16 %v798, %v798
  %v863 = vpack.c.b16 %v799, %v799
  %v864 = vpack.c.b16 %v800, %v800
  %v865 = vpack.c.b16 %v801, %v801
  %v866 = vpack.c.b16 %v802, %v802
  %v867 = vpack.c.b16 %v803, %v803
  %v868 = vpack.c.b16 %v804, %v804
  %v869 = vpack.c.b16 %v805, %v805
  %v870 = vpack.c.b16 %v806, %v806
  %v871 = vpack.c.b16 %v807, %v807
  %v872 = vpack.c.b16 %v808, %v808
  %v873 = vpack.c.b16 %v809, %v809
  %v874 = vpack.c.b16 %v810, %v810
  %v875 = vpack.c.b16 %v811, %v811
  %v876 = vpack.c.b16 %v812, %v812
  %v877 = vpack.c.b16 %v813, %v813
  %v878 = vpack.c.b16 %v814, %v814
  %v879 = vpack.c.b16 %v815, %v815
  %v880 = vpack.c.b16 %v816, %v816
  %v881 = vpack.c.b16 %v817, %v817
  %v882 = vpack.c.b16 %v818, %v818
  %v883 = vpack.c.b16 %v819, %v819
  %v884 = vpack.c.b16 %v820, %v820
  %v885 = vpack.c.b16 %v821, %v821
  %v886 = vpack.c.b16 %v822, %v822
  %951 = vst [vmem:[%s3] sm:$0xf] %v823
  %952 = vst [vmem:[%s3 + $0x4] sm:$0xf] %v824
  %953 = vst [vmem:[%s3 + $0x8] sm:$0xf] %v825
  %954 = vst [vmem:[%s3 + $0xc] sm:$0xf] %v826
  %955 = vst [vmem:[%s3 + $0x10] sm:$0xf] %v827
  %956 = vst [vmem:[%s3 + $0x14] sm:$0xf] %v828
  %957 = vst [vmem:[%s3 + $0x18] sm:$0xf] %v829
  %958 = vst [vmem:[%s3 + $0x1c] sm:$0xf] %v830
  %959 = vst [vmem:[%s3 + $0x20] sm:$0xf] %v831
  %960 = vst [vmem:[%s3 + $0x24] sm:$0xf] %v832
  %961 = vst [vmem:[%s3 + $0x28] sm:$0xf] %v833
  %962 = vst [vmem:[%s3 + $0x2c] sm:$0xf] %v834
  %963 = vst [vmem:[%s3 + $0x30] sm:$0xf] %v835
  %964 = vst [vmem:[%s3 + $0x34] sm:$0xf] %v836
  %965 = vst [vmem:[%s3 + $0x38] sm:$0xf] %v837
  %966 = vst [vmem:[%s3 + $0x3c] sm:$0xf] %v838
  %967 = vst [vmem:[%s3 + $0x40] sm:$0xf] %v839
  %968 = vst [vmem:[%s3 + $0x44] sm:$0xf] %v840
  %969 = vst [vmem:[%s3 + $0x48] sm:$0xf] %v841
  %970 = vst [vmem:[%s3 + $0x4c] sm:$0xf] %v842
  %971 = vst [vmem:[%s3 + $0x50] sm:$0xf] %v843
  %972 = vst [vmem:[%s3 + $0x54] sm:$0xf] %v844
  %973 = vst [vmem:[%s3 + $0x58] sm:$0xf] %v845
  %974 = vst [vmem:[%s3 + $0x5c] sm:$0xf] %v846
  %975 = vst [vmem:[%s3 + $0x60] sm:$0xf] %v847
  %976 = vst [vmem:[%s3 + $0x64] sm:$0xf] %v848
  %977 = vst [vmem:[%s3 + $0x68] sm:$0xf] %v849
  %978 = vst [vmem:[%s3 + $0x6c] sm:$0xf] %v850
  %979 = vst [vmem:[%s3 + $0x70] sm:$0xf] %v851
  %980 = vst [vmem:[%s3 + $0x74] sm:$0xf] %v852
  %981 = vst [vmem:[%s3 + $0x78] sm:$0xf] %v853
  %982 = vst [vmem:[%s3 + $0x7c] sm:$0xf] %v854
  %983 = vst [vmem:[%s3 + $0x80] sm:$0xf] %v855
  %984 = vst [vmem:[%s3 + $0x84] sm:$0xf] %v856
  %985 = vst [vmem:[%s3 + $0x88] sm:$0xf] %v857
  %986 = vst [vmem:[%s3 + $0x8c] sm:$0xf] %v858
  %987 = vst [vmem:[%s3 + $0x90] sm:$0xf] %v859
  %988 = vst [vmem:[%s3 + $0x94] sm:$0xf] %v860
  %989 = vst [vmem:[%s3 + $0x98] sm:$0xf] %v861
  %990 = vst [vmem:[%s3 + $0x9c] sm:$0xf] %v862
  %991 = vst [vmem:[%s3 + $0xa0] sm:$0xf] %v863
  %992 = vst [vmem:[%s3 + $0xa4] sm:$0xf] %v864
  %993 = vst [vmem:[%s3 + $0xa8] sm:$0xf] %v865
  %994 = vst [vmem:[%s3 + $0xac] sm:$0xf] %v866
  %995 = vst [vmem:[%s3 + $0xb0] sm:$0xf] %v867
  %996 = vst [vmem:[%s3 + $0xb4] sm:$0xf] %v868
  %997 = vst [vmem:[%s3 + $0xb8] sm:$0xf] %v869
  %998 = vst [vmem:[%s3 + $0xbc] sm:$0xf] %v870
  %999 = vst [vmem:[%s3 + $0xc0] sm:$0xf] %v871
  %1000 = vst [vmem:[%s3 + $0xc4] sm:$0xf] %v872
  %1001 = vst [vmem:[%s3 + $0xc8] sm:$0xf] %v873
  %1002 = vst [vmem:[%s3 + $0xcc] sm:$0xf] %v874
  %1003 = vst [vmem:[%s3 + $0xd0] sm:$0xf] %v875
  %1004 = vst [vmem:[%s3 + $0xd4] sm:$0xf] %v876
  %1005 = vst [vmem:[%s3 + $0xd8] sm:$0xf] %v877
  %1006 = vst [vmem:[%s3 + $0xdc] sm:$0xf] %v878
  %1007 = vst [vmem:[%s3 + $0xe0] sm:$0xf] %v879
  %1008 = vst [vmem:[%s3 + $0xe4] sm:$0xf] %v880
  %1009 = vst [vmem:[%s3 + $0xe8] sm:$0xf] %v881
  %1010 = vst [vmem:[%s3 + $0xec] sm:$0xf] %v882
  %1011 = vst [vmem:[%s3 + $0xf0] sm:$0xf] %v883
  %1012 = vst [vmem:[%s3 + $0xf4] sm:$0xf] %v884
  %1013 = vst [vmem:[%s3 + $0xf8] sm:$0xf] %v885
  %1014 = vst [vmem:[%s3 + $0xfc] sm:$0xf] %v886
  // Predicated region
  $region14: #{_lambda_.8} parent=0 // pred_check
    _
  $region15: #{_lambda_.8} parent=0 // pred_check_branch
    %1016 = sbr.rel (0) target = $region17
  $region16: #{_lambda_.8} parent=0 // pred_region
    _
  $region17: #{_lambda_.8} parent=0 // pred_fallthru
    _
  // Predicated region
  $region18: #{_lambda_.8} parent=0 // pred_check
    _
  $region19: #{_lambda_.8} parent=0 // pred_check_branch
    %1018 = sbr.rel (0) target = $region21
  $region20: #{_lambda_.8} parent=0 // pred_region
    _
  $region21: #{_lambda_.8} parent=0 // pred_fallthru
    _

// kernel: _lambda_.9
$region0: #{_lambda_.9}
  #allocation0 [shape = 'u32[]', space=smem, size = 0x4, offset = 0x4, fixed_abs, tag = 'smem constant byte address 0x4 - core index']
  #allocation1 [shape = 'u32[144,128]{1,0:T(1,128)}', space=vmem, size = 0x12000, scoped, tag = 'internal scratch']
  %s0 = inlined_call_operand.vmem [shape: bf16[2,256,576], index: 0, kind: input, shape index: {}]
  %s1 = inlined_call_operand.vmem [shape: bf16[2,640,256], index: 1, kind: output, shape index: {}]
  %s2 = sld [smem:[#allocation0]]
  $region37: #{_lambda_.9} parent=0
    _
  %s4 = ssub.s32 1, %s2
  %s5 = scalar_select 0, %s4, %s2
  loop: start=0, step=1, limit=4
  $region2: #{_lambda_.9} parent=0 // loop_pre_header
    _
  $region3: #{_lambda_.9} parent=0 // loop_header
    %s7 = sphi 0, %s11
    %p8 = scmp.ge.s32.totalorder %s7, 4
    %s14 = sphi 0, %s26
    %s15 = sphi 0, %s22
    %s16 = sphi 0, %s14
    %s17 = sphi 0, %s15
    %s18 = sphi 0, %s16
    %s19 = sphi 0, %s17
    %s31 = sphi 0, %s33
    %s34 = sphi 0, %s31
    %s35 = sphi 0, %s34
    %s51 = sphi 0, %s35
    %s59 = sphi 0, %s61
    %s62 = sphi 0, %s59
    %s63 = sphi 0, %s62
    %s79 = sphi 0, %s63
  $region4: #{_lambda_.9} parent=0 // loop_header_branch
    %10 = sbr.rel (%p8) target = $region8
  $region5: #{_lambda_.9} parent=0 // loop_body
    %s12 = ssub.s32 %s7, 1
    %s13 = ssub.s32 %s7, 2
    %s20 = sadd.s32 1, %s15
    %p21 = scmp.ge.s32.totalorder %s20, 1
    %s22 = scalar_select %p21, 0, %s20
    %s23 = sadd.s32 1, %s14
    %s24 = scalar_select %p21, %s23, %s14
    %p25 = scmp.ge.s32.totalorder %s24, 2
    %s26 = scalar_select %p25, 0, %s24
    %s27 = ssub.s32 %s14, %s26
    %s28 = ssub.s32 %s15, %s22
    %s29 = sor.u32 %s27, %s28
    %p30 = scmp.eq.s32.totalorder %s29, 0
    %s32 = sadd.s32 %s31, 1
    %s33 = scalar_select %p30, %s31, %s32
    %p36 = pneg %p30
    %p37 = scmp.eq.s32.totalorder %s7, 1
    %p38 = por %p36, %p37
    %p39 = scmp.ne.s32.totalorder %s31, %s34
    %p40 = scmp.eq.s32.totalorder %s7, 0
    %p41 = por %p39, %p40
    %p42 = scmp.ne.s32.totalorder %s31, %s34
    %p43 = scmp.eq.s32.totalorder %s12, 1
    %p44 = por %p42, %p43
    %p45 = scmp.ne.s32.totalorder %s34, %s35
    %p46 = scmp.eq.s32.totalorder %s12, 0
    %p47 = por %p45, %p46
    %p48 = scmp.ne.s32.totalorder %s34, %s35
    %p49 = scmp.eq.s32.totalorder %s13, 1
    %p50 = por %p48, %p49
    %p52 = scmp.ne.s32.totalorder %s35, %s51
    %p53 = scmp.eq.s32.totalorder %s13, 0
    %p54 = por %p52, %p53
    %s55 = ssub.s32 %s14, %s26
    %s56 = ssub.s32 %s15, %s22
    %s57 = sor.u32 %s55, %s56
    %p58 = scmp.eq.s32.totalorder %s57, 0
    %s60 = sadd.s32 %s59, 1
    %s61 = scalar_select %p58, %s59, %s60
    %p64 = pneg %p58
    %p65 = scmp.eq.s32.totalorder %s7, 1
    %p66 = por %p64, %p65
    %p67 = scmp.ne.s32.totalorder %s59, %s62
    %p68 = scmp.eq.s32.totalorder %s7, 0
    %p69 = por %p67, %p68
    %p70 = scmp.ne.s32.totalorder %s59, %s62
    %p71 = scmp.eq.s32.totalorder %s12, 1
    %p72 = por %p70, %p71
    %p73 = scmp.ne.s32.totalorder %s62, %s63
    %p74 = scmp.eq.s32.totalorder %s12, 0
    %p75 = por %p73, %p74
    %p76 = scmp.ne.s32.totalorder %s62, %s63
    %p77 = scmp.eq.s32.totalorder %s13, 1
    %p78 = por %p76, %p77
    %p80 = scmp.ne.s32.totalorder %s63, %s79
    %p81 = scmp.eq.s32.totalorder %s13, 0
    %p82 = por %p80, %p81
    %p83 = scmp.le.s32.totalorder 1, %s7
    %p84 = scmp.lt.s32.totalorder %s7, 3
    %p85 = pnand %p83, %p84
    %p86 = pneg %p85
    // Predicated region
    $region9: #{_lambda_.9} parent=5 // pred_check
      _
    $region10: #{_lambda_.9} parent=5 // pred_check_branch
      %88 = sbr.rel (%p85) target = $region12
    $region11: #{_lambda_.9} parent=5 // pred_region
      %s89 = ssub.s32 %s7, 1
    $region12: #{_lambda_.9} parent=5 // pred_fallthru
      _
    %p90 = scmp.lt.s32.totalorder %s7, 2
    // Predicated region
    $region13: #{_lambda_.9} parent=5 // pred_check
      %p91 = pneg %p90
    $region14: #{_lambda_.9} parent=5 // pred_check_branch
      %93 = sbr.rel (%p91) target = $region16
    $region15: #{_lambda_.9} parent=5 // pred_region
      // Predicated region
      $region17: #{_lambda_.9} parent=15 // pred_check
        %p94 = pneg %p41
      $region18: #{_lambda_.9} parent=15 // pred_check_branch
        %96 = sbr.rel (%p94) target = $region20
      $region19: #{_lambda_.9} parent=15 // pred_region
        %s97 = smul.u32 32, %s15
        %p98 = scmp.lt.s32.totalorder %s14, 1
        %s99 = scalar_select %p98, %s14, 1
        %p100 = scmp.lt.s32.totalorder %s97, 31
        %s101 = scalar_select %p100, %s97, 31
        %s102 = smul.addr %s101, 5
        %s103 = smul.addr %s99, 160
        %s104 = sadd.s32 %s102, %s103
        %s105 = smul.addr %s104, 4
        %s106 = scalar_lea.vmem %s0, %s105
        %s107 = smul.u32 32, %s15
      $region20: #{_lambda_.9} parent=15 // pred_fallthru
        _
    $region16: #{_lambda_.9} parent=5 // pred_fallthru
      _
    %p108 = scmp.le.s32.totalorder 1, %s7
    %p109 = scmp.lt.s32.totalorder %s7, 3
    %p110 = pnand %p108, %p109
    %p111 = pneg %p110
    // Predicated region
    $region21: #{_lambda_.9} parent=5 // pred_check
      _
    $region22: #{_lambda_.9} parent=5 // pred_check_branch
      %113 = sbr.rel (%p110) target = $region24
    $region23: #{_lambda_.9} parent=5 // pred_region
      %s114 = ssub.s32 %s7, 1
      %s115 = smul.u32 32, %s17
      %p116 = scmp.lt.s32.totalorder %s16, 1
      %s117 = scalar_select %p116, %s16, 1
      %p118 = scmp.lt.s32.totalorder %s115, 31
      %s119 = scalar_select %p118, %s115, 31
      %s120 = smul.addr %s119, 5
      %s121 = smul.addr %s117, 160
      %s122 = sadd.s32 %s120, %s121
      %s123 = smul.addr %s122, 4
      %s124 = scalar_lea.vmem %s0, %s123
      %p125 = pneg %p47
      %p126 = pneg %p44
      %p127 = pneg %p75
      %p128 = pneg %p72
      %s129 = smul.u32 2, %s17
      %p130 = scmp.lt.s32.totalorder %s16, 1
      %s131 = scalar_select %p130, %s16, 1
      %p132 = scmp.lt.s32.totalorder %s129, 1
      %s133 = scalar_select %p132, %s129, 1
      %s134 = smul.addr %s131, 160
      %s135 = sadd.s32 %s133, %s134
      %s136 = smul.addr %s135, 4
      %s137 = scalar_lea.vmem %s1, %s136
      %s138 = smul.u32 32, %s17
      %p139 = scmp.lt.s32.totalorder %s16, 1
      %s140 = scalar_select %p139, %s16, 1
      %p141 = scmp.lt.s32.totalorder %s138, 31
      %s142 = scalar_select %p141, %s138, 31
      %s143 = smul.addr %s142, 5
      %s144 = smul.addr %s140, 160
      %s145 = sadd.s32 %s143, %s144
      %s146 = smul.addr %s145, 4
      %s147 = scalar_lea.vmem %s0, %s146
      %s148 = smul.u32 32, %s17
      %s149 = smul.u32 2, %s17
      %p150 = scmp.lt.s32.totalorder %s16, 1
      %s151 = scalar_select %p150, %s16, 1
      %p152 = scmp.lt.s32.totalorder %s149, 1
      %s153 = scalar_select %p152, %s149, 1
      %s154 = smul.addr %s151, 160
      %s155 = sadd.s32 %s153, %s154
      %s156 = smul.addr %s155, 4
      %s157 = scalar_lea.vmem %s1, %s156
      %s158 = smul.u32 2, %s17
      %v160 = vld [vmem:[%s147] sm:$0xff]
      %v161 = vld [vmem:[%s147 + $0x8] sm:$0xff]
      %v162 = vld [vmem:[%s147 + $0x10] sm:$0xf]
      %v163 = vld [vmem:[%s147 + $0x14] sm:$0xff]
      %v164 = vld [vmem:[%s147 + $0x1c] sm:$0xff]
      %v165 = vld [vmem:[%s147 + $0x24] sm:$0xf]
      %v166 = vld [vmem:[%s147 + $0x28] sm:$0xff]
      %v167 = vld [vmem:[%s147 + $0x30] sm:$0xff]
      %v168 = vld [vmem:[%s147 + $0x38] sm:$0xf]
      %v169 = vld [vmem:[%s147 + $0x3c] sm:$0xff]
      %v170 = vld [vmem:[%s147 + $0x44] sm:$0xff]
      %v171 = vld [vmem:[%s147 + $0x4c] sm:$0xf]
      %v172 = vld [vmem:[%s147 + $0x50] sm:$0xff]
      %v173 = vld [vmem:[%s147 + $0x58] sm:$0xff]
      %v174 = vld [vmem:[%s147 + $0x60] sm:$0xf]
      %v175 = vld [vmem:[%s147 + $0x64] sm:$0xff]
      %v176 = vld [vmem:[%s147 + $0x6c] sm:$0xff]
      %v177 = vld [vmem:[%s147 + $0x74] sm:$0xf]
      %v178 = vld [vmem:[%s147 + $0x78] sm:$0xff]
      %v179 = vld [vmem:[%s147 + $0x80] sm:$0xff]
      %v180 = vld [vmem:[%s147 + $0x88] sm:$0xf]
      %v181 = vld [vmem:[%s147 + $0x8c] sm:$0xff]
      %v182 = vld [vmem:[%s147 + $0x94] sm:$0xff]
      %v183 = vld [vmem:[%s147 + $0x9c] sm:$0xf]
      %v184 = vld [vmem:[%s147 + $0xa0] sm:$0xff]
      %v185 = vld [vmem:[%s147 + $0xa8] sm:$0xff]
      %v186 = vld [vmem:[%s147 + $0xb0] sm:$0xf]
      %v187 = vld [vmem:[%s147 + $0xb4] sm:$0xff]
      %v188 = vld [vmem:[%s147 + $0xbc] sm:$0xff]
      %v189 = vld [vmem:[%s147 + $0xc4] sm:$0xf]
      %v190 = vld [vmem:[%s147 + $0xc8] sm:$0xff]
      %v191 = vld [vmem:[%s147 + $0xd0] sm:$0xff]
      %v192 = vld [vmem:[%s147 + $0xd8] sm:$0xf]
      %v193 = vld [vmem:[%s147 + $0xdc] sm:$0xff]
      %v194 = vld [vmem:[%s147 + $0xe4] sm:$0xff]
      %v195 = vld [vmem:[%s147 + $0xec] sm:$0xf]
      %v196 = vld [vmem:[%s147 + $0xf0] sm:$0xff]
      %v197 = vld [vmem:[%s147 + $0xf8] sm:$0xff]
      %v198 = vld [vmem:[%s147 + $0x100] sm:$0xf]
      %v199 = vld [vmem:[%s147 + $0x104] sm:$0xff]
      %v200 = vld [vmem:[%s147 + $0x10c] sm:$0xff]
      %v201 = vld [vmem:[%s147 + $0x114] sm:$0xf]
      %v202 = vld [vmem:[%s147 + $0x118] sm:$0xff]
      %v203 = vld [vmem:[%s147 + $0x120] sm:$0xff]
      %v204 = vld [vmem:[%s147 + $0x128] sm:$0xf]
      %v205 = vld [vmem:[%s147 + $0x12c] sm:$0xff]
      %v206 = vld [vmem:[%s147 + $0x134] sm:$0xff]
      %v207 = vld [vmem:[%s147 + $0x13c] sm:$0xf]
      %v208 = vld [vmem:[%s147 + $0x140] sm:$0xff]
      %v209 = vld [vmem:[%s147 + $0x148] sm:$0xff]
      %v210 = vld [vmem:[%s147 + $0x150] sm:$0xf]
      %v211 = vld [vmem:[%s147 + $0x154] sm:$0xff]
      %v212 = vld [vmem:[%s147 + $0x15c] sm:$0xff]
      %v213 = vld [vmem:[%s147 + $0x164] sm:$0xf]
      %v214 = vld [vmem:[%s147 + $0x168] sm:$0xff]
      %v215 = vld [vmem:[%s147 + $0x170] sm:$0xff]
      %v216 = vld [vmem:[%s147 + $0x178] sm:$0xf]
      %v217 = vld [vmem:[%s147 + $0x17c] sm:$0xff]
      %v218 = vld [vmem:[%s147 + $0x184] sm:$0xff]
      %v219 = vld [vmem:[%s147 + $0x18c] sm:$0xf]
      %v220 = vld [vmem:[%s147 + $0x190] sm:$0xff]
      %v221 = vld [vmem:[%s147 + $0x198] sm:$0xff]
      %v222 = vld [vmem:[%s147 + $0x1a0] sm:$0xf]
      %v223 = vld [vmem:[%s147 + $0x1a4] sm:$0xff]
      %v224 = vld [vmem:[%s147 + $0x1ac] sm:$0xff]
      %v225 = vld [vmem:[%s147 + $0x1b4] sm:$0xf]
      %v226 = vld [vmem:[%s147 + $0x1b8] sm:$0xff]
      %v227 = vld [vmem:[%s147 + $0x1c0] sm:$0xff]
      %v228 = vld [vmem:[%s147 + $0x1c8] sm:$0xf]
      %v229 = vld [vmem:[%s147 + $0x1cc] sm:$0xff]
      %v230 = vld [vmem:[%s147 + $0x1d4] sm:$0xff]
      %v231 = vld [vmem:[%s147 + $0x1dc] sm:$0xf]
      %v232 = vld [vmem:[%s147 + $0x1e0] sm:$0xff]
      %v233 = vld [vmem:[%s147 + $0x1e8] sm:$0xff]
      %v234 = vld [vmem:[%s147 + $0x1f0] sm:$0xf]
      %v235 = vld [vmem:[%s147 + $0x1f4] sm:$0xff]
      %v236 = vld [vmem:[%s147 + $0x1fc] sm:$0xff]
      %v237 = vld [vmem:[%s147 + $0x204] sm:$0xf]
      %v238 = vld [vmem:[%s147 + $0x208] sm:$0xff]
      %v239 = vld [vmem:[%s147 + $0x210] sm:$0xff]
      %v240 = vld [vmem:[%s147 + $0x218] sm:$0xf]
      %v241 = vld [vmem:[%s147 + $0x21c] sm:$0xff]
      %v242 = vld [vmem:[%s147 + $0x224] sm:$0xff]
      %v243 = vld [vmem:[%s147 + $0x22c] sm:$0xf]
      %v244 = vld [vmem:[%s147 + $0x230] sm:$0xff]
      %v245 = vld [vmem:[%s147 + $0x238] sm:$0xff]
      %v246 = vld [vmem:[%s147 + $0x240] sm:$0xf]
      %v247 = vld [vmem:[%s147 + $0x244] sm:$0xff]
      %v248 = vld [vmem:[%s147 + $0x24c] sm:$0xff]
      %v249 = vld [vmem:[%s147 + $0x254] sm:$0xf]
      %v250 = vld [vmem:[%s147 + $0x258] sm:$0xff]
      %v251 = vld [vmem:[%s147 + $0x260] sm:$0xff]
      %v252 = vld [vmem:[%s147 + $0x268] sm:$0xf]
      %v253 = vld [vmem:[%s147 + $0x26c] sm:$0xff]
      %v254 = vld [vmem:[%s147 + $0x274] sm:$0xff]
      %v255 = vld [vmem:[%s147 + $0x27c] sm:$0xf]
      %v256 = vunpack.c.l.bf16 %v160
      %v257 = vunpack.c.h.bf16 %v160
      %v258 = vunpack.c.l.bf16 %v161
      %v259 = vunpack.c.h.bf16 %v161
      %v260 = vunpack.c.l.bf16 %v162
      %v261 = vunpack.c.l.bf16 %v163
      %v262 = vunpack.c.h.bf16 %v163
      %v263 = vunpack.c.l.bf16 %v164
      %v264 = vunpack.c.h.bf16 %v164
      %v265 = vunpack.c.l.bf16 %v165
      %v266 = vunpack.c.l.bf16 %v166
      %v267 = vunpack.c.h.bf16 %v166
      %v268 = vunpack.c.l.bf16 %v167
      %v269 = vunpack.c.h.bf16 %v167
      %v270 = vunpack.c.l.bf16 %v168
      %v271 = vunpack.c.l.bf16 %v169
      %v272 = vunpack.c.h.bf16 %v169
      %v273 = vunpack.c.l.bf16 %v170
      %v274 = vunpack.c.h.bf16 %v170
      %v275 = vunpack.c.l.bf16 %v171
      %v276 = vunpack.c.l.bf16 %v172
      %v277 = vunpack.c.h.bf16 %v172
      %v278 = vunpack.c.l.bf16 %v173
      %v279 = vunpack.c.h.bf16 %v173
      %v280 = vunpack.c.l.bf16 %v174
      %v281 = vunpack.c.l.bf16 %v175
      %v282 = vunpack.c.h.bf16 %v175
      %v283 = vunpack.c.l.bf16 %v176
      %v284 = vunpack.c.h.bf16 %v176
      %v285 = vunpack.c.l.bf16 %v177
      %v286 = vunpack.c.l.bf16 %v178
      %v287 = vunpack.c.h.bf16 %v178
      %v288 = vunpack.c.l.bf16 %v179
      %v289 = vunpack.c.h.bf16 %v179
      %v290 = vunpack.c.l.bf16 %v180
      %v291 = vunpack.c.l.bf16 %v181
      %v292 = vunpack.c.h.bf16 %v181
      %v293 = vunpack.c.l.bf16 %v182
      %v294 = vunpack.c.h.bf16 %v182
      %v295 = vunpack.c.l.bf16 %v183
      %v296 = vunpack.c.l.bf16 %v184
      %v297 = vunpack.c.h.bf16 %v184
      %v298 = vunpack.c.l.bf16 %v185
      %v299 = vunpack.c.h.bf16 %v185
      %v300 = vunpack.c.l.bf16 %v186
      %v301 = vunpack.c.l.bf16 %v187
      %v302 = vunpack.c.h.bf16 %v187
      %v303 = vunpack.c.l.bf16 %v188
      %v304 = vunpack.c.h.bf16 %v188
      %v305 = vunpack.c.l.bf16 %v189
      %v306 = vunpack.c.l.bf16 %v190
      %v307 = vunpack.c.h.bf16 %v190
      %v308 = vunpack.c.l.bf16 %v191
      %v309 = vunpack.c.h.bf16 %v191
      %v310 = vunpack.c.l.bf16 %v192
      %v311 = vunpack.c.l.bf16 %v193
      %v312 = vunpack.c.h.bf16 %v193
      %v313 = vunpack.c.l.bf16 %v194
      %v314 = vunpack.c.h.bf16 %v194
      %v315 = vunpack.c.l.bf16 %v195
      %v316 = vunpack.c.l.bf16 %v196
      %v317 = vunpack.c.h.bf16 %v196
      %v318 = vunpack.c.l.bf16 %v197
      %v319 = vunpack.c.h.bf16 %v197
      %v320 = vunpack.c.l.bf16 %v198
      %v321 = vunpack.c.l.bf16 %v199
      %v322 = vunpack.c.h.bf16 %v199
      %v323 = vunpack.c.l.bf16 %v200
      %v324 = vunpack.c.h.bf16 %v200
      %v325 = vunpack.c.l.bf16 %v201
      %v326 = vunpack.c.l.bf16 %v202
      %v327 = vunpack.c.h.bf16 %v202
      %v328 = vunpack.c.l.bf16 %v203
      %v329 = vunpack.c.h.bf16 %v203
      %v330 = vunpack.c.l.bf16 %v204
      %v331 = vunpack.c.l.bf16 %v205
      %v332 = vunpack.c.h.bf16 %v205
      %v333 = vunpack.c.l.bf16 %v206
      %v334 = vunpack.c.h.bf16 %v206
      %v335 = vunpack.c.l.bf16 %v207
      %v336 = vunpack.c.l.bf16 %v208
      %v337 = vunpack.c.h.bf16 %v208
      %v338 = vunpack.c.l.bf16 %v209
      %v339 = vunpack.c.h.bf16 %v209
      %v340 = vunpack.c.l.bf16 %v210
      %v341 = vunpack.c.l.bf16 %v211
      %v342 = vunpack.c.h.bf16 %v211
      %v343 = vunpack.c.l.bf16 %v212
      %v344 = vunpack.c.h.bf16 %v212
      %v345 = vunpack.c.l.bf16 %v213
      %v346 = vunpack.c.l.bf16 %v214
      %v347 = vunpack.c.h.bf16 %v214
      %v348 = vunpack.c.l.bf16 %v215
      %v349 = vunpack.c.h.bf16 %v215
      %v350 = vunpack.c.l.bf16 %v216
      %v351 = vunpack.c.l.bf16 %v217
      %v352 = vunpack.c.h.bf16 %v217
      %v353 = vunpack.c.l.bf16 %v218
      %v354 = vunpack.c.h.bf16 %v218
      %v355 = vunpack.c.l.bf16 %v219
      %v356 = vunpack.c.l.bf16 %v220
      %v357 = vunpack.c.h.bf16 %v220
      %v358 = vunpack.c.l.bf16 %v221
      %v359 = vunpack.c.h.bf16 %v221
      %v360 = vunpack.c.l.bf16 %v222
      %v361 = vunpack.c.l.bf16 %v223
      %v362 = vunpack.c.h.bf16 %v223
      %v363 = vunpack.c.l.bf16 %v224
      %v364 = vunpack.c.h.bf16 %v224
      %v365 = vunpack.c.l.bf16 %v225
      %v366 = vunpack.c.l.bf16 %v226
      %v367 = vunpack.c.h.bf16 %v226
      %v368 = vunpack.c.l.bf16 %v227
      %v369 = vunpack.c.h.bf16 %v227
      %v370 = vunpack.c.l.bf16 %v228
      %v371 = vunpack.c.l.bf16 %v229
      %v372 = vunpack.c.h.bf16 %v229
      %v373 = vunpack.c.l.bf16 %v230
      %v374 = vunpack.c.h.bf16 %v230
      %v375 = vunpack.c.l.bf16 %v231
      %v376 = vunpack.c.l.bf16 %v232
      %v377 = vunpack.c.h.bf16 %v232
      %v378 = vunpack.c.l.bf16 %v233
      %v379 = vunpack.c.h.bf16 %v233
      %v380 = vunpack.c.l.bf16 %v234
      %v381 = vunpack.c.l.bf16 %v235
      %v382 = vunpack.c.h.bf16 %v235
      %v383 = vunpack.c.l.bf16 %v236
      %v384 = vunpack.c.h.bf16 %v236
      %v385 = vunpack.c.l.bf16 %v237
      %v386 = vunpack.c.l.bf16 %v238
      %v387 = vunpack.c.h.bf16 %v238
      %v388 = vunpack.c.l.bf16 %v239
      %v389 = vunpack.c.h.bf16 %v239
      %v390 = vunpack.c.l.bf16 %v240
      %v391 = vunpack.c.l.bf16 %v241
      %v392 = vunpack.c.h.bf16 %v241
      %v393 = vunpack.c.l.bf16 %v242
      %v394 = vunpack.c.h.bf16 %v242
      %v395 = vunpack.c.l.bf16 %v243
      %v396 = vunpack.c.l.bf16 %v244
      %v397 = vunpack.c.h.bf16 %v244
      %v398 = vunpack.c.l.bf16 %v245
      %v399 = vunpack.c.h.bf16 %v245
      %v400 = vunpack.c.l.bf16 %v246
      %v401 = vunpack.c.l.bf16 %v247
      %v402 = vunpack.c.h.bf16 %v247
      %v403 = vunpack.c.l.bf16 %v248
      %v404 = vunpack.c.h.bf16 %v248
      %v405 = vunpack.c.l.bf16 %v249
      %v406 = vunpack.c.l.bf16 %v250
      %v407 = vunpack.c.h.bf16 %v250
      %v408 = vunpack.c.l.bf16 %v251
      %v409 = vunpack.c.h.bf16 %v251
      %v410 = vunpack.c.l.bf16 %v252
      %v411 = vunpack.c.l.bf16 %v253
      %v412 = vunpack.c.h.bf16 %v253
      %v413 = vunpack.c.l.bf16 %v254
      %v414 = vunpack.c.h.bf16 %v254
      %v415 = vunpack.c.l.bf16 %v255
      %v416 = vmul.f32 %v256, %v256
      %v417 = vmul.f32 %v257, %v257
      %v418 = vmul.f32 %v258, %v258
      %v419 = vmul.f32 %v259, %v259
      %v420 = vmul.f32 %v260, %v260
      %v421 = vmul.f32 %v261, %v261
      %v422 = vmul.f32 %v262, %v262
      %v423 = vmul.f32 %v263, %v263
      %v424 = vmul.f32 %v264, %v264
      %v425 = vmul.f32 %v265, %v265
      %v426 = vmul.f32 %v266, %v266
      %v427 = vmul.f32 %v267, %v267
      %v428 = vmul.f32 %v268, %v268
      %v429 = vmul.f32 %v269, %v269
      %v430 = vmul.f32 %v270, %v270
      %v431 = vmul.f32 %v271, %v271
      %v432 = vmul.f32 %v272, %v272
      %v433 = vmul.f32 %v273, %v273
      %v434 = vmul.f32 %v274, %v274
      %v435 = vmul.f32 %v275, %v275
      %v436 = vmul.f32 %v276, %v276
      %v437 = vmul.f32 %v277, %v277
      %v438 = vmul.f32 %v278, %v278
      %v439 = vmul.f32 %v279, %v279
      %v440 = vmul.f32 %v280, %v280
      %v441 = vmul.f32 %v281, %v281
      %v442 = vmul.f32 %v282, %v282
      %v443 = vmul.f32 %v283, %v283
      %v444 = vmul.f32 %v284, %v284
      %v445 = vmul.f32 %v285, %v285
      %v446 = vmul.f32 %v286, %v286
      %v447 = vmul.f32 %v287, %v287
      %v448 = vmul.f32 %v288, %v288
      %v449 = vmul.f32 %v289, %v289
      %v450 = vmul.f32 %v290, %v290
      %v451 = vmul.f32 %v291, %v291
      %v452 = vmul.f32 %v292, %v292
      %v453 = vmul.f32 %v293, %v293
      %v454 = vmul.f32 %v294, %v294
      %v455 = vmul.f32 %v295, %v295
      %v456 = vmul.f32 %v296, %v296
      %v457 = vmul.f32 %v297, %v297
      %v458 = vmul.f32 %v298, %v298
      %v459 = vmul.f32 %v299, %v299
      %v460 = vmul.f32 %v300, %v300
      %v461 = vmul.f32 %v301, %v301
      %v462 = vmul.f32 %v302, %v302
      %v463 = vmul.f32 %v303, %v303
      %v464 = vmul.f32 %v304, %v304
      %v465 = vmul.f32 %v305, %v305
      %v466 = vmul.f32 %v306, %v306
      %v467 = vmul.f32 %v307, %v307
      %v468 = vmul.f32 %v308, %v308
      %v469 = vmul.f32 %v309, %v309
      %v470 = vmul.f32 %v310, %v310
      %v471 = vmul.f32 %v311, %v311
      %v472 = vmul.f32 %v312, %v312
      %v473 = vmul.f32 %v313, %v313
      %v474 = vmul.f32 %v314, %v314
      %v475 = vmul.f32 %v315, %v315
      %v476 = vmul.f32 %v316, %v316
      %v477 = vmul.f32 %v317, %v317
      %v478 = vmul.f32 %v318, %v318
      %v479 = vmul.f32 %v319, %v319
      %v480 = vmul.f32 %v320, %v320
      %v481 = vmul.f32 %v321, %v321
      %v482 = vmul.f32 %v322, %v322
      %v483 = vmul.f32 %v323, %v323
      %v484 = vmul.f32 %v324, %v324
      %v485 = vmul.f32 %v325, %v325
      %v486 = vmul.f32 %v326, %v326
      %v487 = vmul.f32 %v327, %v327
      %v488 = vmul.f32 %v328, %v328
      %v489 = vmul.f32 %v329, %v329
      %v490 = vmul.f32 %v330, %v330
      %v491 = vmul.f32 %v331, %v331
      %v492 = vmul.f32 %v332, %v332
      %v493 = vmul.f32 %v333, %v333
      %v494 = vmul.f32 %v334, %v334
      %v495 = vmul.f32 %v335, %v335
      %v496 = vmul.f32 %v336, %v336
      %v497 = vmul.f32 %v337, %v337
      %v498 = vmul.f32 %v338, %v338
      %v499 = vmul.f32 %v339, %v339
      %v500 = vmul.f32 %v340, %v340
      %v501 = vmul.f32 %v341, %v341
      %v502 = vmul.f32 %v342, %v342
      %v503 = vmul.f32 %v343, %v343
      %v504 = vmul.f32 %v344, %v344
      %v505 = vmul.f32 %v345, %v345
      %v506 = vmul.f32 %v346, %v346
      %v507 = vmul.f32 %v347, %v347
      %v508 = vmul.f32 %v348, %v348
      %v509 = vmul.f32 %v349, %v349
      %v510 = vmul.f32 %v350, %v350
      %v511 = vmul.f32 %v351, %v351
      %v512 = vmul.f32 %v352, %v352
      %v513 = vmul.f32 %v353, %v353
      %v514 = vmul.f32 %v354, %v354
      %v515 = vmul.f32 %v355, %v355
      %v516 = vmul.f32 %v356, %v356
      %v517 = vmul.f32 %v357, %v357
      %v518 = vmul.f32 %v358, %v358
      %v519 = vmul.f32 %v359, %v359
      %v520 = vmul.f32 %v360, %v360
      %v521 = vmul.f32 %v361, %v361
      %v522 = vmul.f32 %v362, %v362
      %v523 = vmul.f32 %v363, %v363
      %v524 = vmul.f32 %v364, %v364
      %v525 = vmul.f32 %v365, %v365
      %v526 = vmul.f32 %v366, %v366
      %v527 = vmul.f32 %v367, %v367
      %v528 = vmul.f32 %v368, %v368
      %v529 = vmul.f32 %v369, %v369
      %v530 = vmul.f32 %v370, %v370
      %v531 = vmul.f32 %v371, %v371
      %v532 = vmul.f32 %v372, %v372
      %v533 = vmul.f32 %v373, %v373
      %v534 = vmul.f32 %v374, %v374
      %v535 = vmul.f32 %v375, %v375
      %v536 = vmul.f32 %v376, %v376
      %v537 = vmul.f32 %v377, %v377
      %v538 = vmul.f32 %v378, %v378
      %v539 = vmul.f32 %v379, %v379
      %v540 = vmul.f32 %v380, %v380
      %v541 = vmul.f32 %v381, %v381
      %v542 = vmul.f32 %v382, %v382
      %v543 = vmul.f32 %v383, %v383
      %v544 = vmul.f32 %v384, %v384
      %v545 = vmul.f32 %v385, %v385
      %v546 = vmul.f32 %v386, %v386
      %v547 = vmul.f32 %v387, %v387
      %v548 = vmul.f32 %v388, %v388
      %v549 = vmul.f32 %v389, %v389
      %v550 = vmul.f32 %v390, %v390
      %v551 = vmul.f32 %v391, %v391
      %v552 = vmul.f32 %v392, %v392
      %v553 = vmul.f32 %v393, %v393
      %v554 = vmul.f32 %v394, %v394
      %v555 = vmul.f32 %v395, %v395
      %v556 = vmul.f32 %v396, %v396
      %v557 = vmul.f32 %v397, %v397
      %v558 = vmul.f32 %v398, %v398
      %v559 = vmul.f32 %v399, %v399
      %v560 = vmul.f32 %v400, %v400
      %v561 = vmul.f32 %v401, %v401
      %v562 = vmul.f32 %v402, %v402
      %v563 = vmul.f32 %v403, %v403
      %v564 = vmul.f32 %v404, %v404
      %v565 = vmul.f32 %v405, %v405
      %v566 = vmul.f32 %v406, %v406
      %v567 = vmul.f32 %v407, %v407
      %v568 = vmul.f32 %v408, %v408
      %v569 = vmul.f32 %v409, %v409
      %v570 = vmul.f32 %v410, %v410
      %v571 = vmul.f32 %v411, %v411
      %v572 = vmul.f32 %v412, %v412
      %v573 = vmul.f32 %v413, %v413
      %v574 = vmul.f32 %v414, %v414
      %v575 = vmul.f32 %v415, %v415
      %v576 = vadd.f32 %v416, %v417
      %v577 = vadd.f32 %v576, %v418
      %v578 = vadd.f32 %v577, %v419
      %vm579 = vcmask 523264
      %v580 = vsel %vm579, %v420, 0.0
      %v581 = vadd.f32 %v578, %v580
      %582 = vadd.xlane.f32.xlu0 %v581
      %v583 = vpop.xlane.xlu0 %582
      %v584 = vadd.f32 %v421, %v422
      %v585 = vadd.f32 %v584, %v423
      %v586 = vadd.f32 %v585, %v424
      %v587 = vsel %vm579, %v425, 0.0
      %v588 = vadd.f32 %v586, %v587
      %589 = vadd.xlane.f32.xlu0 %v588
      %v590 = vpop.xlane.xlu0 %589
      %v591 = vadd.f32 %v426, %v427
      %v592 = vadd.f32 %v591, %v428
      %v593 = vadd.f32 %v592, %v429
      %v594 = vsel %vm579, %v430, 0.0
      %v595 = vadd.f32 %v593, %v594
      %596 = vadd.xlane.f32.xlu0 %v595
      %v597 = vpop.xlane.xlu0 %596
      %v598 = vadd.f32 %v431, %v432
      %v599 = vadd.f32 %v598, %v433
      %v600 = vadd.f32 %v599, %v434
      %v601 = vsel %vm579, %v435, 0.0
      %v602 = vadd.f32 %v600, %v601
      %603 = vadd.xlane.f32.xlu0 %v602
      %v604 = vpop.xlane.xlu0 %603
      %v605 = vadd.f32 %v436, %v437
      %v606 = vadd.f32 %v605, %v438
      %v607 = vadd.f32 %v606, %v439
      %v608 = vsel %vm579, %v440, 0.0
      %v609 = vadd.f32 %v607, %v608
      %610 = vadd.xlane.f32.xlu0 %v609
      %v611 = vpop.xlane.xlu0 %610
      %v612 = vadd.f32 %v441, %v442
      %v613 = vadd.f32 %v612, %v443
      %v614 = vadd.f32 %v613, %v444
      %v615 = vsel %vm579, %v445, 0.0
      %v616 = vadd.f32 %v614, %v615
      %617 = vadd.xlane.f32.xlu0 %v616
      %v618 = vpop.xlane.xlu0 %617
      %v619 = vadd.f32 %v446, %v447
      %v620 = vadd.f32 %v619, %v448
      %v621 = vadd.f32 %v620, %v449
      %v622 = vsel %vm579, %v450, 0.0
      %v623 = vadd.f32 %v621, %v622
      %624 = vadd.xlane.f32.xlu0 %v623
      %v625 = vpop.xlane.xlu0 %624
      %v626 = vadd.f32 %v451, %v452
      %v627 = vadd.f32 %v626, %v453
      %v628 = vadd.f32 %v627, %v454
      %v629 = vsel %vm579, %v455, 0.0
      %v630 = vadd.f32 %v628, %v629
      %631 = vadd.xlane.f32.xlu0 %v630
      %v632 = vpop.xlane.xlu0 %631
      %v633 = vadd.f32 %v456, %v457
      %v634 = vadd.f32 %v633, %v458
      %v635 = vadd.f32 %v634, %v459
      %v636 = vsel %vm579, %v460, 0.0
      %v637 = vadd.f32 %v635, %v636
      %638 = vadd.xlane.f32.xlu0 %v637
      %v639 = vpop.xlane.xlu0 %638
      %v640 = vadd.f32 %v461, %v462
      %v641 = vadd.f32 %v640, %v463
      %v642 = vadd.f32 %v641, %v464
      %v643 = vsel %vm579, %v465, 0.0
      %v644 = vadd.f32 %v642, %v643
      %645 = vadd.xlane.f32.xlu0 %v644
      %v646 = vpop.xlane.xlu0 %645
      %v647 = vadd.f32 %v466, %v467
      %v648 = vadd.f32 %v647, %v468
      %v649 = vadd.f32 %v648, %v469
      %v650 = vsel %vm579, %v470, 0.0
      %v651 = vadd.f32 %v649, %v650
      %652 = vadd.xlane.f32.xlu0 %v651
      %v653 = vpop.xlane.xlu0 %652
      %v654 = vadd.f32 %v471, %v472
      %v655 = vadd.f32 %v654, %v473
      %v656 = vadd.f32 %v655, %v474
      %v657 = vsel %vm579, %v475, 0.0
      %v658 = vadd.f32 %v656, %v657
      %659 = vadd.xlane.f32.xlu0 %v658
      %v660 = vpop.xlane.xlu0 %659
      %v661 = vadd.f32 %v476, %v477
      %v662 = vadd.f32 %v661, %v478
      %v663 = vadd.f32 %v662, %v479
      %v664 = vsel %vm579, %v480, 0.0
      %v665 = vadd.f32 %v663, %v664
      %666 = vadd.xlane.f32.xlu0 %v665
      %v667 = vpop.xlane.xlu0 %666
      %v668 = vadd.f32 %v481, %v482
      %v669 = vadd.f32 %v668, %v483
      %v670 = vadd.f32 %v669, %v484
      %v671 = vsel %vm579, %v485, 0.0
      %v672 = vadd.f32 %v670, %v671
      %673 = vadd.xlane.f32.xlu0 %v672
      %v674 = vpop.xlane.xlu0 %673
      %v675 = vadd.f32 %v486, %v487
      %v676 = vadd.f32 %v675, %v488
      %v677 = vadd.f32 %v676, %v489
      %v678 = vsel %vm579, %v490, 0.0
      %v679 = vadd.f32 %v677, %v678
      %680 = vadd.xlane.f32.xlu0 %v679
      %v681 = vpop.xlane.xlu0 %680
      %v682 = vadd.f32 %v491, %v492
      %v683 = vadd.f32 %v682, %v493
      %v684 = vadd.f32 %v683, %v494
      %v685 = vsel %vm579, %v495, 0.0
      %v686 = vadd.f32 %v684, %v685
      %687 = vadd.xlane.f32.xlu0 %v686
      %v688 = vpop.xlane.xlu0 %687
      %v689 = vadd.f32 %v496, %v497
      %v690 = vadd.f32 %v689, %v498
      %v691 = vadd.f32 %v690, %v499
      %v692 = vsel %vm579, %v500, 0.0
      %v693 = vadd.f32 %v691, %v692
      %694 = vadd.xlane.f32.xlu0 %v693
      %v695 = vpop.xlane.xlu0 %694
      %v696 = vadd.f32 %v501, %v502
      %v697 = vadd.f32 %v696, %v503
      %v698 = vadd.f32 %v697, %v504
      %v699 = vsel %vm579, %v505, 0.0
      %v700 = vadd.f32 %v698, %v699
      %701 = vadd.xlane.f32.xlu0 %v700
      %v702 = vpop.xlane.xlu0 %701
      %v703 = vadd.f32 %v506, %v507
      %v704 = vadd.f32 %v703, %v508
      %v705 = vadd.f32 %v704, %v509
      %v706 = vsel %vm579, %v510, 0.0
      %v707 = vadd.f32 %v705, %v706
      %708 = vadd.xlane.f32.xlu0 %v707
      %v709 = vpop.xlane.xlu0 %708
      %v710 = vadd.f32 %v511, %v512
      %v711 = vadd.f32 %v710, %v513
      %v712 = vadd.f32 %v711, %v514
      %v713 = vsel %vm579, %v515, 0.0
      %v714 = vadd.f32 %v712, %v713
      %715 = vadd.xlane.f32.xlu0 %v714
      %v716 = vpop.xlane.xlu0 %715
      %v717 = vadd.f32 %v516, %v517
      %v718 = vadd.f32 %v717, %v518
      %v719 = vadd.f32 %v718, %v519
      %v720 = vsel %vm579, %v520, 0.0
      %v721 = vadd.f32 %v719, %v720
      %722 = vadd.xlane.f32.xlu0 %v721
      %v723 = vpop.xlane.xlu0 %722
      %v724 = vadd.f32 %v521, %v522
      %v725 = vadd.f32 %v724, %v523
      %v726 = vadd.f32 %v725, %v524
      %v727 = vsel %vm579, %v525, 0.0
      %v728 = vadd.f32 %v726, %v727
      %729 = vadd.xlane.f32.xlu0 %v728
      %v730 = vpop.xlane.xlu0 %729
      %v731 = vadd.f32 %v526, %v527
      %v732 = vadd.f32 %v731, %v528
      %v733 = vadd.f32 %v732, %v529
      %v734 = vsel %vm579, %v530, 0.0
      %v735 = vadd.f32 %v733, %v734
      %736 = vadd.xlane.f32.xlu0 %v735
      %v737 = vpop.xlane.xlu0 %736
      %v738 = vadd.f32 %v531, %v532
      %v739 = vadd.f32 %v738, %v533
      %v740 = vadd.f32 %v739, %v534
      %v741 = vsel %vm579, %v535, 0.0
      %v742 = vadd.f32 %v740, %v741
      %743 = vadd.xlane.f32.xlu0 %v742
      %v744 = vpop.xlane.xlu0 %743
      %v745 = vadd.f32 %v536, %v537
      %v746 = vadd.f32 %v745, %v538
      %v747 = vadd.f32 %v746, %v539
      %v748 = vsel %vm579, %v540, 0.0
      %v749 = vadd.f32 %v747, %v748
      %750 = vadd.xlane.f32.xlu0 %v749
      %v751 = vpop.xlane.xlu0 %750
      %v752 = vadd.f32 %v541, %v542
      %v753 = vadd.f32 %v752, %v543
      %v754 = vadd.f32 %v753, %v544
      %v755 = vsel %vm579, %v545, 0.0
      %v756 = vadd.f32 %v754, %v755
      %757 = vadd.xlane.f32.xlu0 %v756
      %v758 = vpop.xlane.xlu0 %757
      %v759 = vadd.f32 %v546, %v547
      %v760 = vadd.f32 %v759, %v548
      %v761 = vadd.f32 %v760, %v549
      %v762 = vsel %vm579, %v550, 0.0
      %v763 = vadd.f32 %v761, %v762
      %764 = vadd.xlane.f32.xlu0 %v763
      %v765 = vpop.xlane.xlu0 %764
      %v766 = vadd.f32 %v551, %v552
      %v767 = vadd.f32 %v766, %v553
      %v768 = vadd.f32 %v767, %v554
      %v769 = vsel %vm579, %v555, 0.0
      %v770 = vadd.f32 %v768, %v769
      %771 = vadd.xlane.f32.xlu0 %v770
      %v772 = vpop.xlane.xlu0 %771
      %v773 = vadd.f32 %v556, %v557
      %v774 = vadd.f32 %v773, %v558
      %v775 = vadd.f32 %v774, %v559
      %v776 = vsel %vm579, %v560, 0.0
      %v777 = vadd.f32 %v775, %v776
      %778 = vadd.xlane.f32.xlu0 %v777
      %v779 = vpop.xlane.xlu0 %778
      %v780 = vadd.f32 %v561, %v562
      %v781 = vadd.f32 %v780, %v563
      %v782 = vadd.f32 %v781, %v564
      %v783 = vsel %vm579, %v565, 0.0
      %v784 = vadd.f32 %v782, %v783
      %785 = vadd.xlane.f32.xlu0 %v784
      %v786 = vpop.xlane.xlu0 %785
      %v787 = vadd.f32 %v566, %v567
      %v788 = vadd.f32 %v787, %v568
      %v789 = vadd.f32 %v788, %v569
      %v790 = vsel %vm579, %v570, 0.0
      %v791 = vadd.f32 %v789, %v790
      %792 = vadd.xlane.f32.xlu0 %v791
      %v793 = vpop.xlane.xlu0 %792
      %v794 = vadd.f32 %v571, %v572
      %v795 = vadd.f32 %v794, %v573
      %v796 = vadd.f32 %v795, %v574
      %v797 = vsel %vm579, %v575, 0.0
      %v798 = vadd.f32 %v796, %v797
      %799 = vadd.xlane.f32.xlu0 %v798
      %v800 = vpop.xlane.xlu0 %799
      %v801 = vmax.f32 %v583, 1e-24
      %v802 = vmax.f32 %v590, 1e-24
      %v803 = vmax.f32 %v597, 1e-24
      %v804 = vmax.f32 %v604, 1e-24
      %v805 = vmax.f32 %v611, 1e-24
      %v806 = vmax.f32 %v618, 1e-24
      %v807 = vmax.f32 %v625, 1e-24
      %v808 = vmax.f32 %v632, 1e-24
      %v809 = vmax.f32 %v639, 1e-24
      %v810 = vmax.f32 %v646, 1e-24
      %v811 = vmax.f32 %v653, 1e-24
      %v812 = vmax.f32 %v660, 1e-24
      %v813 = vmax.f32 %v667, 1e-24
      %v814 = vmax.f32 %v674, 1e-24
      %v815 = vmax.f32 %v681, 1e-24
      %v816 = vmax.f32 %v688, 1e-24
      %v817 = vmax.f32 %v695, 1e-24
      %v818 = vmax.f32 %v702, 1e-24
      %v819 = vmax.f32 %v709, 1e-24
      %v820 = vmax.f32 %v716, 1e-24
      %v821 = vmax.f32 %v723, 1e-24
      %v822 = vmax.f32 %v730, 1e-24
      %v823 = vmax.f32 %v737, 1e-24
      %v824 = vmax.f32 %v744, 1e-24
      %v825 = vmax.f32 %v751, 1e-24
      %v826 = vmax.f32 %v758, 1e-24
      %v827 = vmax.f32 %v765, 1e-24
      %v828 = vmax.f32 %v772, 1e-24
      %v829 = vmax.f32 %v779, 1e-24
      %v830 = vmax.f32 %v786, 1e-24
      %v831 = vmax.f32 %v793, 1e-24
      %v832 = vmax.f32 %v800, 1e-24
      %v833 = vrsqrt.pop %v801
      %v834 = vrsqrt.pop %v802
      %v835 = vrsqrt.pop %v803
      %v836 = vrsqrt.pop %v804
      %v837 = vrsqrt.pop %v805
      %v838 = vrsqrt.pop %v806
      %v839 = vrsqrt.pop %v807
      %v840 = vrsqrt.pop %v808
      %v841 = vrsqrt.pop %v809
      %v842 = vrsqrt.pop %v810
      %v843 = vrsqrt.pop %v811
      %v844 = vrsqrt.pop %v812
      %v845 = vrsqrt.pop %v813
      %v846 = vrsqrt.pop %v814
      %v847 = vrsqrt.pop %v815
      %v848 = vrsqrt.pop %v816
      %v849 = vrsqrt.pop %v817
      %v850 = vrsqrt.pop %v818
      %v851 = vrsqrt.pop %v819
      %v852 = vrsqrt.pop %v820
      %v853 = vrsqrt.pop %v821
      %v854 = vrsqrt.pop %v822
      %v855 = vrsqrt.pop %v823
      %v856 = vrsqrt.pop %v824
      %v857 = vrsqrt.pop %v825
      %v858 = vrsqrt.pop %v826
      %v859 = vrsqrt.pop %v827
      %v860 = vrsqrt.pop %v828
      %v861 = vrsqrt.pop %v829
      %v862 = vrsqrt.pop %v830
      %v863 = vrsqrt.pop %v831
      %v864 = vrsqrt.pop %v832
      %v865 = vmul.f32 %v256, %v833
      %v866 = vmul.f32 %v257, %v833
      %v867 = vmul.f32 %v258, %v833
      %v868 = vmul.f32 %v259, %v833
      %v869 = vmul.f32 %v260, %v833
      %v870 = vmul.f32 %v261, %v834
      %v871 = vmul.f32 %v262, %v834
      %v872 = vmul.f32 %v263, %v834
      %v873 = vmul.f32 %v264, %v834
      %v874 = vmul.f32 %v265, %v834
      %v875 = vmul.f32 %v266, %v835
      %v876 = vmul.f32 %v267, %v835
      %v877 = vmul.f32 %v268, %v835
      %v878 = vmul.f32 %v269, %v835
      %v879 = vmul.f32 %v270, %v835
      %v880 = vmul.f32 %v271, %v836
      %v881 = vmul.f32 %v272, %v836
      %v882 = vmul.f32 %v273, %v836
      %v883 = vmul.f32 %v274, %v836
      %v884 = vmul.f32 %v275, %v836
      %v885 = vmul.f32 %v276, %v837
      %v886 = vmul.f32 %v277, %v837
      %v887 = vmul.f32 %v278, %v837
      %v888 = vmul.f32 %v279, %v837
      %v889 = vmul.f32 %v280, %v837
      %v890 = vmul.f32 %v281, %v838
      %v891 = vmul.f32 %v282, %v838
      %v892 = vmul.f32 %v283, %v838
      %v893 = vmul.f32 %v284, %v838
      %v894 = vmul.f32 %v285, %v838
      %v895 = vmul.f32 %v286, %v839
      %v896 = vmul.f32 %v287, %v839
      %v897 = vmul.f32 %v288, %v839
      %v898 = vmul.f32 %v289, %v839
      %v899 = vmul.f32 %v290, %v839
      %v900 = vmul.f32 %v291, %v840
      %v901 = vmul.f32 %v292, %v840
      %v902 = vmul.f32 %v293, %v840
      %v903 = vmul.f32 %v294, %v840
      %v904 = vmul.f32 %v295, %v840
      %v905 = vmul.f32 %v296, %v841
      %v906 = vmul.f32 %v297, %v841
      %v907 = vmul.f32 %v298, %v841
      %v908 = vmul.f32 %v299, %v841
      %v909 = vmul.f32 %v300, %v841
      %v910 = vmul.f32 %v301, %v842
      %v911 = vmul.f32 %v302, %v842
      %v912 = vmul.f32 %v303, %v842
      %v913 = vmul.f32 %v304, %v842
      %v914 = vmul.f32 %v305, %v842
      %v915 = vmul.f32 %v306, %v843
      %v916 = vmul.f32 %v307, %v843
      %v917 = vmul.f32 %v308, %v843
      %v918 = vmul.f32 %v309, %v843
      %v919 = vmul.f32 %v310, %v843
      %v920 = vmul.f32 %v311, %v844
      %v921 = vmul.f32 %v312, %v844
      %v922 = vmul.f32 %v313, %v844
      %v923 = vmul.f32 %v314, %v844
      %v924 = vmul.f32 %v315, %v844
      %v925 = vmul.f32 %v316, %v845
      %v926 = vmul.f32 %v317, %v845
      %v927 = vmul.f32 %v318, %v845
      %v928 = vmul.f32 %v319, %v845
      %v929 = vmul.f32 %v320, %v845
      %v930 = vmul.f32 %v321, %v846
      %v931 = vmul.f32 %v322, %v846
      %v932 = vmul.f32 %v323, %v846
      %v933 = vmul.f32 %v324, %v846
      %v934 = vmul.f32 %v325, %v846
      %v935 = vmul.f32 %v326, %v847
      %v936 = vmul.f32 %v327, %v847
      %v937 = vmul.f32 %v328, %v847
      %v938 = vmul.f32 %v329, %v847
      %v939 = vmul.f32 %v330, %v847
      %v940 = vmul.f32 %v331, %v848
      %v941 = vmul.f32 %v332, %v848
      %v942 = vmul.f32 %v333, %v848
      %v943 = vmul.f32 %v334, %v848
      %v944 = vmul.f32 %v335, %v848
      %v945 = vmul.f32 %v336, %v849
      %v946 = vmul.f32 %v337, %v849
      %v947 = vmul.f32 %v338, %v849
      %v948 = vmul.f32 %v339, %v849
      %v949 = vmul.f32 %v340, %v849
      %v950 = vmul.f32 %v341, %v850
      %v951 = vmul.f32 %v342, %v850
      %v952 = vmul.f32 %v343, %v850
      %v953 = vmul.f32 %v344, %v850
      %v954 = vmul.f32 %v345, %v850
      %v955 = vmul.f32 %v346, %v851
      %v956 = vmul.f32 %v347, %v851
      %v957 = vmul.f32 %v348, %v851
      %v958 = vmul.f32 %v349, %v851
      %v959 = vmul.f32 %v350, %v851
      %v960 = vmul.f32 %v351, %v852
      %v961 = vmul.f32 %v352, %v852
      %v962 = vmul.f32 %v353, %v852
      %v963 = vmul.f32 %v354, %v852
      %v964 = vmul.f32 %v355, %v852
      %v965 = vmul.f32 %v356, %v853
      %v966 = vmul.f32 %v357, %v853
      %v967 = vmul.f32 %v358, %v853
      %v968 = vmul.f32 %v359, %v853
      %v969 = vmul.f32 %v360, %v853
      %v970 = vmul.f32 %v361, %v854
      %v971 = vmul.f32 %v362, %v854
      %v972 = vmul.f32 %v363, %v854
      %v973 = vmul.f32 %v364, %v854
      %v974 = vmul.f32 %v365, %v854
      %v975 = vmul.f32 %v366, %v855
      %v976 = vmul.f32 %v367, %v855
      %v977 = vmul.f32 %v368, %v855
      %v978 = vmul.f32 %v369, %v855
      %v979 = vmul.f32 %v370, %v855
      %v980 = vmul.f32 %v371, %v856
      %v981 = vmul.f32 %v372, %v856
      %v982 = vmul.f32 %v373, %v856
      %v983 = vmul.f32 %v374, %v856
      %v984 = vmul.f32 %v375, %v856
      %v985 = vmul.f32 %v376, %v857
      %v986 = vmul.f32 %v377, %v857
      %v987 = vmul.f32 %v378, %v857
      %v988 = vmul.f32 %v379, %v857
      %v989 = vmul.f32 %v380, %v857
      %v990 = vmul.f32 %v381, %v858
      %v991 = vmul.f32 %v382, %v858
      %v992 = vmul.f32 %v383, %v858
      %v993 = vmul.f32 %v384, %v858
      %v994 = vmul.f32 %v385, %v858
      %v995 = vmul.f32 %v386, %v859
      %v996 = vmul.f32 %v387, %v859
      %v997 = vmul.f32 %v388, %v859
      %v998 = vmul.f32 %v389, %v859
      %v999 = vmul.f32 %v390, %v859
      %v1000 = vmul.f32 %v391, %v860
      %v1001 = vmul.f32 %v392, %v860
      %v1002 = vmul.f32 %v393, %v860
      %v1003 = vmul.f32 %v394, %v860
      %v1004 = vmul.f32 %v395, %v860
      %v1005 = vmul.f32 %v396, %v861
      %v1006 = vmul.f32 %v397, %v861
      %v1007 = vmul.f32 %v398, %v861
      %v1008 = vmul.f32 %v399, %v861
      %v1009 = vmul.f32 %v400, %v861
      %v1010 = vmul.f32 %v401, %v862
      %v1011 = vmul.f32 %v402, %v862
      %v1012 = vmul.f32 %v403, %v862
      %v1013 = vmul.f32 %v404, %v862
      %v1014 = vmul.f32 %v405, %v862
      %v1015 = vmul.f32 %v406, %v863
      %v1016 = vmul.f32 %v407, %v863
      %v1017 = vmul.f32 %v408, %v863
      %v1018 = vmul.f32 %v409, %v863
      %v1019 = vmul.f32 %v410, %v863
      %v1020 = vmul.f32 %v411, %v864
      %v1021 = vmul.f32 %v412, %v864
      %v1022 = vmul.f32 %v413, %v864
      %v1023 = vmul.f32 %v414, %v864
      %v1024 = vmul.f32 %v415, %v864
      %v1025 = vpack.c.bf16 %v870, %v865
      %v1026 = vpack.c.bf16 %v871, %v866
      %v1027 = vpack.c.bf16 %v872, %v867
      %v1028 = vpack.c.bf16 %v873, %v868
      %v1029 = vpack.c.bf16 %v874, %v869
      %v1030 = vpack.c.bf16 %v880, %v875
      %v1031 = vpack.c.bf16 %v881, %v876
      %v1032 = vpack.c.bf16 %v882, %v877
      %v1033 = vpack.c.bf16 %v883, %v878
      %v1034 = vpack.c.bf16 %v884, %v879
      %v1035 = vpack.c.bf16 %v890, %v885
      %v1036 = vpack.c.bf16 %v891, %v886
      %v1037 = vpack.c.bf16 %v892, %v887
      %v1038 = vpack.c.bf16 %v893, %v888
      %v1039 = vpack.c.bf16 %v894, %v889
      %v1040 = vpack.c.bf16 %v900, %v895
      %v1041 = vpack.c.bf16 %v901, %v896
      %v1042 = vpack.c.bf16 %v902, %v897
      %v1043 = vpack.c.bf16 %v903, %v898
      %v1044 = vpack.c.bf16 %v904, %v899
      %v1045 = vpack.c.bf16 %v910, %v905
      %v1046 = vpack.c.bf16 %v911, %v906
      %v1047 = vpack.c.bf16 %v912, %v907
      %v1048 = vpack.c.bf16 %v913, %v908
      %v1049 = vpack.c.bf16 %v914, %v909
      %v1050 = vpack.c.bf16 %v920, %v915
      %v1051 = vpack.c.bf16 %v921, %v916
      %v1052 = vpack.c.bf16 %v922, %v917
      %v1053 = vpack.c.bf16 %v923, %v918
      %v1054 = vpack.c.bf16 %v924, %v919
      %v1055 = vpack.c.bf16 %v930, %v925
      %v1056 = vpack.c.bf16 %v931, %v926
      %v1057 = vpack.c.bf16 %v932, %v927
      %v1058 = vpack.c.bf16 %v933, %v928
      %v1059 = vpack.c.bf16 %v934, %v929
      %v1060 = vpack.c.bf16 %v940, %v935
      %v1061 = vpack.c.bf16 %v941, %v936
      %v1062 = vpack.c.bf16 %v942, %v937
      %v1063 = vpack.c.bf16 %v943, %v938
      %v1064 = vpack.c.bf16 %v944, %v939
      %v1065 = vpack.c.bf16 %v950, %v945
      %v1066 = vpack.c.bf16 %v951, %v946
      %v1067 = vpack.c.bf16 %v952, %v947
      %v1068 = vpack.c.bf16 %v953, %v948
      %v1069 = vpack.c.bf16 %v954, %v949
      %v1070 = vpack.c.bf16 %v960, %v955
      %v1071 = vpack.c.bf16 %v961, %v956
      %v1072 = vpack.c.bf16 %v962, %v957
      %v1073 = vpack.c.bf16 %v963, %v958
      %v1074 = vpack.c.bf16 %v964, %v959
      %v1075 = vpack.c.bf16 %v970, %v965
      %v1076 = vpack.c.bf16 %v971, %v966
      %v1077 = vpack.c.bf16 %v972, %v967
      %v1078 = vpack.c.bf16 %v973, %v968
      %v1079 = vpack.c.bf16 %v974, %v969
      %v1080 = vpack.c.bf16 %v980, %v975
      %v1081 = vpack.c.bf16 %v981, %v976
      %v1082 = vpack.c.bf16 %v982, %v977
      %v1083 = vpack.c.bf16 %v983, %v978
      %v1084 = vpack.c.bf16 %v984, %v979
      %v1085 = vpack.c.bf16 %v990, %v985
      %v1086 = vpack.c.bf16 %v991, %v986
      %v1087 = vpack.c.bf16 %v992, %v987
      %v1088 = vpack.c.bf16 %v993, %v988
      %v1089 = vpack.c.bf16 %v994, %v989
      %v1090 = vpack.c.bf16 %v1000, %v995
      %v1091 = vpack.c.bf16 %v1001, %v996
      %v1092 = vpack.c.bf16 %v1002, %v997
      %v1093 = vpack.c.bf16 %v1003, %v998
      %v1094 = vpack.c.bf16 %v1004, %v999
      %v1095 = vpack.c.bf16 %v1010, %v1005
      %v1096 = vpack.c.bf16 %v1011, %v1006
      %v1097 = vpack.c.bf16 %v1012, %v1007
      %v1098 = vpack.c.bf16 %v1013, %v1008
      %v1099 = vpack.c.bf16 %v1014, %v1009
      %v1100 = vpack.c.bf16 %v1020, %v1015
      %v1101 = vpack.c.bf16 %v1021, %v1016
      %v1102 = vpack.c.bf16 %v1022, %v1017
      %v1103 = vpack.c.bf16 %v1023, %v1018
      %v1104 = vpack.c.bf16 %v1024, %v1019
      %v1107 = vsel %vm579, %v1029, 0
      %v1110 = vsel %vm579, %v1034, 0
      %v1113 = vsel %vm579, %v1039, 0
      %v1116 = vsel %vm579, %v1044, 0
      %v1119 = vsel %vm579, %v1049, 0
      %v1122 = vsel %vm579, %v1054, 0
      %v1125 = vsel %vm579, %v1059, 0
      %v1128 = vsel %vm579, %v1064, 0
      %v1131 = vsel %vm579, %v1069, 0
      %v1134 = vsel %vm579, %v1074, 0
      %v1137 = vsel %vm579, %v1079, 0
      %v1140 = vsel %vm579, %v1084, 0
      %v1143 = vsel %vm579, %v1089, 0
      %v1146 = vsel %vm579, %v1094, 0
      %v1149 = vsel %vm579, %v1099, 0
      %v1152 = vsel %vm579, %v1104, 0
      %1154 = vxpose.xlu0.c.b16.start [1/8] %v1025, 128
      %1155 = vxpose.xlu0.c.b16.cont [2/8] %v1030, 128
      %1156 = vxpose.xlu0.c.b16.cont [3/8] %v1035, 128
      %1157 = vxpose.xlu0.c.b16.cont [4/8] %v1040, 128
      %1158 = vxpose.xlu0.c.b16.cont [5/8] %v1045, 128
      %1159 = vxpose.xlu0.c.b16.cont [6/8] %v1050, 128
      %1160 = vxpose.xlu0.c.b16.cont [7/8] %v1055, 128
      %1161 = vxpose.xlu0.c.b16.end [8/8] %v1060, 128
      %v1162 = vpop.trf.xlu0
      %v1163 = vpop.trf.xlu0
      %v1164 = vpop.trf.xlu0
      %v1165 = vpop.trf.xlu0
      %v1166 = vpop.trf.xlu0
      %v1167 = vpop.trf.xlu0
      %v1168 = vpop.trf.xlu0
      %v1169 = vpop.trf.xlu0
      %1170 = vxpose.xlu0.c.b16.start [1/8] %v1026, 128
      %1171 = vxpose.xlu0.c.b16.cont [2/8] %v1031, 128
      %1172 = vxpose.xlu0.c.b16.cont [3/8] %v1036, 128
      %1173 = vxpose.xlu0.c.b16.cont [4/8] %v1041, 128
      %1174 = vxpose.xlu0.c.b16.cont [5/8] %v1046, 128
      %1175 = vxpose.xlu0.c.b16.cont [6/8] %v1051, 128
      %1176 = vxpose.xlu0.c.b16.cont [7/8] %v1056, 128
      %1177 = vxpose.xlu0.c.b16.end [8/8] %v1061, 128
      %v1178 = vpop.trf.xlu0
      %v1179 = vpop.trf.xlu0
      %v1180 = vpop.trf.xlu0
      %v1181 = vpop.trf.xlu0
      %v1182 = vpop.trf.xlu0
      %v1183 = vpop.trf.xlu0
      %v1184 = vpop.trf.xlu0
      %v1185 = vpop.trf.xlu0
      %1186 = vxpose.xlu0.c.b16.start [1/8] %v1027, 128
      %1187 = vxpose.xlu0.c.b16.cont [2/8] %v1032, 128
      %1188 = vxpose.xlu0.c.b16.cont [3/8] %v1037, 128
      %1189 = vxpose.xlu0.c.b16.cont [4/8] %v1042, 128
      %1190 = vxpose.xlu0.c.b16.cont [5/8] %v1047, 128
      %1191 = vxpose.xlu0.c.b16.cont [6/8] %v1052, 128
      %1192 = vxpose.xlu0.c.b16.cont [7/8] %v1057, 128
      %1193 = vxpose.xlu0.c.b16.end [8/8] %v1062, 128
      %v1194 = vpop.trf.xlu0
      %v1195 = vpop.trf.xlu0
      %v1196 = vpop.trf.xlu0
      %v1197 = vpop.trf.xlu0
      %v1198 = vpop.trf.xlu0
      %v1199 = vpop.trf.xlu0
      %v1200 = vpop.trf.xlu0
      %v1201 = vpop.trf.xlu0
      %1202 = vxpose.xlu0.c.b16.start [1/8] %v1028, 128
      %1203 = vxpose.xlu0.c.b16.cont [2/8] %v1033, 128
      %1204 = vxpose.xlu0.c.b16.cont [3/8] %v1038, 128
      %1205 = vxpose.xlu0.c.b16.cont [4/8] %v1043, 128
      %1206 = vxpose.xlu0.c.b16.cont [5/8] %v1048, 128
      %1207 = vxpose.xlu0.c.b16.cont [6/8] %v1053, 128
      %1208 = vxpose.xlu0.c.b16.cont [7/8] %v1058, 128
      %1209 = vxpose.xlu0.c.b16.end [8/8] %v1063, 128
      %v1210 = vpop.trf.xlu0
      %v1211 = vpop.trf.xlu0
      %v1212 = vpop.trf.xlu0
      %v1213 = vpop.trf.xlu0
      %v1214 = vpop.trf.xlu0
      %v1215 = vpop.trf.xlu0
      %v1216 = vpop.trf.xlu0
      %v1217 = vpop.trf.xlu0
      %1218 = vxpose.xlu0.c.b16.start [1/8] %v1107, 128
      %1219 = vxpose.xlu0.c.b16.cont [2/8] %v1110, 128
      %1220 = vxpose.xlu0.c.b16.cont [3/8] %v1113, 128
      %1221 = vxpose.xlu0.c.b16.cont [4/8] %v1116, 128
      %1222 = vxpose.xlu0.c.b16.cont [5/8] %v1119, 128
      %1223 = vxpose.xlu0.c.b16.cont [6/8] %v1122, 128
      %1224 = vxpose.xlu0.c.b16.cont [7/8] %v1125, 128
      %1225 = vxpose.xlu0.c.b16.end [8/8] %v1128, 128
      %v1226 = vpop.trf.xlu0
      %v1227 = vpop.trf.xlu0
      %v1228 = vpop.trf.xlu0
      %v1229 = vpop.trf.xlu0
      %v1230 = vpop.trf.xlu0
      %v1231 = vpop.trf.xlu0
      %v1232 = vpop.trf.xlu0
      %v1233 = vpop.trf.xlu0
      %1234 = vxpose.xlu0.c.b16.start [1/8] %v1065, 128
      %1235 = vxpose.xlu0.c.b16.cont [2/8] %v1070, 128
      %1236 = vxpose.xlu0.c.b16.cont [3/8] %v1075, 128
      %1237 = vxpose.xlu0.c.b16.cont [4/8] %v1080, 128
      %1238 = vxpose.xlu0.c.b16.cont [5/8] %v1085, 128
      %1239 = vxpose.xlu0.c.b16.cont [6/8] %v1090, 128
      %1240 = vxpose.xlu0.c.b16.cont [7/8] %v1095, 128
      %1241 = vxpose.xlu0.c.b16.end [8/8] %v1100, 128
      %v1242 = vpop.trf.xlu0
      %v1243 = vpop.trf.xlu0
      %v1244 = vpop.trf.xlu0
      %v1245 = vpop.trf.xlu0
      %v1246 = vpop.trf.xlu0
      %v1247 = vpop.trf.xlu0
      %v1248 = vpop.trf.xlu0
      %v1249 = vpop.trf.xlu0
      %1250 = vxpose.xlu0.c.b16.start [1/8] %v1066, 128
      %1251 = vxpose.xlu0.c.b16.cont [2/8] %v1071, 128
      %1252 = vxpose.xlu0.c.b16.cont [3/8] %v1076, 128
      %1253 = vxpose.xlu0.c.b16.cont [4/8] %v1081, 128
      %1254 = vxpose.xlu0.c.b16.cont [5/8] %v1086, 128
      %1255 = vxpose.xlu0.c.b16.cont [6/8] %v1091, 128
      %1256 = vxpose.xlu0.c.b16.cont [7/8] %v1096, 128
      %1257 = vxpose.xlu0.c.b16.end [8/8] %v1101, 128
      %v1258 = vpop.trf.xlu0
      %v1259 = vpop.trf.xlu0
      %v1260 = vpop.trf.xlu0
      %v1261 = vpop.trf.xlu0
      %v1262 = vpop.trf.xlu0
      %v1263 = vpop.trf.xlu0
      %v1264 = vpop.trf.xlu0
      %v1265 = vpop.trf.xlu0
      %1266 = vxpose.xlu0.c.b16.start [1/8] %v1067, 128
      %1267 = vxpose.xlu0.c.b16.cont [2/8] %v1072, 128
      %1268 = vxpose.xlu0.c.b16.cont [3/8] %v1077, 128
      %1269 = vxpose.xlu0.c.b16.cont [4/8] %v1082, 128
      %1270 = vxpose.xlu0.c.b16.cont [5/8] %v1087, 128
      %1271 = vxpose.xlu0.c.b16.cont [6/8] %v1092, 128
      %1272 = vxpose.xlu0.c.b16.cont [7/8] %v1097, 128
      %1273 = vxpose.xlu0.c.b16.end [8/8] %v1102, 128
      %v1274 = vpop.trf.xlu0
      %v1275 = vpop.trf.xlu0
      %v1276 = vpop.trf.xlu0
      %v1277 = vpop.trf.xlu0
      %v1278 = vpop.trf.xlu0
      %v1279 = vpop.trf.xlu0
      %v1280 = vpop.trf.xlu0
      %v1281 = vpop.trf.xlu0
      %1282 = vxpose.xlu0.c.b16.start [1/8] %v1068, 128
      %1283 = vxpose.xlu0.c.b16.cont [2/8] %v1073, 128
      %1284 = vxpose.xlu0.c.b16.cont [3/8] %v1078, 128
      %1285 = vxpose.xlu0.c.b16.cont [4/8] %v1083, 128
      %1286 = vxpose.xlu0.c.b16.cont [5/8] %v1088, 128
      %1287 = vxpose.xlu0.c.b16.cont [6/8] %v1093, 128
      %1288 = vxpose.xlu0.c.b16.cont [7/8] %v1098, 128
      %1289 = vxpose.xlu0.c.b16.end [8/8] %v1103, 128
      %v1290 = vpop.trf.xlu0
      %v1291 = vpop.trf.xlu0
      %v1292 = vpop.trf.xlu0
      %v1293 = vpop.trf.xlu0
      %v1294 = vpop.trf.xlu0
      %v1295 = vpop.trf.xlu0
      %v1296 = vpop.trf.xlu0
      %v1297 = vpop.trf.xlu0
      %1298 = vxpose.xlu0.c.b16.start [1/8] %v1131, 128
      %1299 = vxpose.xlu0.c.b16.cont [2/8] %v1134, 128
      %1300 = vxpose.xlu0.c.b16.cont [3/8] %v1137, 128
      %1301 = vxpose.xlu0.c.b16.cont [4/8] %v1140, 128
      %1302 = vxpose.xlu0.c.b16.cont [5/8] %v1143, 128
      %1303 = vxpose.xlu0.c.b16.cont [6/8] %v1146, 128
      %1304 = vxpose.xlu0.c.b16.cont [7/8] %v1149, 128
      %1305 = vxpose.xlu0.c.b16.end [8/8] %v1152, 128
      %v1306 = vpop.trf.xlu0
      %v1307 = vpop.trf.xlu0
      %v1308 = vpop.trf.xlu0
      %v1309 = vpop.trf.xlu0
      %v1310 = vpop.trf.xlu0
      %v1311 = vpop.trf.xlu0
      %v1312 = vpop.trf.xlu0
      %v1313 = vpop.trf.xlu0
      %v1394 = vunpack.c.l.b16 %v1162
      %v1395 = vunpack.c.l.b16 %v1242
      %v1396 = vunpack.c.h.b16 %v1162
      %v1397 = vunpack.c.h.b16 %v1242
      %v1398 = vunpack.c.l.b16 %v1163
      %v1399 = vunpack.c.l.b16 %v1243
      %v1400 = vunpack.c.h.b16 %v1163
      %v1401 = vunpack.c.h.b16 %v1243
      %v1402 = vunpack.c.l.b16 %v1164
      %v1403 = vunpack.c.l.b16 %v1244
      %v1404 = vunpack.c.h.b16 %v1164
      %v1405 = vunpack.c.h.b16 %v1244
      %v1406 = vunpack.c.l.b16 %v1165
      %v1407 = vunpack.c.l.b16 %v1245
      %v1408 = vunpack.c.h.b16 %v1165
      %v1409 = vunpack.c.h.b16 %v1245
      %v1410 = vunpack.c.l.b16 %v1166
      %v1411 = vunpack.c.l.b16 %v1246
      %v1412 = vunpack.c.h.b16 %v1166
      %v1413 = vunpack.c.h.b16 %v1246
      %v1414 = vunpack.c.l.b16 %v1167
      %v1415 = vunpack.c.l.b16 %v1247
      %v1416 = vunpack.c.h.b16 %v1167
      %v1417 = vunpack.c.h.b16 %v1247
      %v1418 = vunpack.c.l.b16 %v1168
      %v1419 = vunpack.c.l.b16 %v1248
      %v1420 = vunpack.c.h.b16 %v1168
      %v1421 = vunpack.c.h.b16 %v1248
      %v1422 = vunpack.c.l.b16 %v1169
      %v1423 = vunpack.c.l.b16 %v1249
      %v1424 = vunpack.c.h.b16 %v1169
      %v1425 = vunpack.c.h.b16 %v1249
      %v1426 = vunpack.c.l.b16 %v1178
      %v1427 = vunpack.c.l.b16 %v1258
      %v1428 = vunpack.c.h.b16 %v1178
      %v1429 = vunpack.c.h.b16 %v1258
      %v1430 = vunpack.c.l.b16 %v1179
      %v1431 = vunpack.c.l.b16 %v1259
      %v1432 = vunpack.c.h.b16 %v1179
      %v1433 = vunpack.c.h.b16 %v1259
      %v1434 = vunpack.c.l.b16 %v1180
      %v1435 = vunpack.c.l.b16 %v1260
      %v1436 = vunpack.c.h.b16 %v1180
      %v1437 = vunpack.c.h.b16 %v1260
      %v1438 = vunpack.c.l.b16 %v1181
      %v1439 = vunpack.c.l.b16 %v1261
      %v1440 = vunpack.c.h.b16 %v1181
      %v1441 = vunpack.c.h.b16 %v1261
      %v1442 = vunpack.c.l.b16 %v1182
      %v1443 = vunpack.c.l.b16 %v1262
      %v1444 = vunpack.c.h.b16 %v1182
      %v1445 = vunpack.c.h.b16 %v1262
      %v1446 = vunpack.c.l.b16 %v1183
      %v1447 = vunpack.c.l.b16 %v1263
      %v1448 = vunpack.c.h.b16 %v1183
      %v1449 = vunpack.c.h.b16 %v1263
      %v1450 = vunpack.c.l.b16 %v1184
      %v1451 = vunpack.c.l.b16 %v1264
      %v1452 = vunpack.c.h.b16 %v1184
      %v1453 = vunpack.c.h.b16 %v1264
      %v1454 = vunpack.c.l.b16 %v1185
      %v1455 = vunpack.c.l.b16 %v1265
      %v1456 = vunpack.c.h.b16 %v1185
      %v1457 = vunpack.c.h.b16 %v1265
      %v1458 = vunpack.c.l.b16 %v1194
      %v1459 = vunpack.c.l.b16 %v1274
      %v1460 = vunpack.c.h.b16 %v1194
      %v1461 = vunpack.c.h.b16 %v1274
      %v1462 = vunpack.c.l.b16 %v1195
      %v1463 = vunpack.c.l.b16 %v1275
      %v1464 = vunpack.c.h.b16 %v1195
      %v1465 = vunpack.c.h.b16 %v1275
      %v1466 = vunpack.c.l.b16 %v1196
      %v1467 = vunpack.c.l.b16 %v1276
      %v1468 = vunpack.c.h.b16 %v1196
      %v1469 = vunpack.c.h.b16 %v1276
      %v1470 = vunpack.c.l.b16 %v1197
      %v1471 = vunpack.c.l.b16 %v1277
      %v1472 = vunpack.c.h.b16 %v1197
      %v1473 = vunpack.c.h.b16 %v1277
      %v1474 = vunpack.c.l.b16 %v1198
      %v1475 = vunpack.c.l.b16 %v1278
      %v1476 = vunpack.c.h.b16 %v1198
      %v1477 = vunpack.c.h.b16 %v1278
      %v1478 = vunpack.c.l.b16 %v1199
      %v1479 = vunpack.c.l.b16 %v1279
      %v1480 = vunpack.c.h.b16 %v1199
      %v1481 = vunpack.c.h.b16 %v1279
      %v1482 = vunpack.c.l.b16 %v1200
      %v1483 = vunpack.c.l.b16 %v1280
      %v1484 = vunpack.c.h.b16 %v1200
      %v1485 = vunpack.c.h.b16 %v1280
      %v1486 = vunpack.c.l.b16 %v1201
      %v1487 = vunpack.c.l.b16 %v1281
      %v1488 = vunpack.c.h.b16 %v1201
      %v1489 = vunpack.c.h.b16 %v1281
      %v1490 = vunpack.c.l.b16 %v1210
      %v1491 = vunpack.c.l.b16 %v1290
      %v1492 = vunpack.c.h.b16 %v1210
      %v1493 = vunpack.c.h.b16 %v1290
      %v1494 = vunpack.c.l.b16 %v1211
      %v1495 = vunpack.c.l.b16 %v1291
      %v1496 = vunpack.c.h.b16 %v1211
      %v1497 = vunpack.c.h.b16 %v1291
      %v1498 = vunpack.c.l.b16 %v1212
      %v1499 = vunpack.c.l.b16 %v1292
      %v1500 = vunpack.c.h.b16 %v1212
      %v1501 = vunpack.c.h.b16 %v1292
      %v1502 = vunpack.c.l.b16 %v1213
      %v1503 = vunpack.c.l.b16 %v1293
      %v1504 = vunpack.c.h.b16 %v1213
      %v1505 = vunpack.c.h.b16 %v1293
      %v1506 = vunpack.c.l.b16 %v1214
      %v1507 = vunpack.c.l.b16 %v1294
      %v1508 = vunpack.c.h.b16 %v1214
      %v1509 = vunpack.c.h.b16 %v1294
      %v1510 = vunpack.c.l.b16 %v1215
      %v1511 = vunpack.c.l.b16 %v1295
      %v1512 = vunpack.c.h.b16 %v1215
      %v1513 = vunpack.c.h.b16 %v1295
      %v1514 = vunpack.c.l.b16 %v1216
      %v1515 = vunpack.c.l.b16 %v1296
      %v1516 = vunpack.c.h.b16 %v1216
      %v1517 = vunpack.c.h.b16 %v1296
      %v1518 = vunpack.c.l.b16 %v1217
      %v1519 = vunpack.c.l.b16 %v1297
      %v1520 = vunpack.c.h.b16 %v1217
      %v1521 = vunpack.c.h.b16 %v1297
      %v1522 = vunpack.c.l.b16 %v1226
      %v1523 = vunpack.c.l.b16 %v1306
      %v1524 = vunpack.c.h.b16 %v1226
      %v1525 = vunpack.c.h.b16 %v1306
      %v1526 = vunpack.c.l.b16 %v1227
      %v1527 = vunpack.c.l.b16 %v1307
      %v1528 = vunpack.c.h.b16 %v1227
      %v1529 = vunpack.c.h.b16 %v1307
      %v1530 = vunpack.c.l.b16 %v1228
      %v1531 = vunpack.c.l.b16 %v1308
      %v1532 = vunpack.c.h.b16 %v1228
      %v1533 = vunpack.c.h.b16 %v1308
      %v1534 = vunpack.c.l.b16 %v1229
      %v1535 = vunpack.c.l.b16 %v1309
      %v1536 = vunpack.c.h.b16 %v1229
      %v1537 = vunpack.c.h.b16 %v1309
      %v1538 = vunpack.c.l.b16 %v1230
      %v1539 = vunpack.c.l.b16 %v1310
      %v1540 = vunpack.c.h.b16 %v1230
      %v1541 = vunpack.c.h.b16 %v1310
      %v1542 = vunpack.c.l.b16 %v1231
      %v1543 = vunpack.c.l.b16 %v1311
      %v1544 = vunpack.c.h.b16 %v1231
      %v1545 = vunpack.c.h.b16 %v1311
      %v1546 = vunpack.c.l.b16 %v1232
      %v1547 = vunpack.c.l.b16 %v1312
      %v1548 = vunpack.c.h.b16 %v1232
      %v1549 = vunpack.c.h.b16 %v1312
      %v1550 = vunpack.c.l.b16 %v1233
      %v1551 = vunpack.c.l.b16 %v1313
      %v1552 = vunpack.c.h.b16 %v1233
      %v1553 = vunpack.c.h.b16 %v1313
      %v1554 = vpack.c.b16 %v1395, %v1394
      %v1555 = vpack.c.b16 %v1397, %v1396
      %v1556 = vpack.c.b16 %v1399, %v1398
      %v1557 = vpack.c.b16 %v1401, %v1400
      %v1558 = vpack.c.b16 %v1403, %v1402
      %v1559 = vpack.c.b16 %v1405, %v1404
      %v1560 = vpack.c.b16 %v1407, %v1406
      %v1561 = vpack.c.b16 %v1409, %v1408
      %v1562 = vpack.c.b16 %v1411, %v1410
      %v1563 = vpack.c.b16 %v1413, %v1412
      %v1564 = vpack.c.b16 %v1415, %v1414
      %v1565 = vpack.c.b16 %v1417, %v1416
      %v1566 = vpack.c.b16 %v1419, %v1418
      %v1567 = vpack.c.b16 %v1421, %v1420
      %v1568 = vpack.c.b16 %v1423, %v1422
      %v1569 = vpack.c.b16 %v1425, %v1424
      %v1570 = vpack.c.b16 %v1427, %v1426
      %v1571 = vpack.c.b16 %v1429, %v1428
      %v1572 = vpack.c.b16 %v1431, %v1430
      %v1573 = vpack.c.b16 %v1433, %v1432
      %v1574 = vpack.c.b16 %v1435, %v1434
      %v1575 = vpack.c.b16 %v1437, %v1436
      %v1576 = vpack.c.b16 %v1439, %v1438
      %v1577 = vpack.c.b16 %v1441, %v1440
      %v1578 = vpack.c.b16 %v1443, %v1442
      %v1579 = vpack.c.b16 %v1445, %v1444
      %v1580 = vpack.c.b16 %v1447, %v1446
      %v1581 = vpack.c.b16 %v1449, %v1448
      %v1582 = vpack.c.b16 %v1451, %v1450
      %v1583 = vpack.c.b16 %v1453, %v1452
      %v1584 = vpack.c.b16 %v1455, %v1454
      %v1585 = vpack.c.b16 %v1457, %v1456
      %v1586 = vpack.c.b16 %v1459, %v1458
      %v1587 = vpack.c.b16 %v1461, %v1460
      %v1588 = vpack.c.b16 %v1463, %v1462
      %v1589 = vpack.c.b16 %v1465, %v1464
      %v1590 = vpack.c.b16 %v1467, %v1466
      %v1591 = vpack.c.b16 %v1469, %v1468
      %v1592 = vpack.c.b16 %v1471, %v1470
      %v1593 = vpack.c.b16 %v1473, %v1472
      %v1594 = vpack.c.b16 %v1475, %v1474
      %v1595 = vpack.c.b16 %v1477, %v1476
      %v1596 = vpack.c.b16 %v1479, %v1478
      %v1597 = vpack.c.b16 %v1481, %v1480
      %v1598 = vpack.c.b16 %v1483, %v1482
      %v1599 = vpack.c.b16 %v1485, %v1484
      %v1600 = vpack.c.b16 %v1487, %v1486
      %v1601 = vpack.c.b16 %v1489, %v1488
      %v1602 = vpack.c.b16 %v1491, %v1490
      %v1603 = vpack.c.b16 %v1493, %v1492
      %v1604 = vpack.c.b16 %v1495, %v1494
      %v1605 = vpack.c.b16 %v1497, %v1496
      %v1606 = vpack.c.b16 %v1499, %v1498
      %v1607 = vpack.c.b16 %v1501, %v1500
      %v1608 = vpack.c.b16 %v1503, %v1502
      %v1609 = vpack.c.b16 %v1505, %v1504
      %v1610 = vpack.c.b16 %v1507, %v1506
      %v1611 = vpack.c.b16 %v1509, %v1508
      %v1612 = vpack.c.b16 %v1511, %v1510
      %v1613 = vpack.c.b16 %v1513, %v1512
      %v1614 = vpack.c.b16 %v1515, %v1514
      %v1615 = vpack.c.b16 %v1517, %v1516
      %v1616 = vpack.c.b16 %v1519, %v1518
      %v1617 = vpack.c.b16 %v1521, %v1520
      %v1618 = vpack.c.b16 %v1523, %v1522
      %v1619 = vpack.c.b16 %v1525, %v1524
      %v1620 = vpack.c.b16 %v1527, %v1526
      %v1621 = vpack.c.b16 %v1529, %v1528
      %v1622 = vpack.c.b16 %v1531, %v1530
      %v1623 = vpack.c.b16 %v1533, %v1532
      %v1624 = vpack.c.b16 %v1535, %v1534
      %v1625 = vpack.c.b16 %v1537, %v1536
      %v1626 = vpack.c.b16 %v1539, %v1538
      %v1627 = vpack.c.b16 %v1541, %v1540
      %v1628 = vpack.c.b16 %v1543, %v1542
      %v1629 = vpack.c.b16 %v1545, %v1544
      %v1630 = vpack.c.b16 %v1547, %v1546
      %v1631 = vpack.c.b16 %v1549, %v1548
      %v1632 = vpack.c.b16 %v1551, %v1550
      %v1633 = vpack.c.b16 %v1553, %v1552
      %1714 = vst [vmem:[%s157] sm:$0xff] %v1554
      %1715 = vst [vmem:[%s157 + $0x8] sm:$0xff] %v1555
      %1716 = vst [vmem:[%s157 + $0x10] sm:$0xff] %v1556
      %1717 = vst [vmem:[%s157 + $0x18] sm:$0xff] %v1557
      %1718 = vst [vmem:[%s157 + $0x20] sm:$0xff] %v1558
      %1719 = vst [vmem:[%s157 + $0x28] sm:$0xff] %v1559
      %1720 = vst [vmem:[%s157 + $0x30] sm:$0xff] %v1560
      %1721 = vst [vmem:[%s157 + $0x38] sm:$0xff] %v1561
      %1722 = vst [vmem:[%s157 + $0x40] sm:$0xff] %v1562
      %1723 = vst [vmem:[%s157 + $0x48] sm:$0xff] %v1563
      %1724 = vst [vmem:[%s157 + $0x50] sm:$0xff] %v1564
      %1725 = vst [vmem:[%s157 + $0x58] sm:$0xff] %v1565
      %1726 = vst [vmem:[%s157 + $0x60] sm:$0xff] %v1566
      %1727 = vst [vmem:[%s157 + $0x68] sm:$0xff] %v1567
      %1728 = vst [vmem:[%s157 + $0x70] sm:$0xff] %v1568
      %1729 = vst [vmem:[%s157 + $0x78] sm:$0xff] %v1569
      %1730 = vst [vmem:[%s157 + $0x80] sm:$0xff] %v1570
      %1731 = vst [vmem:[%s157 + $0x88] sm:$0xff] %v1571
      %1732 = vst [vmem:[%s157 + $0x90] sm:$0xff] %v1572
      %1733 = vst [vmem:[%s157 + $0x98] sm:$0xff] %v1573
      %1734 = vst [vmem:[%s157 + $0xa0] sm:$0xff] %v1574
      %1735 = vst [vmem:[%s157 + $0xa8] sm:$0xff] %v1575
      %1736 = vst [vmem:[%s157 + $0xb0] sm:$0xff] %v1576
      %1737 = vst [vmem:[%s157 + $0xb8] sm:$0xff] %v1577
      %1738 = vst [vmem:[%s157 + $0xc0] sm:$0xff] %v1578
      %1739 = vst [vmem:[%s157 + $0xc8] sm:$0xff] %v1579
      %1740 = vst [vmem:[%s157 + $0xd0] sm:$0xff] %v1580
      %1741 = vst [vmem:[%s157 + $0xd8] sm:$0xff] %v1581
      %1742 = vst [vmem:[%s157 + $0xe0] sm:$0xff] %v1582
      %1743 = vst [vmem:[%s157 + $0xe8] sm:$0xff] %v1583
      %1744 = vst [vmem:[%s157 + $0xf0] sm:$0xff] %v1584
      %1745 = vst [vmem:[%s157 + $0xf8] sm:$0xff] %v1585
      %1746 = vst [vmem:[%s157 + $0x100] sm:$0xff] %v1586
      %1747 = vst [vmem:[%s157 + $0x108] sm:$0xff] %v1587
      %1748 = vst [vmem:[%s157 + $0x110] sm:$0xff] %v1588
      %1749 = vst [vmem:[%s157 + $0x118] sm:$0xff] %v1589
      %1750 = vst [vmem:[%s157 + $0x120] sm:$0xff] %v1590
      %1751 = vst [vmem:[%s157 + $0x128] sm:$0xff] %v1591
      %1752 = vst [vmem:[%s157 + $0x130] sm:$0xff] %v1592
      %1753 = vst [vmem:[%s157 + $0x138] sm:$0xff] %v1593
      %1754 = vst [vmem:[%s157 + $0x140] sm:$0xff] %v1594
      %1755 = vst [vmem:[%s157 + $0x148] sm:$0xff] %v1595
      %1756 = vst [vmem:[%s157 + $0x150] sm:$0xff] %v1596
      %1757 = vst [vmem:[%s157 + $0x158] sm:$0xff] %v1597
      %1758 = vst [vmem:[%s157 + $0x160] sm:$0xff] %v1598
      %1759 = vst [vmem:[%s157 + $0x168] sm:$0xff] %v1599
      %1760 = vst [vmem:[%s157 + $0x170] sm:$0xff] %v1600
      %1761 = vst [vmem:[%s157 + $0x178] sm:$0xff] %v1601
      %1762 = vst [vmem:[%s157 + $0x180] sm:$0xff] %v1602
      %1763 = vst [vmem:[%s157 + $0x188] sm:$0xff] %v1603
      %1764 = vst [vmem:[%s157 + $0x190] sm:$0xff] %v1604
      %1765 = vst [vmem:[%s157 + $0x198] sm:$0xff] %v1605
      %1766 = vst [vmem:[%s157 + $0x1a0] sm:$0xff] %v1606
      %1767 = vst [vmem:[%s157 + $0x1a8] sm:$0xff] %v1607
      %1768 = vst [vmem:[%s157 + $0x1b0] sm:$0xff] %v1608
      %1769 = vst [vmem:[%s157 + $0x1b8] sm:$0xff] %v1609
      %1770 = vst [vmem:[%s157 + $0x1c0] sm:$0xff] %v1610
      %1771 = vst [vmem:[%s157 + $0x1c8] sm:$0xff] %v1611
      %1772 = vst [vmem:[%s157 + $0x1d0] sm:$0xff] %v1612
      %1773 = vst [vmem:[%s157 + $0x1d8] sm:$0xff] %v1613
      %1774 = vst [vmem:[%s157 + $0x1e0] sm:$0xff] %v1614
      %1775 = vst [vmem:[%s157 + $0x1e8] sm:$0xff] %v1615
      %1776 = vst [vmem:[%s157 + $0x1f0] sm:$0xff] %v1616
      %1777 = vst [vmem:[%s157 + $0x1f8] sm:$0xff] %v1617
      %1778 = vst [vmem:[%s157 + $0x200] sm:$0xff] %v1618
      %1779 = vst [vmem:[%s157 + $0x208] sm:$0xff] %v1619
      %1780 = vst [vmem:[%s157 + $0x210] sm:$0xff] %v1620
      %1781 = vst [vmem:[%s157 + $0x218] sm:$0xff] %v1621
      %1782 = vst [vmem:[%s157 + $0x220] sm:$0xff] %v1622
      %1783 = vst [vmem:[%s157 + $0x228] sm:$0xff] %v1623
      %1784 = vst [vmem:[%s157 + $0x230] sm:$0xff] %v1624
      %1785 = vst [vmem:[%s157 + $0x238] sm:$0xff] %v1625
      %1786 = vst [vmem:[%s157 + $0x240] sm:$0xff] %v1626
      %1787 = vst [vmem:[%s157 + $0x248] sm:$0xff] %v1627
      %1788 = vst [vmem:[%s157 + $0x250] sm:$0xff] %v1628
      %1789 = vst [vmem:[%s157 + $0x258] sm:$0xff] %v1629
      %1790 = vst [vmem:[%s157 + $0x260] sm:$0xff] %v1630
      %1791 = vst [vmem:[%s157 + $0x268] sm:$0xff] %v1631
      %1792 = vst [vmem:[%s157 + $0x270] sm:$0xff] %v1632
      %1793 = vst [vmem:[%s157 + $0x278] sm:$0xff] %v1633
      %s1794 = smul.u32 2, %s17
      %p1795 = scmp.lt.s32.totalorder %s16, 1
      %s1796 = scalar_select %p1795, %s16, 1
      %p1797 = scmp.lt.s32.totalorder %s1794, 1
      %s1798 = scalar_select %p1797, %s1794, 1
      %s1799 = smul.addr %s1796, 160
      %s1800 = sadd.s32 %s1798, %s1799
      %s1801 = smul.addr %s1800, 4
      %s1802 = scalar_lea.vmem %s1, %s1801
      // Predicated region
      $region25: #{_lambda_.9} parent=23 // pred_check
        %p1803 = pneg %p72
      $region26: #{_lambda_.9} parent=23 // pred_check_branch
        %1805 = sbr.rel (%p1803) target = $region28
      $region27: #{_lambda_.9} parent=23 // pred_region
        %s1806 = smul.u32 2, %s17
      $region28: #{_lambda_.9} parent=23 // pred_fallthru
        _
    $region24: #{_lambda_.9} parent=5 // pred_fallthru
      _
    %p1807 = scmp.le.s32.totalorder 2, %s7
    // Predicated region
    $region29: #{_lambda_.9} parent=5 // pred_check
      %p1808 = pneg %p1807
    $region30: #{_lambda_.9} parent=5 // pred_check_branch
      %1810 = sbr.rel (%p1808) target = $region32
    $region31: #{_lambda_.9} parent=5 // pred_region
      %s1811 = ssub.s32 %s7, 2
      // Predicated region
      $region33: #{_lambda_.9} parent=31 // pred_check
        %p1812 = pneg %p78
      $region34: #{_lambda_.9} parent=31 // pred_check_branch
        %1814 = sbr.rel (%p1812) target = $region36
      $region35: #{_lambda_.9} parent=31 // pred_region
        %s1815 = smul.u32 2, %s19
        %p1816 = scmp.lt.s32.totalorder %s18, 1
        %s1817 = scalar_select %p1816, %s18, 1
        %p1818 = scmp.lt.s32.totalorder %s1815, 1
        %s1819 = scalar_select %p1818, %s1815, 1
        %s1820 = smul.addr %s1817, 160
        %s1821 = sadd.s32 %s1819, %s1820
        %s1822 = smul.addr %s1821, 4
        %s1823 = scalar_lea.vmem %s1, %s1822
      $region36: #{_lambda_.9} parent=31 // pred_fallthru
        _
    $region32: #{_lambda_.9} parent=5 // pred_fallthru
      _
  $region6: #{_lambda_.9} parent=0 // loop_footer
    %s11 = sadd.s32 1, %s7
  $region7: #{_lambda_.9} parent=0 // loop_footer_branch
    %6 = sbr.rel target = $region3
  $region8: #{_lambda_.9} parent=0 // loop_exit
    _

// kernel: _lambda_.6
$region0: #{_lambda_.6}
  #allocation0 [shape = 'u32[]', space=smem, size = 0x4, offset = 0x4, fixed_abs, tag = 'smem constant byte address 0x4 - core index']
  #allocation1 [shape = 'u32[144,128]{1,0:T(1,128)}', space=vmem, size = 0x12000, scoped, tag = 'internal scratch']
  %s0 = inlined_call_operand.vmem [shape: bf16[256,128], index: 0, kind: input, shape index: {}]
  %s1 = inlined_call_operand.vmem [shape: bf16[128,128], index: 1, kind: input, shape index: {}]
  %s2 = inlined_call_operand.vmem [shape: f32[1,128], index: 2, kind: input, shape index: {}]
  %s3 = inlined_call_operand.vmem [shape: bf16[256,128], index: 3, kind: output, shape index: {}]
  %s4 = sld [smem:[#allocation0]]
  $region22: #{_lambda_.6} parent=0
    _
  %s6 = ssub.s32 1, %s4
  %s7 = scalar_select 0, %s6, %s4
  // Predicated region
  $region2: #{_lambda_.6} parent=0 // pred_check
    _
  $region3: #{_lambda_.6} parent=0 // pred_check_branch
    %9 = sbr.rel (0) target = $region5
  $region4: #{_lambda_.6} parent=0 // pred_region
    _
  $region5: #{_lambda_.6} parent=0 // pred_fallthru
    _
  // Predicated region
  $region6: #{_lambda_.6} parent=0 // pred_check
    _
  $region7: #{_lambda_.6} parent=0 // pred_check_branch
    %11 = sbr.rel (0) target = $region9
  $region8: #{_lambda_.6} parent=0 // pred_region
    _
  $region9: #{_lambda_.6} parent=0 // pred_fallthru
    _
  // Predicated region
  $region10: #{_lambda_.6} parent=0 // pred_check
    _
  $region11: #{_lambda_.6} parent=0 // pred_check_branch
    %13 = sbr.rel (0) target = $region13
  $region12: #{_lambda_.6} parent=0 // pred_region
    _
  $region13: #{_lambda_.6} parent=0 // pred_fallthru
    _
  %v15 = vld [vmem:[%s0] sm:$0xf]
  %v16 = vld [vmem:[%s0 + $0x4] sm:$0xf]
  %v17 = vld [vmem:[%s0 + $0x8] sm:$0xf]
  %v18 = vld [vmem:[%s0 + $0xc] sm:$0xf]
  %v19 = vld [vmem:[%s0 + $0x10] sm:$0xf]
  %v20 = vld [vmem:[%s0 + $0x14] sm:$0xf]
  %v21 = vld [vmem:[%s0 + $0x18] sm:$0xf]
  %v22 = vld [vmem:[%s0 + $0x1c] sm:$0xf]
  %v23 = vld [vmem:[%s0 + $0x20] sm:$0xf]
  %v24 = vld [vmem:[%s0 + $0x24] sm:$0xf]
  %v25 = vld [vmem:[%s0 + $0x28] sm:$0xf]
  %v26 = vld [vmem:[%s0 + $0x2c] sm:$0xf]
  %v27 = vld [vmem:[%s0 + $0x30] sm:$0xf]
  %v28 = vld [vmem:[%s0 + $0x34] sm:$0xf]
  %v29 = vld [vmem:[%s0 + $0x38] sm:$0xf]
  %v30 = vld [vmem:[%s0 + $0x3c] sm:$0xf]
  %v31 = vld [vmem:[%s0 + $0x40] sm:$0xf]
  %v32 = vld [vmem:[%s0 + $0x44] sm:$0xf]
  %v33 = vld [vmem:[%s0 + $0x48] sm:$0xf]
  %v34 = vld [vmem:[%s0 + $0x4c] sm:$0xf]
  %v35 = vld [vmem:[%s0 + $0x50] sm:$0xf]
  %v36 = vld [vmem:[%s0 + $0x54] sm:$0xf]
  %v37 = vld [vmem:[%s0 + $0x58] sm:$0xf]
  %v38 = vld [vmem:[%s0 + $0x5c] sm:$0xf]
  %v39 = vld [vmem:[%s0 + $0x60] sm:$0xf]
  %v40 = vld [vmem:[%s0 + $0x64] sm:$0xf]
  %v41 = vld [vmem:[%s0 + $0x68] sm:$0xf]
  %v42 = vld [vmem:[%s0 + $0x6c] sm:$0xf]
  %v43 = vld [vmem:[%s0 + $0x70] sm:$0xf]
  %v44 = vld [vmem:[%s0 + $0x74] sm:$0xf]
  %v45 = vld [vmem:[%s0 + $0x78] sm:$0xf]
  %v46 = vld [vmem:[%s0 + $0x7c] sm:$0xf]
  %v47 = vld [vmem:[%s1] sm:$0xf]
  %v48 = vld [vmem:[%s1 + $0x4] sm:$0xf]
  %v49 = vld [vmem:[%s1 + $0x8] sm:$0xf]
  %v50 = vld [vmem:[%s1 + $0xc] sm:$0xf]
  %v51 = vld [vmem:[%s1 + $0x10] sm:$0xf]
  %v52 = vld [vmem:[%s1 + $0x14] sm:$0xf]
  %v53 = vld [vmem:[%s1 + $0x18] sm:$0xf]
  %v54 = vld [vmem:[%s1 + $0x1c] sm:$0xf]
  %v55 = vld [vmem:[%s1 + $0x20] sm:$0xf]
  %v56 = vld [vmem:[%s1 + $0x24] sm:$0xf]
  %v57 = vld [vmem:[%s1 + $0x28] sm:$0xf]
  %v58 = vld [vmem:[%s1 + $0x2c] sm:$0xf]
  %v59 = vld [vmem:[%s1 + $0x30] sm:$0xf]
  %v60 = vld [vmem:[%s1 + $0x34] sm:$0xf]
  %v61 = vld [vmem:[%s1 + $0x38] sm:$0xf]
  %v62 = vld [vmem:[%s1 + $0x3c] sm:$0xf]
  %v63 = vld [vmem:[%s2] sm:$0x1]
  %v65 = vlaneseq
  %v66 = vshrl.u32 %v65, 7
  %v67 = vsub.s32 0, %v66
  %v68 = vrot.slane %v63, %v67
  %v102 = vunpack.c.l.b16 %v15
  %v103 = vunpack.c.l.b16 %v16
  %v104 = vunpack.c.l.b16 %v17
  %v105 = vunpack.c.l.b16 %v18
  %v106 = vunpack.c.l.b16 %v19
  %v107 = vunpack.c.l.b16 %v20
  %v108 = vunpack.c.l.b16 %v21
  %v109 = vunpack.c.l.b16 %v22
  %v110 = vunpack.c.l.b16 %v23
  %v111 = vunpack.c.l.b16 %v24
  %v112 = vunpack.c.l.b16 %v25
  %v113 = vunpack.c.l.b16 %v26
  %v114 = vunpack.c.l.b16 %v27
  %v115 = vunpack.c.l.b16 %v28
  %v116 = vunpack.c.l.b16 %v29
  %v117 = vunpack.c.l.b16 %v30
  %v118 = vunpack.c.l.b16 %v31
  %v119 = vunpack.c.l.b16 %v32
  %v120 = vunpack.c.l.b16 %v33
  %v121 = vunpack.c.l.b16 %v34
  %v122 = vunpack.c.l.b16 %v35
  %v123 = vunpack.c.l.b16 %v36
  %v124 = vunpack.c.l.b16 %v37
  %v125 = vunpack.c.l.b16 %v38
  %v126 = vunpack.c.l.b16 %v39
  %v127 = vunpack.c.l.b16 %v40
  %v128 = vunpack.c.l.b16 %v41
  %v129 = vunpack.c.l.b16 %v42
  %v130 = vunpack.c.l.b16 %v43
  %v131 = vunpack.c.l.b16 %v44
  %v132 = vunpack.c.l.b16 %v45
  %v133 = vunpack.c.l.b16 %v46
  %v134 = vpack.c.b16 %v103, %v102
  %v135 = vpack.c.b16 %v105, %v104
  %v136 = vpack.c.b16 %v107, %v106
  %v137 = vpack.c.b16 %v109, %v108
  %v138 = vpack.c.b16 %v111, %v110
  %v139 = vpack.c.b16 %v113, %v112
  %v140 = vpack.c.b16 %v115, %v114
  %v141 = vpack.c.b16 %v117, %v116
  %v142 = vpack.c.b16 %v119, %v118
  %v143 = vpack.c.b16 %v121, %v120
  %v144 = vpack.c.b16 %v123, %v122
  %v145 = vpack.c.b16 %v125, %v124
  %v146 = vpack.c.b16 %v127, %v126
  %v147 = vpack.c.b16 %v129, %v128
  %v148 = vpack.c.b16 %v131, %v130
  %v149 = vpack.c.b16 %v133, %v132
  %v182 = vunpack.c.l.b16 %v47
  %v183 = vunpack.c.l.b16 %v48
  %v184 = vunpack.c.l.b16 %v49
  %v185 = vunpack.c.l.b16 %v50
  %v186 = vunpack.c.l.b16 %v51
  %v187 = vunpack.c.l.b16 %v52
  %v188 = vunpack.c.l.b16 %v53
  %v189 = vunpack.c.l.b16 %v54
  %v190 = vunpack.c.l.b16 %v55
  %v191 = vunpack.c.l.b16 %v56
  %v192 = vunpack.c.l.b16 %v57
  %v193 = vunpack.c.l.b16 %v58
  %v194 = vunpack.c.l.b16 %v59
  %v195 = vunpack.c.l.b16 %v60
  %v196 = vunpack.c.l.b16 %v61
  %v197 = vunpack.c.l.b16 %v62
  %v198 = vpack.c.b16 %v183, %v182
  %v199 = vpack.c.b16 %v185, %v184
  %v200 = vpack.c.b16 %v187, %v186
  %v201 = vpack.c.b16 %v189, %v188
  %v202 = vpack.c.b16 %v191, %v190
  %v203 = vpack.c.b16 %v193, %v192
  %v204 = vpack.c.b16 %v195, %v194
  %v205 = vpack.c.b16 %v197, %v196
  %214 = vmatprep.subr.bf16.mxu0 0
  %215 = vmatpush1.bf16.msra.mxu0 %v198
  %216 = vmatprep.subr.bf16.mxu0 0
  %217 = vmatpush1.bf16.msra.mxu0 %v199
  %218 = vmatprep.subr.bf16.mxu0 0
  %219 = vmatpush1.bf16.msra.mxu0 %v200
  %220 = vmatprep.subr.bf16.mxu0 0
  %221 = vmatpush1.bf16.msra.mxu0 %v201
  %222 = vmatprep.subr.bf16.mxu0 0
  %223 = vmatpush1.bf16.msra.mxu0 %v202
  %224 = vmatprep.subr.bf16.mxu0 0
  %225 = vmatpush1.bf16.msra.mxu0 %v203
  %226 = vmatprep.subr.bf16.mxu0 0
  %227 = vmatpush1.bf16.msra.mxu0 %v204
  %228 = vmatprep.subr.bf16.mxu0 0
  %229 = vmatpush1.bf16.msra.mxu0 %v205
  %230 = vmatprep.subr.bf16.mxu0 0
  %231 = vmatpush1.bf16.msra.mxu0 0
  %232 = vmatprep.subr.bf16.mxu0 0
  %233 = vmatpush1.bf16.msra.mxu0 0
  %234 = vmatprep.subr.bf16.mxu0 0
  %235 = vmatpush1.bf16.msra.mxu0 0
  %236 = vmatprep.subr.bf16.mxu0 0
  %237 = vmatpush1.bf16.msra.mxu0 0
  %238 = vmatprep.subr.bf16.mxu0 0
  %239 = vmatpush1.bf16.msra.mxu0 0
  %240 = vmatprep.subr.bf16.mxu0 0
  %241 = vmatpush1.bf16.msra.mxu0 0
  %242 = vmatprep.subr.bf16.mxu0 0
  %243 = vmatpush1.bf16.msra.mxu0 0
  %244 = vmatprep.subr.bf16.mxu0 0
  %245 = vmatpush1.bf16.msra.mxu0 0
  %246 = vmatprep.mubr.bf16.mxu0 0
  %247 = vmatmul.mubr.bf16.gmra.mrb[0].mxu0 %v134
  %v248 = vpop.f32.mrb[0].mxu0
  %v249 = vadd.f32 %v68, %v248
  %v250 = vpop.f32.mrb[0].mxu0
  %v251 = vpop.f32.mrb[0].mxu0
  %v252 = vadd.f32 %v68, %v251
  %v253 = vpop.f32.mrb[0].mxu0
  %254 = vmatprep.mubr.bf16.mxu0 0
  %255 = vmatmul.mubr.bf16.gmra.mrb[0].mxu0 %v135
  %v256 = vpop.f32.mrb[0].mxu0
  %v257 = vadd.f32 %v68, %v256
  %v258 = vpop.f32.mrb[0].mxu0
  %v259 = vpop.f32.mrb[0].mxu0
  %v260 = vadd.f32 %v68, %v259
  %v261 = vpop.f32.mrb[0].mxu0
  %262 = vmatprep.mubr.bf16.mxu0 0
  %263 = vmatmul.mubr.bf16.gmra.mrb[0].mxu0 %v136
  %v264 = vpop.f32.mrb[0].mxu0
  %v265 = vadd.f32 %v68, %v264
  %v266 = vpop.f32.mrb[0].mxu0
  %v267 = vpop.f32.mrb[0].mxu0
  %v268 = vadd.f32 %v68, %v267
  %v269 = vpop.f32.mrb[0].mxu0
  %270 = vmatprep.mubr.bf16.mxu0 0
  %271 = vmatmul.mubr.bf16.gmra.mrb[0].mxu0 %v137
  %v272 = vpop.f32.mrb[0].mxu0
  %v273 = vadd.f32 %v68, %v272
  %v274 = vpop.f32.mrb[0].mxu0
  %v275 = vpop.f32.mrb[0].mxu0
  %v276 = vadd.f32 %v68, %v275
  %v277 = vpop.f32.mrb[0].mxu0
  %278 = vmatprep.mubr.bf16.mxu0 0
  %279 = vmatmul.mubr.bf16.gmra.mrb[0].mxu0 %v138
  %v280 = vpop.f32.mrb[0].mxu0
  %v281 = vadd.f32 %v68, %v280
  %v282 = vpop.f32.mrb[0].mxu0
  %v283 = vpop.f32.mrb[0].mxu0
  %v284 = vadd.f32 %v68, %v283
  %v285 = vpop.f32.mrb[0].mxu0
  %286 = vmatprep.mubr.bf16.mxu0 0
  %287 = vmatmul.mubr.bf16.gmra.mrb[0].mxu0 %v139
  %v288 = vpop.f32.mrb[0].mxu0
  %v289 = vadd.f32 %v68, %v288
  %v290 = vpop.f32.mrb[0].mxu0
  %v291 = vpop.f32.mrb[0].mxu0
  %v292 = vadd.f32 %v68, %v291
  %v293 = vpop.f32.mrb[0].mxu0
  %294 = vmatprep.mubr.bf16.mxu0 0
  %295 = vmatmul.mubr.bf16.gmra.mrb[0].mxu0 %v140
  %v296 = vpop.f32.mrb[0].mxu0
  %v297 = vadd.f32 %v68, %v296
  %v298 = vpop.f32.mrb[0].mxu0
  %v299 = vpop.f32.mrb[0].mxu0
  %v300 = vadd.f32 %v68, %v299
  %v301 = vpop.f32.mrb[0].mxu0
  %302 = vmatprep.mubr.bf16.mxu0 0
  %303 = vmatmul.mubr.bf16.gmra.mrb[0].mxu0 %v141
  %v304 = vpop.f32.mrb[0].mxu0
  %v305 = vadd.f32 %v68, %v304
  %v306 = vpop.f32.mrb[0].mxu0
  %v307 = vpop.f32.mrb[0].mxu0
  %v308 = vadd.f32 %v68, %v307
  %v309 = vpop.f32.mrb[0].mxu0
  %310 = vmatprep.mubr.bf16.mxu0 0
  %311 = vmatmul.mubr.bf16.gmra.mrb[0].mxu0 %v142
  %v312 = vpop.f32.mrb[0].mxu0
  %v313 = vadd.f32 %v68, %v312
  %v314 = vpop.f32.mrb[0].mxu0
  %v315 = vpop.f32.mrb[0].mxu0
  %v316 = vadd.f32 %v68, %v315
  %v317 = vpop.f32.mrb[0].mxu0
  %318 = vmatprep.mubr.bf16.mxu0 0
  %319 = vmatmul.mubr.bf16.gmra.mrb[0].mxu0 %v143
  %v320 = vpop.f32.mrb[0].mxu0
  %v321 = vadd.f32 %v68, %v320
  %v322 = vpop.f32.mrb[0].mxu0
  %v323 = vpop.f32.mrb[0].mxu0
  %v324 = vadd.f32 %v68, %v323
  %v325 = vpop.f32.mrb[0].mxu0
  %326 = vmatprep.mubr.bf16.mxu0 0
  %327 = vmatmul.mubr.bf16.gmra.mrb[0].mxu0 %v144
  %v328 = vpop.f32.mrb[0].mxu0
  %v329 = vadd.f32 %v68, %v328
  %v330 = vpop.f32.mrb[0].mxu0
  %v331 = vpop.f32.mrb[0].mxu0
  %v332 = vadd.f32 %v68, %v331
  %v333 = vpop.f32.mrb[0].mxu0
  %334 = vmatprep.mubr.bf16.mxu0 0
  %335 = vmatmul.mubr.bf16.gmra.mrb[0].mxu0 %v145
  %v336 = vpop.f32.mrb[0].mxu0
  %v337 = vadd.f32 %v68, %v336
  %v338 = vpop.f32.mrb[0].mxu0
  %v339 = vpop.f32.mrb[0].mxu0
  %v340 = vadd.f32 %v68, %v339
  %v341 = vpop.f32.mrb[0].mxu0
  %342 = vmatprep.mubr.bf16.mxu0 0
  %343 = vmatmul.mubr.bf16.gmra.mrb[0].mxu0 %v146
  %v344 = vpop.f32.mrb[0].mxu0
  %v345 = vadd.f32 %v68, %v344
  %v346 = vpop.f32.mrb[0].mxu0
  %v347 = vpop.f32.mrb[0].mxu0
  %v348 = vadd.f32 %v68, %v347
  %v349 = vpop.f32.mrb[0].mxu0
  %350 = vmatprep.mubr.bf16.mxu0 0
  %351 = vmatmul.mubr.bf16.gmra.mrb[0].mxu0 %v147
  %v352 = vpop.f32.mrb[0].mxu0
  %v353 = vadd.f32 %v68, %v352
  %v354 = vpop.f32.mrb[0].mxu0
  %v355 = vpop.f32.mrb[0].mxu0
  %v356 = vadd.f32 %v68, %v355
  %v357 = vpop.f32.mrb[0].mxu0
  %358 = vmatprep.mubr.bf16.mxu0 0
  %359 = vmatmul.mubr.bf16.gmra.mrb[0].mxu0 %v148
  %v360 = vpop.f32.mrb[0].mxu0
  %v361 = vadd.f32 %v68, %v360
  %v362 = vpop.f32.mrb[0].mxu0
  %v363 = vpop.f32.mrb[0].mxu0
  %v364 = vadd.f32 %v68, %v363
  %v365 = vpop.f32.mrb[0].mxu0
  %366 = vmatprep.mubr.bf16.mxu0 0
  %367 = vmatmul.mubr.bf16.gmra.mrb[0].mxu0 %v149
  %v368 = vpop.f32.mrb[0].mxu0
  %v369 = vadd.f32 %v68, %v368
  %v370 = vpop.f32.mrb[0].mxu0
  %v371 = vpop.f32.mrb[0].mxu0
  %v372 = vadd.f32 %v68, %v371
  %v373 = vpop.f32.mrb[0].mxu0
  %374 = vdwg.mxu0
  %v375 = vmax.f32 %v249, 0.0
  %v376 = vmax.f32 %v252, 0.0
  %v377 = vmax.f32 %v257, 0.0
  %v378 = vmax.f32 %v260, 0.0
  %v379 = vmax.f32 %v265, 0.0
  %v380 = vmax.f32 %v268, 0.0
  %v381 = vmax.f32 %v273, 0.0
  %v382 = vmax.f32 %v276, 0.0
  %v383 = vmax.f32 %v281, 0.0
  %v384 = vmax.f32 %v284, 0.0
  %v385 = vmax.f32 %v289, 0.0
  %v386 = vmax.f32 %v292, 0.0
  %v387 = vmax.f32 %v297, 0.0
  %v388 = vmax.f32 %v300, 0.0
  %v389 = vmax.f32 %v305, 0.0
  %v390 = vmax.f32 %v308, 0.0
  %v391 = vmax.f32 %v313, 0.0
  %v392 = vmax.f32 %v316, 0.0
  %v393 = vmax.f32 %v321, 0.0
  %v394 = vmax.f32 %v324, 0.0
  %v395 = vmax.f32 %v329, 0.0
  %v396 = vmax.f32 %v332, 0.0
  %v397 = vmax.f32 %v337, 0.0
  %v398 = vmax.f32 %v340, 0.0
  %v399 = vmax.f32 %v345, 0.0
  %v400 = vmax.f32 %v348, 0.0
  %v401 = vmax.f32 %v353, 0.0
  %v402 = vmax.f32 %v356, 0.0
  %v403 = vmax.f32 %v361, 0.0
  %v404 = vmax.f32 %v364, 0.0
  %v405 = vmax.f32 %v369, 0.0
  %v406 = vmax.f32 %v372, 0.0
  %v407 = vpack.c.bf16 %v376, %v375
  %v408 = vpack.c.bf16 %v378, %v377
  %v409 = vpack.c.bf16 %v380, %v379
  %v410 = vpack.c.bf16 %v382, %v381
  %v411 = vpack.c.bf16 %v384, %v383
  %v412 = vpack.c.bf16 %v386, %v385
  %v413 = vpack.c.bf16 %v388, %v387
  %v414 = vpack.c.bf16 %v390, %v389
  %v415 = vpack.c.bf16 %v392, %v391
  %v416 = vpack.c.bf16 %v394, %v393
  %v417 = vpack.c.bf16 %v396, %v395
  %v418 = vpack.c.bf16 %v398, %v397
  %v419 = vpack.c.bf16 %v400, %v399
  %v420 = vpack.c.bf16 %v402, %v401
  %v421 = vpack.c.bf16 %v404, %v403
  %v422 = vpack.c.bf16 %v406, %v405
  %v439 = vunpack.c.l.b16 %v407
  %v440 = vunpack.c.h.b16 %v407
  %v441 = vunpack.c.l.b16 %v408
  %v442 = vunpack.c.h.b16 %v408
  %v443 = vunpack.c.l.b16 %v409
  %v444 = vunpack.c.h.b16 %v409
  %v445 = vunpack.c.l.b16 %v410
  %v446 = vunpack.c.h.b16 %v410
  %v447 = vunpack.c.l.b16 %v411
  %v448 = vunpack.c.h.b16 %v411
  %v449 = vunpack.c.l.b16 %v412
  %v450 = vunpack.c.h.b16 %v412
  %v451 = vunpack.c.l.b16 %v413
  %v452 = vunpack.c.h.b16 %v413
  %v453 = vunpack.c.l.b16 %v414
  %v454 = vunpack.c.h.b16 %v414
  %v455 = vunpack.c.l.b16 %v415
  %v456 = vunpack.c.h.b16 %v415
  %v457 = vunpack.c.l.b16 %v416
  %v458 = vunpack.c.h.b16 %v416
  %v459 = vunpack.c.l.b16 %v417
  %v460 = vunpack.c.h.b16 %v417
  %v461 = vunpack.c.l.b16 %v418
  %v462 = vunpack.c.h.b16 %v418
  %v463 = vunpack.c.l.b16 %v419
  %v464 = vunpack.c.h.b16 %v419
  %v465 = vunpack.c.l.b16 %v420
  %v466 = vunpack.c.h.b16 %v420
  %v467 = vunpack.c.l.b16 %v421
  %v468 = vunpack.c.h.b16 %v421
  %v469 = vunpack.c.l.b16 %v422
  %v470 = vunpack.c.h.b16 %v422
  %v471 = vpack.c.b16 %v439, %v439
  %v472 = vpack.c.b16 %v440, %v440
  %v473 = vpack.c.b16 %v441, %v441
  %v474 = vpack.c.b16 %v442, %v442
  %v475 = vpack.c.b16 %v443, %v443
  %v476 = vpack.c.b16 %v444, %v444
  %v477 = vpack.c.b16 %v445, %v445
  %v478 = vpack.c.b16 %v446, %v446
  %v479 = vpack.c.b16 %v447, %v447
  %v480 = vpack.c.b16 %v448, %v448
  %v481 = vpack.c.b16 %v449, %v449
  %v482 = vpack.c.b16 %v450, %v450
  %v483 = vpack.c.b16 %v451, %v451
  %v484 = vpack.c.b16 %v452, %v452
  %v485 = vpack.c.b16 %v453, %v453
  %v486 = vpack.c.b16 %v454, %v454
  %v487 = vpack.c.b16 %v455, %v455
  %v488 = vpack.c.b16 %v456, %v456
  %v489 = vpack.c.b16 %v457, %v457
  %v490 = vpack.c.b16 %v458, %v458
  %v491 = vpack.c.b16 %v459, %v459
  %v492 = vpack.c.b16 %v460, %v460
  %v493 = vpack.c.b16 %v461, %v461
  %v494 = vpack.c.b16 %v462, %v462
  %v495 = vpack.c.b16 %v463, %v463
  %v496 = vpack.c.b16 %v464, %v464
  %v497 = vpack.c.b16 %v465, %v465
  %v498 = vpack.c.b16 %v466, %v466
  %v499 = vpack.c.b16 %v467, %v467
  %v500 = vpack.c.b16 %v468, %v468
  %v501 = vpack.c.b16 %v469, %v469
  %v502 = vpack.c.b16 %v470, %v470
  %535 = vst [vmem:[%s3] sm:$0xf] %v471
  %536 = vst [vmem:[%s3 + $0x4] sm:$0xf] %v472
  %537 = vst [vmem:[%s3 + $0x8] sm:$0xf] %v473
  %538 = vst [vmem:[%s3 + $0xc] sm:$0xf] %v474
  %539 = vst [vmem:[%s3 + $0x10] sm:$0xf] %v475
  %540 = vst [vmem:[%s3 + $0x14] sm:$0xf] %v476
  %541 = vst [vmem:[%s3 + $0x18] sm:$0xf] %v477
  %542 = vst [vmem:[%s3 + $0x1c] sm:$0xf] %v478
  %543 = vst [vmem:[%s3 + $0x20] sm:$0xf] %v479
  %544 = vst [vmem:[%s3 + $0x24] sm:$0xf] %v480
  %545 = vst [vmem:[%s3 + $0x28] sm:$0xf] %v481
  %546 = vst [vmem:[%s3 + $0x2c] sm:$0xf] %v482
  %547 = vst [vmem:[%s3 + $0x30] sm:$0xf] %v483
  %548 = vst [vmem:[%s3 + $0x34] sm:$0xf] %v484
  %549 = vst [vmem:[%s3 + $0x38] sm:$0xf] %v485
  %550 = vst [vmem:[%s3 + $0x3c] sm:$0xf] %v486
  %551 = vst [vmem:[%s3 + $0x40] sm:$0xf] %v487
  %552 = vst [vmem:[%s3 + $0x44] sm:$0xf] %v488
  %553 = vst [vmem:[%s3 + $0x48] sm:$0xf] %v489
  %554 = vst [vmem:[%s3 + $0x4c] sm:$0xf] %v490
  %555 = vst [vmem:[%s3 + $0x50] sm:$0xf] %v491
  %556 = vst [vmem:[%s3 + $0x54] sm:$0xf] %v492
  %557 = vst [vmem:[%s3 + $0x58] sm:$0xf] %v493
  %558 = vst [vmem:[%s3 + $0x5c] sm:$0xf] %v494
  %559 = vst [vmem:[%s3 + $0x60] sm:$0xf] %v495
  %560 = vst [vmem:[%s3 + $0x64] sm:$0xf] %v496
  %561 = vst [vmem:[%s3 + $0x68] sm:$0xf] %v497
  %562 = vst [vmem:[%s3 + $0x6c] sm:$0xf] %v498
  %563 = vst [vmem:[%s3 + $0x70] sm:$0xf] %v499
  %564 = vst [vmem:[%s3 + $0x74] sm:$0xf] %v500
  %565 = vst [vmem:[%s3 + $0x78] sm:$0xf] %v501
  %566 = vst [vmem:[%s3 + $0x7c] sm:$0xf] %v502
  // Predicated region
  $region14: #{_lambda_.6} parent=0 // pred_check
    _
  $region15: #{_lambda_.6} parent=0 // pred_check_branch
    %568 = sbr.rel (0) target = $region17
  $region16: #{_lambda_.6} parent=0 // pred_region
    _
  $region17: #{_lambda_.6} parent=0 // pred_fallthru
    _
  // Predicated region
  $region18: #{_lambda_.6} parent=0 // pred_check
    _
  $region19: #{_lambda_.6} parent=0 // pred_check_branch
    %570 = sbr.rel (0) target = $region21
  $region20: #{_lambda_.6} parent=0 // pred_region
    _
  $region21: #{_lambda_.6} parent=0 // pred_fallthru
    _

// kernel: _lambda_.10
$region0: #{_lambda_.10}
  #allocation0 [shape = 'u32[]', space=smem, size = 0x4, offset = 0x4, fixed_abs, tag = 'smem constant byte address 0x4 - core index']
  #allocation1 [shape = 'u32[144,128]{1,0:T(1,128)}', space=vmem, size = 0x12000, scoped, tag = 'internal scratch']
  %s0 = inlined_call_operand.vmem [shape: bf16[1,256,576], index: 0, kind: input, shape index: {}]
  %s1 = inlined_call_operand.vmem [shape: bf16[1,256,640], index: 1, kind: output, shape index: {}]
  %s2 = sld [smem:[#allocation0]]
  $region14: #{_lambda_.10} parent=0
    _
  %s4 = ssub.s32 1, %s2
  %s5 = scalar_select 0, %s4, %s2
  // Predicated region
  $region2: #{_lambda_.10} parent=0 // pred_check
    _
  $region3: #{_lambda_.10} parent=0 // pred_check_branch
    %7 = sbr.rel (0) target = $region5
  $region4: #{_lambda_.10} parent=0 // pred_region
    _
  $region5: #{_lambda_.10} parent=0 // pred_fallthru
    _
  %v9 = vld [vmem:[%s0] sm:$0xff]
  %v10 = vld [vmem:[%s0 + $0x8] sm:$0xff]
  %v11 = vld [vmem:[%s0 + $0x10] sm:$0xf]
  %v12 = vld [vmem:[%s0 + $0x14] sm:$0xff]
  %v13 = vld [vmem:[%s0 + $0x1c] sm:$0xff]
  %v14 = vld [vmem:[%s0 + $0x24] sm:$0xf]
  %v15 = vld [vmem:[%s0 + $0x28] sm:$0xff]
  %v16 = vld [vmem:[%s0 + $0x30] sm:$0xff]
  %v17 = vld [vmem:[%s0 + $0x38] sm:$0xf]
  %v18 = vld [vmem:[%s0 + $0x3c] sm:$0xff]
  %v19 = vld [vmem:[%s0 + $0x44] sm:$0xff]
  %v20 = vld [vmem:[%s0 + $0x4c] sm:$0xf]
  %v21 = vld [vmem:[%s0 + $0x50] sm:$0xff]
  %v22 = vld [vmem:[%s0 + $0x58] sm:$0xff]
  %v23 = vld [vmem:[%s0 + $0x60] sm:$0xf]
  %v24 = vld [vmem:[%s0 + $0x64] sm:$0xff]
  %v25 = vld [vmem:[%s0 + $0x6c] sm:$0xff]
  %v26 = vld [vmem:[%s0 + $0x74] sm:$0xf]
  %v27 = vld [vmem:[%s0 + $0x78] sm:$0xff]
  %v28 = vld [vmem:[%s0 + $0x80] sm:$0xff]
  %v29 = vld [vmem:[%s0 + $0x88] sm:$0xf]
  %v30 = vld [vmem:[%s0 + $0x8c] sm:$0xff]
  %v31 = vld [vmem:[%s0 + $0x94] sm:$0xff]
  %v32 = vld [vmem:[%s0 + $0x9c] sm:$0xf]
  %v33 = vld [vmem:[%s0 + $0xa0] sm:$0xff]
  %v34 = vld [vmem:[%s0 + $0xa8] sm:$0xff]
  %v35 = vld [vmem:[%s0 + $0xb0] sm:$0xf]
  %v36 = vld [vmem:[%s0 + $0xb4] sm:$0xff]
  %v37 = vld [vmem:[%s0 + $0xbc] sm:$0xff]
  %v38 = vld [vmem:[%s0 + $0xc4] sm:$0xf]
  %v39 = vld [vmem:[%s0 + $0xc8] sm:$0xff]
  %v40 = vld [vmem:[%s0 + $0xd0] sm:$0xff]
  %v41 = vld [vmem:[%s0 + $0xd8] sm:$0xf]
  %v42 = vld [vmem:[%s0 + $0xdc] sm:$0xff]
  %v43 = vld [vmem:[%s0 + $0xe4] sm:$0xff]
  %v44 = vld [vmem:[%s0 + $0xec] sm:$0xf]
  %v45 = vld [vmem:[%s0 + $0xf0] sm:$0xff]
  %v46 = vld [vmem:[%s0 + $0xf8] sm:$0xff]
  %v47 = vld [vmem:[%s0 + $0x100] sm:$0xf]
  %v48 = vld [vmem:[%s0 + $0x104] sm:$0xff]
  %v49 = vld [vmem:[%s0 + $0x10c] sm:$0xff]
  %v50 = vld [vmem:[%s0 + $0x114] sm:$0xf]
  %v51 = vld [vmem:[%s0 + $0x118] sm:$0xff]
  %v52 = vld [vmem:[%s0 + $0x120] sm:$0xff]
  %v53 = vld [vmem:[%s0 + $0x128] sm:$0xf]
  %v54 = vld [vmem:[%s0 + $0x12c] sm:$0xff]
  %v55 = vld [vmem:[%s0 + $0x134] sm:$0xff]
  %v56 = vld [vmem:[%s0 + $0x13c] sm:$0xf]
  %v57 = vld [vmem:[%s0 + $0x140] sm:$0xff]
  %v58 = vld [vmem:[%s0 + $0x148] sm:$0xff]
  %v59 = vld [vmem:[%s0 + $0x150] sm:$0xf]
  %v60 = vld [vmem:[%s0 + $0x154] sm:$0xff]
  %v61 = vld [vmem:[%s0 + $0x15c] sm:$0xff]
  %v62 = vld [vmem:[%s0 + $0x164] sm:$0xf]
  %v63 = vld [vmem:[%s0 + $0x168] sm:$0xff]
  %v64 = vld [vmem:[%s0 + $0x170] sm:$0xff]
  %v65 = vld [vmem:[%s0 + $0x178] sm:$0xf]
  %v66 = vld [vmem:[%s0 + $0x17c] sm:$0xff]
  %v67 = vld [vmem:[%s0 + $0x184] sm:$0xff]
  %v68 = vld [vmem:[%s0 + $0x18c] sm:$0xf]
  %v69 = vld [vmem:[%s0 + $0x190] sm:$0xff]
  %v70 = vld [vmem:[%s0 + $0x198] sm:$0xff]
  %v71 = vld [vmem:[%s0 + $0x1a0] sm:$0xf]
  %v72 = vld [vmem:[%s0 + $0x1a4] sm:$0xff]
  %v73 = vld [vmem:[%s0 + $0x1ac] sm:$0xff]
  %v74 = vld [vmem:[%s0 + $0x1b4] sm:$0xf]
  %v75 = vld [vmem:[%s0 + $0x1b8] sm:$0xff]
  %v76 = vld [vmem:[%s0 + $0x1c0] sm:$0xff]
  %v77 = vld [vmem:[%s0 + $0x1c8] sm:$0xf]
  %v78 = vld [vmem:[%s0 + $0x1cc] sm:$0xff]
  %v79 = vld [vmem:[%s0 + $0x1d4] sm:$0xff]
  %v80 = vld [vmem:[%s0 + $0x1dc] sm:$0xf]
  %v81 = vld [vmem:[%s0 + $0x1e0] sm:$0xff]
  %v82 = vld [vmem:[%s0 + $0x1e8] sm:$0xff]
  %v83 = vld [vmem:[%s0 + $0x1f0] sm:$0xf]
  %v84 = vld [vmem:[%s0 + $0x1f4] sm:$0xff]
  %v85 = vld [vmem:[%s0 + $0x1fc] sm:$0xff]
  %v86 = vld [vmem:[%s0 + $0x204] sm:$0xf]
  %v87 = vld [vmem:[%s0 + $0x208] sm:$0xff]
  %v88 = vld [vmem:[%s0 + $0x210] sm:$0xff]
  %v89 = vld [vmem:[%s0 + $0x218] sm:$0xf]
  %v90 = vld [vmem:[%s0 + $0x21c] sm:$0xff]
  %v91 = vld [vmem:[%s0 + $0x224] sm:$0xff]
  %v92 = vld [vmem:[%s0 + $0x22c] sm:$0xf]
  %v93 = vld [vmem:[%s0 + $0x230] sm:$0xff]
  %v94 = vld [vmem:[%s0 + $0x238] sm:$0xff]
  %v95 = vld [vmem:[%s0 + $0x240] sm:$0xf]
  %v96 = vld [vmem:[%s0 + $0x244] sm:$0xff]
  %v97 = vld [vmem:[%s0 + $0x24c] sm:$0xff]
  %v98 = vld [vmem:[%s0 + $0x254] sm:$0xf]
  %v99 = vld [vmem:[%s0 + $0x258] sm:$0xff]
  %v100 = vld [vmem:[%s0 + $0x260] sm:$0xff]
  %v101 = vld [vmem:[%s0 + $0x268] sm:$0xf]
  %v102 = vld [vmem:[%s0 + $0x26c] sm:$0xff]
  %v103 = vld [vmem:[%s0 + $0x274] sm:$0xff]
  %v104 = vld [vmem:[%s0 + $0x27c] sm:$0xf]
  %v105 = vunpack.c.l.bf16 %v9
  %v106 = vunpack.c.h.bf16 %v9
  %v107 = vunpack.c.l.bf16 %v10
  %v108 = vunpack.c.h.bf16 %v10
  %v109 = vunpack.c.l.bf16 %v11
  %v110 = vunpack.c.l.bf16 %v12
  %v111 = vunpack.c.h.bf16 %v12
  %v112 = vunpack.c.l.bf16 %v13
  %v113 = vunpack.c.h.bf16 %v13
  %v114 = vunpack.c.l.bf16 %v14
  %v115 = vunpack.c.l.bf16 %v15
  %v116 = vunpack.c.h.bf16 %v15
  %v117 = vunpack.c.l.bf16 %v16
  %v118 = vunpack.c.h.bf16 %v16
  %v119 = vunpack.c.l.bf16 %v17
  %v120 = vunpack.c.l.bf16 %v18
  %v121 = vunpack.c.h.bf16 %v18
  %v122 = vunpack.c.l.bf16 %v19
  %v123 = vunpack.c.h.bf16 %v19
  %v124 = vunpack.c.l.bf16 %v20
  %v125 = vunpack.c.l.bf16 %v21
  %v126 = vunpack.c.h.bf16 %v21
  %v127 = vunpack.c.l.bf16 %v22
  %v128 = vunpack.c.h.bf16 %v22
  %v129 = vunpack.c.l.bf16 %v23
  %v130 = vunpack.c.l.bf16 %v24
  %v131 = vunpack.c.h.bf16 %v24
  %v132 = vunpack.c.l.bf16 %v25
  %v133 = vunpack.c.h.bf16 %v25
  %v134 = vunpack.c.l.bf16 %v26
  %v135 = vunpack.c.l.bf16 %v27
  %v136 = vunpack.c.h.bf16 %v27
  %v137 = vunpack.c.l.bf16 %v28
  %v138 = vunpack.c.h.bf16 %v28
  %v139 = vunpack.c.l.bf16 %v29
  %v140 = vunpack.c.l.bf16 %v30
  %v141 = vunpack.c.h.bf16 %v30
  %v142 = vunpack.c.l.bf16 %v31
  %v143 = vunpack.c.h.bf16 %v31
  %v144 = vunpack.c.l.bf16 %v32
  %v145 = vunpack.c.l.bf16 %v33
  %v146 = vunpack.c.h.bf16 %v33
  %v147 = vunpack.c.l.bf16 %v34
  %v148 = vunpack.c.h.bf16 %v34
  %v149 = vunpack.c.l.bf16 %v35
  %v150 = vunpack.c.l.bf16 %v36
  %v151 = vunpack.c.h.bf16 %v36
  %v152 = vunpack.c.l.bf16 %v37
  %v153 = vunpack.c.h.bf16 %v37
  %v154 = vunpack.c.l.bf16 %v38
  %v155 = vunpack.c.l.bf16 %v39
  %v156 = vunpack.c.h.bf16 %v39
  %v157 = vunpack.c.l.bf16 %v40
  %v158 = vunpack.c.h.bf16 %v40
  %v159 = vunpack.c.l.bf16 %v41
  %v160 = vunpack.c.l.bf16 %v42
  %v161 = vunpack.c.h.bf16 %v42
  %v162 = vunpack.c.l.bf16 %v43
  %v163 = vunpack.c.h.bf16 %v43
  %v164 = vunpack.c.l.bf16 %v44
  %v165 = vunpack.c.l.bf16 %v45
  %v166 = vunpack.c.h.bf16 %v45
  %v167 = vunpack.c.l.bf16 %v46
  %v168 = vunpack.c.h.bf16 %v46
  %v169 = vunpack.c.l.bf16 %v47
  %v170 = vunpack.c.l.bf16 %v48
  %v171 = vunpack.c.h.bf16 %v48
  %v172 = vunpack.c.l.bf16 %v49
  %v173 = vunpack.c.h.bf16 %v49
  %v174 = vunpack.c.l.bf16 %v50
  %v175 = vunpack.c.l.bf16 %v51
  %v176 = vunpack.c.h.bf16 %v51
  %v177 = vunpack.c.l.bf16 %v52
  %v178 = vunpack.c.h.bf16 %v52
  %v179 = vunpack.c.l.bf16 %v53
  %v180 = vunpack.c.l.bf16 %v54
  %v181 = vunpack.c.h.bf16 %v54
  %v182 = vunpack.c.l.bf16 %v55
  %v183 = vunpack.c.h.bf16 %v55
  %v184 = vunpack.c.l.bf16 %v56
  %v185 = vunpack.c.l.bf16 %v57
  %v186 = vunpack.c.h.bf16 %v57
  %v187 = vunpack.c.l.bf16 %v58
  %v188 = vunpack.c.h.bf16 %v58
  %v189 = vunpack.c.l.bf16 %v59
  %v190 = vunpack.c.l.bf16 %v60
  %v191 = vunpack.c.h.bf16 %v60
  %v192 = vunpack.c.l.bf16 %v61
  %v193 = vunpack.c.h.bf16 %v61
  %v194 = vunpack.c.l.bf16 %v62
  %v195 = vunpack.c.l.bf16 %v63
  %v196 = vunpack.c.h.bf16 %v63
  %v197 = vunpack.c.l.bf16 %v64
  %v198 = vunpack.c.h.bf16 %v64
  %v199 = vunpack.c.l.bf16 %v65
  %v200 = vunpack.c.l.bf16 %v66
  %v201 = vunpack.c.h.bf16 %v66
  %v202 = vunpack.c.l.bf16 %v67
  %v203 = vunpack.c.h.bf16 %v67
  %v204 = vunpack.c.l.bf16 %v68
  %v205 = vunpack.c.l.bf16 %v69
  %v206 = vunpack.c.h.bf16 %v69
  %v207 = vunpack.c.l.bf16 %v70
  %v208 = vunpack.c.h.bf16 %v70
  %v209 = vunpack.c.l.bf16 %v71
  %v210 = vunpack.c.l.bf16 %v72
  %v211 = vunpack.c.h.bf16 %v72
  %v212 = vunpack.c.l.bf16 %v73
  %v213 = vunpack.c.h.bf16 %v73
  %v214 = vunpack.c.l.bf16 %v74
  %v215 = vunpack.c.l.bf16 %v75
  %v216 = vunpack.c.h.bf16 %v75
  %v217 = vunpack.c.l.bf16 %v76
  %v218 = vunpack.c.h.bf16 %v76
  %v219 = vunpack.c.l.bf16 %v77
  %v220 = vunpack.c.l.bf16 %v78
  %v221 = vunpack.c.h.bf16 %v78
  %v222 = vunpack.c.l.bf16 %v79
  %v223 = vunpack.c.h.bf16 %v79
  %v224 = vunpack.c.l.bf16 %v80
  %v225 = vunpack.c.l.bf16 %v81
  %v226 = vunpack.c.h.bf16 %v81
  %v227 = vunpack.c.l.bf16 %v82
  %v228 = vunpack.c.h.bf16 %v82
  %v229 = vunpack.c.l.bf16 %v83
  %v230 = vunpack.c.l.bf16 %v84
  %v231 = vunpack.c.h.bf16 %v84
  %v232 = vunpack.c.l.bf16 %v85
  %v233 = vunpack.c.h.bf16 %v85
  %v234 = vunpack.c.l.bf16 %v86
  %v235 = vunpack.c.l.bf16 %v87
  %v236 = vunpack.c.h.bf16 %v87
  %v237 = vunpack.c.l.bf16 %v88
  %v238 = vunpack.c.h.bf16 %v88
  %v239 = vunpack.c.l.bf16 %v89
  %v240 = vunpack.c.l.bf16 %v90
  %v241 = vunpack.c.h.bf16 %v90
  %v242 = vunpack.c.l.bf16 %v91
  %v243 = vunpack.c.h.bf16 %v91
  %v244 = vunpack.c.l.bf16 %v92
  %v245 = vunpack.c.l.bf16 %v93
  %v246 = vunpack.c.h.bf16 %v93
  %v247 = vunpack.c.l.bf16 %v94
  %v248 = vunpack.c.h.bf16 %v94
  %v249 = vunpack.c.l.bf16 %v95
  %v250 = vunpack.c.l.bf16 %v96
  %v251 = vunpack.c.h.bf16 %v96
  %v252 = vunpack.c.l.bf16 %v97
  %v253 = vunpack.c.h.bf16 %v97
  %v254 = vunpack.c.l.bf16 %v98
  %v255 = vunpack.c.l.bf16 %v99
  %v256 = vunpack.c.h.bf16 %v99
  %v257 = vunpack.c.l.bf16 %v100
  %v258 = vunpack.c.h.bf16 %v100
  %v259 = vunpack.c.l.bf16 %v101
  %v260 = vunpack.c.l.bf16 %v102
  %v261 = vunpack.c.h.bf16 %v102
  %v262 = vunpack.c.l.bf16 %v103
  %v263 = vunpack.c.h.bf16 %v103
  %v264 = vunpack.c.l.bf16 %v104
  %v265 = vmul.f32 %v105, %v105
  %v266 = vmul.f32 %v106, %v106
  %v267 = vmul.f32 %v107, %v107
  %v268 = vmul.f32 %v108, %v108
  %v269 = vmul.f32 %v109, %v109
  %v270 = vmul.f32 %v110, %v110
  %v271 = vmul.f32 %v111, %v111
  %v272 = vmul.f32 %v112, %v112
  %v273 = vmul.f32 %v113, %v113
  %v274 = vmul.f32 %v114, %v114
  %v275 = vmul.f32 %v115, %v115
  %v276 = vmul.f32 %v116, %v116
  %v277 = vmul.f32 %v117, %v117
  %v278 = vmul.f32 %v118, %v118
  %v279 = vmul.f32 %v119, %v119
  %v280 = vmul.f32 %v120, %v120
  %v281 = vmul.f32 %v121, %v121
  %v282 = vmul.f32 %v122, %v122
  %v283 = vmul.f32 %v123, %v123
  %v284 = vmul.f32 %v124, %v124
  %v285 = vmul.f32 %v125, %v125
  %v286 = vmul.f32 %v126, %v126
  %v287 = vmul.f32 %v127, %v127
  %v288 = vmul.f32 %v128, %v128
  %v289 = vmul.f32 %v129, %v129
  %v290 = vmul.f32 %v130, %v130
  %v291 = vmul.f32 %v131, %v131
  %v292 = vmul.f32 %v132, %v132
  %v293 = vmul.f32 %v133, %v133
  %v294 = vmul.f32 %v134, %v134
  %v295 = vmul.f32 %v135, %v135
  %v296 = vmul.f32 %v136, %v136
  %v297 = vmul.f32 %v137, %v137
  %v298 = vmul.f32 %v138, %v138
  %v299 = vmul.f32 %v139, %v139
  %v300 = vmul.f32 %v140, %v140
  %v301 = vmul.f32 %v141, %v141
  %v302 = vmul.f32 %v142, %v142
  %v303 = vmul.f32 %v143, %v143
  %v304 = vmul.f32 %v144, %v144
  %v305 = vmul.f32 %v145, %v145
  %v306 = vmul.f32 %v146, %v146
  %v307 = vmul.f32 %v147, %v147
  %v308 = vmul.f32 %v148, %v148
  %v309 = vmul.f32 %v149, %v149
  %v310 = vmul.f32 %v150, %v150
  %v311 = vmul.f32 %v151, %v151
  %v312 = vmul.f32 %v152, %v152
  %v313 = vmul.f32 %v153, %v153
  %v314 = vmul.f32 %v154, %v154
  %v315 = vmul.f32 %v155, %v155
  %v316 = vmul.f32 %v156, %v156
  %v317 = vmul.f32 %v157, %v157
  %v318 = vmul.f32 %v158, %v158
  %v319 = vmul.f32 %v159, %v159
  %v320 = vmul.f32 %v160, %v160
  %v321 = vmul.f32 %v161, %v161
  %v322 = vmul.f32 %v162, %v162
  %v323 = vmul.f32 %v163, %v163
  %v324 = vmul.f32 %v164, %v164
  %v325 = vmul.f32 %v165, %v165
  %v326 = vmul.f32 %v166, %v166
  %v327 = vmul.f32 %v167, %v167
  %v328 = vmul.f32 %v168, %v168
  %v329 = vmul.f32 %v169, %v169
  %v330 = vmul.f32 %v170, %v170
  %v331 = vmul.f32 %v171, %v171
  %v332 = vmul.f32 %v172, %v172
  %v333 = vmul.f32 %v173, %v173
  %v334 = vmul.f32 %v174, %v174
  %v335 = vmul.f32 %v175, %v175
  %v336 = vmul.f32 %v176, %v176
  %v337 = vmul.f32 %v177, %v177
  %v338 = vmul.f32 %v178, %v178
  %v339 = vmul.f32 %v179, %v179
  %v340 = vmul.f32 %v180, %v180
  %v341 = vmul.f32 %v181, %v181
  %v342 = vmul.f32 %v182, %v182
  %v343 = vmul.f32 %v183, %v183
  %v344 = vmul.f32 %v184, %v184
  %v345 = vmul.f32 %v185, %v185
  %v346 = vmul.f32 %v186, %v186
  %v347 = vmul.f32 %v187, %v187
  %v348 = vmul.f32 %v188, %v188
  %v349 = vmul.f32 %v189, %v189
  %v350 = vmul.f32 %v190, %v190
  %v351 = vmul.f32 %v191, %v191
  %v352 = vmul.f32 %v192, %v192
  %v353 = vmul.f32 %v193, %v193
  %v354 = vmul.f32 %v194, %v194
  %v355 = vmul.f32 %v195, %v195
  %v356 = vmul.f32 %v196, %v196
  %v357 = vmul.f32 %v197, %v197
  %v358 = vmul.f32 %v198, %v198
  %v359 = vmul.f32 %v199, %v199
  %v360 = vmul.f32 %v200, %v200
  %v361 = vmul.f32 %v201, %v201
  %v362 = vmul.f32 %v202, %v202
  %v363 = vmul.f32 %v203, %v203
  %v364 = vmul.f32 %v204, %v204
  %v365 = vmul.f32 %v205, %v205
  %v366 = vmul.f32 %v206, %v206
  %v367 = vmul.f32 %v207, %v207
  %v368 = vmul.f32 %v208, %v208
  %v369 = vmul.f32 %v209, %v209
  %v370 = vmul.f32 %v210, %v210
  %v371 = vmul.f32 %v211, %v211
  %v372 = vmul.f32 %v212, %v212
  %v373 = vmul.f32 %v213, %v213
  %v374 = vmul.f32 %v214, %v214
  %v375 = vmul.f32 %v215, %v215
  %v376 = vmul.f32 %v216, %v216
  %v377 = vmul.f32 %v217, %v217
  %v378 = vmul.f32 %v218, %v218
  %v379 = vmul.f32 %v219, %v219
  %v380 = vmul.f32 %v220, %v220
  %v381 = vmul.f32 %v221, %v221
  %v382 = vmul.f32 %v222, %v222
  %v383 = vmul.f32 %v223, %v223
  %v384 = vmul.f32 %v224, %v224
  %v385 = vmul.f32 %v225, %v225
  %v386 = vmul.f32 %v226, %v226
  %v387 = vmul.f32 %v227, %v227
  %v388 = vmul.f32 %v228, %v228
  %v389 = vmul.f32 %v229, %v229
  %v390 = vmul.f32 %v230, %v230
  %v391 = vmul.f32 %v231, %v231
  %v392 = vmul.f32 %v232, %v232
  %v393 = vmul.f32 %v233, %v233
  %v394 = vmul.f32 %v234, %v234
  %v395 = vmul.f32 %v235, %v235
  %v396 = vmul.f32 %v236, %v236
  %v397 = vmul.f32 %v237, %v237
  %v398 = vmul.f32 %v238, %v238
  %v399 = vmul.f32 %v239, %v239
  %v400 = vmul.f32 %v240, %v240
  %v401 = vmul.f32 %v241, %v241
  %v402 = vmul.f32 %v242, %v242
  %v403 = vmul.f32 %v243, %v243
  %v404 = vmul.f32 %v244, %v244
  %v405 = vmul.f32 %v245, %v245
  %v406 = vmul.f32 %v246, %v246
  %v407 = vmul.f32 %v247, %v247
  %v408 = vmul.f32 %v248, %v248
  %v409 = vmul.f32 %v249, %v249
  %v410 = vmul.f32 %v250, %v250
  %v411 = vmul.f32 %v251, %v251
  %v412 = vmul.f32 %v252, %v252
  %v413 = vmul.f32 %v253, %v253
  %v414 = vmul.f32 %v254, %v254
  %v415 = vmul.f32 %v255, %v255
  %v416 = vmul.f32 %v256, %v256
  %v417 = vmul.f32 %v257, %v257
  %v418 = vmul.f32 %v258, %v258
  %v419 = vmul.f32 %v259, %v259
  %v420 = vmul.f32 %v260, %v260
  %v421 = vmul.f32 %v261, %v261
  %v422 = vmul.f32 %v262, %v262
  %v423 = vmul.f32 %v263, %v263
  %v424 = vmul.f32 %v264, %v264
  %v425 = vadd.f32 %v265, %v266
  %v426 = vadd.f32 %v425, %v267
  %v427 = vadd.f32 %v426, %v268
  %vm428 = vcmask 523264
  %v429 = vsel %vm428, %v269, 0.0
  %v430 = vadd.f32 %v427, %v429
  %431 = vadd.xlane.f32.xlu0 %v430
  %v432 = vpop.xlane.xlu0 %431
  %v433 = vadd.f32 %v270, %v271
  %v434 = vadd.f32 %v433, %v272
  %v435 = vadd.f32 %v434, %v273
  %v436 = vsel %vm428, %v274, 0.0
  %v437 = vadd.f32 %v435, %v436
  %438 = vadd.xlane.f32.xlu0 %v437
  %v439 = vpop.xlane.xlu0 %438
  %v440 = vadd.f32 %v275, %v276
  %v441 = vadd.f32 %v440, %v277
  %v442 = vadd.f32 %v441, %v278
  %v443 = vsel %vm428, %v279, 0.0
  %v444 = vadd.f32 %v442, %v443
  %445 = vadd.xlane.f32.xlu0 %v444
  %v446 = vpop.xlane.xlu0 %445
  %v447 = vadd.f32 %v280, %v281
  %v448 = vadd.f32 %v447, %v282
  %v449 = vadd.f32 %v448, %v283
  %v450 = vsel %vm428, %v284, 0.0
  %v451 = vadd.f32 %v449, %v450
  %452 = vadd.xlane.f32.xlu0 %v451
  %v453 = vpop.xlane.xlu0 %452
  %v454 = vadd.f32 %v285, %v286
  %v455 = vadd.f32 %v454, %v287
  %v456 = vadd.f32 %v455, %v288
  %v457 = vsel %vm428, %v289, 0.0
  %v458 = vadd.f32 %v456, %v457
  %459 = vadd.xlane.f32.xlu0 %v458
  %v460 = vpop.xlane.xlu0 %459
  %v461 = vadd.f32 %v290, %v291
  %v462 = vadd.f32 %v461, %v292
  %v463 = vadd.f32 %v462, %v293
  %v464 = vsel %vm428, %v294, 0.0
  %v465 = vadd.f32 %v463, %v464
  %466 = vadd.xlane.f32.xlu0 %v465
  %v467 = vpop.xlane.xlu0 %466
  %v468 = vadd.f32 %v295, %v296
  %v469 = vadd.f32 %v468, %v297
  %v470 = vadd.f32 %v469, %v298
  %v471 = vsel %vm428, %v299, 0.0
  %v472 = vadd.f32 %v470, %v471
  %473 = vadd.xlane.f32.xlu0 %v472
  %v474 = vpop.xlane.xlu0 %473
  %v475 = vadd.f32 %v300, %v301
  %v476 = vadd.f32 %v475, %v302
  %v477 = vadd.f32 %v476, %v303
  %v478 = vsel %vm428, %v304, 0.0
  %v479 = vadd.f32 %v477, %v478
  %480 = vadd.xlane.f32.xlu0 %v479
  %v481 = vpop.xlane.xlu0 %480
  %v482 = vadd.f32 %v305, %v306
  %v483 = vadd.f32 %v482, %v307
  %v484 = vadd.f32 %v483, %v308
  %v485 = vsel %vm428, %v309, 0.0
  %v486 = vadd.f32 %v484, %v485
  %487 = vadd.xlane.f32.xlu0 %v486
  %v488 = vpop.xlane.xlu0 %487
  %v489 = vadd.f32 %v310, %v311
  %v490 = vadd.f32 %v489, %v312
  %v491 = vadd.f32 %v490, %v313
  %v492 = vsel %vm428, %v314, 0.0
  %v493 = vadd.f32 %v491, %v492
  %494 = vadd.xlane.f32.xlu0 %v493
  %v495 = vpop.xlane.xlu0 %494
  %v496 = vadd.f32 %v315, %v316
  %v497 = vadd.f32 %v496, %v317
  %v498 = vadd.f32 %v497, %v318
  %v499 = vsel %vm428, %v319, 0.0
  %v500 = vadd.f32 %v498, %v499
  %501 = vadd.xlane.f32.xlu0 %v500
  %v502 = vpop.xlane.xlu0 %501
  %v503 = vadd.f32 %v320, %v321
  %v504 = vadd.f32 %v503, %v322
  %v505 = vadd.f32 %v504, %v323
  %v506 = vsel %vm428, %v324, 0.0
  %v507 = vadd.f32 %v505, %v506
  %508 = vadd.xlane.f32.xlu0 %v507
  %v509 = vpop.xlane.xlu0 %508
  %v510 = vadd.f32 %v325, %v326
  %v511 = vadd.f32 %v510, %v327
  %v512 = vadd.f32 %v511, %v328
  %v513 = vsel %vm428, %v329, 0.0
  %v514 = vadd.f32 %v512, %v513
  %515 = vadd.xlane.f32.xlu0 %v514
  %v516 = vpop.xlane.xlu0 %515
  %v517 = vadd.f32 %v330, %v331
  %v518 = vadd.f32 %v517, %v332
  %v519 = vadd.f32 %v518, %v333
  %v520 = vsel %vm428, %v334, 0.0
  %v521 = vadd.f32 %v519, %v520
  %522 = vadd.xlane.f32.xlu0 %v521
  %v523 = vpop.xlane.xlu0 %522
  %v524 = vadd.f32 %v335, %v336
  %v525 = vadd.f32 %v524, %v337
  %v526 = vadd.f32 %v525, %v338
  %v527 = vsel %vm428, %v339, 0.0
  %v528 = vadd.f32 %v526, %v527
  %529 = vadd.xlane.f32.xlu0 %v528
  %v530 = vpop.xlane.xlu0 %529
  %v531 = vadd.f32 %v340, %v341
  %v532 = vadd.f32 %v531, %v342
  %v533 = vadd.f32 %v532, %v343
  %v534 = vsel %vm428, %v344, 0.0
  %v535 = vadd.f32 %v533, %v534
  %536 = vadd.xlane.f32.xlu0 %v535
  %v537 = vpop.xlane.xlu0 %536
  %v538 = vadd.f32 %v345, %v346
  %v539 = vadd.f32 %v538, %v347
  %v540 = vadd.f32 %v539, %v348
  %v541 = vsel %vm428, %v349, 0.0
  %v542 = vadd.f32 %v540, %v541
  %543 = vadd.xlane.f32.xlu0 %v542
  %v544 = vpop.xlane.xlu0 %543
  %v545 = vadd.f32 %v350, %v351
  %v546 = vadd.f32 %v545, %v352
  %v547 = vadd.f32 %v546, %v353
  %v548 = vsel %vm428, %v354, 0.0
  %v549 = vadd.f32 %v547, %v548
  %550 = vadd.xlane.f32.xlu0 %v549
  %v551 = vpop.xlane.xlu0 %550
  %v552 = vadd.f32 %v355, %v356
  %v553 = vadd.f32 %v552, %v357
  %v554 = vadd.f32 %v553, %v358
  %v555 = vsel %vm428, %v359, 0.0
  %v556 = vadd.f32 %v554, %v555
  %557 = vadd.xlane.f32.xlu0 %v556
  %v558 = vpop.xlane.xlu0 %557
  %v559 = vadd.f32 %v360, %v361
  %v560 = vadd.f32 %v559, %v362
  %v561 = vadd.f32 %v560, %v363
  %v562 = vsel %vm428, %v364, 0.0
  %v563 = vadd.f32 %v561, %v562
  %564 = vadd.xlane.f32.xlu0 %v563
  %v565 = vpop.xlane.xlu0 %564
  %v566 = vadd.f32 %v365, %v366
  %v567 = vadd.f32 %v566, %v367
  %v568 = vadd.f32 %v567, %v368
  %v569 = vsel %vm428, %v369, 0.0
  %v570 = vadd.f32 %v568, %v569
  %571 = vadd.xlane.f32.xlu0 %v570
  %v572 = vpop.xlane.xlu0 %571
  %v573 = vadd.f32 %v370, %v371
  %v574 = vadd.f32 %v573, %v372
  %v575 = vadd.f32 %v574, %v373
  %v576 = vsel %vm428, %v374, 0.0
  %v577 = vadd.f32 %v575, %v576
  %578 = vadd.xlane.f32.xlu0 %v577
  %v579 = vpop.xlane.xlu0 %578
  %v580 = vadd.f32 %v375, %v376
  %v581 = vadd.f32 %v580, %v377
  %v582 = vadd.f32 %v581, %v378
  %v583 = vsel %vm428, %v379, 0.0
  %v584 = vadd.f32 %v582, %v583
  %585 = vadd.xlane.f32.xlu0 %v584
  %v586 = vpop.xlane.xlu0 %585
  %v587 = vadd.f32 %v380, %v381
  %v588 = vadd.f32 %v587, %v382
  %v589 = vadd.f32 %v588, %v383
  %v590 = vsel %vm428, %v384, 0.0
  %v591 = vadd.f32 %v589, %v590
  %592 = vadd.xlane.f32.xlu0 %v591
  %v593 = vpop.xlane.xlu0 %592
  %v594 = vadd.f32 %v385, %v386
  %v595 = vadd.f32 %v594, %v387
  %v596 = vadd.f32 %v595, %v388
  %v597 = vsel %vm428, %v389, 0.0
  %v598 = vadd.f32 %v596, %v597
  %599 = vadd.xlane.f32.xlu0 %v598
  %v600 = vpop.xlane.xlu0 %599
  %v601 = vadd.f32 %v390, %v391
  %v602 = vadd.f32 %v601, %v392
  %v603 = vadd.f32 %v602, %v393
  %v604 = vsel %vm428, %v394, 0.0
  %v605 = vadd.f32 %v603, %v604
  %606 = vadd.xlane.f32.xlu0 %v605
  %v607 = vpop.xlane.xlu0 %606
  %v608 = vadd.f32 %v395, %v396
  %v609 = vadd.f32 %v608, %v397
  %v610 = vadd.f32 %v609, %v398
  %v611 = vsel %vm428, %v399, 0.0
  %v612 = vadd.f32 %v610, %v611
  %613 = vadd.xlane.f32.xlu0 %v612
  %v614 = vpop.xlane.xlu0 %613
  %v615 = vadd.f32 %v400, %v401
  %v616 = vadd.f32 %v615, %v402
  %v617 = vadd.f32 %v616, %v403
  %v618 = vsel %vm428, %v404, 0.0
  %v619 = vadd.f32 %v617, %v618
  %620 = vadd.xlane.f32.xlu0 %v619
  %v621 = vpop.xlane.xlu0 %620
  %v622 = vadd.f32 %v405, %v406
  %v623 = vadd.f32 %v622, %v407
  %v624 = vadd.f32 %v623, %v408
  %v625 = vsel %vm428, %v409, 0.0
  %v626 = vadd.f32 %v624, %v625
  %627 = vadd.xlane.f32.xlu0 %v626
  %v628 = vpop.xlane.xlu0 %627
  %v629 = vadd.f32 %v410, %v411
  %v630 = vadd.f32 %v629, %v412
  %v631 = vadd.f32 %v630, %v413
  %v632 = vsel %vm428, %v414, 0.0
  %v633 = vadd.f32 %v631, %v632
  %634 = vadd.xlane.f32.xlu0 %v633
  %v635 = vpop.xlane.xlu0 %634
  %v636 = vadd.f32 %v415, %v416
  %v637 = vadd.f32 %v636, %v417
  %v638 = vadd.f32 %v637, %v418
  %v639 = vsel %vm428, %v419, 0.0
  %v640 = vadd.f32 %v638, %v639
  %641 = vadd.xlane.f32.xlu0 %v640
  %v642 = vpop.xlane.xlu0 %641
  %v643 = vadd.f32 %v420, %v421
  %v644 = vadd.f32 %v643, %v422
  %v645 = vadd.f32 %v644, %v423
  %v646 = vsel %vm428, %v424, 0.0
  %v647 = vadd.f32 %v645, %v646
  %648 = vadd.xlane.f32.xlu0 %v647
  %v649 = vpop.xlane.xlu0 %648
  %v650 = vmax.f32 %v432, 1e-24
  %v651 = vmax.f32 %v439, 1e-24
  %v652 = vmax.f32 %v446, 1e-24
  %v653 = vmax.f32 %v453, 1e-24
  %v654 = vmax.f32 %v460, 1e-24
  %v655 = vmax.f32 %v467, 1e-24
  %v656 = vmax.f32 %v474, 1e-24
  %v657 = vmax.f32 %v481, 1e-24
  %v658 = vmax.f32 %v488, 1e-24
  %v659 = vmax.f32 %v495, 1e-24
  %v660 = vmax.f32 %v502, 1e-24
  %v661 = vmax.f32 %v509, 1e-24
  %v662 = vmax.f32 %v516, 1e-24
  %v663 = vmax.f32 %v523, 1e-24
  %v664 = vmax.f32 %v530, 1e-24
  %v665 = vmax.f32 %v537, 1e-24
  %v666 = vmax.f32 %v544, 1e-24
  %v667 = vmax.f32 %v551, 1e-24
  %v668 = vmax.f32 %v558, 1e-24
  %v669 = vmax.f32 %v565, 1e-24
  %v670 = vmax.f32 %v572, 1e-24
  %v671 = vmax.f32 %v579, 1e-24
  %v672 = vmax.f32 %v586, 1e-24
  %v673 = vmax.f32 %v593, 1e-24
  %v674 = vmax.f32 %v600, 1e-24
  %v675 = vmax.f32 %v607, 1e-24
  %v676 = vmax.f32 %v614, 1e-24
  %v677 = vmax.f32 %v621, 1e-24
  %v678 = vmax.f32 %v628, 1e-24
  %v679 = vmax.f32 %v635, 1e-24
  %v680 = vmax.f32 %v642, 1e-24
  %v681 = vmax.f32 %v649, 1e-24
  %v682 = vrsqrt.pop %v650
  %v683 = vrsqrt.pop %v651
  %v684 = vrsqrt.pop %v652
  %v685 = vrsqrt.pop %v653
  %v686 = vrsqrt.pop %v654
  %v687 = vrsqrt.pop %v655
  %v688 = vrsqrt.pop %v656
  %v689 = vrsqrt.pop %v657
  %v690 = vrsqrt.pop %v658
  %v691 = vrsqrt.pop %v659
  %v692 = vrsqrt.pop %v660
  %v693 = vrsqrt.pop %v661
  %v694 = vrsqrt.pop %v662
  %v695 = vrsqrt.pop %v663
  %v696 = vrsqrt.pop %v664
  %v697 = vrsqrt.pop %v665
  %v698 = vrsqrt.pop %v666
  %v699 = vrsqrt.pop %v667
  %v700 = vrsqrt.pop %v668
  %v701 = vrsqrt.pop %v669
  %v702 = vrsqrt.pop %v670
  %v703 = vrsqrt.pop %v671
  %v704 = vrsqrt.pop %v672
  %v705 = vrsqrt.pop %v673
  %v706 = vrsqrt.pop %v674
  %v707 = vrsqrt.pop %v675
  %v708 = vrsqrt.pop %v676
  %v709 = vrsqrt.pop %v677
  %v710 = vrsqrt.pop %v678
  %v711 = vrsqrt.pop %v679
  %v712 = vrsqrt.pop %v680
  %v713 = vrsqrt.pop %v681
  %v714 = vmul.f32 %v105, %v682
  %v715 = vmul.f32 %v106, %v682
  %v716 = vmul.f32 %v107, %v682
  %v717 = vmul.f32 %v108, %v682
  %v718 = vmul.f32 %v109, %v682
  %v719 = vmul.f32 %v110, %v683
  %v720 = vmul.f32 %v111, %v683
  %v721 = vmul.f32 %v112, %v683
  %v722 = vmul.f32 %v113, %v683
  %v723 = vmul.f32 %v114, %v683
  %v724 = vmul.f32 %v115, %v684
  %v725 = vmul.f32 %v116, %v684
  %v726 = vmul.f32 %v117, %v684
  %v727 = vmul.f32 %v118, %v684
  %v728 = vmul.f32 %v119, %v684
  %v729 = vmul.f32 %v120, %v685
  %v730 = vmul.f32 %v121, %v685
  %v731 = vmul.f32 %v122, %v685
  %v732 = vmul.f32 %v123, %v685
  %v733 = vmul.f32 %v124, %v685
  %v734 = vmul.f32 %v125, %v686
  %v735 = vmul.f32 %v126, %v686
  %v736 = vmul.f32 %v127, %v686
  %v737 = vmul.f32 %v128, %v686
  %v738 = vmul.f32 %v129, %v686
  %v739 = vmul.f32 %v130, %v687
  %v740 = vmul.f32 %v131, %v687
  %v741 = vmul.f32 %v132, %v687
  %v742 = vmul.f32 %v133, %v687
  %v743 = vmul.f32 %v134, %v687
  %v744 = vmul.f32 %v135, %v688
  %v745 = vmul.f32 %v136, %v688
  %v746 = vmul.f32 %v137, %v688
  %v747 = vmul.f32 %v138, %v688
  %v748 = vmul.f32 %v139, %v688
  %v749 = vmul.f32 %v140, %v689
  %v750 = vmul.f32 %v141, %v689
  %v751 = vmul.f32 %v142, %v689
  %v752 = vmul.f32 %v143, %v689
  %v753 = vmul.f32 %v144, %v689
  %v754 = vmul.f32 %v145, %v690
  %v755 = vmul.f32 %v146, %v690
  %v756 = vmul.f32 %v147, %v690
  %v757 = vmul.f32 %v148, %v690
  %v758 = vmul.f32 %v149, %v690
  %v759 = vmul.f32 %v150, %v691
  %v760 = vmul.f32 %v151, %v691
  %v761 = vmul.f32 %v152, %v691
  %v762 = vmul.f32 %v153, %v691
  %v763 = vmul.f32 %v154, %v691
  %v764 = vmul.f32 %v155, %v692
  %v765 = vmul.f32 %v156, %v692
  %v766 = vmul.f32 %v157, %v692
  %v767 = vmul.f32 %v158, %v692
  %v768 = vmul.f32 %v159, %v692
  %v769 = vmul.f32 %v160, %v693
  %v770 = vmul.f32 %v161, %v693
  %v771 = vmul.f32 %v162, %v693
  %v772 = vmul.f32 %v163, %v693
  %v773 = vmul.f32 %v164, %v693
  %v774 = vmul.f32 %v165, %v694
  %v775 = vmul.f32 %v166, %v694
  %v776 = vmul.f32 %v167, %v694
  %v777 = vmul.f32 %v168, %v694
  %v778 = vmul.f32 %v169, %v694
  %v779 = vmul.f32 %v170, %v695
  %v780 = vmul.f32 %v171, %v695
  %v781 = vmul.f32 %v172, %v695
  %v782 = vmul.f32 %v173, %v695
  %v783 = vmul.f32 %v174, %v695
  %v784 = vmul.f32 %v175, %v696
  %v785 = vmul.f32 %v176, %v696
  %v786 = vmul.f32 %v177, %v696
  %v787 = vmul.f32 %v178, %v696
  %v788 = vmul.f32 %v179, %v696
  %v789 = vmul.f32 %v180, %v697
  %v790 = vmul.f32 %v181, %v697
  %v791 = vmul.f32 %v182, %v697
  %v792 = vmul.f32 %v183, %v697
  %v793 = vmul.f32 %v184, %v697
  %v794 = vmul.f32 %v185, %v698
  %v795 = vmul.f32 %v186, %v698
  %v796 = vmul.f32 %v187, %v698
  %v797 = vmul.f32 %v188, %v698
  %v798 = vmul.f32 %v189, %v698
  %v799 = vmul.f32 %v190, %v699
  %v800 = vmul.f32 %v191, %v699
  %v801 = vmul.f32 %v192, %v699
  %v802 = vmul.f32 %v193, %v699
  %v803 = vmul.f32 %v194, %v699
  %v804 = vmul.f32 %v195, %v700
  %v805 = vmul.f32 %v196, %v700
  %v806 = vmul.f32 %v197, %v700
  %v807 = vmul.f32 %v198, %v700
  %v808 = vmul.f32 %v199, %v700
  %v809 = vmul.f32 %v200, %v701
  %v810 = vmul.f32 %v201, %v701
  %v811 = vmul.f32 %v202, %v701
  %v812 = vmul.f32 %v203, %v701
  %v813 = vmul.f32 %v204, %v701
  %v814 = vmul.f32 %v205, %v702
  %v815 = vmul.f32 %v206, %v702
  %v816 = vmul.f32 %v207, %v702
  %v817 = vmul.f32 %v208, %v702
  %v818 = vmul.f32 %v209, %v702
  %v819 = vmul.f32 %v210, %v703
  %v820 = vmul.f32 %v211, %v703
  %v821 = vmul.f32 %v212, %v703
  %v822 = vmul.f32 %v213, %v703
  %v823 = vmul.f32 %v214, %v703
  %v824 = vmul.f32 %v215, %v704
  %v825 = vmul.f32 %v216, %v704
  %v826 = vmul.f32 %v217, %v704
  %v827 = vmul.f32 %v218, %v704
  %v828 = vmul.f32 %v219, %v704
  %v829 = vmul.f32 %v220, %v705
  %v830 = vmul.f32 %v221, %v705
  %v831 = vmul.f32 %v222, %v705
  %v832 = vmul.f32 %v223, %v705
  %v833 = vmul.f32 %v224, %v705
  %v834 = vmul.f32 %v225, %v706
  %v835 = vmul.f32 %v226, %v706
  %v836 = vmul.f32 %v227, %v706
  %v837 = vmul.f32 %v228, %v706
  %v838 = vmul.f32 %v229, %v706
  %v839 = vmul.f32 %v230, %v707
  %v840 = vmul.f32 %v231, %v707
  %v841 = vmul.f32 %v232, %v707
  %v842 = vmul.f32 %v233, %v707
  %v843 = vmul.f32 %v234, %v707
  %v844 = vmul.f32 %v235, %v708
  %v845 = vmul.f32 %v236, %v708
  %v846 = vmul.f32 %v237, %v708
  %v847 = vmul.f32 %v238, %v708
  %v848 = vmul.f32 %v239, %v708
  %v849 = vmul.f32 %v240, %v709
  %v850 = vmul.f32 %v241, %v709
  %v851 = vmul.f32 %v242, %v709
  %v852 = vmul.f32 %v243, %v709
  %v853 = vmul.f32 %v244, %v709
  %v854 = vmul.f32 %v245, %v710
  %v855 = vmul.f32 %v246, %v710
  %v856 = vmul.f32 %v247, %v710
  %v857 = vmul.f32 %v248, %v710
  %v858 = vmul.f32 %v249, %v710
  %v859 = vmul.f32 %v250, %v711
  %v860 = vmul.f32 %v251, %v711
  %v861 = vmul.f32 %v252, %v711
  %v862 = vmul.f32 %v253, %v711
  %v863 = vmul.f32 %v254, %v711
  %v864 = vmul.f32 %v255, %v712
  %v865 = vmul.f32 %v256, %v712
  %v866 = vmul.f32 %v257, %v712
  %v867 = vmul.f32 %v258, %v712
  %v868 = vmul.f32 %v259, %v712
  %v869 = vmul.f32 %v260, %v713
  %v870 = vmul.f32 %v261, %v713
  %v871 = vmul.f32 %v262, %v713
  %v872 = vmul.f32 %v263, %v713
  %v873 = vmul.f32 %v264, %v713
  %v874 = vpack.c.bf16 %v719, %v714
  %v875 = vpack.c.bf16 %v720, %v715
  %v876 = vpack.c.bf16 %v721, %v716
  %v877 = vpack.c.bf16 %v722, %v717
  %v878 = vpack.c.bf16 %v723, %v718
  %v879 = vpack.c.bf16 %v729, %v724
  %v880 = vpack.c.bf16 %v730, %v725
  %v881 = vpack.c.bf16 %v731, %v726
  %v882 = vpack.c.bf16 %v732, %v727
  %v883 = vpack.c.bf16 %v733, %v728
  %v884 = vpack.c.bf16 %v739, %v734
  %v885 = vpack.c.bf16 %v740, %v735
  %v886 = vpack.c.bf16 %v741, %v736
  %v887 = vpack.c.bf16 %v742, %v737
  %v888 = vpack.c.bf16 %v743, %v738
  %v889 = vpack.c.bf16 %v749, %v744
  %v890 = vpack.c.bf16 %v750, %v745
  %v891 = vpack.c.bf16 %v751, %v746
  %v892 = vpack.c.bf16 %v752, %v747
  %v893 = vpack.c.bf16 %v753, %v748
  %v894 = vpack.c.bf16 %v759, %v754
  %v895 = vpack.c.bf16 %v760, %v755
  %v896 = vpack.c.bf16 %v761, %v756
  %v897 = vpack.c.bf16 %v762, %v757
  %v898 = vpack.c.bf16 %v763, %v758
  %v899 = vpack.c.bf16 %v769, %v764
  %v900 = vpack.c.bf16 %v770, %v765
  %v901 = vpack.c.bf16 %v771, %v766
  %v902 = vpack.c.bf16 %v772, %v767
  %v903 = vpack.c.bf16 %v773, %v768
  %v904 = vpack.c.bf16 %v779, %v774
  %v905 = vpack.c.bf16 %v780, %v775
  %v906 = vpack.c.bf16 %v781, %v776
  %v907 = vpack.c.bf16 %v782, %v777
  %v908 = vpack.c.bf16 %v783, %v778
  %v909 = vpack.c.bf16 %v789, %v784
  %v910 = vpack.c.bf16 %v790, %v785
  %v911 = vpack.c.bf16 %v791, %v786
  %v912 = vpack.c.bf16 %v792, %v787
  %v913 = vpack.c.bf16 %v793, %v788
  %v914 = vpack.c.bf16 %v799, %v794
  %v915 = vpack.c.bf16 %v800, %v795
  %v916 = vpack.c.bf16 %v801, %v796
  %v917 = vpack.c.bf16 %v802, %v797
  %v918 = vpack.c.bf16 %v803, %v798
  %v919 = vpack.c.bf16 %v809, %v804
  %v920 = vpack.c.bf16 %v810, %v805
  %v921 = vpack.c.bf16 %v811, %v806
  %v922 = vpack.c.bf16 %v812, %v807
  %v923 = vpack.c.bf16 %v813, %v808
  %v924 = vpack.c.bf16 %v819, %v814
  %v925 = vpack.c.bf16 %v820, %v815
  %v926 = vpack.c.bf16 %v821, %v816
  %v927 = vpack.c.bf16 %v822, %v817
  %v928 = vpack.c.bf16 %v823, %v818
  %v929 = vpack.c.bf16 %v829, %v824
  %v930 = vpack.c.bf16 %v830, %v825
  %v931 = vpack.c.bf16 %v831, %v826
  %v932 = vpack.c.bf16 %v832, %v827
  %v933 = vpack.c.bf16 %v833, %v828
  %v934 = vpack.c.bf16 %v839, %v834
  %v935 = vpack.c.bf16 %v840, %v835
  %v936 = vpack.c.bf16 %v841, %v836
  %v937 = vpack.c.bf16 %v842, %v837
  %v938 = vpack.c.bf16 %v843, %v838
  %v939 = vpack.c.bf16 %v849, %v844
  %v940 = vpack.c.bf16 %v850, %v845
  %v941 = vpack.c.bf16 %v851, %v846
  %v942 = vpack.c.bf16 %v852, %v847
  %v943 = vpack.c.bf16 %v853, %v848
  %v944 = vpack.c.bf16 %v859, %v854
  %v945 = vpack.c.bf16 %v860, %v855
  %v946 = vpack.c.bf16 %v861, %v856
  %v947 = vpack.c.bf16 %v862, %v857
  %v948 = vpack.c.bf16 %v863, %v858
  %v949 = vpack.c.bf16 %v869, %v864
  %v950 = vpack.c.bf16 %v870, %v865
  %v951 = vpack.c.bf16 %v871, %v866
  %v952 = vpack.c.bf16 %v872, %v867
  %v953 = vpack.c.bf16 %v873, %v868
  %v956 = vsel %vm428, %v878, 0
  %v958 = vsel %vm428, %v883, 0
  %v960 = vsel %vm428, %v888, 0
  %v962 = vsel %vm428, %v893, 0
  %v964 = vsel %vm428, %v898, 0
  %v966 = vsel %vm428, %v903, 0
  %v968 = vsel %vm428, %v908, 0
  %v970 = vsel %vm428, %v913, 0
  %v972 = vsel %vm428, %v918, 0
  %v974 = vsel %vm428, %v923, 0
  %v976 = vsel %vm428, %v928, 0
  %v978 = vsel %vm428, %v933, 0
  %v980 = vsel %vm428, %v938, 0
  %v982 = vsel %vm428, %v943, 0
  %v984 = vsel %vm428, %v948, 0
  %v986 = vsel %vm428, %v953, 0
  %v1067 = vunpack.c.l.b16 %v874
  %v1068 = vunpack.c.l.b16 %v875
  %v1069 = vunpack.c.l.b16 %v876
  %v1070 = vunpack.c.l.b16 %v877
  %v1071 = vunpack.c.l.b16 %v956
  %v1072 = vunpack.c.h.b16 %v874
  %v1073 = vunpack.c.h.b16 %v875
  %v1074 = vunpack.c.h.b16 %v876
  %v1075 = vunpack.c.h.b16 %v877
  %v1076 = vunpack.c.h.b16 %v956
  %v1077 = vunpack.c.l.b16 %v879
  %v1078 = vunpack.c.l.b16 %v880
  %v1079 = vunpack.c.l.b16 %v881
  %v1080 = vunpack.c.l.b16 %v882
  %v1081 = vunpack.c.l.b16 %v958
  %v1082 = vunpack.c.h.b16 %v879
  %v1083 = vunpack.c.h.b16 %v880
  %v1084 = vunpack.c.h.b16 %v881
  %v1085 = vunpack.c.h.b16 %v882
  %v1086 = vunpack.c.h.b16 %v958
  %v1087 = vunpack.c.l.b16 %v884
  %v1088 = vunpack.c.l.b16 %v885
  %v1089 = vunpack.c.l.b16 %v886
  %v1090 = vunpack.c.l.b16 %v887
  %v1091 = vunpack.c.l.b16 %v960
  %v1092 = vunpack.c.h.b16 %v884
  %v1093 = vunpack.c.h.b16 %v885
  %v1094 = vunpack.c.h.b16 %v886
  %v1095 = vunpack.c.h.b16 %v887
  %v1096 = vunpack.c.h.b16 %v960
  %v1097 = vunpack.c.l.b16 %v889
  %v1098 = vunpack.c.l.b16 %v890
  %v1099 = vunpack.c.l.b16 %v891
  %v1100 = vunpack.c.l.b16 %v892
  %v1101 = vunpack.c.l.b16 %v962
  %v1102 = vunpack.c.h.b16 %v889
  %v1103 = vunpack.c.h.b16 %v890
  %v1104 = vunpack.c.h.b16 %v891
  %v1105 = vunpack.c.h.b16 %v892
  %v1106 = vunpack.c.h.b16 %v962
  %v1107 = vunpack.c.l.b16 %v894
  %v1108 = vunpack.c.l.b16 %v895
  %v1109 = vunpack.c.l.b16 %v896
  %v1110 = vunpack.c.l.b16 %v897
  %v1111 = vunpack.c.l.b16 %v964
  %v1112 = vunpack.c.h.b16 %v894
  %v1113 = vunpack.c.h.b16 %v895
  %v1114 = vunpack.c.h.b16 %v896
  %v1115 = vunpack.c.h.b16 %v897
  %v1116 = vunpack.c.h.b16 %v964
  %v1117 = vunpack.c.l.b16 %v899
  %v1118 = vunpack.c.l.b16 %v900
  %v1119 = vunpack.c.l.b16 %v901
  %v1120 = vunpack.c.l.b16 %v902
  %v1121 = vunpack.c.l.b16 %v966
  %v1122 = vunpack.c.h.b16 %v899
  %v1123 = vunpack.c.h.b16 %v900
  %v1124 = vunpack.c.h.b16 %v901
  %v1125 = vunpack.c.h.b16 %v902
  %v1126 = vunpack.c.h.b16 %v966
  %v1127 = vunpack.c.l.b16 %v904
  %v1128 = vunpack.c.l.b16 %v905
  %v1129 = vunpack.c.l.b16 %v906
  %v1130 = vunpack.c.l.b16 %v907
  %v1131 = vunpack.c.l.b16 %v968
  %v1132 = vunpack.c.h.b16 %v904
  %v1133 = vunpack.c.h.b16 %v905
  %v1134 = vunpack.c.h.b16 %v906
  %v1135 = vunpack.c.h.b16 %v907
  %v1136 = vunpack.c.h.b16 %v968
  %v1137 = vunpack.c.l.b16 %v909
  %v1138 = vunpack.c.l.b16 %v910
  %v1139 = vunpack.c.l.b16 %v911
  %v1140 = vunpack.c.l.b16 %v912
  %v1141 = vunpack.c.l.b16 %v970
  %v1142 = vunpack.c.h.b16 %v909
  %v1143 = vunpack.c.h.b16 %v910
  %v1144 = vunpack.c.h.b16 %v911
  %v1145 = vunpack.c.h.b16 %v912
  %v1146 = vunpack.c.h.b16 %v970
  %v1147 = vunpack.c.l.b16 %v914
  %v1148 = vunpack.c.l.b16 %v915
  %v1149 = vunpack.c.l.b16 %v916
  %v1150 = vunpack.c.l.b16 %v917
  %v1151 = vunpack.c.l.b16 %v972
  %v1152 = vunpack.c.h.b16 %v914
  %v1153 = vunpack.c.h.b16 %v915
  %v1154 = vunpack.c.h.b16 %v916
  %v1155 = vunpack.c.h.b16 %v917
  %v1156 = vunpack.c.h.b16 %v972
  %v1157 = vunpack.c.l.b16 %v919
  %v1158 = vunpack.c.l.b16 %v920
  %v1159 = vunpack.c.l.b16 %v921
  %v1160 = vunpack.c.l.b16 %v922
  %v1161 = vunpack.c.l.b16 %v974
  %v1162 = vunpack.c.h.b16 %v919
  %v1163 = vunpack.c.h.b16 %v920
  %v1164 = vunpack.c.h.b16 %v921
  %v1165 = vunpack.c.h.b16 %v922
  %v1166 = vunpack.c.h.b16 %v974
  %v1167 = vunpack.c.l.b16 %v924
  %v1168 = vunpack.c.l.b16 %v925
  %v1169 = vunpack.c.l.b16 %v926
  %v1170 = vunpack.c.l.b16 %v927
  %v1171 = vunpack.c.l.b16 %v976
  %v1172 = vunpack.c.h.b16 %v924
  %v1173 = vunpack.c.h.b16 %v925
  %v1174 = vunpack.c.h.b16 %v926
  %v1175 = vunpack.c.h.b16 %v927
  %v1176 = vunpack.c.h.b16 %v976
  %v1177 = vunpack.c.l.b16 %v929
  %v1178 = vunpack.c.l.b16 %v930
  %v1179 = vunpack.c.l.b16 %v931
  %v1180 = vunpack.c.l.b16 %v932
  %v1181 = vunpack.c.l.b16 %v978
  %v1182 = vunpack.c.h.b16 %v929
  %v1183 = vunpack.c.h.b16 %v930
  %v1184 = vunpack.c.h.b16 %v931
  %v1185 = vunpack.c.h.b16 %v932
  %v1186 = vunpack.c.h.b16 %v978
  %v1187 = vunpack.c.l.b16 %v934
  %v1188 = vunpack.c.l.b16 %v935
  %v1189 = vunpack.c.l.b16 %v936
  %v1190 = vunpack.c.l.b16 %v937
  %v1191 = vunpack.c.l.b16 %v980
  %v1192 = vunpack.c.h.b16 %v934
  %v1193 = vunpack.c.h.b16 %v935
  %v1194 = vunpack.c.h.b16 %v936
  %v1195 = vunpack.c.h.b16 %v937
  %v1196 = vunpack.c.h.b16 %v980
  %v1197 = vunpack.c.l.b16 %v939
  %v1198 = vunpack.c.l.b16 %v940
  %v1199 = vunpack.c.l.b16 %v941
  %v1200 = vunpack.c.l.b16 %v942
  %v1201 = vunpack.c.l.b16 %v982
  %v1202 = vunpack.c.h.b16 %v939
  %v1203 = vunpack.c.h.b16 %v940
  %v1204 = vunpack.c.h.b16 %v941
  %v1205 = vunpack.c.h.b16 %v942
  %v1206 = vunpack.c.h.b16 %v982
  %v1207 = vunpack.c.l.b16 %v944
  %v1208 = vunpack.c.l.b16 %v945
  %v1209 = vunpack.c.l.b16 %v946
  %v1210 = vunpack.c.l.b16 %v947
  %v1211 = vunpack.c.l.b16 %v984
  %v1212 = vunpack.c.h.b16 %v944
  %v1213 = vunpack.c.h.b16 %v945
  %v1214 = vunpack.c.h.b16 %v946
  %v1215 = vunpack.c.h.b16 %v947
  %v1216 = vunpack.c.h.b16 %v984
  %v1217 = vunpack.c.l.b16 %v949
  %v1218 = vunpack.c.l.b16 %v950
  %v1219 = vunpack.c.l.b16 %v951
  %v1220 = vunpack.c.l.b16 %v952
  %v1221 = vunpack.c.l.b16 %v986
  %v1222 = vunpack.c.h.b16 %v949
  %v1223 = vunpack.c.h.b16 %v950
  %v1224 = vunpack.c.h.b16 %v951
  %v1225 = vunpack.c.h.b16 %v952
  %v1226 = vunpack.c.h.b16 %v986
  %v1227 = vpack.c.b16 %v1068, %v1067
  %v1228 = vpack.c.b16 %v1070, %v1069
  %v1229 = vpack.c.b16 %v1071, %v1071
  %v1230 = vpack.c.b16 %v1073, %v1072
  %v1231 = vpack.c.b16 %v1075, %v1074
  %v1232 = vpack.c.b16 %v1076, %v1076
  %v1233 = vpack.c.b16 %v1078, %v1077
  %v1234 = vpack.c.b16 %v1080, %v1079
  %v1235 = vpack.c.b16 %v1081, %v1081
  %v1236 = vpack.c.b16 %v1083, %v1082
  %v1237 = vpack.c.b16 %v1085, %v1084
  %v1238 = vpack.c.b16 %v1086, %v1086
  %v1239 = vpack.c.b16 %v1088, %v1087
  %v1240 = vpack.c.b16 %v1090, %v1089
  %v1241 = vpack.c.b16 %v1091, %v1091
  %v1242 = vpack.c.b16 %v1093, %v1092
  %v1243 = vpack.c.b16 %v1095, %v1094
  %v1244 = vpack.c.b16 %v1096, %v1096
  %v1245 = vpack.c.b16 %v1098, %v1097
  %v1246 = vpack.c.b16 %v1100, %v1099
  %v1247 = vpack.c.b16 %v1101, %v1101
  %v1248 = vpack.c.b16 %v1103, %v1102
  %v1249 = vpack.c.b16 %v1105, %v1104
  %v1250 = vpack.c.b16 %v1106, %v1106
  %v1251 = vpack.c.b16 %v1108, %v1107
  %v1252 = vpack.c.b16 %v1110, %v1109
  %v1253 = vpack.c.b16 %v1111, %v1111
  %v1254 = vpack.c.b16 %v1113, %v1112
  %v1255 = vpack.c.b16 %v1115, %v1114
  %v1256 = vpack.c.b16 %v1116, %v1116
  %v1257 = vpack.c.b16 %v1118, %v1117
  %v1258 = vpack.c.b16 %v1120, %v1119
  %v1259 = vpack.c.b16 %v1121, %v1121
  %v1260 = vpack.c.b16 %v1123, %v1122
  %v1261 = vpack.c.b16 %v1125, %v1124
  %v1262 = vpack.c.b16 %v1126, %v1126
  %v1263 = vpack.c.b16 %v1128, %v1127
  %v1264 = vpack.c.b16 %v1130, %v1129
  %v1265 = vpack.c.b16 %v1131, %v1131
  %v1266 = vpack.c.b16 %v1133, %v1132
  %v1267 = vpack.c.b16 %v1135, %v1134
  %v1268 = vpack.c.b16 %v1136, %v1136
  %v1269 = vpack.c.b16 %v1138, %v1137
  %v1270 = vpack.c.b16 %v1140, %v1139
  %v1271 = vpack.c.b16 %v1141, %v1141
  %v1272 = vpack.c.b16 %v1143, %v1142
  %v1273 = vpack.c.b16 %v1145, %v1144
  %v1274 = vpack.c.b16 %v1146, %v1146
  %v1275 = vpack.c.b16 %v1148, %v1147
  %v1276 = vpack.c.b16 %v1150, %v1149
  %v1277 = vpack.c.b16 %v1151, %v1151
  %v1278 = vpack.c.b16 %v1153, %v1152
  %v1279 = vpack.c.b16 %v1155, %v1154
  %v1280 = vpack.c.b16 %v1156, %v1156
  %v1281 = vpack.c.b16 %v1158, %v1157
  %v1282 = vpack.c.b16 %v1160, %v1159
  %v1283 = vpack.c.b16 %v1161, %v1161
  %v1284 = vpack.c.b16 %v1163, %v1162
  %v1285 = vpack.c.b16 %v1165, %v1164
  %v1286 = vpack.c.b16 %v1166, %v1166
  %v1287 = vpack.c.b16 %v1168, %v1167
  %v1288 = vpack.c.b16 %v1170, %v1169
  %v1289 = vpack.c.b16 %v1171, %v1171
  %v1290 = vpack.c.b16 %v1173, %v1172
  %v1291 = vpack.c.b16 %v1175, %v1174
  %v1292 = vpack.c.b16 %v1176, %v1176
  %v1293 = vpack.c.b16 %v1178, %v1177
  %v1294 = vpack.c.b16 %v1180, %v1179
  %v1295 = vpack.c.b16 %v1181, %v1181
  %v1296 = vpack.c.b16 %v1183, %v1182
  %v1297 = vpack.c.b16 %v1185, %v1184
  %v1298 = vpack.c.b16 %v1186, %v1186
  %v1299 = vpack.c.b16 %v1188, %v1187
  %v1300 = vpack.c.b16 %v1190, %v1189
  %v1301 = vpack.c.b16 %v1191, %v1191
  %v1302 = vpack.c.b16 %v1193, %v1192
  %v1303 = vpack.c.b16 %v1195, %v1194
  %v1304 = vpack.c.b16 %v1196, %v1196
  %v1305 = vpack.c.b16 %v1198, %v1197
  %v1306 = vpack.c.b16 %v1200, %v1199
  %v1307 = vpack.c.b16 %v1201, %v1201
  %v1308 = vpack.c.b16 %v1203, %v1202
  %v1309 = vpack.c.b16 %v1205, %v1204
  %v1310 = vpack.c.b16 %v1206, %v1206
  %v1311 = vpack.c.b16 %v1208, %v1207
  %v1312 = vpack.c.b16 %v1210, %v1209
  %v1313 = vpack.c.b16 %v1211, %v1211
  %v1314 = vpack.c.b16 %v1213, %v1212
  %v1315 = vpack.c.b16 %v1215, %v1214
  %v1316 = vpack.c.b16 %v1216, %v1216
  %v1317 = vpack.c.b16 %v1218, %v1217
  %v1318 = vpack.c.b16 %v1220, %v1219
  %v1319 = vpack.c.b16 %v1221, %v1221
  %v1320 = vpack.c.b16 %v1223, %v1222
  %v1321 = vpack.c.b16 %v1225, %v1224
  %v1322 = vpack.c.b16 %v1226, %v1226
  %1419 = vst [vmem:[%s1] sm:$0xff] %v1227
  %1420 = vst [vmem:[%s1 + $0x8] sm:$0xff] %v1228
  %1421 = vst [vmem:[%s1 + $0x10] sm:$0xf] %v1229
  %1422 = vst [vmem:[%s1 + $0x14] sm:$0xff] %v1230
  %1423 = vst [vmem:[%s1 + $0x1c] sm:$0xff] %v1231
  %1424 = vst [vmem:[%s1 + $0x24] sm:$0xf] %v1232
  %1425 = vst [vmem:[%s1 + $0x28] sm:$0xff] %v1233
  %1426 = vst [vmem:[%s1 + $0x30] sm:$0xff] %v1234
  %1427 = vst [vmem:[%s1 + $0x38] sm:$0xf] %v1235
  %1428 = vst [vmem:[%s1 + $0x3c] sm:$0xff] %v1236
  %1429 = vst [vmem:[%s1 + $0x44] sm:$0xff] %v1237
  %1430 = vst [vmem:[%s1 + $0x4c] sm:$0xf] %v1238
  %1431 = vst [vmem:[%s1 + $0x50] sm:$0xff] %v1239
  %1432 = vst [vmem:[%s1 + $0x58] sm:$0xff] %v1240
  %1433 = vst [vmem:[%s1 + $0x60] sm:$0xf] %v1241
  %1434 = vst [vmem:[%s1 + $0x64] sm:$0xff] %v1242
  %1435 = vst [vmem:[%s1 + $0x6c] sm:$0xff] %v1243
  %1436 = vst [vmem:[%s1 + $0x74] sm:$0xf] %v1244
  %1437 = vst [vmem:[%s1 + $0x78] sm:$0xff] %v1245
  %1438 = vst [vmem:[%s1 + $0x80] sm:$0xff] %v1246
  %1439 = vst [vmem:[%s1 + $0x88] sm:$0xf] %v1247
  %1440 = vst [vmem:[%s1 + $0x8c] sm:$0xff] %v1248
  %1441 = vst [vmem:[%s1 + $0x94] sm:$0xff] %v1249
  %1442 = vst [vmem:[%s1 + $0x9c] sm:$0xf] %v1250
  %1443 = vst [vmem:[%s1 + $0xa0] sm:$0xff] %v1251
  %1444 = vst [vmem:[%s1 + $0xa8] sm:$0xff] %v1252
  %1445 = vst [vmem:[%s1 + $0xb0] sm:$0xf] %v1253
  %1446 = vst [vmem:[%s1 + $0xb4] sm:$0xff] %v1254
  %1447 = vst [vmem:[%s1 + $0xbc] sm:$0xff] %v1255
  %1448 = vst [vmem:[%s1 + $0xc4] sm:$0xf] %v1256
  %1449 = vst [vmem:[%s1 + $0xc8] sm:$0xff] %v1257
  %1450 = vst [vmem:[%s1 + $0xd0] sm:$0xff] %v1258
  %1451 = vst [vmem:[%s1 + $0xd8] sm:$0xf] %v1259
  %1452 = vst [vmem:[%s1 + $0xdc] sm:$0xff] %v1260
  %1453 = vst [vmem:[%s1 + $0xe4] sm:$0xff] %v1261
  %1454 = vst [vmem:[%s1 + $0xec] sm:$0xf] %v1262
  %1455 = vst [vmem:[%s1 + $0xf0] sm:$0xff] %v1263
  %1456 = vst [vmem:[%s1 + $0xf8] sm:$0xff] %v1264
  %1457 = vst [vmem:[%s1 + $0x100] sm:$0xf] %v1265
  %1458 = vst [vmem:[%s1 + $0x104] sm:$0xff] %v1266
  %1459 = vst [vmem:[%s1 + $0x10c] sm:$0xff] %v1267
  %1460 = vst [vmem:[%s1 + $0x114] sm:$0xf] %v1268
  %1461 = vst [vmem:[%s1 + $0x118] sm:$0xff] %v1269
  %1462 = vst [vmem:[%s1 + $0x120] sm:$0xff] %v1270
  %1463 = vst [vmem:[%s1 + $0x128] sm:$0xf] %v1271
  %1464 = vst [vmem:[%s1 + $0x12c] sm:$0xff] %v1272
  %1465 = vst [vmem:[%s1 + $0x134] sm:$0xff] %v1273
  %1466 = vst [vmem:[%s1 + $0x13c] sm:$0xf] %v1274
  %1467 = vst [vmem:[%s1 + $0x140] sm:$0xff] %v1275
  %1468 = vst [vmem:[%s1 + $0x148] sm:$0xff] %v1276
  %1469 = vst [vmem:[%s1 + $0x150] sm:$0xf] %v1277
  %1470 = vst [vmem:[%s1 + $0x154] sm:$0xff] %v1278
  %1471 = vst [vmem:[%s1 + $0x15c] sm:$0xff] %v1279
  %1472 = vst [vmem:[%s1 + $0x164] sm:$0xf] %v1280
  %1473 = vst [vmem:[%s1 + $0x168] sm:$0xff] %v1281
  %1474 = vst [vmem:[%s1 + $0x170] sm:$0xff] %v1282
  %1475 = vst [vmem:[%s1 + $0x178] sm:$0xf] %v1283
  %1476 = vst [vmem:[%s1 + $0x17c] sm:$0xff] %v1284
  %1477 = vst [vmem:[%s1 + $0x184] sm:$0xff] %v1285
  %1478 = vst [vmem:[%s1 + $0x18c] sm:$0xf] %v1286
  %1479 = vst [vmem:[%s1 + $0x190] sm:$0xff] %v1287
  %1480 = vst [vmem:[%s1 + $0x198] sm:$0xff] %v1288
  %1481 = vst [vmem:[%s1 + $0x1a0] sm:$0xf] %v1289
  %1482 = vst [vmem:[%s1 + $0x1a4] sm:$0xff] %v1290
  %1483 = vst [vmem:[%s1 + $0x1ac] sm:$0xff] %v1291
  %1484 = vst [vmem:[%s1 + $0x1b4] sm:$0xf] %v1292
  %1485 = vst [vmem:[%s1 + $0x1b8] sm:$0xff] %v1293
  %1486 = vst [vmem:[%s1 + $0x1c0] sm:$0xff] %v1294
  %1487 = vst [vmem:[%s1 + $0x1c8] sm:$0xf] %v1295
  %1488 = vst [vmem:[%s1 + $0x1cc] sm:$0xff] %v1296
  %1489 = vst [vmem:[%s1 + $0x1d4] sm:$0xff] %v1297
  %1490 = vst [vmem:[%s1 + $0x1dc] sm:$0xf] %v1298
  %1491 = vst [vmem:[%s1 + $0x1e0] sm:$0xff] %v1299
  %1492 = vst [vmem:[%s1 + $0x1e8] sm:$0xff] %v1300
  %1493 = vst [vmem:[%s1 + $0x1f0] sm:$0xf] %v1301
  %1494 = vst [vmem:[%s1 + $0x1f4] sm:$0xff] %v1302
  %1495 = vst [vmem:[%s1 + $0x1fc] sm:$0xff] %v1303
  %1496 = vst [vmem:[%s1 + $0x204] sm:$0xf] %v1304
  %1497 = vst [vmem:[%s1 + $0x208] sm:$0xff] %v1305
  %1498 = vst [vmem:[%s1 + $0x210] sm:$0xff] %v1306
  %1499 = vst [vmem:[%s1 + $0x218] sm:$0xf] %v1307
  %1500 = vst [vmem:[%s1 + $0x21c] sm:$0xff] %v1308
  %1501 = vst [vmem:[%s1 + $0x224] sm:$0xff] %v1309
  %1502 = vst [vmem:[%s1 + $0x22c] sm:$0xf] %v1310
  %1503 = vst [vmem:[%s1 + $0x230] sm:$0xff] %v1311
  %1504 = vst [vmem:[%s1 + $0x238] sm:$0xff] %v1312
  %1505 = vst [vmem:[%s1 + $0x240] sm:$0xf] %v1313
  %1506 = vst [vmem:[%s1 + $0x244] sm:$0xff] %v1314
  %1507 = vst [vmem:[%s1 + $0x24c] sm:$0xff] %v1315
  %1508 = vst [vmem:[%s1 + $0x254] sm:$0xf] %v1316
  %1509 = vst [vmem:[%s1 + $0x258] sm:$0xff] %v1317
  %1510 = vst [vmem:[%s1 + $0x260] sm:$0xff] %v1318
  %1511 = vst [vmem:[%s1 + $0x268] sm:$0xf] %v1319
  %1512 = vst [vmem:[%s1 + $0x26c] sm:$0xff] %v1320
  %1513 = vst [vmem:[%s1 + $0x274] sm:$0xff] %v1321
  %1514 = vst [vmem:[%s1 + $0x27c] sm:$0xf] %v1322
  // Predicated region
  $region6: #{_lambda_.10} parent=0 // pred_check
    _
  $region7: #{_lambda_.10} parent=0 // pred_check_branch
    %1516 = sbr.rel (0) target = $region9
  $region8: #{_lambda_.10} parent=0 // pred_region
    _
  $region9: #{_lambda_.10} parent=0 // pred_fallthru
    _
  // Predicated region
  $region10: #{_lambda_.10} parent=0 // pred_check
    _
  $region11: #{_lambda_.10} parent=0 // pred_check_branch
    %1518 = sbr.rel (0) target = $region13
  $region12: #{_lambda_.10} parent=0 // pred_region
    _
  $region13: #{_lambda_.10} parent=0 // pred_fallthru
    _

// kernel: _lambda_.11
$region0: #{_lambda_.11}
  #allocation0 [shape = 'u32[]', space=smem, size = 0x4, offset = 0x4, fixed_abs, tag = 'smem constant byte address 0x4 - core index']
  #allocation1 [shape = 'u32[144,128]{1,0:T(1,128)}', space=vmem, size = 0x12000, scoped, tag = 'internal scratch']
  #allocation2 [shape = 'f32[1,256]{1,0:T(1,128)}', space=vmem, size = 0x400, scoped, tag = 'scratch operand']
  #allocation3 [shape = 's32[1,256]{1,0:T(1,128)}', space=vmem, size = 0x400, scoped, tag = 'scratch operand']
  %s0 = inlined_call_operand.vmem [shape: bf16[1,256,640], index: 0, kind: input, shape index: {}]
  %s1 = inlined_call_operand.vmem [shape: bf16[2,640,256], index: 1, kind: input, shape index: {}]
  %s2 = inlined_call_operand.vmem [shape: s32[2,1,256], index: 2, kind: output, shape index: {}]
  %s3 = sld [smem:[#allocation0]]
  $region49: #{_lambda_.11} parent=0
    _
  %s5 = ssub.s32 1, %s3
  %s6 = scalar_select 0, %s5, %s3
  loop: start=0, step=1, limit=4
  $region2: #{_lambda_.11} parent=0 // loop_pre_header
    _
  $region3: #{_lambda_.11} parent=0 // loop_header
    %s8 = sphi 0, %s12
    %p9 = scmp.ge.s32.totalorder %s8, 4
    %s15 = sphi 0, %s34
    %s16 = sphi 0, %s30
    %s17 = sphi 0, %s26
    %s18 = sphi 0, %s15
    %s19 = sphi 0, %s16
    %s20 = sphi 0, %s17
    %s21 = sphi 0, %s18
    %s22 = sphi 0, %s19
    %s23 = sphi 0, %s20
    %s37 = sphi 0, %s39
    %s40 = sphi 0, %s37
    %s41 = sphi 0, %s40
    %s57 = sphi 0, %s41
    %s65 = sphi 0, %s67
    %s68 = sphi 0, %s65
    %s69 = sphi 0, %s68
    %s85 = sphi 0, %s69
    %s93 = sphi 0, %s95
    %s96 = sphi 0, %s93
    %s97 = sphi 0, %s96
    %s113 = sphi 0, %s97
  $region4: #{_lambda_.11} parent=0 // loop_header_branch
    %11 = sbr.rel (%p9) target = $region8
  $region5: #{_lambda_.11} parent=0 // loop_body
    %s13 = ssub.s32 %s8, 1
    %s14 = ssub.s32 %s8, 2
    %s24 = sadd.s32 1, %s17
    %p25 = scmp.ge.s32.totalorder %s24, 1
    %s26 = scalar_select %p25, 0, %s24
    %s27 = sadd.s32 1, %s16
    %s28 = scalar_select %p25, %s27, %s16
    %p29 = scmp.ge.s32.totalorder %s28, 1
    %s30 = scalar_select %p29, 0, %s28
    %s31 = sadd.s32 1, %s15
    %s32 = scalar_select %p29, %s31, %s15
    %p33 = scmp.ge.s32.totalorder %s32, 2
    %s34 = scalar_select %p33, 0, %s32
    %s35 = ssub.s32 %s17, %s26
    %p36 = scmp.eq.s32.totalorder %s35, 0
    %s38 = sadd.s32 %s37, 1
    %s39 = scalar_select %p36, %s37, %s38
    %p42 = pneg %p36
    %p43 = scmp.eq.s32.totalorder %s8, 1
    %p44 = por %p42, %p43
    %p45 = scmp.ne.s32.totalorder %s37, %s40
    %p46 = scmp.eq.s32.totalorder %s8, 0
    %p47 = por %p45, %p46
    %p48 = scmp.ne.s32.totalorder %s37, %s40
    %p49 = scmp.eq.s32.totalorder %s13, 1
    %p50 = por %p48, %p49
    %p51 = scmp.ne.s32.totalorder %s40, %s41
    %p52 = scmp.eq.s32.totalorder %s13, 0
    %p53 = por %p51, %p52
    %p54 = scmp.ne.s32.totalorder %s40, %s41
    %p55 = scmp.eq.s32.totalorder %s14, 1
    %p56 = por %p54, %p55
    %p58 = scmp.ne.s32.totalorder %s41, %s57
    %p59 = scmp.eq.s32.totalorder %s14, 0
    %p60 = por %p58, %p59
    %s61 = ssub.s32 %s15, %s34
    %s62 = ssub.s32 %s16, %s30
    %s63 = sor.u32 %s61, %s62
    %p64 = scmp.eq.s32.totalorder %s63, 0
    %s66 = sadd.s32 %s65, 1
    %s67 = scalar_select %p64, %s65, %s66
    %p70 = pneg %p64
    %p71 = scmp.eq.s32.totalorder %s8, 1
    %p72 = por %p70, %p71
    %p73 = scmp.ne.s32.totalorder %s65, %s68
    %p74 = scmp.eq.s32.totalorder %s8, 0
    %p75 = por %p73, %p74
    %p76 = scmp.ne.s32.totalorder %s65, %s68
    %p77 = scmp.eq.s32.totalorder %s13, 1
    %p78 = por %p76, %p77
    %p79 = scmp.ne.s32.totalorder %s68, %s69
    %p80 = scmp.eq.s32.totalorder %s13, 0
    %p81 = por %p79, %p80
    %p82 = scmp.ne.s32.totalorder %s68, %s69
    %p83 = scmp.eq.s32.totalorder %s14, 1
    %p84 = por %p82, %p83
    %p86 = scmp.ne.s32.totalorder %s69, %s85
    %p87 = scmp.eq.s32.totalorder %s14, 0
    %p88 = por %p86, %p87
    %s89 = ssub.s32 %s15, %s34
    %s90 = ssub.s32 %s16, %s30
    %s91 = sor.u32 %s89, %s90
    %p92 = scmp.eq.s32.totalorder %s91, 0
    %s94 = sadd.s32 %s93, 1
    %s95 = scalar_select %p92, %s93, %s94
    %p98 = pneg %p92
    %p99 = scmp.eq.s32.totalorder %s8, 1
    %p100 = por %p98, %p99
    %p101 = scmp.ne.s32.totalorder %s93, %s96
    %p102 = scmp.eq.s32.totalorder %s8, 0
    %p103 = por %p101, %p102
    %p104 = scmp.ne.s32.totalorder %s93, %s96
    %p105 = scmp.eq.s32.totalorder %s13, 1
    %p106 = por %p104, %p105
    %p107 = scmp.ne.s32.totalorder %s96, %s97
    %p108 = scmp.eq.s32.totalorder %s13, 0
    %p109 = por %p107, %p108
    %p110 = scmp.ne.s32.totalorder %s96, %s97
    %p111 = scmp.eq.s32.totalorder %s14, 1
    %p112 = por %p110, %p111
    %p114 = scmp.ne.s32.totalorder %s97, %s113
    %p115 = scmp.eq.s32.totalorder %s14, 0
    %p116 = por %p114, %p115
    %p117 = scmp.le.s32.totalorder 1, %s8
    %p118 = scmp.lt.s32.totalorder %s8, 3
    %p119 = pnand %p117, %p118
    %p120 = pneg %p119
    // Predicated region
    $region9: #{_lambda_.11} parent=5 // pred_check
      _
    $region10: #{_lambda_.11} parent=5 // pred_check_branch
      %122 = sbr.rel (%p119) target = $region12
    $region11: #{_lambda_.11} parent=5 // pred_region
      %s123 = ssub.s32 %s8, 1
      // Predicated region
      $region13: #{_lambda_.11} parent=11 // pred_check
        %p124 = pneg %p53
      $region14: #{_lambda_.11} parent=11 // pred_check_branch
        %126 = sbr.rel (%p124) target = $region16
      $region15: #{_lambda_.11} parent=11 // pred_region
        %s127 = smul.u32 32, %s20
        %p128 = scmp.lt.s32.totalorder %s127, 31
        %s129 = scalar_select %p128, %s127, 31
        %s130 = smul.addr %s129, 5
        %s131 = smul.addr %s130, 4
        %s132 = scalar_lea.vmem %s0, %s131
        %s133 = smul.u32 32, %s20
      $region16: #{_lambda_.11} parent=11 // pred_fallthru
        _
    $region12: #{_lambda_.11} parent=5 // pred_fallthru
      _
    %p134 = scmp.lt.s32.totalorder %s8, 2
    // Predicated region
    $region17: #{_lambda_.11} parent=5 // pred_check
      %p135 = pneg %p134
    $region18: #{_lambda_.11} parent=5 // pred_check_branch
      %137 = sbr.rel (%p135) target = $region20
    $region19: #{_lambda_.11} parent=5 // pred_region
      // Predicated region
      $region21: #{_lambda_.11} parent=19 // pred_check
        %p138 = pneg %p75
      $region22: #{_lambda_.11} parent=19 // pred_check_branch
        %140 = sbr.rel (%p138) target = $region24
      $region23: #{_lambda_.11} parent=19 // pred_region
        %s141 = smul.u32 2, %s16
        %p142 = scmp.lt.s32.totalorder %s15, 1
        %s143 = scalar_select %p142, %s15, 1
        %p144 = scmp.lt.s32.totalorder %s141, 1
        %s145 = scalar_select %p144, %s141, 1
        %s146 = smul.addr %s143, 160
        %s147 = sadd.s32 %s145, %s146
        %s148 = smul.addr %s147, 4
        %s149 = scalar_lea.vmem %s1, %s148
        %s150 = smul.u32 2, %s16
      $region24: #{_lambda_.11} parent=19 // pred_fallthru
        _
    $region20: #{_lambda_.11} parent=5 // pred_fallthru
      _
    %p151 = scmp.le.s32.totalorder 1, %s8
    %p152 = scmp.lt.s32.totalorder %s8, 3
    %p153 = pnand %p151, %p152
    %p154 = pneg %p153
    // Predicated region
    $region25: #{_lambda_.11} parent=5 // pred_check
      _
    $region26: #{_lambda_.11} parent=5 // pred_check_branch
      %156 = sbr.rel (%p153) target = $region28
    $region27: #{_lambda_.11} parent=5 // pred_region
      %s157 = ssub.s32 %s8, 1
      %s158 = smul.u32 32, %s20
      %p159 = scmp.lt.s32.totalorder %s158, 31
      %s160 = scalar_select %p159, %s158, 31
      %s161 = smul.addr %s160, 5
      %s162 = smul.addr %s161, 4
      %s163 = scalar_lea.vmem %s0, %s162
      %p164 = pneg %p53
      %p165 = pneg %p50
      %s166 = smul.u32 2, %s19
      %p167 = scmp.lt.s32.totalorder %s18, 1
      %s168 = scalar_select %p167, %s18, 1
      %p169 = scmp.lt.s32.totalorder %s166, 1
      %s170 = scalar_select %p169, %s166, 1
      %s171 = smul.addr %s168, 160
      %s172 = sadd.s32 %s170, %s171
      %s173 = smul.addr %s172, 4
      %s174 = scalar_lea.vmem %s1, %s173
      %p175 = pneg %p81
      %p176 = pneg %p78
      %p177 = pneg %p109
      %p178 = pneg %p106
      %s179 = smul.u32 2, %s19
      %p180 = scmp.lt.s32.totalorder %s18, 1
      %s181 = scalar_select %p180, %s18, 1
      %p182 = scmp.lt.s32.totalorder %s179, 1
      %s183 = scalar_select %p182, %s179, 1
      %s184 = smul.addr %s181, 2
      %s185 = sadd.s32 %s183, %s184
      %s186 = scalar_lea.vmem %s2, %s185
      %s187 = smul.u32 32, %s20
      %p188 = scmp.lt.s32.totalorder %s187, 31
      %s189 = scalar_select %p188, %s187, 31
      %s190 = smul.addr %s189, 5
      %s191 = smul.addr %s190, 4
      %s192 = scalar_lea.vmem %s0, %s191
      %s193 = smul.u32 32, %s20
      %s194 = smul.u32 2, %s19
      %p195 = scmp.lt.s32.totalorder %s18, 1
      %s196 = scalar_select %p195, %s18, 1
      %p197 = scmp.lt.s32.totalorder %s194, 1
      %s198 = scalar_select %p197, %s194, 1
      %s199 = smul.addr %s196, 160
      %s200 = sadd.s32 %s198, %s199
      %s201 = smul.addr %s200, 4
      %s202 = scalar_lea.vmem %s1, %s201
      %s203 = smul.u32 2, %s19
      %s204 = smul.u32 2, %s19
      %p205 = scmp.lt.s32.totalorder %s18, 1
      %s206 = scalar_select %p205, %s18, 1
      %p207 = scmp.lt.s32.totalorder %s204, 1
      %s208 = scalar_select %p207, %s204, 1
      %s209 = smul.addr %s206, 2
      %s210 = sadd.s32 %s208, %s209
      %s211 = scalar_lea.vmem %s2, %s210
      %s212 = smul.u32 2, %s19
      %p214 = scmp.eq.s32.totalorder %s20, 0
      // Predicated region
      $region29: #{_lambda_.11} parent=27 // pred_check
        %p215 = pneg %p214
      $region30: #{_lambda_.11} parent=27 // pred_check_branch
        %217 = sbr.rel (%p215) target = $region32
      $region31: #{_lambda_.11} parent=27 // pred_region
        %v218 = vlaneseq
        %vm219 = vcmp.ge.s32.totalorder %v218, 0
        %vm220 = vcmp.lt.s32.totalorder %v218, 256
        %vm221 = vmand %vm219, %vm220
        %222 = vst.msk [vmem:[#allocation2] sm:$0x3] %vm221, -inf
        %223 = vst.msk [vmem:[#allocation3] sm:$0x3] %vm221, 0
      $region32: #{_lambda_.11} parent=27 // pred_fallthru
        _
      %v224 = vld [vmem:[%s192] sm:$0xff]
      %v225 = vld [vmem:[%s192 + $0x8] sm:$0xff]
      %v226 = vld [vmem:[%s192 + $0x10] sm:$0xf]
      %v227 = vld [vmem:[%s192 + $0x14] sm:$0xff]
      %v228 = vld [vmem:[%s192 + $0x1c] sm:$0xff]
      %v229 = vld [vmem:[%s192 + $0x24] sm:$0xf]
      %v230 = vld [vmem:[%s192 + $0x28] sm:$0xff]
      %v231 = vld [vmem:[%s192 + $0x30] sm:$0xff]
      %v232 = vld [vmem:[%s192 + $0x38] sm:$0xf]
      %v233 = vld [vmem:[%s192 + $0x3c] sm:$0xff]
      %v234 = vld [vmem:[%s192 + $0x44] sm:$0xff]
      %v235 = vld [vmem:[%s192 + $0x4c] sm:$0xf]
      %v236 = vld [vmem:[%s192 + $0x50] sm:$0xff]
      %v237 = vld [vmem:[%s192 + $0x58] sm:$0xff]
      %v238 = vld [vmem:[%s192 + $0x60] sm:$0xf]
      %v239 = vld [vmem:[%s192 + $0x64] sm:$0xff]
      %v240 = vld [vmem:[%s192 + $0x6c] sm:$0xff]
      %v241 = vld [vmem:[%s192 + $0x74] sm:$0xf]
      %v242 = vld [vmem:[%s192 + $0x78] sm:$0xff]
      %v243 = vld [vmem:[%s192 + $0x80] sm:$0xff]
      %v244 = vld [vmem:[%s192 + $0x88] sm:$0xf]
      %v245 = vld [vmem:[%s192 + $0x8c] sm:$0xff]
      %v246 = vld [vmem:[%s192 + $0x94] sm:$0xff]
      %v247 = vld [vmem:[%s192 + $0x9c] sm:$0xf]
      %v248 = vld [vmem:[%s192 + $0xa0] sm:$0xff]
      %v249 = vld [vmem:[%s192 + $0xa8] sm:$0xff]
      %v250 = vld [vmem:[%s192 + $0xb0] sm:$0xf]
      %v251 = vld [vmem:[%s192 + $0xb4] sm:$0xff]
      %v252 = vld [vmem:[%s192 + $0xbc] sm:$0xff]
      %v253 = vld [vmem:[%s192 + $0xc4] sm:$0xf]
      %v254 = vld [vmem:[%s192 + $0xc8] sm:$0xff]
      %v255 = vld [vmem:[%s192 + $0xd0] sm:$0xff]
      %v256 = vld [vmem:[%s192 + $0xd8] sm:$0xf]
      %v257 = vld [vmem:[%s192 + $0xdc] sm:$0xff]
      %v258 = vld [vmem:[%s192 + $0xe4] sm:$0xff]
      %v259 = vld [vmem:[%s192 + $0xec] sm:$0xf]
      %v260 = vld [vmem:[%s192 + $0xf0] sm:$0xff]
      %v261 = vld [vmem:[%s192 + $0xf8] sm:$0xff]
      %v262 = vld [vmem:[%s192 + $0x100] sm:$0xf]
      %v263 = vld [vmem:[%s192 + $0x104] sm:$0xff]
      %v264 = vld [vmem:[%s192 + $0x10c] sm:$0xff]
      %v265 = vld [vmem:[%s192 + $0x114] sm:$0xf]
      %v266 = vld [vmem:[%s192 + $0x118] sm:$0xff]
      %v267 = vld [vmem:[%s192 + $0x120] sm:$0xff]
      %v268 = vld [vmem:[%s192 + $0x128] sm:$0xf]
      %v269 = vld [vmem:[%s192 + $0x12c] sm:$0xff]
      %v270 = vld [vmem:[%s192 + $0x134] sm:$0xff]
      %v271 = vld [vmem:[%s192 + $0x13c] sm:$0xf]
      %v272 = vld [vmem:[%s192 + $0x140] sm:$0xff]
      %v273 = vld [vmem:[%s192 + $0x148] sm:$0xff]
      %v274 = vld [vmem:[%s192 + $0x150] sm:$0xf]
      %v275 = vld [vmem:[%s192 + $0x154] sm:$0xff]
      %v276 = vld [vmem:[%s192 + $0x15c] sm:$0xff]
      %v277 = vld [vmem:[%s192 + $0x164] sm:$0xf]
      %v278 = vld [vmem:[%s192 + $0x168] sm:$0xff]
      %v279 = vld [vmem:[%s192 + $0x170] sm:$0xff]
      %v280 = vld [vmem:[%s192 + $0x178] sm:$0xf]
      %v281 = vld [vmem:[%s192 + $0x17c] sm:$0xff]
      %v282 = vld [vmem:[%s192 + $0x184] sm:$0xff]
      %v283 = vld [vmem:[%s192 + $0x18c] sm:$0xf]
      %v284 = vld [vmem:[%s192 + $0x190] sm:$0xff]
      %v285 = vld [vmem:[%s192 + $0x198] sm:$0xff]
      %v286 = vld [vmem:[%s192 + $0x1a0] sm:$0xf]
      %v287 = vld [vmem:[%s192 + $0x1a4] sm:$0xff]
      %v288 = vld [vmem:[%s192 + $0x1ac] sm:$0xff]
      %v289 = vld [vmem:[%s192 + $0x1b4] sm:$0xf]
      %v290 = vld [vmem:[%s192 + $0x1b8] sm:$0xff]
      %v291 = vld [vmem:[%s192 + $0x1c0] sm:$0xff]
      %v292 = vld [vmem:[%s192 + $0x1c8] sm:$0xf]
      %v293 = vld [vmem:[%s192 + $0x1cc] sm:$0xff]
      %v294 = vld [vmem:[%s192 + $0x1d4] sm:$0xff]
      %v295 = vld [vmem:[%s192 + $0x1dc] sm:$0xf]
      %v296 = vld [vmem:[%s192 + $0x1e0] sm:$0xff]
      %v297 = vld [vmem:[%s192 + $0x1e8] sm:$0xff]
      %v298 = vld [vmem:[%s192 + $0x1f0] sm:$0xf]
      %v299 = vld [vmem:[%s192 + $0x1f4] sm:$0xff]
      %v300 = vld [vmem:[%s192 + $0x1fc] sm:$0xff]
      %v301 = vld [vmem:[%s192 + $0x204] sm:$0xf]
      %v302 = vld [vmem:[%s192 + $0x208] sm:$0xff]
      %v303 = vld [vmem:[%s192 + $0x210] sm:$0xff]
      %v304 = vld [vmem:[%s192 + $0x218] sm:$0xf]
      %v305 = vld [vmem:[%s192 + $0x21c] sm:$0xff]
      %v306 = vld [vmem:[%s192 + $0x224] sm:$0xff]
      %v307 = vld [vmem:[%s192 + $0x22c] sm:$0xf]
      %v308 = vld [vmem:[%s192 + $0x230] sm:$0xff]
      %v309 = vld [vmem:[%s192 + $0x238] sm:$0xff]
      %v310 = vld [vmem:[%s192 + $0x240] sm:$0xf]
      %v311 = vld [vmem:[%s192 + $0x244] sm:$0xff]
      %v312 = vld [vmem:[%s192 + $0x24c] sm:$0xff]
      %v313 = vld [vmem:[%s192 + $0x254] sm:$0xf]
      %v314 = vld [vmem:[%s192 + $0x258] sm:$0xff]
      %v315 = vld [vmem:[%s192 + $0x260] sm:$0xff]
      %v316 = vld [vmem:[%s192 + $0x268] sm:$0xf]
      %v317 = vld [vmem:[%s192 + $0x26c] sm:$0xff]
      %v318 = vld [vmem:[%s192 + $0x274] sm:$0xff]
      %v319 = vld [vmem:[%s192 + $0x27c] sm:$0xf]
      %v320 = vld [vmem:[%s202] sm:$0xff]
      %v321 = vld [vmem:[%s202 + $0x8] sm:$0xff]
      %v322 = vld [vmem:[%s202 + $0x10] sm:$0xff]
      %v323 = vld [vmem:[%s202 + $0x18] sm:$0xff]
      %v324 = vld [vmem:[%s202 + $0x20] sm:$0xff]
      %v325 = vld [vmem:[%s202 + $0x28] sm:$0xff]
      %v326 = vld [vmem:[%s202 + $0x30] sm:$0xff]
      %v327 = vld [vmem:[%s202 + $0x38] sm:$0xff]
      %v328 = vld [vmem:[%s202 + $0x40] sm:$0xff]
      %v329 = vld [vmem:[%s202 + $0x48] sm:$0xff]
      %v330 = vld [vmem:[%s202 + $0x50] sm:$0xff]
      %v331 = vld [vmem:[%s202 + $0x58] sm:$0xff]
      %v332 = vld [vmem:[%s202 + $0x60] sm:$0xff]
      %v333 = vld [vmem:[%s202 + $0x68] sm:$0xff]
      %v334 = vld [vmem:[%s202 + $0x70] sm:$0xff]
      %v335 = vld [vmem:[%s202 + $0x78] sm:$0xff]
      %v336 = vld [vmem:[%s202 + $0x80] sm:$0xff]
      %v337 = vld [vmem:[%s202 + $0x88] sm:$0xff]
      %v338 = vld [vmem:[%s202 + $0x90] sm:$0xff]
      %v339 = vld [vmem:[%s202 + $0x98] sm:$0xff]
      %v340 = vld [vmem:[%s202 + $0xa0] sm:$0xff]
      %v341 = vld [vmem:[%s202 + $0xa8] sm:$0xff]
      %v342 = vld [vmem:[%s202 + $0xb0] sm:$0xff]
      %v343 = vld [vmem:[%s202 + $0xb8] sm:$0xff]
      %v344 = vld [vmem:[%s202 + $0xc0] sm:$0xff]
      %v345 = vld [vmem:[%s202 + $0xc8] sm:$0xff]
      %v346 = vld [vmem:[%s202 + $0xd0] sm:$0xff]
      %v347 = vld [vmem:[%s202 + $0xd8] sm:$0xff]
      %v348 = vld [vmem:[%s202 + $0xe0] sm:$0xff]
      %v349 = vld [vmem:[%s202 + $0xe8] sm:$0xff]
      %v350 = vld [vmem:[%s202 + $0xf0] sm:$0xff]
      %v351 = vld [vmem:[%s202 + $0xf8] sm:$0xff]
      %v352 = vld [vmem:[%s202 + $0x100] sm:$0xff]
      %v353 = vld [vmem:[%s202 + $0x108] sm:$0xff]
      %v354 = vld [vmem:[%s202 + $0x110] sm:$0xff]
      %v355 = vld [vmem:[%s202 + $0x118] sm:$0xff]
      %v356 = vld [vmem:[%s202 + $0x120] sm:$0xff]
      %v357 = vld [vmem:[%s202 + $0x128] sm:$0xff]
      %v358 = vld [vmem:[%s202 + $0x130] sm:$0xff]
      %v359 = vld [vmem:[%s202 + $0x138] sm:$0xff]
      %v360 = vld [vmem:[%s202 + $0x140] sm:$0xff]
      %v361 = vld [vmem:[%s202 + $0x148] sm:$0xff]
      %v362 = vld [vmem:[%s202 + $0x150] sm:$0xff]
      %v363 = vld [vmem:[%s202 + $0x158] sm:$0xff]
      %v364 = vld [vmem:[%s202 + $0x160] sm:$0xff]
      %v365 = vld [vmem:[%s202 + $0x168] sm:$0xff]
      %v366 = vld [vmem:[%s202 + $0x170] sm:$0xff]
      %v367 = vld [vmem:[%s202 + $0x178] sm:$0xff]
      %v368 = vld [vmem:[%s202 + $0x180] sm:$0xff]
      %v369 = vld [vmem:[%s202 + $0x188] sm:$0xff]
      %v370 = vld [vmem:[%s202 + $0x190] sm:$0xff]
      %v371 = vld [vmem:[%s202 + $0x198] sm:$0xff]
      %v372 = vld [vmem:[%s202 + $0x1a0] sm:$0xff]
      %v373 = vld [vmem:[%s202 + $0x1a8] sm:$0xff]
      %v374 = vld [vmem:[%s202 + $0x1b0] sm:$0xff]
      %v375 = vld [vmem:[%s202 + $0x1b8] sm:$0xff]
      %v376 = vld [vmem:[%s202 + $0x1c0] sm:$0xff]
      %v377 = vld [vmem:[%s202 + $0x1c8] sm:$0xff]
      %v378 = vld [vmem:[%s202 + $0x1d0] sm:$0xff]
      %v379 = vld [vmem:[%s202 + $0x1d8] sm:$0xff]
      %v380 = vld [vmem:[%s202 + $0x1e0] sm:$0xff]
      %v381 = vld [vmem:[%s202 + $0x1e8] sm:$0xff]
      %v382 = vld [vmem:[%s202 + $0x1f0] sm:$0xff]
      %v383 = vld [vmem:[%s202 + $0x1f8] sm:$0xff]
      %v384 = vld [vmem:[%s202 + $0x200] sm:$0xff]
      %v385 = vld [vmem:[%s202 + $0x208] sm:$0xff]
      %v386 = vld [vmem:[%s202 + $0x210] sm:$0xff]
      %v387 = vld [vmem:[%s202 + $0x218] sm:$0xff]
      %v388 = vld [vmem:[%s202 + $0x220] sm:$0xff]
      %v389 = vld [vmem:[%s202 + $0x228] sm:$0xff]
      %v390 = vld [vmem:[%s202 + $0x230] sm:$0xff]
      %v391 = vld [vmem:[%s202 + $0x238] sm:$0xff]
      %v392 = vld [vmem:[%s202 + $0x240] sm:$0xff]
      %v393 = vld [vmem:[%s202 + $0x248] sm:$0xff]
      %v394 = vld [vmem:[%s202 + $0x250] sm:$0xff]
      %v395 = vld [vmem:[%s202 + $0x258] sm:$0xff]
      %v396 = vld [vmem:[%s202 + $0x260] sm:$0xff]
      %v397 = vld [vmem:[%s202 + $0x268] sm:$0xff]
      %v398 = vld [vmem:[%s202 + $0x270] sm:$0xff]
      %v399 = vld [vmem:[%s202 + $0x278] sm:$0xff]
      %v496 = vunpack.c.l.b16 %v224
      %v497 = vunpack.c.h.b16 %v224
      %v498 = vunpack.c.l.b16 %v225
      %v499 = vunpack.c.h.b16 %v225
      %v500 = vunpack.c.l.b16 %v226
      %v501 = vunpack.c.l.b16 %v227
      %v502 = vunpack.c.h.b16 %v227
      %v503 = vunpack.c.l.b16 %v228
      %v504 = vunpack.c.h.b16 %v228
      %v505 = vunpack.c.l.b16 %v229
      %v506 = vunpack.c.l.b16 %v230
      %v507 = vunpack.c.h.b16 %v230
      %v508 = vunpack.c.l.b16 %v231
      %v509 = vunpack.c.h.b16 %v231
      %v510 = vunpack.c.l.b16 %v232
      %v511 = vunpack.c.l.b16 %v233
      %v512 = vunpack.c.h.b16 %v233
      %v513 = vunpack.c.l.b16 %v234
      %v514 = vunpack.c.h.b16 %v234
      %v515 = vunpack.c.l.b16 %v235
      %v516 = vunpack.c.l.b16 %v236
      %v517 = vunpack.c.h.b16 %v236
      %v518 = vunpack.c.l.b16 %v237
      %v519 = vunpack.c.h.b16 %v237
      %v520 = vunpack.c.l.b16 %v238
      %v521 = vunpack.c.l.b16 %v239
      %v522 = vunpack.c.h.b16 %v239
      %v523 = vunpack.c.l.b16 %v240
      %v524 = vunpack.c.h.b16 %v240
      %v525 = vunpack.c.l.b16 %v241
      %v526 = vunpack.c.l.b16 %v242
      %v527 = vunpack.c.h.b16 %v242
      %v528 = vunpack.c.l.b16 %v243
      %v529 = vunpack.c.h.b16 %v243
      %v530 = vunpack.c.l.b16 %v244
      %v531 = vunpack.c.l.b16 %v245
      %v532 = vunpack.c.h.b16 %v245
      %v533 = vunpack.c.l.b16 %v246
      %v534 = vunpack.c.h.b16 %v246
      %v535 = vunpack.c.l.b16 %v247
      %v536 = vunpack.c.l.b16 %v248
      %v537 = vunpack.c.h.b16 %v248
      %v538 = vunpack.c.l.b16 %v249
      %v539 = vunpack.c.h.b16 %v249
      %v540 = vunpack.c.l.b16 %v250
      %v541 = vunpack.c.l.b16 %v251
      %v542 = vunpack.c.h.b16 %v251
      %v543 = vunpack.c.l.b16 %v252
      %v544 = vunpack.c.h.b16 %v252
      %v545 = vunpack.c.l.b16 %v253
      %v546 = vunpack.c.l.b16 %v254
      %v547 = vunpack.c.h.b16 %v254
      %v548 = vunpack.c.l.b16 %v255
      %v549 = vunpack.c.h.b16 %v255
      %v550 = vunpack.c.l.b16 %v256
      %v551 = vunpack.c.l.b16 %v257
      %v552 = vunpack.c.h.b16 %v257
      %v553 = vunpack.c.l.b16 %v258
      %v554 = vunpack.c.h.b16 %v258
      %v555 = vunpack.c.l.b16 %v259
      %v556 = vunpack.c.l.b16 %v260
      %v557 = vunpack.c.h.b16 %v260
      %v558 = vunpack.c.l.b16 %v261
      %v559 = vunpack.c.h.b16 %v261
      %v560 = vunpack.c.l.b16 %v262
      %v561 = vunpack.c.l.b16 %v263
      %v562 = vunpack.c.h.b16 %v263
      %v563 = vunpack.c.l.b16 %v264
      %v564 = vunpack.c.h.b16 %v264
      %v565 = vunpack.c.l.b16 %v265
      %v566 = vunpack.c.l.b16 %v266
      %v567 = vunpack.c.h.b16 %v266
      %v568 = vunpack.c.l.b16 %v267
      %v569 = vunpack.c.h.b16 %v267
      %v570 = vunpack.c.l.b16 %v268
      %v571 = vunpack.c.l.b16 %v269
      %v572 = vunpack.c.h.b16 %v269
      %v573 = vunpack.c.l.b16 %v270
      %v574 = vunpack.c.h.b16 %v270
      %v575 = vunpack.c.l.b16 %v271
      %v576 = vunpack.c.l.b16 %v272
      %v577 = vunpack.c.h.b16 %v272
      %v578 = vunpack.c.l.b16 %v273
      %v579 = vunpack.c.h.b16 %v273
      %v580 = vunpack.c.l.b16 %v274
      %v581 = vunpack.c.l.b16 %v275
      %v582 = vunpack.c.h.b16 %v275
      %v583 = vunpack.c.l.b16 %v276
      %v584 = vunpack.c.h.b16 %v276
      %v585 = vunpack.c.l.b16 %v277
      %v586 = vunpack.c.l.b16 %v278
      %v587 = vunpack.c.h.b16 %v278
      %v588 = vunpack.c.l.b16 %v279
      %v589 = vunpack.c.h.b16 %v279
      %v590 = vunpack.c.l.b16 %v280
      %v591 = vunpack.c.l.b16 %v281
      %v592 = vunpack.c.h.b16 %v281
      %v593 = vunpack.c.l.b16 %v282
      %v594 = vunpack.c.h.b16 %v282
      %v595 = vunpack.c.l.b16 %v283
      %v596 = vunpack.c.l.b16 %v284
      %v597 = vunpack.c.h.b16 %v284
      %v598 = vunpack.c.l.b16 %v285
      %v599 = vunpack.c.h.b16 %v285
      %v600 = vunpack.c.l.b16 %v286
      %v601 = vunpack.c.l.b16 %v287
      %v602 = vunpack.c.h.b16 %v287
      %v603 = vunpack.c.l.b16 %v288
      %v604 = vunpack.c.h.b16 %v288
      %v605 = vunpack.c.l.b16 %v289
      %v606 = vunpack.c.l.b16 %v290
      %v607 = vunpack.c.h.b16 %v290
      %v608 = vunpack.c.l.b16 %v291
      %v609 = vunpack.c.h.b16 %v291
      %v610 = vunpack.c.l.b16 %v292
      %v611 = vunpack.c.l.b16 %v293
      %v612 = vunpack.c.h.b16 %v293
      %v613 = vunpack.c.l.b16 %v294
      %v614 = vunpack.c.h.b16 %v294
      %v615 = vunpack.c.l.b16 %v295
      %v616 = vunpack.c.l.b16 %v296
      %v617 = vunpack.c.h.b16 %v296
      %v618 = vunpack.c.l.b16 %v297
      %v619 = vunpack.c.h.b16 %v297
      %v620 = vunpack.c.l.b16 %v298
      %v621 = vunpack.c.l.b16 %v299
      %v622 = vunpack.c.h.b16 %v299
      %v623 = vunpack.c.l.b16 %v300
      %v624 = vunpack.c.h.b16 %v300
      %v625 = vunpack.c.l.b16 %v301
      %v626 = vunpack.c.l.b16 %v302
      %v627 = vunpack.c.h.b16 %v302
      %v628 = vunpack.c.l.b16 %v303
      %v629 = vunpack.c.h.b16 %v303
      %v630 = vunpack.c.l.b16 %v304
      %v631 = vunpack.c.l.b16 %v305
      %v632 = vunpack.c.h.b16 %v305
      %v633 = vunpack.c.l.b16 %v306
      %v634 = vunpack.c.h.b16 %v306
      %v635 = vunpack.c.l.b16 %v307
      %v636 = vunpack.c.l.b16 %v308
      %v637 = vunpack.c.h.b16 %v308
      %v638 = vunpack.c.l.b16 %v309
      %v639 = vunpack.c.h.b16 %v309
      %v640 = vunpack.c.l.b16 %v310
      %v641 = vunpack.c.l.b16 %v311
      %v642 = vunpack.c.h.b16 %v311
      %v643 = vunpack.c.l.b16 %v312
      %v644 = vunpack.c.h.b16 %v312
      %v645 = vunpack.c.l.b16 %v313
      %v646 = vunpack.c.l.b16 %v314
      %v647 = vunpack.c.h.b16 %v314
      %v648 = vunpack.c.l.b16 %v315
      %v649 = vunpack.c.h.b16 %v315
      %v650 = vunpack.c.l.b16 %v316
      %v651 = vunpack.c.l.b16 %v317
      %v652 = vunpack.c.h.b16 %v317
      %v653 = vunpack.c.l.b16 %v318
      %v654 = vunpack.c.h.b16 %v318
      %v655 = vunpack.c.l.b16 %v319
      %v656 = vpack.c.b16 %v501, %v496
      %v657 = vpack.c.b16 %v502, %v497
      %v658 = vpack.c.b16 %v503, %v498
      %v659 = vpack.c.b16 %v504, %v499
      %v660 = vpack.c.b16 %v505, %v500
      %v661 = vpack.c.b16 %v511, %v506
      %v662 = vpack.c.b16 %v512, %v507
      %v663 = vpack.c.b16 %v513, %v508
      %v664 = vpack.c.b16 %v514, %v509
      %v665 = vpack.c.b16 %v515, %v510
      %v666 = vpack.c.b16 %v521, %v516
      %v667 = vpack.c.b16 %v522, %v517
      %v668 = vpack.c.b16 %v523, %v518
      %v669 = vpack.c.b16 %v524, %v519
      %v670 = vpack.c.b16 %v525, %v520
      %v671 = vpack.c.b16 %v531, %v526
      %v672 = vpack.c.b16 %v532, %v527
      %v673 = vpack.c.b16 %v533, %v528
      %v674 = vpack.c.b16 %v534, %v529
      %v675 = vpack.c.b16 %v535, %v530
      %v676 = vpack.c.b16 %v541, %v536
      %v677 = vpack.c.b16 %v542, %v537
      %v678 = vpack.c.b16 %v543, %v538
      %v679 = vpack.c.b16 %v544, %v539
      %v680 = vpack.c.b16 %v545, %v540
      %v681 = vpack.c.b16 %v551, %v546
      %v682 = vpack.c.b16 %v552, %v547
      %v683 = vpack.c.b16 %v553, %v548
      %v684 = vpack.c.b16 %v554, %v549
      %v685 = vpack.c.b16 %v555, %v550
      %v686 = vpack.c.b16 %v561, %v556
      %v687 = vpack.c.b16 %v562, %v557
      %v688 = vpack.c.b16 %v563, %v558
      %v689 = vpack.c.b16 %v564, %v559
      %v690 = vpack.c.b16 %v565, %v560
      %v691 = vpack.c.b16 %v571, %v566
      %v692 = vpack.c.b16 %v572, %v567
      %v693 = vpack.c.b16 %v573, %v568
      %v694 = vpack.c.b16 %v574, %v569
      %v695 = vpack.c.b16 %v575, %v570
      %v696 = vpack.c.b16 %v581, %v576
      %v697 = vpack.c.b16 %v582, %v577
      %v698 = vpack.c.b16 %v583, %v578
      %v699 = vpack.c.b16 %v584, %v579
      %v700 = vpack.c.b16 %v585, %v580
      %v701 = vpack.c.b16 %v591, %v586
      %v702 = vpack.c.b16 %v592, %v587
      %v703 = vpack.c.b16 %v593, %v588
      %v704 = vpack.c.b16 %v594, %v589
      %v705 = vpack.c.b16 %v595, %v590
      %v706 = vpack.c.b16 %v601, %v596
      %v707 = vpack.c.b16 %v602, %v597
      %v708 = vpack.c.b16 %v603, %v598
      %v709 = vpack.c.b16 %v604, %v599
      %v710 = vpack.c.b16 %v605, %v600
      %v711 = vpack.c.b16 %v611, %v606
      %v712 = vpack.c.b16 %v612, %v607
      %v713 = vpack.c.b16 %v613, %v608
      %v714 = vpack.c.b16 %v614, %v609
      %v715 = vpack.c.b16 %v615, %v610
      %v716 = vpack.c.b16 %v621, %v616
      %v717 = vpack.c.b16 %v622, %v617
      %v718 = vpack.c.b16 %v623, %v618
      %v719 = vpack.c.b16 %v624, %v619
      %v720 = vpack.c.b16 %v625, %v620
      %v721 = vpack.c.b16 %v631, %v626
      %v722 = vpack.c.b16 %v632, %v627
      %v723 = vpack.c.b16 %v633, %v628
      %v724 = vpack.c.b16 %v634, %v629
      %v725 = vpack.c.b16 %v635, %v630
      %v726 = vpack.c.b16 %v641, %v636
      %v727 = vpack.c.b16 %v642, %v637
      %v728 = vpack.c.b16 %v643, %v638
      %v729 = vpack.c.b16 %v644, %v639
      %v730 = vpack.c.b16 %v645, %v640
      %v731 = vpack.c.b16 %v651, %v646
      %v732 = vpack.c.b16 %v652, %v647
      %v733 = vpack.c.b16 %v653, %v648
      %v734 = vpack.c.b16 %v654, %v649
      %v735 = vpack.c.b16 %v655, %v650
      %v896 = vunpack.c.l.b16 %v320
      %v897 = vunpack.c.h.b16 %v320
      %v898 = vunpack.c.l.b16 %v321
      %v899 = vunpack.c.h.b16 %v321
      %v900 = vunpack.c.l.b16 %v322
      %v901 = vunpack.c.h.b16 %v322
      %v902 = vunpack.c.l.b16 %v323
      %v903 = vunpack.c.h.b16 %v323
      %v904 = vunpack.c.l.b16 %v324
      %v905 = vunpack.c.h.b16 %v324
      %v906 = vunpack.c.l.b16 %v325
      %v907 = vunpack.c.h.b16 %v325
      %v908 = vunpack.c.l.b16 %v326
      %v909 = vunpack.c.h.b16 %v326
      %v910 = vunpack.c.l.b16 %v327
      %v911 = vunpack.c.h.b16 %v327
      %v912 = vunpack.c.l.b16 %v328
      %v913 = vunpack.c.h.b16 %v328
      %v914 = vunpack.c.l.b16 %v329
      %v915 = vunpack.c.h.b16 %v329
      %v916 = vunpack.c.l.b16 %v330
      %v917 = vunpack.c.h.b16 %v330
      %v918 = vunpack.c.l.b16 %v331
      %v919 = vunpack.c.h.b16 %v331
      %v920 = vunpack.c.l.b16 %v332
      %v921 = vunpack.c.h.b16 %v332
      %v922 = vunpack.c.l.b16 %v333
      %v923 = vunpack.c.h.b16 %v333
      %v924 = vunpack.c.l.b16 %v334
      %v925 = vunpack.c.h.b16 %v334
      %v926 = vunpack.c.l.b16 %v335
      %v927 = vunpack.c.h.b16 %v335
      %v928 = vunpack.c.l.b16 %v336
      %v929 = vunpack.c.h.b16 %v336
      %v930 = vunpack.c.l.b16 %v337
      %v931 = vunpack.c.h.b16 %v337
      %v932 = vunpack.c.l.b16 %v338
      %v933 = vunpack.c.h.b16 %v338
      %v934 = vunpack.c.l.b16 %v339
      %v935 = vunpack.c.h.b16 %v339
      %v936 = vunpack.c.l.b16 %v340
      %v937 = vunpack.c.h.b16 %v340
      %v938 = vunpack.c.l.b16 %v341
      %v939 = vunpack.c.h.b16 %v341
      %v940 = vunpack.c.l.b16 %v342
      %v941 = vunpack.c.h.b16 %v342
      %v942 = vunpack.c.l.b16 %v343
      %v943 = vunpack.c.h.b16 %v343
      %v944 = vunpack.c.l.b16 %v344
      %v945 = vunpack.c.h.b16 %v344
      %v946 = vunpack.c.l.b16 %v345
      %v947 = vunpack.c.h.b16 %v345
      %v948 = vunpack.c.l.b16 %v346
      %v949 = vunpack.c.h.b16 %v346
      %v950 = vunpack.c.l.b16 %v347
      %v951 = vunpack.c.h.b16 %v347
      %v952 = vunpack.c.l.b16 %v348
      %v953 = vunpack.c.h.b16 %v348
      %v954 = vunpack.c.l.b16 %v349
      %v955 = vunpack.c.h.b16 %v349
      %v956 = vunpack.c.l.b16 %v350
      %v957 = vunpack.c.h.b16 %v350
      %v958 = vunpack.c.l.b16 %v351
      %v959 = vunpack.c.h.b16 %v351
      %v960 = vunpack.c.l.b16 %v352
      %v961 = vunpack.c.h.b16 %v352
      %v962 = vunpack.c.l.b16 %v353
      %v963 = vunpack.c.h.b16 %v353
      %v964 = vunpack.c.l.b16 %v354
      %v965 = vunpack.c.h.b16 %v354
      %v966 = vunpack.c.l.b16 %v355
      %v967 = vunpack.c.h.b16 %v355
      %v968 = vunpack.c.l.b16 %v356
      %v969 = vunpack.c.h.b16 %v356
      %v970 = vunpack.c.l.b16 %v357
      %v971 = vunpack.c.h.b16 %v357
      %v972 = vunpack.c.l.b16 %v358
      %v973 = vunpack.c.h.b16 %v358
      %v974 = vunpack.c.l.b16 %v359
      %v975 = vunpack.c.h.b16 %v359
      %v976 = vunpack.c.l.b16 %v360
      %v977 = vunpack.c.h.b16 %v360
      %v978 = vunpack.c.l.b16 %v361
      %v979 = vunpack.c.h.b16 %v361
      %v980 = vunpack.c.l.b16 %v362
      %v981 = vunpack.c.h.b16 %v362
      %v982 = vunpack.c.l.b16 %v363
      %v983 = vunpack.c.h.b16 %v363
      %v984 = vunpack.c.l.b16 %v364
      %v985 = vunpack.c.h.b16 %v364
      %v986 = vunpack.c.l.b16 %v365
      %v987 = vunpack.c.h.b16 %v365
      %v988 = vunpack.c.l.b16 %v366
      %v989 = vunpack.c.h.b16 %v366
      %v990 = vunpack.c.l.b16 %v367
      %v991 = vunpack.c.h.b16 %v367
      %v992 = vunpack.c.l.b16 %v368
      %v993 = vunpack.c.h.b16 %v368
      %v994 = vunpack.c.l.b16 %v369
      %v995 = vunpack.c.h.b16 %v369
      %v996 = vunpack.c.l.b16 %v370
      %v997 = vunpack.c.h.b16 %v370
      %v998 = vunpack.c.l.b16 %v371
      %v999 = vunpack.c.h.b16 %v371
      %v1000 = vunpack.c.l.b16 %v372
      %v1001 = vunpack.c.h.b16 %v372
      %v1002 = vunpack.c.l.b16 %v373
      %v1003 = vunpack.c.h.b16 %v373
      %v1004 = vunpack.c.l.b16 %v374
      %v1005 = vunpack.c.h.b16 %v374
      %v1006 = vunpack.c.l.b16 %v375
      %v1007 = vunpack.c.h.b16 %v375
      %v1008 = vunpack.c.l.b16 %v376
      %v1009 = vunpack.c.h.b16 %v376
      %v1010 = vunpack.c.l.b16 %v377
      %v1011 = vunpack.c.h.b16 %v377
      %v1012 = vunpack.c.l.b16 %v378
      %v1013 = vunpack.c.h.b16 %v378
      %v1014 = vunpack.c.l.b16 %v379
      %v1015 = vunpack.c.h.b16 %v379
      %v1016 = vunpack.c.l.b16 %v380
      %v1017 = vunpack.c.h.b16 %v380
      %v1018 = vunpack.c.l.b16 %v381
      %v1019 = vunpack.c.h.b16 %v381
      %v1020 = vunpack.c.l.b16 %v382
      %v1021 = vunpack.c.h.b16 %v382
      %v1022 = vunpack.c.l.b16 %v383
      %v1023 = vunpack.c.h.b16 %v383
      %v1024 = vunpack.c.l.b16 %v384
      %v1025 = vunpack.c.h.b16 %v384
      %v1026 = vunpack.c.l.b16 %v385
      %v1027 = vunpack.c.h.b16 %v385
      %v1028 = vunpack.c.l.b16 %v386
      %v1029 = vunpack.c.h.b16 %v386
      %v1030 = vunpack.c.l.b16 %v387
      %v1031 = vunpack.c.h.b16 %v387
      %v1032 = vunpack.c.l.b16 %v388
      %v1033 = vunpack.c.h.b16 %v388
      %v1034 = vunpack.c.l.b16 %v389
      %v1035 = vunpack.c.h.b16 %v389
      %v1036 = vunpack.c.l.b16 %v390
      %v1037 = vunpack.c.h.b16 %v390
      %v1038 = vunpack.c.l.b16 %v391
      %v1039 = vunpack.c.h.b16 %v391
      %v1040 = vunpack.c.l.b16 %v392
      %v1041 = vunpack.c.h.b16 %v392
      %v1042 = vunpack.c.l.b16 %v393
      %v1043 = vunpack.c.h.b16 %v393
      %v1044 = vunpack.c.l.b16 %v394
      %v1045 = vunpack.c.h.b16 %v394
      %v1046 = vunpack.c.l.b16 %v395
      %v1047 = vunpack.c.h.b16 %v395
      %v1048 = vunpack.c.l.b16 %v396
      %v1049 = vunpack.c.h.b16 %v396
      %v1050 = vunpack.c.l.b16 %v397
      %v1051 = vunpack.c.h.b16 %v397
      %v1052 = vunpack.c.l.b16 %v398
      %v1053 = vunpack.c.h.b16 %v398
      %v1054 = vunpack.c.l.b16 %v399
      %v1055 = vunpack.c.h.b16 %v399
      %v1056 = vpack.c.b16 %v898, %v896
      %v1057 = vpack.c.b16 %v899, %v897
      %v1058 = vpack.c.b16 %v902, %v900
      %v1059 = vpack.c.b16 %v903, %v901
      %v1060 = vpack.c.b16 %v906, %v904
      %v1061 = vpack.c.b16 %v907, %v905
      %v1062 = vpack.c.b16 %v910, %v908
      %v1063 = vpack.c.b16 %v911, %v909
      %v1064 = vpack.c.b16 %v914, %v912
      %v1065 = vpack.c.b16 %v915, %v913
      %v1066 = vpack.c.b16 %v918, %v916
      %v1067 = vpack.c.b16 %v919, %v917
      %v1068 = vpack.c.b16 %v922, %v920
      %v1069 = vpack.c.b16 %v923, %v921
      %v1070 = vpack.c.b16 %v926, %v924
      %v1071 = vpack.c.b16 %v927, %v925
      %v1072 = vpack.c.b16 %v930, %v928
      %v1073 = vpack.c.b16 %v931, %v929
      %v1074 = vpack.c.b16 %v934, %v932
      %v1075 = vpack.c.b16 %v935, %v933
      %v1076 = vpack.c.b16 %v938, %v936
      %v1077 = vpack.c.b16 %v939, %v937
      %v1078 = vpack.c.b16 %v942, %v940
      %v1079 = vpack.c.b16 %v943, %v941
      %v1080 = vpack.c.b16 %v946, %v944
      %v1081 = vpack.c.b16 %v947, %v945
      %v1082 = vpack.c.b16 %v950, %v948
      %v1083 = vpack.c.b16 %v951, %v949
      %v1084 = vpack.c.b16 %v954, %v952
      %v1085 = vpack.c.b16 %v955, %v953
      %v1086 = vpack.c.b16 %v958, %v956
      %v1087 = vpack.c.b16 %v959, %v957
      %v1088 = vpack.c.b16 %v962, %v960
      %v1089 = vpack.c.b16 %v963, %v961
      %v1090 = vpack.c.b16 %v966, %v964
      %v1091 = vpack.c.b16 %v967, %v965
      %v1092 = vpack.c.b16 %v970, %v968
      %v1093 = vpack.c.b16 %v971, %v969
      %v1094 = vpack.c.b16 %v974, %v972
      %v1095 = vpack.c.b16 %v975, %v973
      %v1096 = vpack.c.b16 %v978, %v976
      %v1097 = vpack.c.b16 %v979, %v977
      %v1098 = vpack.c.b16 %v982, %v980
      %v1099 = vpack.c.b16 %v983, %v981
      %v1100 = vpack.c.b16 %v986, %v984
      %v1101 = vpack.c.b16 %v987, %v985
      %v1102 = vpack.c.b16 %v990, %v988
      %v1103 = vpack.c.b16 %v991, %v989
      %v1104 = vpack.c.b16 %v994, %v992
      %v1105 = vpack.c.b16 %v995, %v993
      %v1106 = vpack.c.b16 %v998, %v996
      %v1107 = vpack.c.b16 %v999, %v997
      %v1108 = vpack.c.b16 %v1002, %v1000
      %v1109 = vpack.c.b16 %v1003, %v1001
      %v1110 = vpack.c.b16 %v1006, %v1004
      %v1111 = vpack.c.b16 %v1007, %v1005
      %v1112 = vpack.c.b16 %v1010, %v1008
      %v1113 = vpack.c.b16 %v1011, %v1009
      %v1114 = vpack.c.b16 %v1014, %v1012
      %v1115 = vpack.c.b16 %v1015, %v1013
      %v1116 = vpack.c.b16 %v1018, %v1016
      %v1117 = vpack.c.b16 %v1019, %v1017
      %v1118 = vpack.c.b16 %v1022, %v1020
      %v1119 = vpack.c.b16 %v1023, %v1021
      %v1120 = vpack.c.b16 %v1026, %v1024
      %v1121 = vpack.c.b16 %v1027, %v1025
      %v1122 = vpack.c.b16 %v1030, %v1028
      %v1123 = vpack.c.b16 %v1031, %v1029
      %v1124 = vpack.c.b16 %v1034, %v1032
      %v1125 = vpack.c.b16 %v1035, %v1033
      %v1126 = vpack.c.b16 %v1038, %v1036
      %v1127 = vpack.c.b16 %v1039, %v1037
      %v1128 = vpack.c.b16 %v1042, %v1040
      %v1129 = vpack.c.b16 %v1043, %v1041
      %v1130 = vpack.c.b16 %v1046, %v1044
      %v1131 = vpack.c.b16 %v1047, %v1045
      %v1132 = vpack.c.b16 %v1050, %v1048
      %v1133 = vpack.c.b16 %v1051, %v1049
      %v1134 = vpack.c.b16 %v1054, %v1052
      %v1135 = vpack.c.b16 %v1055, %v1053
      %1216 = vmatprep.subr.bf16.mxu0 %v1057
      %1217 = vmatpush1.bf16.msra.mxu0 %v1056
      %1218 = vmatprep.subr.bf16.mxu0 %v1059
      %1219 = vmatpush1.bf16.msra.mxu0 %v1058
      %1220 = vmatprep.subr.bf16.mxu0 %v1061
      %1221 = vmatpush1.bf16.msra.mxu0 %v1060
      %1222 = vmatprep.subr.bf16.mxu0 %v1063
      %1223 = vmatpush1.bf16.msra.mxu0 %v1062
      %1224 = vmatprep.subr.bf16.mxu0 %v1065
      %1225 = vmatpush1.bf16.msra.mxu0 %v1064
      %1226 = vmatprep.subr.bf16.mxu0 %v1067
      %1227 = vmatpush1.bf16.msra.mxu0 %v1066
      %1228 = vmatprep.subr.bf16.mxu0 %v1069
      %1229 = vmatpush1.bf16.msra.mxu0 %v1068
      %1230 = vmatprep.subr.bf16.mxu0 %v1071
      %1231 = vmatpush1.bf16.msra.mxu0 %v1070
      %1232 = vmatprep.subr.bf16.mxu0 %v1073
      %1233 = vmatpush1.bf16.msra.mxu0 %v1072
      %1234 = vmatprep.subr.bf16.mxu0 %v1075
      %1235 = vmatpush1.bf16.msra.mxu0 %v1074
      %1236 = vmatprep.subr.bf16.mxu0 %v1077
      %1237 = vmatpush1.bf16.msra.mxu0 %v1076
      %1238 = vmatprep.subr.bf16.mxu0 %v1079
      %1239 = vmatpush1.bf16.msra.mxu0 %v1078
      %1240 = vmatprep.subr.bf16.mxu0 %v1081
      %1241 = vmatpush1.bf16.msra.mxu0 %v1080
      %1242 = vmatprep.subr.bf16.mxu0 %v1083
      %1243 = vmatpush1.bf16.msra.mxu0 %v1082
      %1244 = vmatprep.subr.bf16.mxu0 %v1085
      %1245 = vmatpush1.bf16.msra.mxu0 %v1084
      %1246 = vmatprep.subr.bf16.mxu0 %v1087
      %1247 = vmatpush1.bf16.msra.mxu0 %v1086
      %1248 = vmatprep.mubr.bf16.mxu0 %v657
      %1249 = vmatmul.mubr.bf16.gmra.mrb[0].mxu0 %v656
      %v1250 = vpop.f32.mrb[0].mxu0
      %v1251 = vadd.f32 0.0, %v1250
      %v1252 = vpop.f32.mrb[0].mxu0
      %v1253 = vadd.f32 0.0, %v1252
      %v1254 = vpop.f32.mrb[0].mxu0
      %v1255 = vadd.f32 0.0, %v1254
      %v1256 = vpop.f32.mrb[0].mxu0
      %v1257 = vadd.f32 0.0, %v1256
      %1258 = vmatprep.mubr.bf16.mxu0 %v662
      %1259 = vmatmul.mubr.bf16.gmra.mrb[0].mxu0 %v661
      %v1260 = vpop.f32.mrb[0].mxu0
      %v1261 = vadd.f32 0.0, %v1260
      %v1262 = vpop.f32.mrb[0].mxu0
      %v1263 = vadd.f32 0.0, %v1262
      %v1264 = vpop.f32.mrb[0].mxu0
      %v1265 = vadd.f32 0.0, %v1264
      %v1266 = vpop.f32.mrb[0].mxu0
      %v1267 = vadd.f32 0.0, %v1266
      %1268 = vmatprep.mubr.bf16.mxu0 %v667
      %1269 = vmatmul.mubr.bf16.gmra.mrb[0].mxu0 %v666
      %v1270 = vpop.f32.mrb[0].mxu0
      %v1271 = vadd.f32 0.0, %v1270
      %v1272 = vpop.f32.mrb[0].mxu0
      %v1273 = vadd.f32 0.0, %v1272
      %v1274 = vpop.f32.mrb[0].mxu0
      %v1275 = vadd.f32 0.0, %v1274
      %v1276 = vpop.f32.mrb[0].mxu0
      %v1277 = vadd.f32 0.0, %v1276
      %1278 = vmatprep.mubr.bf16.mxu0 %v672
      %1279 = vmatmul.mubr.bf16.gmra.mrb[0].mxu0 %v671
      %v1280 = vpop.f32.mrb[0].mxu0
      %v1281 = vadd.f32 0.0, %v1280
      %v1282 = vpop.f32.mrb[0].mxu0
      %v1283 = vadd.f32 0.0, %v1282
      %v1284 = vpop.f32.mrb[0].mxu0
      %v1285 = vadd.f32 0.0, %v1284
      %v1286 = vpop.f32.mrb[0].mxu0
      %v1287 = vadd.f32 0.0, %v1286
      %1288 = vmatprep.mubr.bf16.mxu0 %v677
      %1289 = vmatmul.mubr.bf16.gmra.mrb[0].mxu0 %v676
      %v1290 = vpop.f32.mrb[0].mxu0
      %v1291 = vadd.f32 0.0, %v1290
      %v1292 = vpop.f32.mrb[0].mxu0
      %v1293 = vadd.f32 0.0, %v1292
      %v1294 = vpop.f32.mrb[0].mxu0
      %v1295 = vadd.f32 0.0, %v1294
      %v1296 = vpop.f32.mrb[0].mxu0
      %v1297 = vadd.f32 0.0, %v1296
      %1298 = vmatprep.mubr.bf16.mxu0 %v682
      %1299 = vmatmul.mubr.bf16.gmra.mrb[0].mxu0 %v681
      %v1300 = vpop.f32.mrb[0].mxu0
      %v1301 = vadd.f32 0.0, %v1300
      %v1302 = vpop.f32.mrb[0].mxu0
      %v1303 = vadd.f32 0.0, %v1302
      %v1304 = vpop.f32.mrb[0].mxu0
      %v1305 = vadd.f32 0.0, %v1304
      %v1306 = vpop.f32.mrb[0].mxu0
      %v1307 = vadd.f32 0.0, %v1306
      %1308 = vmatprep.mubr.bf16.mxu0 %v687
      %1309 = vmatmul.mubr.bf16.gmra.mrb[0].mxu0 %v686
      %v1310 = vpop.f32.mrb[0].mxu0
      %v1311 = vadd.f32 0.0, %v1310
      %v1312 = vpop.f32.mrb[0].mxu0
      %v1313 = vadd.f32 0.0, %v1312
      %v1314 = vpop.f32.mrb[0].mxu0
      %v1315 = vadd.f32 0.0, %v1314
      %v1316 = vpop.f32.mrb[0].mxu0
      %v1317 = vadd.f32 0.0, %v1316
      %1318 = vmatprep.mubr.bf16.mxu0 %v692
      %1319 = vmatmul.mubr.bf16.gmra.mrb[0].mxu0 %v691
      %v1320 = vpop.f32.mrb[0].mxu0
      %v1321 = vadd.f32 0.0, %v1320
      %v1322 = vpop.f32.mrb[0].mxu0
      %v1323 = vadd.f32 0.0, %v1322
      %v1324 = vpop.f32.mrb[0].mxu0
      %v1325 = vadd.f32 0.0, %v1324
      %v1326 = vpop.f32.mrb[0].mxu0
      %v1327 = vadd.f32 0.0, %v1326
      %1328 = vmatprep.mubr.bf16.mxu0 %v697
      %1329 = vmatmul.mubr.bf16.gmra.mrb[0].mxu0 %v696
      %v1330 = vpop.f32.mrb[0].mxu0
      %v1331 = vadd.f32 0.0, %v1330
      %v1332 = vpop.f32.mrb[0].mxu0
      %v1333 = vadd.f32 0.0, %v1332
      %v1334 = vpop.f32.mrb[0].mxu0
      %v1335 = vadd.f32 0.0, %v1334
      %v1336 = vpop.f32.mrb[0].mxu0
      %v1337 = vadd.f32 0.0, %v1336
      %1338 = vmatprep.mubr.bf16.mxu0 %v702
      %1339 = vmatmul.mubr.bf16.gmra.mrb[0].mxu0 %v701
      %v1340 = vpop.f32.mrb[0].mxu0
      %v1341 = vadd.f32 0.0, %v1340
      %v1342 = vpop.f32.mrb[0].mxu0
      %v1343 = vadd.f32 0.0, %v1342
      %v1344 = vpop.f32.mrb[0].mxu0
      %v1345 = vadd.f32 0.0, %v1344
      %v1346 = vpop.f32.mrb[0].mxu0
      %v1347 = vadd.f32 0.0, %v1346
      %1348 = vmatprep.mubr.bf16.mxu0 %v707
      %1349 = vmatmul.mubr.bf16.gmra.mrb[0].mxu0 %v706
      %v1350 = vpop.f32.mrb[0].mxu0
      %v1351 = vadd.f32 0.0, %v1350
      %v1352 = vpop.f32.mrb[0].mxu0
      %v1353 = vadd.f32 0.0, %v1352
      %v1354 = vpop.f32.mrb[0].mxu0
      %v1355 = vadd.f32 0.0, %v1354
      %v1356 = vpop.f32.mrb[0].mxu0
      %v1357 = vadd.f32 0.0, %v1356
      %1358 = vmatprep.mubr.bf16.mxu0 %v712
      %1359 = vmatmul.mubr.bf16.gmra.mrb[0].mxu0 %v711
      %v1360 = vpop.f32.mrb[0].mxu0
      %v1361 = vadd.f32 0.0, %v1360
      %v1362 = vpop.f32.mrb[0].mxu0
      %v1363 = vadd.f32 0.0, %v1362
      %v1364 = vpop.f32.mrb[0].mxu0
      %v1365 = vadd.f32 0.0, %v1364
      %v1366 = vpop.f32.mrb[0].mxu0
      %v1367 = vadd.f32 0.0, %v1366
      %1368 = vmatprep.mubr.bf16.mxu0 %v717
      %1369 = vmatmul.mubr.bf16.gmra.mrb[0].mxu0 %v716
      %v1370 = vpop.f32.mrb[0].mxu0
      %v1371 = vadd.f32 0.0, %v1370
      %v1372 = vpop.f32.mrb[0].mxu0
      %v1373 = vadd.f32 0.0, %v1372
      %v1374 = vpop.f32.mrb[0].mxu0
      %v1375 = vadd.f32 0.0, %v1374
      %v1376 = vpop.f32.mrb[0].mxu0
      %v1377 = vadd.f32 0.0, %v1376
      %1378 = vmatprep.mubr.bf16.mxu0 %v722
      %1379 = vmatmul.mubr.bf16.gmra.mrb[0].mxu0 %v721
      %v1380 = vpop.f32.mrb[0].mxu0
      %v1381 = vadd.f32 0.0, %v1380
      %v1382 = vpop.f32.mrb[0].mxu0
      %v1383 = vadd.f32 0.0, %v1382
      %v1384 = vpop.f32.mrb[0].mxu0
      %v1385 = vadd.f32 0.0, %v1384
      %v1386 = vpop.f32.mrb[0].mxu0
      %v1387 = vadd.f32 0.0, %v1386
      %1388 = vmatprep.mubr.bf16.mxu0 %v727
      %1389 = vmatmul.mubr.bf16.gmra.mrb[0].mxu0 %v726
      %v1390 = vpop.f32.mrb[0].mxu0
      %v1391 = vadd.f32 0.0, %v1390
      %v1392 = vpop.f32.mrb[0].mxu0
      %v1393 = vadd.f32 0.0, %v1392
      %v1394 = vpop.f32.mrb[0].mxu0
      %v1395 = vadd.f32 0.0, %v1394
      %v1396 = vpop.f32.mrb[0].mxu0
      %v1397 = vadd.f32 0.0, %v1396
      %1398 = vmatprep.mubr.bf16.mxu0 %v732
      %1399 = vmatmul.mubr.bf16.gmra.mrb[0].mxu0 %v731
      %v1400 = vpop.f32.mrb[0].mxu0
      %v1401 = vadd.f32 0.0, %v1400
      %v1402 = vpop.f32.mrb[0].mxu0
      %v1403 = vadd.f32 0.0, %v1402
      %v1404 = vpop.f32.mrb[0].mxu0
      %v1405 = vadd.f32 0.0, %v1404
      %v1406 = vpop.f32.mrb[0].mxu0
      %v1407 = vadd.f32 0.0, %v1406
      %1408 = vdwg.mxu0
      %1409 = vmatprep.subr.bf16.mxu0 %v1089
      %1410 = vmatpush1.bf16.msra.mxu0 %v1088
      %1411 = vmatprep.subr.bf16.mxu0 %v1091
      %1412 = vmatpush1.bf16.msra.mxu0 %v1090
      %1413 = vmatprep.subr.bf16.mxu0 %v1093
      %1414 = vmatpush1.bf16.msra.mxu0 %v1092
      %1415 = vmatprep.subr.bf16.mxu0 %v1095
      %1416 = vmatpush1.bf16.msra.mxu0 %v1094
      %1417 = vmatprep.subr.bf16.mxu0 %v1097
      %1418 = vmatpush1.bf16.msra.mxu0 %v1096
      %1419 = vmatprep.subr.bf16.mxu0 %v1099
      %1420 = vmatpush1.bf16.msra.mxu0 %v1098
      %1421 = vmatprep.subr.bf16.mxu0 %v1101
      %1422 = vmatpush1.bf16.msra.mxu0 %v1100
      %1423 = vmatprep.subr.bf16.mxu0 %v1103
      %1424 = vmatpush1.bf16.msra.mxu0 %v1102
      %1425 = vmatprep.subr.bf16.mxu0 %v1105
      %1426 = vmatpush1.bf16.msra.mxu0 %v1104
      %1427 = vmatprep.subr.bf16.mxu0 %v1107
      %1428 = vmatpush1.bf16.msra.mxu0 %v1106
      %1429 = vmatprep.subr.bf16.mxu0 %v1109
      %1430 = vmatpush1.bf16.msra.mxu0 %v1108
      %1431 = vmatprep.subr.bf16.mxu0 %v1111
      %1432 = vmatpush1.bf16.msra.mxu0 %v1110
      %1433 = vmatprep.subr.bf16.mxu0 %v1113
      %1434 = vmatpush1.bf16.msra.mxu0 %v1112
      %1435 = vmatprep.subr.bf16.mxu0 %v1115
      %1436 = vmatpush1.bf16.msra.mxu0 %v1114
      %1437 = vmatprep.subr.bf16.mxu0 %v1117
      %1438 = vmatpush1.bf16.msra.mxu0 %v1116
      %1439 = vmatprep.subr.bf16.mxu0 %v1119
      %1440 = vmatpush1.bf16.msra.mxu0 %v1118
      %1441 = vmatprep.mubr.bf16.mxu0 %v659
      %1442 = vmatmul.mubr.bf16.gmra.mrb[0].mxu0 %v658
      %v1443 = vpop.f32.mrb[0].mxu0
      %v1444 = vadd.f32 %v1251, %v1443
      %v1445 = vpop.f32.mrb[0].mxu0
      %v1446 = vadd.f32 %v1253, %v1445
      %v1447 = vpop.f32.mrb[0].mxu0
      %v1448 = vadd.f32 %v1255, %v1447
      %v1449 = vpop.f32.mrb[0].mxu0
      %v1450 = vadd.f32 %v1257, %v1449
      %1451 = vmatprep.mubr.bf16.mxu0 %v664
      %1452 = vmatmul.mubr.bf16.gmra.mrb[0].mxu0 %v663
      %v1453 = vpop.f32.mrb[0].mxu0
      %v1454 = vadd.f32 %v1261, %v1453
      %v1455 = vpop.f32.mrb[0].mxu0
      %v1456 = vadd.f32 %v1263, %v1455
      %v1457 = vpop.f32.mrb[0].mxu0
      %v1458 = vadd.f32 %v1265, %v1457
      %v1459 = vpop.f32.mrb[0].mxu0
      %v1460 = vadd.f32 %v1267, %v1459
      %1461 = vmatprep.mubr.bf16.mxu0 %v669
      %1462 = vmatmul.mubr.bf16.gmra.mrb[0].mxu0 %v668
      %v1463 = vpop.f32.mrb[0].mxu0
      %v1464 = vadd.f32 %v1271, %v1463
      %v1465 = vpop.f32.mrb[0].mxu0
      %v1466 = vadd.f32 %v1273, %v1465
      %v1467 = vpop.f32.mrb[0].mxu0
      %v1468 = vadd.f32 %v1275, %v1467
      %v1469 = vpop.f32.mrb[0].mxu0
      %v1470 = vadd.f32 %v1277, %v1469
      %1471 = vmatprep.mubr.bf16.mxu0 %v674
      %1472 = vmatmul.mubr.bf16.gmra.mrb[0].mxu0 %v673
      %v1473 = vpop.f32.mrb[0].mxu0
      %v1474 = vadd.f32 %v1281, %v1473
      %v1475 = vpop.f32.mrb[0].mxu0
      %v1476 = vadd.f32 %v1283, %v1475
      %v1477 = vpop.f32.mrb[0].mxu0
      %v1478 = vadd.f32 %v1285, %v1477
      %v1479 = vpop.f32.mrb[0].mxu0
      %v1480 = vadd.f32 %v1287, %v1479
      %1481 = vmatprep.mubr.bf16.mxu0 %v679
      %1482 = vmatmul.mubr.bf16.gmra.mrb[0].mxu0 %v678
      %v1483 = vpop.f32.mrb[0].mxu0
      %v1484 = vadd.f32 %v1291, %v1483
      %v1485 = vpop.f32.mrb[0].mxu0
      %v1486 = vadd.f32 %v1293, %v1485
      %v1487 = vpop.f32.mrb[0].mxu0
      %v1488 = vadd.f32 %v1295, %v1487
      %v1489 = vpop.f32.mrb[0].mxu0
      %v1490 = vadd.f32 %v1297, %v1489
      %1491 = vmatprep.mubr.bf16.mxu0 %v684
      %1492 = vmatmul.mubr.bf16.gmra.mrb[0].mxu0 %v683
      %v1493 = vpop.f32.mrb[0].mxu0
      %v1494 = vadd.f32 %v1301, %v1493
      %v1495 = vpop.f32.mrb[0].mxu0
      %v1496 = vadd.f32 %v1303, %v1495
      %v1497 = vpop.f32.mrb[0].mxu0
      %v1498 = vadd.f32 %v1305, %v1497
      %v1499 = vpop.f32.mrb[0].mxu0
      %v1500 = vadd.f32 %v1307, %v1499
      %1501 = vmatprep.mubr.bf16.mxu0 %v689
      %1502 = vmatmul.mubr.bf16.gmra.mrb[0].mxu0 %v688
      %v1503 = vpop.f32.mrb[0].mxu0
      %v1504 = vadd.f32 %v1311, %v1503
      %v1505 = vpop.f32.mrb[0].mxu0
      %v1506 = vadd.f32 %v1313, %v1505
      %v1507 = vpop.f32.mrb[0].mxu0
      %v1508 = vadd.f32 %v1315, %v1507
      %v1509 = vpop.f32.mrb[0].mxu0
      %v1510 = vadd.f32 %v1317, %v1509
      %1511 = vmatprep.mubr.bf16.mxu0 %v694
      %1512 = vmatmul.mubr.bf16.gmra.mrb[0].mxu0 %v693
      %v1513 = vpop.f32.mrb[0].mxu0
      %v1514 = vadd.f32 %v1321, %v1513
      %v1515 = vpop.f32.mrb[0].mxu0
      %v1516 = vadd.f32 %v1323, %v1515
      %v1517 = vpop.f32.mrb[0].mxu0
      %v1518 = vadd.f32 %v1325, %v1517
      %v1519 = vpop.f32.mrb[0].mxu0
      %v1520 = vadd.f32 %v1327, %v1519
      %1521 = vmatprep.mubr.bf16.mxu0 %v699
      %1522 = vmatmul.mubr.bf16.gmra.mrb[0].mxu0 %v698
      %v1523 = vpop.f32.mrb[0].mxu0
      %v1524 = vadd.f32 %v1331, %v1523
      %v1525 = vpop.f32.mrb[0].mxu0
      %v1526 = vadd.f32 %v1333, %v1525
      %v1527 = vpop.f32.mrb[0].mxu0
      %v1528 = vadd.f32 %v1335, %v1527
      %v1529 = vpop.f32.mrb[0].mxu0
      %v1530 = vadd.f32 %v1337, %v1529
      %1531 = vmatprep.mubr.bf16.mxu0 %v704
      %1532 = vmatmul.mubr.bf16.gmra.mrb[0].mxu0 %v703
      %v1533 = vpop.f32.mrb[0].mxu0
      %v1534 = vadd.f32 %v1341, %v1533
      %v1535 = vpop.f32.mrb[0].mxu0
      %v1536 = vadd.f32 %v1343, %v1535
      %v1537 = vpop.f32.mrb[0].mxu0
      %v1538 = vadd.f32 %v1345, %v1537
      %v1539 = vpop.f32.mrb[0].mxu0
      %v1540 = vadd.f32 %v1347, %v1539
      %1541 = vmatprep.mubr.bf16.mxu0 %v709
      %1542 = vmatmul.mubr.bf16.gmra.mrb[0].mxu0 %v708
      %v1543 = vpop.f32.mrb[0].mxu0
      %v1544 = vadd.f32 %v1351, %v1543
      %v1545 = vpop.f32.mrb[0].mxu0
      %v1546 = vadd.f32 %v1353, %v1545
      %v1547 = vpop.f32.mrb[0].mxu0
      %v1548 = vadd.f32 %v1355, %v1547
      %v1549 = vpop.f32.mrb[0].mxu0
      %v1550 = vadd.f32 %v1357, %v1549
      %1551 = vmatprep.mubr.bf16.mxu0 %v714
      %1552 = vmatmul.mubr.bf16.gmra.mrb[0].mxu0 %v713
      %v1553 = vpop.f32.mrb[0].mxu0
      %v1554 = vadd.f32 %v1361, %v1553
      %v1555 = vpop.f32.mrb[0].mxu0
      %v1556 = vadd.f32 %v1363, %v1555
      %v1557 = vpop.f32.mrb[0].mxu0
      %v1558 = vadd.f32 %v1365, %v1557
      %v1559 = vpop.f32.mrb[0].mxu0
      %v1560 = vadd.f32 %v1367, %v1559
      %1561 = vmatprep.mubr.bf16.mxu0 %v719
      %1562 = vmatmul.mubr.bf16.gmra.mrb[0].mxu0 %v718
      %v1563 = vpop.f32.mrb[0].mxu0
      %v1564 = vadd.f32 %v1371, %v1563
      %v1565 = vpop.f32.mrb[0].mxu0
      %v1566 = vadd.f32 %v1373, %v1565
      %v1567 = vpop.f32.mrb[0].mxu0
      %v1568 = vadd.f32 %v1375, %v1567
      %v1569 = vpop.f32.mrb[0].mxu0
      %v1570 = vadd.f32 %v1377, %v1569
      %1571 = vmatprep.mubr.bf16.mxu0 %v724
      %1572 = vmatmul.mubr.bf16.gmra.mrb[0].mxu0 %v723
      %v1573 = vpop.f32.mrb[0].mxu0
      %v1574 = vadd.f32 %v1381, %v1573
      %v1575 = vpop.f32.mrb[0].mxu0
      %v1576 = vadd.f32 %v1383, %v1575
      %v1577 = vpop.f32.mrb[0].mxu0
      %v1578 = vadd.f32 %v1385, %v1577
      %v1579 = vpop.f32.mrb[0].mxu0
      %v1580 = vadd.f32 %v1387, %v1579
      %1581 = vmatprep.mubr.bf16.mxu0 %v729
      %1582 = vmatmul.mubr.bf16.gmra.mrb[0].mxu0 %v728
      %v1583 = vpop.f32.mrb[0].mxu0
      %v1584 = vadd.f32 %v1391, %v1583
      %v1585 = vpop.f32.mrb[0].mxu0
      %v1586 = vadd.f32 %v1393, %v1585
      %v1587 = vpop.f32.mrb[0].mxu0
      %v1588 = vadd.f32 %v1395, %v1587
      %v1589 = vpop.f32.mrb[0].mxu0
      %v1590 = vadd.f32 %v1397, %v1589
      %1591 = vmatprep.mubr.bf16.mxu0 %v734
      %1592 = vmatmul.mubr.bf16.gmra.mrb[0].mxu0 %v733
      %v1593 = vpop.f32.mrb[0].mxu0
      %v1594 = vadd.f32 %v1401, %v1593
      %v1595 = vpop.f32.mrb[0].mxu0
      %v1596 = vadd.f32 %v1403, %v1595
      %v1597 = vpop.f32.mrb[0].mxu0
      %v1598 = vadd.f32 %v1405, %v1597
      %v1599 = vpop.f32.mrb[0].mxu0
      %v1600 = vadd.f32 %v1407, %v1599
      %1601 = vdwg.mxu0
      %1602 = vmatprep.subr.bf16.mxu0 %v1121
      %1603 = vmatpush1.bf16.msra.mxu0 %v1120
      %1604 = vmatprep.subr.bf16.mxu0 %v1123
      %1605 = vmatpush1.bf16.msra.mxu0 %v1122
      %1606 = vmatprep.subr.bf16.mxu0 %v1125
      %1607 = vmatpush1.bf16.msra.mxu0 %v1124
      %1608 = vmatprep.subr.bf16.mxu0 %v1127
      %1609 = vmatpush1.bf16.msra.mxu0 %v1126
      %1610 = vmatprep.subr.bf16.mxu0 %v1129
      %1611 = vmatpush1.bf16.msra.mxu0 %v1128
      %1612 = vmatprep.subr.bf16.mxu0 %v1131
      %1613 = vmatpush1.bf16.msra.mxu0 %v1130
      %1614 = vmatprep.subr.bf16.mxu0 %v1133
      %1615 = vmatpush1.bf16.msra.mxu0 %v1132
      %1616 = vmatprep.subr.bf16.mxu0 %v1135
      %1617 = vmatpush1.bf16.msra.mxu0 %v1134
      %1618 = vmatprep.subr.bf16.mxu0 0
      %1619 = vmatpush1.bf16.msra.mxu0 0
      %1620 = vmatprep.subr.bf16.mxu0 0
      %1621 = vmatpush1.bf16.msra.mxu0 0
      %1622 = vmatprep.subr.bf16.mxu0 0
      %1623 = vmatpush1.bf16.msra.mxu0 0
      %1624 = vmatprep.subr.bf16.mxu0 0
      %1625 = vmatpush1.bf16.msra.mxu0 0
      %1626 = vmatprep.subr.bf16.mxu0 0
      %1627 = vmatpush1.bf16.msra.mxu0 0
      %1628 = vmatprep.subr.bf16.mxu0 0
      %1629 = vmatpush1.bf16.msra.mxu0 0
      %1630 = vmatprep.subr.bf16.mxu0 0
      %1631 = vmatpush1.bf16.msra.mxu0 0
      %1632 = vmatprep.subr.bf16.mxu0 0
      %1633 = vmatpush1.bf16.msra.mxu0 0
      %1634 = vmatprep.mubr.bf16.mxu0 0
      %1635 = vmatmul.mubr.bf16.gmra.mrb[0].mxu0 %v660
      %v1636 = vpop.f32.mrb[0].mxu0
      %v1637 = vadd.f32 %v1444, %v1636
      %v1638 = vpop.f32.mrb[0].mxu0
      %v1639 = vadd.f32 %v1446, %v1638
      %v1640 = vpop.f32.mrb[0].mxu0
      %v1641 = vadd.f32 %v1448, %v1640
      %v1642 = vpop.f32.mrb[0].mxu0
      %v1643 = vadd.f32 %v1450, %v1642
      %1644 = vmatprep.mubr.bf16.mxu0 0
      %1645 = vmatmul.mubr.bf16.gmra.mrb[0].mxu0 %v665
      %v1646 = vpop.f32.mrb[0].mxu0
      %v1647 = vadd.f32 %v1454, %v1646
      %v1648 = vpop.f32.mrb[0].mxu0
      %v1649 = vadd.f32 %v1456, %v1648
      %v1650 = vpop.f32.mrb[0].mxu0
      %v1651 = vadd.f32 %v1458, %v1650
      %v1652 = vpop.f32.mrb[0].mxu0
      %v1653 = vadd.f32 %v1460, %v1652
      %1654 = vmatprep.mubr.bf16.mxu0 0
      %1655 = vmatmul.mubr.bf16.gmra.mrb[0].mxu0 %v670
      %v1656 = vpop.f32.mrb[0].mxu0
      %v1657 = vadd.f32 %v1464, %v1656
      %v1658 = vpop.f32.mrb[0].mxu0
      %v1659 = vadd.f32 %v1466, %v1658
      %v1660 = vpop.f32.mrb[0].mxu0
      %v1661 = vadd.f32 %v1468, %v1660
      %v1662 = vpop.f32.mrb[0].mxu0
      %v1663 = vadd.f32 %v1470, %v1662
      %1664 = vmatprep.mubr.bf16.mxu0 0
      %1665 = vmatmul.mubr.bf16.gmra.mrb[0].mxu0 %v675
      %v1666 = vpop.f32.mrb[0].mxu0
      %v1667 = vadd.f32 %v1474, %v1666
      %v1668 = vpop.f32.mrb[0].mxu0
      %v1669 = vadd.f32 %v1476, %v1668
      %v1670 = vpop.f32.mrb[0].mxu0
      %v1671 = vadd.f32 %v1478, %v1670
      %v1672 = vpop.f32.mrb[0].mxu0
      %v1673 = vadd.f32 %v1480, %v1672
      %1674 = vmatprep.mubr.bf16.mxu0 0
      %1675 = vmatmul.mubr.bf16.gmra.mrb[0].mxu0 %v680
      %v1676 = vpop.f32.mrb[0].mxu0
      %v1677 = vadd.f32 %v1484, %v1676
      %v1678 = vpop.f32.mrb[0].mxu0
      %v1679 = vadd.f32 %v1486, %v1678
      %v1680 = vpop.f32.mrb[0].mxu0
      %v1681 = vadd.f32 %v1488, %v1680
      %v1682 = vpop.f32.mrb[0].mxu0
      %v1683 = vadd.f32 %v1490, %v1682
      %1684 = vmatprep.mubr.bf16.mxu0 0
      %1685 = vmatmul.mubr.bf16.gmra.mrb[0].mxu0 %v685
      %v1686 = vpop.f32.mrb[0].mxu0
      %v1687 = vadd.f32 %v1494, %v1686
      %v1688 = vpop.f32.mrb[0].mxu0
      %v1689 = vadd.f32 %v1496, %v1688
      %v1690 = vpop.f32.mrb[0].mxu0
      %v1691 = vadd.f32 %v1498, %v1690
      %v1692 = vpop.f32.mrb[0].mxu0
      %v1693 = vadd.f32 %v1500, %v1692
      %1694 = vmatprep.mubr.bf16.mxu0 0
      %1695 = vmatmul.mubr.bf16.gmra.mrb[0].mxu0 %v690
      %v1696 = vpop.f32.mrb[0].mxu0
      %v1697 = vadd.f32 %v1504, %v1696
      %v1698 = vpop.f32.mrb[0].mxu0
      %v1699 = vadd.f32 %v1506, %v1698
      %v1700 = vpop.f32.mrb[0].mxu0
      %v1701 = vadd.f32 %v1508, %v1700
      %v1702 = vpop.f32.mrb[0].mxu0
      %v1703 = vadd.f32 %v1510, %v1702
      %1704 = vmatprep.mubr.bf16.mxu0 0
      %1705 = vmatmul.mubr.bf16.gmra.mrb[0].mxu0 %v695
      %v1706 = vpop.f32.mrb[0].mxu0
      %v1707 = vadd.f32 %v1514, %v1706
      %v1708 = vpop.f32.mrb[0].mxu0
      %v1709 = vadd.f32 %v1516, %v1708
      %v1710 = vpop.f32.mrb[0].mxu0
      %v1711 = vadd.f32 %v1518, %v1710
      %v1712 = vpop.f32.mrb[0].mxu0
      %v1713 = vadd.f32 %v1520, %v1712
      %1714 = vmatprep.mubr.bf16.mxu0 0
      %1715 = vmatmul.mubr.bf16.gmra.mrb[0].mxu0 %v700
      %v1716 = vpop.f32.mrb[0].mxu0
      %v1717 = vadd.f32 %v1524, %v1716
      %v1718 = vpop.f32.mrb[0].mxu0
      %v1719 = vadd.f32 %v1526, %v1718
      %v1720 = vpop.f32.mrb[0].mxu0
      %v1721 = vadd.f32 %v1528, %v1720
      %v1722 = vpop.f32.mrb[0].mxu0
      %v1723 = vadd.f32 %v1530, %v1722
      %1724 = vmatprep.mubr.bf16.mxu0 0
      %1725 = vmatmul.mubr.bf16.gmra.mrb[0].mxu0 %v705
      %v1726 = vpop.f32.mrb[0].mxu0
      %v1727 = vadd.f32 %v1534, %v1726
      %v1728 = vpop.f32.mrb[0].mxu0
      %v1729 = vadd.f32 %v1536, %v1728
      %v1730 = vpop.f32.mrb[0].mxu0
      %v1731 = vadd.f32 %v1538, %v1730
      %v1732 = vpop.f32.mrb[0].mxu0
      %v1733 = vadd.f32 %v1540, %v1732
      %1734 = vmatprep.mubr.bf16.mxu0 0
      %1735 = vmatmul.mubr.bf16.gmra.mrb[0].mxu0 %v710
      %v1736 = vpop.f32.mrb[0].mxu0
      %v1737 = vadd.f32 %v1544, %v1736
      %v1738 = vpop.f32.mrb[0].mxu0
      %v1739 = vadd.f32 %v1546, %v1738
      %v1740 = vpop.f32.mrb[0].mxu0
      %v1741 = vadd.f32 %v1548, %v1740
      %v1742 = vpop.f32.mrb[0].mxu0
      %v1743 = vadd.f32 %v1550, %v1742
      %1744 = vmatprep.mubr.bf16.mxu0 0
      %1745 = vmatmul.mubr.bf16.gmra.mrb[0].mxu0 %v715
      %v1746 = vpop.f32.mrb[0].mxu0
      %v1747 = vadd.f32 %v1554, %v1746
      %v1748 = vpop.f32.mrb[0].mxu0
      %v1749 = vadd.f32 %v1556, %v1748
      %v1750 = vpop.f32.mrb[0].mxu0
      %v1751 = vadd.f32 %v1558, %v1750
      %v1752 = vpop.f32.mrb[0].mxu0
      %v1753 = vadd.f32 %v1560, %v1752
      %1754 = vmatprep.mubr.bf16.mxu0 0
      %1755 = vmatmul.mubr.bf16.gmra.mrb[0].mxu0 %v720
      %v1756 = vpop.f32.mrb[0].mxu0
      %v1757 = vadd.f32 %v1564, %v1756
      %v1758 = vpop.f32.mrb[0].mxu0
      %v1759 = vadd.f32 %v1566, %v1758
      %v1760 = vpop.f32.mrb[0].mxu0
      %v1761 = vadd.f32 %v1568, %v1760
      %v1762 = vpop.f32.mrb[0].mxu0
      %v1763 = vadd.f32 %v1570, %v1762
      %1764 = vmatprep.mubr.bf16.mxu0 0
      %1765 = vmatmul.mubr.bf16.gmra.mrb[0].mxu0 %v725
      %v1766 = vpop.f32.mrb[0].mxu0
      %v1767 = vadd.f32 %v1574, %v1766
      %v1768 = vpop.f32.mrb[0].mxu0
      %v1769 = vadd.f32 %v1576, %v1768
      %v1770 = vpop.f32.mrb[0].mxu0
      %v1771 = vadd.f32 %v1578, %v1770
      %v1772 = vpop.f32.mrb[0].mxu0
      %v1773 = vadd.f32 %v1580, %v1772
      %1774 = vmatprep.mubr.bf16.mxu0 0
      %1775 = vmatmul.mubr.bf16.gmra.mrb[0].mxu0 %v730
      %v1776 = vpop.f32.mrb[0].mxu0
      %v1777 = vadd.f32 %v1584, %v1776
      %v1778 = vpop.f32.mrb[0].mxu0
      %v1779 = vadd.f32 %v1586, %v1778
      %v1780 = vpop.f32.mrb[0].mxu0
      %v1781 = vadd.f32 %v1588, %v1780
      %v1782 = vpop.f32.mrb[0].mxu0
      %v1783 = vadd.f32 %v1590, %v1782
      %1784 = vmatprep.mubr.bf16.mxu0 0
      %1785 = vmatmul.mubr.bf16.gmra.mrb[0].mxu0 %v735
      %v1786 = vpop.f32.mrb[0].mxu0
      %v1787 = vadd.f32 %v1594, %v1786
      %v1788 = vpop.f32.mrb[0].mxu0
      %v1789 = vadd.f32 %v1596, %v1788
      %v1790 = vpop.f32.mrb[0].mxu0
      %v1791 = vadd.f32 %v1598, %v1790
      %v1792 = vpop.f32.mrb[0].mxu0
      %v1793 = vadd.f32 %v1600, %v1792
      %1794 = vdwg.mxu0
      %v1795 = vlaneseq
      %v1796 = vshrl.u32 %v1795, 7
      %v1797 = vadd.s32 %v1796, 8
      %v1798 = vadd.s32 %v1796, 16
      %v1799 = vadd.s32 %v1796, 24
      %v1800 = vadd.s32 %v1796, 32
      %v1801 = vadd.s32 %v1796, 40
      %v1802 = vadd.s32 %v1796, 48
      %v1803 = vadd.s32 %v1796, 56
      %v1804 = vadd.s32 %v1796, 64
      %v1805 = vadd.s32 %v1796, 72
      %v1806 = vadd.s32 %v1796, 80
      %v1807 = vadd.s32 %v1796, 88
      %v1808 = vadd.s32 %v1796, 96
      %v1809 = vadd.s32 %v1796, 104
      %v1810 = vadd.s32 %v1796, 112
      %v1811 = vadd.s32 %v1796, 120
      %v1812 = vadd.s32 %v1796, 128
      %v1813 = vadd.s32 %v1796, 136
      %v1814 = vadd.s32 %v1796, 144
      %v1815 = vadd.s32 %v1796, 152
      %v1816 = vadd.s32 %v1796, 160
      %v1817 = vadd.s32 %v1796, 168
      %v1818 = vadd.s32 %v1796, 176
      %v1819 = vadd.s32 %v1796, 184
      %v1820 = vadd.s32 %v1796, 192
      %v1821 = vadd.s32 %v1796, 200
      %v1822 = vadd.s32 %v1796, 208
      %v1823 = vadd.s32 %v1796, 216
      %v1824 = vadd.s32 %v1796, 224
      %v1825 = vadd.s32 %v1796, 232
      %v1826 = vadd.s32 %v1796, 240
      %v1827 = vadd.s32 %v1796, 248
      %s1828 = smul.u32 %s20, 256
      %v1829 = vstv %s1828
      %v1830 = vadd.s32 %v1796, %v1829
      %v1831 = vadd.s32 %v1797, %v1829
      %v1832 = vadd.s32 %v1798, %v1829
      %v1833 = vadd.s32 %v1799, %v1829
      %v1834 = vadd.s32 %v1800, %v1829
      %v1835 = vadd.s32 %v1801, %v1829
      %v1836 = vadd.s32 %v1802, %v1829
      %v1837 = vadd.s32 %v1803, %v1829
      %v1838 = vadd.s32 %v1804, %v1829
      %v1839 = vadd.s32 %v1805, %v1829
      %v1840 = vadd.s32 %v1806, %v1829
      %v1841 = vadd.s32 %v1807, %v1829
      %v1842 = vadd.s32 %v1808, %v1829
      %v1843 = vadd.s32 %v1809, %v1829
      %v1844 = vadd.s32 %v1810, %v1829
      %v1845 = vadd.s32 %v1811, %v1829
      %v1846 = vadd.s32 %v1812, %v1829
      %v1847 = vadd.s32 %v1813, %v1829
      %v1848 = vadd.s32 %v1814, %v1829
      %v1849 = vadd.s32 %v1815, %v1829
      %v1850 = vadd.s32 %v1816, %v1829
      %v1851 = vadd.s32 %v1817, %v1829
      %v1852 = vadd.s32 %v1818, %v1829
      %v1853 = vadd.s32 %v1819, %v1829
      %v1854 = vadd.s32 %v1820, %v1829
      %v1855 = vadd.s32 %v1821, %v1829
      %v1856 = vadd.s32 %v1822, %v1829
      %v1857 = vadd.s32 %v1823, %v1829
      %v1858 = vadd.s32 %v1824, %v1829
      %v1859 = vadd.s32 %v1825, %v1829
      %v1860 = vadd.s32 %v1826, %v1829
      %v1861 = vadd.s32 %v1827, %v1829
      %v1862 = vmax.f32 %v1637, %v1647
      %v1863 = vmax.f32 %v1641, %v1651
      %v1864 = vmax.f32 %v1862, %v1657
      %v1865 = vmax.f32 %v1863, %v1661
      %v1866 = vmax.f32 %v1864, %v1667
      %v1867 = vmax.f32 %v1865, %v1671
      %v1868 = vmax.f32 %v1866, %v1677
      %v1869 = vmax.f32 %v1867, %v1681
      %v1870 = vmax.f32 %v1868, %v1687
      %v1871 = vmax.f32 %v1869, %v1691
      %v1872 = vmax.f32 %v1870, %v1697
      %v1873 = vmax.f32 %v1871, %v1701
      %v1874 = vmax.f32 %v1872, %v1707
      %v1875 = vmax.f32 %v1873, %v1711
      %v1876 = vmax.f32 %v1874, %v1717
      %v1877 = vmax.f32 %v1875, %v1721
      %v1878 = vmax.f32 %v1876, %v1727
      %v1879 = vmax.f32 %v1877, %v1731
      %v1880 = vmax.f32 %v1878, %v1737
      %v1881 = vmax.f32 %v1879, %v1741
      %v1882 = vmax.f32 %v1880, %v1747
      %v1883 = vmax.f32 %v1881, %v1751
      %v1884 = vmax.f32 %v1882, %v1757
      %v1885 = vmax.f32 %v1883, %v1761
      %v1886 = vmax.f32 %v1884, %v1767
      %v1887 = vmax.f32 %v1885, %v1771
      %v1888 = vmax.f32 %v1886, %v1777
      %v1889 = vmax.f32 %v1887, %v1781
      %v1890 = vmax.f32 %v1888, %v1787
      %v1891 = vmax.f32 %v1889, %v1791
      %v1892 = vmax.f32 %v1890, %v1891
      %v1893 = vrot.slane %v1892, 4
      %v1894 = vmax.f32 %v1892, %v1893
      %v1895 = vrot.slane %v1894, 2
      %v1896 = vmax.f32 %v1894, %v1895
      %v1897 = vrot.slane %v1896, 1
      %v1898 = vmax.f32 %v1896, %v1897
      %v1899 = vmax.f32 %v1639, %v1649
      %v1900 = vmax.f32 %v1643, %v1653
      %v1901 = vmax.f32 %v1899, %v1659
      %v1902 = vmax.f32 %v1900, %v1663
      %v1903 = vmax.f32 %v1901, %v1669
      %v1904 = vmax.f32 %v1902, %v1673
      %v1905 = vmax.f32 %v1903, %v1679
      %v1906 = vmax.f32 %v1904, %v1683
      %v1907 = vmax.f32 %v1905, %v1689
      %v1908 = vmax.f32 %v1906, %v1693
      %v1909 = vmax.f32 %v1907, %v1699
      %v1910 = vmax.f32 %v1908, %v1703
      %v1911 = vmax.f32 %v1909, %v1709
      %v1912 = vmax.f32 %v1910, %v1713
      %v1913 = vmax.f32 %v1911, %v1719
      %v1914 = vmax.f32 %v1912, %v1723
      %v1915 = vmax.f32 %v1913, %v1729
      %v1916 = vmax.f32 %v1914, %v1733
      %v1917 = vmax.f32 %v1915, %v1739
      %v1918 = vmax.f32 %v1916, %v1743
      %v1919 = vmax.f32 %v1917, %v1749
      %v1920 = vmax.f32 %v1918, %v1753
      %v1921 = vmax.f32 %v1919, %v1759
      %v1922 = vmax.f32 %v1920, %v1763
      %v1923 = vmax.f32 %v1921, %v1769
      %v1924 = vmax.f32 %v1922, %v1773
      %v1925 = vmax.f32 %v1923, %v1779
      %v1926 = vmax.f32 %v1924, %v1783
      %v1927 = vmax.f32 %v1925, %v1789
      %v1928 = vmax.f32 %v1926, %v1793
      %v1929 = vmax.f32 %v1927, %v1928
      %v1930 = vrot.slane %v1929, 4
      %v1931 = vmax.f32 %v1929, %v1930
      %v1932 = vrot.slane %v1931, 2
      %v1933 = vmax.f32 %v1931, %v1932
      %v1934 = vrot.slane %v1933, 1
      %v1935 = vmax.f32 %v1933, %v1934
      %vm1936 = vcmp.eq.f32.partialorder %v1637, %v1898
      %vm1937 = vcmp.eq.f32.partialorder %v1639, %v1935
      %vm1938 = vcmp.eq.f32.partialorder %v1641, %v1898
      %vm1939 = vcmp.eq.f32.partialorder %v1643, %v1935
      %vm1940 = vcmp.eq.f32.partialorder %v1647, %v1898
      %vm1941 = vcmp.eq.f32.partialorder %v1649, %v1935
      %vm1942 = vcmp.eq.f32.partialorder %v1651, %v1898
      %vm1943 = vcmp.eq.f32.partialorder %v1653, %v1935
      %vm1944 = vcmp.eq.f32.partialorder %v1657, %v1898
      %vm1945 = vcmp.eq.f32.partialorder %v1659, %v1935
      %vm1946 = vcmp.eq.f32.partialorder %v1661, %v1898
      %vm1947 = vcmp.eq.f32.partialorder %v1663, %v1935
      %vm1948 = vcmp.eq.f32.partialorder %v1667, %v1898
      %vm1949 = vcmp.eq.f32.partialorder %v1669, %v1935
      %vm1950 = vcmp.eq.f32.partialorder %v1671, %v1898
      %vm1951 = vcmp.eq.f32.partialorder %v1673, %v1935
      %vm1952 = vcmp.eq.f32.partialorder %v1677, %v1898
      %vm1953 = vcmp.eq.f32.partialorder %v1679, %v1935
      %vm1954 = vcmp.eq.f32.partialorder %v1681, %v1898
      %vm1955 = vcmp.eq.f32.partialorder %v1683, %v1935
      %vm1956 = vcmp.eq.f32.partialorder %v1687, %v1898
      %vm1957 = vcmp.eq.f32.partialorder %v1689, %v1935
      %vm1958 = vcmp.eq.f32.partialorder %v1691, %v1898
      %vm1959 = vcmp.eq.f32.partialorder %v1693, %v1935
      %vm1960 = vcmp.eq.f32.partialorder %v1697, %v1898
      %vm1961 = vcmp.eq.f32.partialorder %v1699, %v1935
      %vm1962 = vcmp.eq.f32.partialorder %v1701, %v1898
      %vm1963 = vcmp.eq.f32.partialorder %v1703, %v1935
      %vm1964 = vcmp.eq.f32.partialorder %v1707, %v1898
      %vm1965 = vcmp.eq.f32.partialorder %v1709, %v1935
      %vm1966 = vcmp.eq.f32.partialorder %v1711, %v1898
      %vm1967 = vcmp.eq.f32.partialorder %v1713, %v1935
      %vm1968 = vcmp.eq.f32.partialorder %v1717, %v1898
      %vm1969 = vcmp.eq.f32.partialorder %v1719, %v1935
      %vm1970 = vcmp.eq.f32.partialorder %v1721, %v1898
      %vm1971 = vcmp.eq.f32.partialorder %v1723, %v1935
      %vm1972 = vcmp.eq.f32.partialorder %v1727, %v1898
      %vm1973 = vcmp.eq.f32.partialorder %v1729, %v1935
      %vm1974 = vcmp.eq.f32.partialorder %v1731, %v1898
      %vm1975 = vcmp.eq.f32.partialorder %v1733, %v1935
      %vm1976 = vcmp.eq.f32.partialorder %v1737, %v1898
      %vm1977 = vcmp.eq.f32.partialorder %v1739, %v1935
      %vm1978 = vcmp.eq.f32.partialorder %v1741, %v1898
      %vm1979 = vcmp.eq.f32.partialorder %v1743, %v1935
      %vm1980 = vcmp.eq.f32.partialorder %v1747, %v1898
      %vm1981 = vcmp.eq.f32.partialorder %v1749, %v1935
      %vm1982 = vcmp.eq.f32.partialorder %v1751, %v1898
      %vm1983 = vcmp.eq.f32.partialorder %v1753, %v1935
      %vm1984 = vcmp.eq.f32.partialorder %v1757, %v1898
      %vm1985 = vcmp.eq.f32.partialorder %v1759, %v1935
      %vm1986 = vcmp.eq.f32.partialorder %v1761, %v1898
      %vm1987 = vcmp.eq.f32.partialorder %v1763, %v1935
      %vm1988 = vcmp.eq.f32.partialorder %v1767, %v1898
      %vm1989 = vcmp.eq.f32.partialorder %v1769, %v1935
      %vm1990 = vcmp.eq.f32.partialorder %v1771, %v1898
      %vm1991 = vcmp.eq.f32.partialorder %v1773, %v1935
      %vm1992 = vcmp.eq.f32.partialorder %v1777, %v1898
      %vm1993 = vcmp.eq.f32.partialorder %v1779, %v1935
      %vm1994 = vcmp.eq.f32.partialorder %v1781, %v1898
      %vm1995 = vcmp.eq.f32.partialorder %v1783, %v1935
      %vm1996 = vcmp.eq.f32.partialorder %v1787, %v1898
      %vm1997 = vcmp.eq.f32.partialorder %v1789, %v1935
      %vm1998 = vcmp.eq.f32.partialorder %v1791, %v1898
      %vm1999 = vcmp.eq.f32.partialorder %v1793, %v1935
      %v2000 = vsel %vm1936, %v1830, 1073741824
      %v2001 = vsel %vm1937, %v1830, 1073741824
      %v2002 = vsel %vm1938, %v1831, 1073741824
      %v2003 = vsel %vm1939, %v1831, 1073741824
      %v2004 = vsel %vm1940, %v1832, 1073741824
      %v2005 = vsel %vm1941, %v1832, 1073741824
      %v2006 = vsel %vm1942, %v1833, 1073741824
      %v2007 = vsel %vm1943, %v1833, 1073741824
      %v2008 = vsel %vm1944, %v1834, 1073741824
      %v2009 = vsel %vm1945, %v1834, 1073741824
      %v2010 = vsel %vm1946, %v1835, 1073741824
      %v2011 = vsel %vm1947, %v1835, 1073741824
      %v2012 = vsel %vm1948, %v1836, 1073741824
      %v2013 = vsel %vm1949, %v1836, 1073741824
      %v2014 = vsel %vm1950, %v1837, 1073741824
      %v2015 = vsel %vm1951, %v1837, 1073741824
      %v2016 = vsel %vm1952, %v1838, 1073741824
      %v2017 = vsel %vm1953, %v1838, 1073741824
      %v2018 = vsel %vm1954, %v1839, 1073741824
      %v2019 = vsel %vm1955, %v1839, 1073741824
      %v2020 = vsel %vm1956, %v1840, 1073741824
      %v2021 = vsel %vm1957, %v1840, 1073741824
      %v2022 = vsel %vm1958, %v1841, 1073741824
      %v2023 = vsel %vm1959, %v1841, 1073741824
      %v2024 = vsel %vm1960, %v1842, 1073741824
      %v2025 = vsel %vm1961, %v1842, 1073741824
      %v2026 = vsel %vm1962, %v1843, 1073741824
      %v2027 = vsel %vm1963, %v1843, 1073741824
      %v2028 = vsel %vm1964, %v1844, 1073741824
      %v2029 = vsel %vm1965, %v1844, 1073741824
      %v2030 = vsel %vm1966, %v1845, 1073741824
      %v2031 = vsel %vm1967, %v1845, 1073741824
      %v2032 = vsel %vm1968, %v1846, 1073741824
      %v2033 = vsel %vm1969, %v1846, 1073741824
      %v2034 = vsel %vm1970, %v1847, 1073741824
      %v2035 = vsel %vm1971, %v1847, 1073741824
      %v2036 = vsel %vm1972, %v1848, 1073741824
      %v2037 = vsel %vm1973, %v1848, 1073741824
      %v2038 = vsel %vm1974, %v1849, 1073741824
      %v2039 = vsel %vm1975, %v1849, 1073741824
      %v2040 = vsel %vm1976, %v1850, 1073741824
      %v2041 = vsel %vm1977, %v1850, 1073741824
      %v2042 = vsel %vm1978, %v1851, 1073741824
      %v2043 = vsel %vm1979, %v1851, 1073741824
      %v2044 = vsel %vm1980, %v1852, 1073741824
      %v2045 = vsel %vm1981, %v1852, 1073741824
      %v2046 = vsel %vm1982, %v1853, 1073741824
      %v2047 = vsel %vm1983, %v1853, 1073741824
      %v2048 = vsel %vm1984, %v1854, 1073741824
      %v2049 = vsel %vm1985, %v1854, 1073741824
      %v2050 = vsel %vm1986, %v1855, 1073741824
      %v2051 = vsel %vm1987, %v1855, 1073741824
      %v2052 = vsel %vm1988, %v1856, 1073741824
      %v2053 = vsel %vm1989, %v1856, 1073741824
      %v2054 = vsel %vm1990, %v1857, 1073741824
      %v2055 = vsel %vm1991, %v1857, 1073741824
      %v2056 = vsel %vm1992, %v1858, 1073741824
      %v2057 = vsel %vm1993, %v1858, 1073741824
      %v2058 = vsel %vm1994, %v1859, 1073741824
      %v2059 = vsel %vm1995, %v1859, 1073741824
      %v2060 = vsel %vm1996, %v1860, 1073741824
      %v2061 = vsel %vm1997, %v1860, 1073741824
      %v2062 = vsel %vm1998, %v1861, 1073741824
      %v2063 = vsel %vm1999, %v1861, 1073741824
      %vm2064 = vcmp.lt.s32.totalorder %v2000, %v2004
      %v2065 = vsel %vm2064, %v2000, %v2004
      %vm2066 = vcmp.lt.s32.totalorder %v2002, %v2006
      %v2067 = vsel %vm2066, %v2002, %v2006
      %vm2068 = vcmp.lt.s32.totalorder %v2065, %v2008
      %v2069 = vsel %vm2068, %v2065, %v2008
      %vm2070 = vcmp.lt.s32.totalorder %v2067, %v2010
      %v2071 = vsel %vm2070, %v2067, %v2010
      %vm2072 = vcmp.lt.s32.totalorder %v2069, %v2012
      %v2073 = vsel %vm2072, %v2069, %v2012
      %vm2074 = vcmp.lt.s32.totalorder %v2071, %v2014
      %v2075 = vsel %vm2074, %v2071, %v2014
      %vm2076 = vcmp.lt.s32.totalorder %v2073, %v2016
      %v2077 = vsel %vm2076, %v2073, %v2016
      %vm2078 = vcmp.lt.s32.totalorder %v2075, %v2018
      %v2079 = vsel %vm2078, %v2075, %v2018
      %vm2080 = vcmp.lt.s32.totalorder %v2077, %v2020
      %v2081 = vsel %vm2080, %v2077, %v2020
      %vm2082 = vcmp.lt.s32.totalorder %v2079, %v2022
      %v2083 = vsel %vm2082, %v2079, %v2022
      %vm2084 = vcmp.lt.s32.totalorder %v2081, %v2024
      %v2085 = vsel %vm2084, %v2081, %v2024
      %vm2086 = vcmp.lt.s32.totalorder %v2083, %v2026
      %v2087 = vsel %vm2086, %v2083, %v2026
      %vm2088 = vcmp.lt.s32.totalorder %v2085, %v2028
      %v2089 = vsel %vm2088, %v2085, %v2028
      %vm2090 = vcmp.lt.s32.totalorder %v2087, %v2030
      %v2091 = vsel %vm2090, %v2087, %v2030
      %vm2092 = vcmp.lt.s32.totalorder %v2089, %v2032
      %v2093 = vsel %vm2092, %v2089, %v2032
      %vm2094 = vcmp.lt.s32.totalorder %v2091, %v2034
      %v2095 = vsel %vm2094, %v2091, %v2034
      %vm2096 = vcmp.lt.s32.totalorder %v2093, %v2036
      %v2097 = vsel %vm2096, %v2093, %v2036
      %vm2098 = vcmp.lt.s32.totalorder %v2095, %v2038
      %v2099 = vsel %vm2098, %v2095, %v2038
      %vm2100 = vcmp.lt.s32.totalorder %v2097, %v2040
      %v2101 = vsel %vm2100, %v2097, %v2040
      %vm2102 = vcmp.lt.s32.totalorder %v2099, %v2042
      %v2103 = vsel %vm2102, %v2099, %v2042
      %vm2104 = vcmp.lt.s32.totalorder %v2101, %v2044
      %v2105 = vsel %vm2104, %v2101, %v2044
      %vm2106 = vcmp.lt.s32.totalorder %v2103, %v2046
      %v2107 = vsel %vm2106, %v2103, %v2046
      %vm2108 = vcmp.lt.s32.totalorder %v2105, %v2048
      %v2109 = vsel %vm2108, %v2105, %v2048
      %vm2110 = vcmp.lt.s32.totalorder %v2107, %v2050
      %v2111 = vsel %vm2110, %v2107, %v2050
      %vm2112 = vcmp.lt.s32.totalorder %v2109, %v2052
      %v2113 = vsel %vm2112, %v2109, %v2052
      %vm2114 = vcmp.lt.s32.totalorder %v2111, %v2054
      %v2115 = vsel %vm2114, %v2111, %v2054
      %vm2116 = vcmp.lt.s32.totalorder %v2113, %v2056
      %v2117 = vsel %vm2116, %v2113, %v2056
      %vm2118 = vcmp.lt.s32.totalorder %v2115, %v2058
      %v2119 = vsel %vm2118, %v2115, %v2058
      %vm2120 = vcmp.lt.s32.totalorder %v2117, %v2060
      %v2121 = vsel %vm2120, %v2117, %v2060
      %vm2122 = vcmp.lt.s32.totalorder %v2119, %v2062
      %v2123 = vsel %vm2122, %v2119, %v2062
      %vm2124 = vcmp.lt.s32.totalorder %v2121, %v2123
      %v2125 = vsel %vm2124, %v2121, %v2123
      %v2126 = vrot.slane %v2125, 4
      %vm2127 = vcmp.lt.s32.totalorder %v2125, %v2126
      %v2128 = vsel %vm2127, %v2125, %v2126
      %v2129 = vrot.slane %v2128, 2
      %vm2130 = vcmp.lt.s32.totalorder %v2128, %v2129
      %v2131 = vsel %vm2130, %v2128, %v2129
      %v2132 = vrot.slane %v2131, 1
      %vm2133 = vcmp.lt.s32.totalorder %v2131, %v2132
      %v2134 = vsel %vm2133, %v2131, %v2132
      %vm2135 = vcmp.lt.s32.totalorder %v2001, %v2005
      %v2136 = vsel %vm2135, %v2001, %v2005
      %vm2137 = vcmp.lt.s32.totalorder %v2003, %v2007
      %v2138 = vsel %vm2137, %v2003, %v2007
      %vm2139 = vcmp.lt.s32.totalorder %v2136, %v2009
      %v2140 = vsel %vm2139, %v2136, %v2009
      %vm2141 = vcmp.lt.s32.totalorder %v2138, %v2011
      %v2142 = vsel %vm2141, %v2138, %v2011
      %vm2143 = vcmp.lt.s32.totalorder %v2140, %v2013
      %v2144 = vsel %vm2143, %v2140, %v2013
      %vm2145 = vcmp.lt.s32.totalorder %v2142, %v2015
      %v2146 = vsel %vm2145, %v2142, %v2015
      %vm2147 = vcmp.lt.s32.totalorder %v2144, %v2017
      %v2148 = vsel %vm2147, %v2144, %v2017
      %vm2149 = vcmp.lt.s32.totalorder %v2146, %v2019
      %v2150 = vsel %vm2149, %v2146, %v2019
      %vm2151 = vcmp.lt.s32.totalorder %v2148, %v2021
      %v2152 = vsel %vm2151, %v2148, %v2021
      %vm2153 = vcmp.lt.s32.totalorder %v2150, %v2023
      %v2154 = vsel %vm2153, %v2150, %v2023
      %vm2155 = vcmp.lt.s32.totalorder %v2152, %v2025
      %v2156 = vsel %vm2155, %v2152, %v2025
      %vm2157 = vcmp.lt.s32.totalorder %v2154, %v2027
      %v2158 = vsel %vm2157, %v2154, %v2027
      %vm2159 = vcmp.lt.s32.totalorder %v2156, %v2029
      %v2160 = vsel %vm2159, %v2156, %v2029
      %vm2161 = vcmp.lt.s32.totalorder %v2158, %v2031
      %v2162 = vsel %vm2161, %v2158, %v2031
      %vm2163 = vcmp.lt.s32.totalorder %v2160, %v2033
      %v2164 = vsel %vm2163, %v2160, %v2033
      %vm2165 = vcmp.lt.s32.totalorder %v2162, %v2035
      %v2166 = vsel %vm2165, %v2162, %v2035
      %vm2167 = vcmp.lt.s32.totalorder %v2164, %v2037
      %v2168 = vsel %vm2167, %v2164, %v2037
      %vm2169 = vcmp.lt.s32.totalorder %v2166, %v2039
      %v2170 = vsel %vm2169, %v2166, %v2039
      %vm2171 = vcmp.lt.s32.totalorder %v2168, %v2041
      %v2172 = vsel %vm2171, %v2168, %v2041
      %vm2173 = vcmp.lt.s32.totalorder %v2170, %v2043
      %v2174 = vsel %vm2173, %v2170, %v2043
      %vm2175 = vcmp.lt.s32.totalorder %v2172, %v2045
      %v2176 = vsel %vm2175, %v2172, %v2045
      %vm2177 = vcmp.lt.s32.totalorder %v2174, %v2047
      %v2178 = vsel %vm2177, %v2174, %v2047
      %vm2179 = vcmp.lt.s32.totalorder %v2176, %v2049
      %v2180 = vsel %vm2179, %v2176, %v2049
      %vm2181 = vcmp.lt.s32.totalorder %v2178, %v2051
      %v2182 = vsel %vm2181, %v2178, %v2051
      %vm2183 = vcmp.lt.s32.totalorder %v2180, %v2053
      %v2184 = vsel %vm2183, %v2180, %v2053
      %vm2185 = vcmp.lt.s32.totalorder %v2182, %v2055
      %v2186 = vsel %vm2185, %v2182, %v2055
      %vm2187 = vcmp.lt.s32.totalorder %v2184, %v2057
      %v2188 = vsel %vm2187, %v2184, %v2057
      %vm2189 = vcmp.lt.s32.totalorder %v2186, %v2059
      %v2190 = vsel %vm2189, %v2186, %v2059
      %vm2191 = vcmp.lt.s32.totalorder %v2188, %v2061
      %v2192 = vsel %vm2191, %v2188, %v2061
      %vm2193 = vcmp.lt.s32.totalorder %v2190, %v2063
      %v2194 = vsel %vm2193, %v2190, %v2063
      %vm2195 = vcmp.lt.s32.totalorder %v2192, %v2194
      %v2196 = vsel %vm2195, %v2192, %v2194
      %v2197 = vrot.slane %v2196, 4
      %vm2198 = vcmp.lt.s32.totalorder %v2196, %v2197
      %v2199 = vsel %vm2198, %v2196, %v2197
      %v2200 = vrot.slane %v2199, 2
      %vm2201 = vcmp.lt.s32.totalorder %v2199, %v2200
      %v2202 = vsel %vm2201, %v2199, %v2200
      %v2203 = vrot.slane %v2202, 1
      %vm2204 = vcmp.lt.s32.totalorder %v2202, %v2203
      %v2205 = vsel %vm2204, %v2202, %v2203
      %v2206 = vld [vmem:[#allocation2] sm:$0x3]
      %v2208 = vlaneseq
      %v2209 = vshrl.u32 %v2208, 7
      %v2210 = vsub.s32 0, %v2209
      %v2211 = vrot.slane %v2206, %v2210
      %v2212 = vlaneseq
      %v2213 = vshrl.u32 %v2212, 7
      %v2214 = vsub.s32 1, %v2213
      %v2215 = vrot.slane %v2206, %v2214
      %vm2218 = vcmp.gt.f32.partialorder %v1898, %v2211
      %vm2219 = vcmp.gt.f32.partialorder %v1935, %v2215
      %v2220 = vld [vmem:[#allocation3] sm:$0x3]
      %v2221 = vlaneseq
      %v2222 = vshrl.u32 %v2221, 7
      %v2223 = vsub.s32 0, %v2222
      %v2224 = vrot.slane %v2220, %v2223
      %v2225 = vlaneseq
      %v2226 = vshrl.u32 %v2225, 7
      %v2227 = vsub.s32 1, %v2226
      %v2228 = vrot.slane %v2220, %v2227
      %v2229 = vsel %vm2218, %v2134, %v2224
      %v2230 = vsel %vm2219, %v2205, %v2228
      %v2231 = vcombine.low %v2229, %v2230
      %v2233 = vunpack.c.l.s4 1966171168
      %v2234 = vunpack.c.0.s8 %v2233
      %v2235 = vlaneseq
      %v2236 = vshrl.u32 %v2235, 7
      %v2237 = vsub.s32 %v2234, %v2236
      %v2238 = vrot.slane %v2231, %v2237
      %v2240 = vunpack.c.l.s4 1966171168
      %v2241 = vunpack.c.0.s8 %v2240
      %v2242 = vlaneseq
      %v2243 = vshrl.u32 %v2242, 7
      %v2244 = vsub.s32 %v2241, %v2243
      %v2245 = vrot.slane %v2238, %v2244
      %v2246 = vlaneseq
      %vm2247 = vcmp.ge.s32.totalorder %v2246, 0
      %vm2248 = vcmp.lt.s32.totalorder %v2246, 256
      %vm2249 = vmand %vm2247, %vm2248
      %2250 = vst.msk [vmem:[#allocation3] sm:$0x3] %vm2249, %v2245
      %v2251 = vld [vmem:[#allocation2] sm:$0x3]
      %v2253 = vlaneseq
      %v2254 = vshrl.u32 %v2253, 7
      %v2255 = vsub.s32 0, %v2254
      %v2256 = vrot.slane %v2251, %v2255
      %v2257 = vlaneseq
      %v2258 = vshrl.u32 %v2257, 7
      %v2259 = vsub.s32 1, %v2258
      %v2260 = vrot.slane %v2251, %v2259
      %v2263 = vsel %vm2218, %v1898, %v2256
      %v2264 = vsel %vm2219, %v1935, %v2260
      %v2267 = vcombine.low %v2263, %v2264
      %v2269 = vunpack.c.l.s4 1966171168
      %v2270 = vunpack.c.0.s8 %v2269
      %v2271 = vlaneseq
      %v2272 = vshrl.u32 %v2271, 7
      %v2273 = vsub.s32 %v2270, %v2272
      %v2274 = vrot.slane %v2267, %v2273
      %v2276 = vunpack.c.l.s4 1966171168
      %v2277 = vunpack.c.0.s8 %v2276
      %v2278 = vlaneseq
      %v2279 = vshrl.u32 %v2278, 7
      %v2280 = vsub.s32 %v2277, %v2279
      %v2281 = vrot.slane %v2274, %v2280
      %2283 = vst.msk [vmem:[#allocation2] sm:$0x3] %vm2249, %v2281
      // Predicated region
      $region33: #{_lambda_.11} parent=27 // pred_check
        %p2284 = pneg %p214
      $region34: #{_lambda_.11} parent=27 // pred_check_branch
        %2286 = sbr.rel (%p2284) target = $region36
      $region35: #{_lambda_.11} parent=27 // pred_region
        %v2287 = vld [vmem:[#allocation3] sm:$0x3]
        %2288 = vst.msk [vmem:[%s211] sm:$0x3] %vm2249, %v2287
      $region36: #{_lambda_.11} parent=27 // pred_fallthru
        _
      %s2289 = smul.u32 2, %s19
      %p2290 = scmp.lt.s32.totalorder %s18, 1
      %s2291 = scalar_select %p2290, %s18, 1
      %p2292 = scmp.lt.s32.totalorder %s2289, 1
      %s2293 = scalar_select %p2292, %s2289, 1
      %s2294 = smul.addr %s2291, 2
      %s2295 = sadd.s32 %s2293, %s2294
      %s2296 = scalar_lea.vmem %s2, %s2295
      // Predicated region
      $region37: #{_lambda_.11} parent=27 // pred_check
        %p2297 = pneg %p106
      $region38: #{_lambda_.11} parent=27 // pred_check_branch
        %2299 = sbr.rel (%p2297) target = $region40
      $region39: #{_lambda_.11} parent=27 // pred_region
        %s2300 = smul.u32 2, %s19
      $region40: #{_lambda_.11} parent=27 // pred_fallthru
        _
    $region28: #{_lambda_.11} parent=5 // pred_fallthru
      _
    %p2301 = scmp.le.s32.totalorder 2, %s8
    // Predicated region
    $region41: #{_lambda_.11} parent=5 // pred_check
      %p2302 = pneg %p2301
    $region42: #{_lambda_.11} parent=5 // pred_check_branch
      %2304 = sbr.rel (%p2302) target = $region44
    $region43: #{_lambda_.11} parent=5 // pred_region
      %s2305 = ssub.s32 %s8, 2
      // Predicated region
      $region45: #{_lambda_.11} parent=43 // pred_check
        %p2306 = pneg %p112
      $region46: #{_lambda_.11} parent=43 // pred_check_branch
        %2308 = sbr.rel (%p2306) target = $region48
      $region47: #{_lambda_.11} parent=43 // pred_region
        %s2309 = smul.u32 2, %s22
        %p2310 = scmp.lt.s32.totalorder %s21, 1
        %s2311 = scalar_select %p2310, %s21, 1
        %p2312 = scmp.lt.s32.totalorder %s2309, 1
        %s2313 = scalar_select %p2312, %s2309, 1
        %s2314 = smul.addr %s2311, 2
        %s2315 = sadd.s32 %s2313, %s2314
        %s2316 = scalar_lea.vmem %s2, %s2315
      $region48: #{_lambda_.11} parent=43 // pred_fallthru
        _
    $region44: #{_lambda_.11} parent=5 // pred_fallthru
      _
  $region6: #{_lambda_.11} parent=0 // loop_footer
    %s12 = sadd.s32 1, %s8
  $region7: #{_lambda_.11} parent=0 // loop_footer_branch
    %7 = sbr.rel target = $region3
  $region8: #{_lambda_.11} parent=0 // loop_exit
    _

</llo_original>
